<compile_context>
chip_gen: v7x
topology: tpu7x:2x2x1
jax: 0.10.0
libtpu: 0.0.40
codegen_flags: <defaults>
</compile_context>

<pallas_src>
import numpy as np
import jax
import jax.numpy as jnp
from jax.experimental import pallas as pl
from jax.experimental.pallas import tpu as pltpu


# -------------------------- helpers --------------------------

def _round_up(a, b):
    return -(-a // b) * b


def _pick_trial_block(nt, requested=None):
    """Trials per grid step: target 256 (fills the 256-wide MXU M dim on v6e/v7x,
    >=128 saturates v5e's 128x128 MXU), clamped to the trial count, and capped at
    ~half the trials so the 'parallel' grid keeps >=2 steps for v7x's two TCs."""
    ntp8 = _round_up(int(nt), 8)
    if requested is not None:
        return int(max(8, min(_round_up(int(requested), 8), ntp8)))
    tb = 256
    if ntp8 > 8:
        tb = min(tb, _round_up(-(-ntp8 // 2), 8))
    return int(min(tb, ntp8))


def _vmem_limit(*block_nbytes):
    # Actual double-buffered block bytes + modest headroom (no artificial 32 MiB
    # floor); clamp to 64 MiB so the request stays legal on v7x (64 MiB / TC).
    need = 2 * sum(int(n) for n in block_nbytes) + (8 << 20)
    return int(min(need, 64 << 20))


# -------------------------- Pallas kernels --------------------------

def _sandwich_kernel(x_ref, w_ref, noise_ref, m_ref):
    # One TB-trial block per grid step, all lane-dense (last dim = Nc^2):
    #   m_flat = x_flat @ kron(Cm12^T, Cm12) + diag-jitter-row
    # which is exactly  m[t] = Cm12 @ x[t] @ Cm12 + diag(eps*randn)  per trial.
    m_ref[...] = (
        jnp.dot(x_ref[...], w_ref[...], preferred_element_type=jnp.float32)
        + noise_ref[...]
    )


def _logm_tri_kernel(vt_ref, logw_ref, e1_ref, e2_ref, sel_ref, out_ref):
    # One TB-trial block per grid step, all lane-dense (last dim = Nc^2 / Ppad):
    #   mflat[t, i*Nc+j] = sum_k  log(w[t,k]) * V[t,i,k] * V[t,j,k]
    #   out[t, p]        = sum_{i,j} mflat[t, i*Nc+j] * sel[i*Nc+j, p]
    # i.e.  out = coeffs * triu(V diag(log w) V^T)  flattened and padded to Ppad.
    vt = vt_ref[...]                     # (TB, Nc^2): vt[t, k*Nc + i] = V[t, i, k]
    lw = logw_ref[...]                   # (TB, Nc)    log-eigenvalues
    e1 = e1_ref[...]                     # (Nc, Nc^2)  "repeat each element Nc times"
    e2 = e2_ref[...]                     # (Nc, Nc^2)  "tile the row Nc times"
    nc = lw.shape[-1]

    mflat = jnp.zeros((vt.shape[0], nc * nc), dtype=jnp.float32)
    for k in range(nc):                  # static unroll over the eigen-index
        col = vt[:, k * nc:(k + 1) * nc]             # (TB, Nc) = V[t, :, k]
        scol = col * lw[:, k:k + 1]                  # scaled by log w_k
        mflat = mflat + (
            jnp.dot(scol, e1, preferred_element_type=jnp.float32)
            * jnp.dot(col, e2, preferred_element_type=jnp.float32))

    # Fused sqrt(2)-coeff scaling + upper-triangle extraction: one lane-dense matmul.
    out_ref[...] = jnp.dot(mflat, sel_ref[...], preferred_element_type=jnp.float32)


# -------------------------- pallas_call wrappers --------------------------

def _sandwich(x_flat, W, noise_row, *, tb):
    Ntp, Nc2 = x_flat.shape
    return pl.pallas_call(
        _sandwich_kernel,
        out_shape=jax.ShapeDtypeStruct((Ntp, Nc2), jnp.float32),
        grid=(Ntp // tb,),
        in_specs=[
            pl.BlockSpec((tb, Nc2), lambda t: (t, 0)),     # trials block (lane-dense)
            pl.BlockSpec((Nc2, Nc2), lambda t: (0, 0)),    # kron operator, resident
            pl.BlockSpec((1, Nc2), lambda t: (0, 0)),      # diagonal jitter row
        ],
        out_specs=pl.BlockSpec((tb, Nc2), lambda t: (t, 0)),
        compiler_params=pltpu.CompilerParams(
            dimension_semantics=("parallel",),
            vmem_limit_bytes=_vmem_limit(
                tb * Nc2 * 4, Nc2 * Nc2 * 4, Nc2 * 4, tb * Nc2 * 4),
        ),
    )(x_flat, W, noise_row)


def _logm_tri(vt_flat, logw, e1, e2, sel, *, tb):
    Ntp, Nc2 = vt_flat.shape
    Nc = logw.shape[-1]
    Ppad = sel.shape[-1]
    return pl.pallas_call(
        _logm_tri_kernel,
        out_shape=jax.ShapeDtypeStruct((Ntp, Ppad), jnp.float32),
        grid=(Ntp // tb,),
        in_specs=[
            pl.BlockSpec((tb, Nc2), lambda t: (t, 0)),     # flattened eigenvectors
            pl.BlockSpec((tb, Nc), lambda t: (t, 0)),      # log-eigenvalues
            pl.BlockSpec((Nc, Nc2), lambda t: (0, 0)),     # "repeat" operator, resident
            pl.BlockSpec((Nc, Nc2), lambda t: (0, 0)),     # "tile" operator, resident
            pl.BlockSpec((Nc2, Ppad), lambda t: (0, 0)),   # coeff * triu-selection
        ],
        out_specs=pl.BlockSpec((tb, Ppad), lambda t: (t, 0)),
        compiler_params=pltpu.CompilerParams(
            dimension_semantics=("parallel",),
            vmem_limit_bytes=_vmem_limit(
                tb * Nc2 * 4, tb * Nc * 4, 2 * Nc * Nc2 * 4,
                Nc2 * Ppad * 4, tb * Ppad * 4),
        ),
    )(vt_flat, logw, e1, e2, sel)


# -------------------------- module forward --------------------------

def sym_sqrtm(C):
    w, V = jnp.linalg.eigh(C)
    return (V * jnp.sqrt(w)) @ V.T


def tangent_space_forward(x, sqrt_cov, epsilon, noise_key, *, trial_block=None):
    """Equivalent of TangentSpace.forward (PyTorch) for x: (Nt, Nc, Nc) float32."""
    Nt, Nc, _ = x.shape
    x = x.astype(jnp.float32)

    tb = _pick_trial_block(Nt, trial_block)
    Ntp = _round_up(Nt, tb)
    if Ntp != Nt:
        # Pad with identity covariances so padded trials stay finite through kernel 1.
        pad = jnp.broadcast_to(jnp.eye(Nc, dtype=jnp.float32), (Ntp - Nt, Nc, Nc))
        x = jnp.concatenate([x, pad], axis=0)

    eye = jnp.eye(Nc, dtype=jnp.float32)
    Cref = sqrt_cov @ sqrt_cov.T + epsilon * eye           # tiny, plain JAX glue

    # Cm12 = Cref^{-1/2}  (sym_inv_sqrtm1).
    # TODO(synk): jnp.linalg.eigh (sym_inv_sqrtm1 / sym_logm eigendecomposition) has
    # no Pallas equivalent; it stays in XLA.
    w, V = jnp.linalg.eigh(Cref)
    Cm12 = ((V * (1.0 / jnp.sqrt(w))) @ V.T).astype(jnp.float32)

    # Row-major vec identity: vec(Cm12 @ X @ Cm12) = vec(X) @ kron(Cm12^T, Cm12).
    # (Nc^2, Nc^2) f32: 256 KiB at Nc=16, 4 MiB at Nc=32 — stays VMEM-resident.
    # TODO(synk): for Nc >~ 48 (v7x, 64 MiB VMEM) switch to a two-step batched-matmul
    # sandwich to avoid the O(Nc^4) operator.
    W = jnp.kron(Cm12.T, Cm12).astype(jnp.float32)
    # TODO(synk): optionally cast x/W to bfloat16 (keep f32 accumulation) for the
    # MXU-native path once numerics are validated against the f32 reference.

    # diag(epsilon * randn(Nc)): one draw shared by all trials, exactly like the
    # PyTorch reference; passed as a flat (1, Nc^2) row and broadcast-added in-kernel.
    noise = epsilon * jax.random.normal(noise_key, (Nc,), dtype=jnp.float32)
    noise_row = jnp.diag(noise).reshape(1, Nc * Nc)

    # Pallas kernel 1: whitening sandwich + jitter, lane-dense (TB, Nc^2) blocks.
    m_flat = _sandwich(x.reshape(Ntp, Nc * Nc), W, noise_row, tb=tb)

    # sym_logm eigen-step in XLA, on the valid trials only (no eigh work on padding).
    m = m_flat.reshape(Ntp, Nc, Nc)[:Nt]
    wm, Vm = jnp.linalg.eigh(m)
    # Numerical guard: the reference would NaN on a non-positive eigenvalue; clamp to
    # float32 tiny so only already-degenerate cases differ.
    logw = jnp.log(jnp.maximum(wm, jnp.finfo(jnp.float32).tiny)).astype(jnp.float32)
    Vm = Vm.astype(jnp.float32)
    if Ntp != Nt:
        Vm = jnp.pad(Vm, ((0, Ntp - Nt), (0, 0), (0, 0)))
        logw = jnp.pad(logw, ((0, Ntp - Nt), (0, 0)))
    # Flatten eigenvectors per trial, eigen-index major:
    #   vt[t, k*Nc + i] = V[t, i, k]   (k-th eigenvector contiguous on lanes).
    vt_flat = jnp.swapaxes(Vm, 1, 2).reshape(Ntp, Nc * Nc)

    # Resident operators for kernel 2 (trace-time numpy constants).
    ntri = Nc * (Nc + 1) // 2
    Ppad = max(128, _round_up(ntri, 128))
    e1 = jnp.asarray(np.kron(np.eye(Nc, dtype=np.float32),
                             np.ones((1, Nc), np.float32)))      # repeat-each-elem
    e2 = jnp.asarray(np.kron(np.ones((1, Nc), np.float32),
                             np.eye(Nc, dtype=np.float32)))      # tile-row
    rows, cols = np.triu_indices(Nc)
    sel_np = np.zeros((Nc * Nc, Ppad), np.float32)
    sel_np[rows * Nc + cols, np.arange(ntri)] = np.where(
        cols > rows, np.sqrt(2.0), 1.0).astype(np.float32)
    sel = jnp.asarray(sel_np)

    # Pallas kernel 2: V diag(log w) V^T recombination + fused sqrt(2)-triu coeffs and
    # upper-triangle extraction, lane-dense (TB, Ppad) output blocks.
    T_pad = _logm_tri(vt_flat, logw, e1, e2, sel, tb=tb)
    return T_pad[:Nt, :ntri]                       # (Nt, Nc*(Nc+1)//2)


# -------------------------- pure-JAX reference --------------------------

def _reference_forward(x, sqrt_cov, epsilon, noise_key):
    """Mirrors the PyTorch module op-by-op; used only for the correctness check."""
    Nt, Nc, _ = x.shape
    eye = jnp.eye(Nc, dtype=jnp.float32)
    Cref = sqrt_cov @ sqrt_cov.T + epsilon * eye
    w, V = jnp.linalg.eigh(Cref)
    Cm12 = (V * (1.0 / jnp.sqrt(w))) @ V.T
    noise = epsilon * jax.random.normal(noise_key, (Nc,), dtype=jnp.float32)
    m = Cm12[None] @ x @ Cm12[None] + jnp.diag(noise)[None]
    wm, Vm = jnp.linalg.eigh(m)
    mlog = jnp.einsum('tik,tk,tjk->tij', Vm, jnp.log(wm), Vm)
    coeffs = np.sqrt(2.0) * np.triu(np.ones((Nc, Nc)), 1) + np.eye(Nc)
    mlog = mlog * jnp.asarray(coeffs, dtype=jnp.float32)
    rows, cols = np.triu_indices(Nc)
    return mlog[:, rows, cols]


# ------------------------------ demo ------------------------------

if __name__ == "__main__":
    Nt, Nc = 20, 16          # padded to 32 -> 2 'parallel' grid steps of TB=16
    epsilon = 1e-6

    key = jax.random.PRNGKey(0)
    k_cref, k_x, k_noise = jax.random.split(key, 3)

    # Deterministic SPD reference covariance -> parameter init sqrt_cov = sym_sqrtm(Cref)
    B = jax.random.normal(k_cref, (Nc, 2 * Nc), dtype=jnp.float32)
    Cref0 = B @ B.T / (2 * Nc) + 0.1 * jnp.eye(Nc, dtype=jnp.float32)
    sqrt_cov = sym_sqrtm(Cref0).astype(jnp.float32)   # nn.Parameter equivalent

    # Deterministic SPD input covariances, shape (Nt, Nc, Nc)
    A = jax.random.normal(k_x, (Nt, Nc, 64), dtype=jnp.float32)
    x = jnp.einsum("nct,ndt->ncd", A, A) / 64.0 + 0.1 * jnp.eye(Nc, dtype=jnp.float32)

    fwd = jax.jit(tangent_space_forward)
    T = jax.block_until_ready(fwd(x, sqrt_cov, epsilon, k_noise))

    expected_shape = (Nt, Nc * (Nc + 1) // 2)
    assert T.shape == expected_shape, T.shape
    assert bool(jnp.all(jnp.isfinite(T)))

    # Correctness check against the pure-JAX reference (same key -> same jitter draw).
    T_ref = _reference_forward(x, sqrt_cov, epsilon, k_noise)
    assert bool(jnp.allclose(T, T_ref, rtol=2e-3, atol=2e-3)), (
        float(jnp.max(jnp.abs(T - T_ref))))

    print("KERNEL_OK")
</pallas_src>

<mosaic_0001>
module attributes {stable_mosaic.version = 11 : i64} {
  func.func @_sandwich_kernel(%arg0: i32, %arg1: memref<16x256xf32, #tpu.memory_space<vmem>>, %arg2: memref<256x256xf32, #tpu.memory_space<vmem>>, %arg3: memref<1x256xf32, #tpu.memory_space<vmem>>, %arg4: memref<16x256xf32, #tpu.memory_space<vmem>>) attributes {dimension_semantics = [#tpu.dimension_semantics<parallel>], iteration_bounds = array<i64: 2>, scalar_prefetch = 0 : i64, scratch_operands = 0 : i64, tpu.core_type = #tpu.core_type<tc>, window_params = [{transform_indices = @transform_0, window_bounds = array<i64: 16, 256>}, {pipeline_mode = #tpu.pipeline_mode<synchronous>, transform_indices = @transform_1, window_bounds = array<i64: 256, 256>}, {pipeline_mode = #tpu.pipeline_mode<synchronous>, transform_indices = @transform_2, window_bounds = array<i64: 1, 256>}, {transform_indices = @transform_3, window_bounds = array<i64: 16, 256>}]} {
    %c0 = arith.constant 0 : index
    %c0_0 = arith.constant 0 : index
    %0 = vector.load %arg1[%c0, %c0_0] : memref<16x256xf32, #tpu.memory_space<vmem>>, vector<16x256xf32>
    %c0_1 = arith.constant 0 : index
    %c0_2 = arith.constant 0 : index
    %1 = vector.load %arg2[%c0_1, %c0_2] : memref<256x256xf32, #tpu.memory_space<vmem>>, vector<256x256xf32>
    %cst = arith.constant dense<0.000000e+00> : vector<16x256xf32>
    %2 = tpu.matmul %0, %1, %cst {dimension_numbers = #tpu.dot_dimension_numbers<[1], [0], [0], [1], [0, 0, 1, 1], [], []>} : vector<16x256xf32>, vector<256x256xf32>, vector<16x256xf32> -> vector<16x256xf32>
    %c0_3 = arith.constant 0 : index
    %c0_4 = arith.constant 0 : index
    %3 = vector.load %arg3[%c0_3, %c0_4] : memref<1x256xf32, #tpu.memory_space<vmem>>, vector<1x256xf32>
    %4 = vector.broadcast %3 : vector<1x256xf32> to vector<16x256xf32>
    %5 = arith.addf %2, %4 : vector<16x256xf32>
    %c0_5 = arith.constant 0 : index
    %c0_6 = arith.constant 0 : index
    %6 = vector.load %arg4[%c0_5, %c0_6] : memref<16x256xf32, #tpu.memory_space<vmem>>, vector<16x256xf32>
    tpu.vector_store %arg4[%c0_5, %c0_6], %5 {strides = array<i32>} : memref<16x256xf32, #tpu.memory_space<vmem>>, vector<16x256xf32>,
    return
  }
  func.func @transform_0(%arg0: i32) -> (i32, i32) {
    %c0_i32 = arith.constant 0 : i32
    %c0_i32_0 = arith.constant 0 : i32
    return %arg0, %c0_i32 : i32, i32
  }
  func.func @transform_1(%arg0: i32) -> (i32, i32) {
    %c0_i32 = arith.constant 0 : i32
    %c0_i32_0 = arith.constant 0 : i32
    %c0_i32_1 = arith.constant 0 : i32
    return %c0_i32, %c0_i32_0 : i32, i32
  }
  func.func @transform_2(%arg0: i32) -> (i32, i32) {
    %c0_i32 = arith.constant 0 : i32
    %c0_i32_0 = arith.constant 0 : i32
    %c0_i32_1 = arith.constant 0 : i32
    return %c0_i32, %c0_i32_0 : i32, i32
  }
  func.func @transform_3(%arg0: i32) -> (i32, i32) {
    %c0_i32 = arith.constant 0 : i32
    %c0_i32_0 = arith.constant 0 : i32
    return %arg0, %c0_i32 : i32, i32
  }
}

module attributes {stable_mosaic.version = 11 : i64} {
  func.func @_logm_tri_kernel(%arg0: i32, %arg1: memref<16x256xf32, #tpu.memory_space<vmem>>, %arg2: memref<16x16xf32, #tpu.memory_space<vmem>>, %arg3: memref<16x256xf32, #tpu.memory_space<vmem>>, %arg4: memref<16x256xf32, #tpu.memory_space<vmem>>, %arg5: memref<256x256xf32, #tpu.memory_space<vmem>>, %arg6: memref<16x256xf32, #tpu.memory_space<vmem>>) attributes {dimension_semantics = [#tpu.dimension_semantics<parallel>], iteration_bounds = array<i64: 2>, scalar_prefetch = 0 : i64, scratch_operands = 0 : i64, tpu.core_type = #tpu.core_type<tc>, window_params = [{transform_indices = @transform_0, window_bounds = array<i64: 16, 256>}, {transform_indices = @transform_1, window_bounds = array<i64: 16, 16>}, {pipeline_mode = #tpu.pipeline_mode<synchronous>, transform_indices = @transform_2, window_bounds = array<i64: 16, 256>}, {pipeline_mode = #tpu.pipeline_mode<synchronous>, transform_indices = @transform_3, window_bounds = array<i64: 16, 256>}, {pipeline_mode = #tpu.pipeline_mode<synchronous>, transform_indices = @transform_4, window_bounds = array<i64: 256, 256>}, {transform_indices = @transform_5, window_bounds = array<i64: 16, 256>}]} {
    %c0 = arith.constant 0 : index
    %c0_0 = arith.constant 0 : index
    %0 = vector.load %arg1[%c0, %c0_0] : memref<16x256xf32, #tpu.memory_space<vmem>>, vector<16x256xf32>
    %c0_1 = arith.constant 0 : index
    %c0_2 = arith.constant 0 : index
    %1 = vector.load %arg2[%c0_1, %c0_2] : memref<16x16xf32, #tpu.memory_space<vmem>>, vector<16x16xf32>
    %c0_3 = arith.constant 0 : index
    %c0_4 = arith.constant 0 : index
    %2 = vector.load %arg3[%c0_3, %c0_4] : memref<16x256xf32, #tpu.memory_space<vmem>>, vector<16x256xf32>
    %c0_5 = arith.constant 0 : index
    %c0_6 = arith.constant 0 : index
    %3 = vector.load %arg4[%c0_5, %c0_6] : memref<16x256xf32, #tpu.memory_space<vmem>>, vector<16x256xf32>
    %cst = arith.constant 0.000000e+00 : f32
    %4 = vector.broadcast %cst : f32 to vector<16x256xf32>
    %5 = vector.extract_strided_slice %0 {offsets = [0, 0], sizes = [16, 16], strides = [1, 1]} : vector<16x256xf32> to vector<16x16xf32>
    %6 = vector.extract_strided_slice %1 {offsets = [0, 0], sizes = [16, 1], strides = [1, 1]} : vector<16x16xf32> to vector<16x1xf32>
    %7 = vector.broadcast %6 : vector<16x1xf32> to vector<16x16xf32>
    %8 = arith.mulf %5, %7 : vector<16x16xf32>
    %cst_7 = arith.constant dense<0.000000e+00> : vector<16x256xf32>
    %9 = tpu.matmul %8, %2, %cst_7 {dimension_numbers = #tpu.dot_dimension_numbers<[1], [0], [0], [1], [0, 0, 1, 1], [], []>} : vector<16x16xf32>, vector<16x256xf32>, vector<16x256xf32> -> vector<16x256xf32>
    %cst_8 = arith.constant dense<0.000000e+00> : vector<16x256xf32>
    %10 = tpu.matmul %5, %3, %cst_8 {dimension_numbers = #tpu.dot_dimension_numbers<[1], [0], [0], [1], [0, 0, 1, 1], [], []>} : vector<16x16xf32>, vector<16x256xf32>, vector<16x256xf32> -> vector<16x256xf32>
    %11 = arith.mulf %9, %10 : vector<16x256xf32>
    %12 = arith.addf %4, %11 : vector<16x256xf32>
    %13 = vector.extract_strided_slice %0 {offsets = [0, 16], sizes = [16, 16], strides = [1, 1]} : vector<16x256xf32> to vector<16x16xf32>
    %14 = vector.extract_strided_slice %1 {offsets = [0, 1], sizes = [16, 1], strides = [1, 1]} : vector<16x16xf32> to vector<16x1xf32>
    %15 = vector.broadcast %14 : vector<16x1xf32> to vector<16x16xf32>
    %16 = arith.mulf %13, %15 : vector<16x16xf32>
    %cst_9 = arith.constant dense<0.000000e+00> : vector<16x256xf32>
    %17 = tpu.matmul %16, %2, %cst_9 {dimension_numbers = #tpu.dot_dimension_numbers<[1], [0], [0], [1], [0, 0, 1, 1], [], []>} : vector<16x16xf32>, vector<16x256xf32>, vector<16x256xf32> -> vector<16x256xf32>
    %cst_10 = arith.constant dense<0.000000e+00> : vector<16x256xf32>
    %18 = tpu.matmul %13, %3, %cst_10 {dimension_numbers = #tpu.dot_dimension_numbers<[1], [0], [0], [1], [0, 0, 1, 1], [], []>} : vector<16x16xf32>, vector<16x256xf32>, vector<16x256xf32> -> vector<16x256xf32>
    %19 = arith.mulf %17, %18 : vector<16x256xf32>
    %20 = arith.addf %12, %19 : vector<16x256xf32>
    %21 = vector.extract_strided_slice %0 {offsets = [0, 32], sizes = [16, 16], strides = [1, 1]} : vector<16x256xf32> to vector<16x16xf32>
    %22 = vector.extract_strided_slice %1 {offsets = [0, 2], sizes = [16, 1], strides = [1, 1]} : vector<16x16xf32> to vector<16x1xf32>
    %23 = vector.broadcast %22 : vector<16x1xf32> to vector<16x16xf32>
    %24 = arith.mulf %21, %23 : vector<16x16xf32>
    %cst_11 = arith.constant dense<0.000000e+00> : vector<16x256xf32>
    %25 = tpu.matmul %24, %2, %cst_11 {dimension_numbers = #tpu.dot_dimension_numbers<[1], [0], [0], [1], [0, 0, 1, 1], [], []>} : vector<16x16xf32>, vector<16x256xf32>, vector<16x256xf32> -> vector<16x256xf32>
    %cst_12 = arith.constant dense<0.000000e+00> : vector<16x256xf32>
    %26 = tpu.matmul %21, %3, %cst_12 {dimension_numbers = #tpu.dot_dimension_numbers<[1], [0], [0], [1], [0, 0, 1, 1], [], []>} : vector<16x16xf32>, vector<16x256xf32>, vector<16x256xf32> -> vector<16x256xf32>
    %27 = arith.mulf %25, %26 : vector<16x256xf32>
    %28 = arith.addf %20, %27 : vector<16x256xf32>
    %29 = vector.extract_strided_slice %0 {offsets = [0, 48], sizes = [16, 16], strides = [1, 1]} : vector<16x256xf32> to vector<16x16xf32>
    %30 = vector.extract_strided_slice %1 {offsets = [0, 3], sizes = [16, 1], strides = [1, 1]} : vector<16x16xf32> to vector<16x1xf32>
    %31 = vector.broadcast %30 : vector<16x1xf32> to vector<16x16xf32>
    %32 = arith.mulf %29, %31 : vector<16x16xf32>
    %cst_13 = arith.constant dense<0.000000e+00> : vector<16x256xf32>
    %33 = tpu.matmul %32, %2, %cst_13 {dimension_numbers = #tpu.dot_dimension_numbers<[1], [0], [0], [1], [0, 0, 1, 1], [], []>} : vector<16x16xf32>, vector<16x256xf32>, vector<16x256xf32> -> vector<16x256xf32>
    %cst_14 = arith.constant dense<0.000000e+00> : vector<16x256xf32>
    %34 = tpu.matmul %29, %3, %cst_14 {dimension_numbers = #tpu.dot_dimension_numbers<[1], [0], [0], [1], [0, 0, 1, 1], [], []>} : vector<16x16xf32>, vector<16x256xf32>, vector<16x256xf32> -> vector<16x256xf32>
    %35 = arith.mulf %33, %34 : vector<16x256xf32>
    %36 = arith.addf %28, %35 : vector<16x256xf32>
    %37 = vector.extract_strided_slice %0 {offsets = [0, 64], sizes = [16, 16], strides = [1, 1]} : vector<16x256xf32> to vector<16x16xf32>
    %38 = vector.extract_strided_slice %1 {offsets = [0, 4], sizes = [16, 1], strides = [1, 1]} : vector<16x16xf32> to vector<16x1xf32>
    %39 = vector.broadcast %38 : vector<16x1xf32> to vector<16x16xf32>
    %40 = arith.mulf %37, %39 : vector<16x16xf32>
    %cst_15 = arith.constant dense<0.000000e+00> : vector<16x256xf32>
    %41 = tpu.matmul %40, %2, %cst_15 {dimension_numbers = #tpu.dot_dimension_numbers<[1], [0], [0], [1], [0, 0, 1, 1], [], []>} : vector<16x16xf32>, vector<16x256xf32>, vector<16x256xf32> -> vector<16x256xf32>
    %cst_16 = arith.constant dense<0.000000e+00> : vector<16x256xf32>
    %42 = tpu.matmul %37, %3, %cst_16 {dimension_numbers = #tpu.dot_dimension_numbers<[1], [0], [0], [1], [0, 0, 1, 1], [], []>} : vector<16x16xf32>, vector<16x256xf32>, vector<16x256xf32> -> vector<16x256xf32>
    %43 = arith.mulf %41, %42 : vector<16x256xf32>
    %44 = arith.addf %36, %43 : vector<16x256xf32>
    %45 = vector.extract_strided_slice %0 {offsets = [0, 80], sizes = [16, 16], strides = [1, 1]} : vector<16x256xf32> to vector<16x16xf32>
    %46 = vector.extract_strided_slice %1 {offsets = [0, 5], sizes = [16, 1], strides = [1, 1]} : vector<16x16xf32> to vector<16x1xf32>
    %47 = vector.broadcast %46 : vector<16x1xf32> to vector<16x16xf32>
    %48 = arith.mulf %45, %47 : vector<16x16xf32>
    %cst_17 = arith.constant dense<0.000000e+00> : vector<16x256xf32>
    %49 = tpu.matmul %48, %2, %cst_17 {dimension_numbers = #tpu.dot_dimension_numbers<[1], [0], [0], [1], [0, 0, 1, 1], [], []>} : vector<16x16xf32>, vector<16x256xf32>, vector<16x256xf32> -> vector<16x256xf32>
    %cst_18 = arith.constant dense<0.000000e+00> : vector<16x256xf32>
    %50 = tpu.matmul %45, %3, %cst_18 {dimension_numbers = #tpu.dot_dimension_numbers<[1], [0], [0], [1], [0, 0, 1, 1], [], []>} : vector<16x16xf32>, vector<16x256xf32>, vector<16x256xf32> -> vector<16x256xf32>
    %51 = arith.mulf %49, %50 : vector<16x256xf32>
    %52 = arith.addf %44, %51 : vector<16x256xf32>
    %53 = vector.extract_strided_slice %0 {offsets = [0, 96], sizes = [16, 16], strides = [1, 1]} : vector<16x256xf32> to vector<16x16xf32>
    %54 = vector.extract_strided_slice %1 {offsets = [0, 6], sizes = [16, 1], strides = [1, 1]} : vector<16x16xf32> to vector<16x1xf32>
    %55 = vector.broadcast %54 : vector<16x1xf32> to vector<16x16xf32>
    %56 = arith.mulf %53, %55 : vector<16x16xf32>
    %cst_19 = arith.constant dense<0.000000e+00> : vector<16x256xf32>
    %57 = tpu.matmul %56, %2, %cst_19 {dimension_numbers = #tpu.dot_dimension_numbers<[1], [0], [0], [1], [0, 0, 1, 1], [], []>} : vector<16x16xf32>, vector<16x256xf32>, vector<16x256xf32> -> vector<16x256xf32>
    %cst_20 = arith.constant dense<0.000000e+00> : vector<16x256xf32>
    %58 = tpu.matmul %53, %3, %cst_20 {dimension_numbers = #tpu.dot_dimension_numbers<[1], [0], [0], [1], [0, 0, 1, 1], [], []>} : vector<16x16xf32>, vector<16x256xf32>, vector<16x256xf32> -> vector<16x256xf32>
    %59 = arith.mulf %57, %58 : vector<16x256xf32>
    %60 = arith.addf %52, %59 : vector<16x256xf32>
    %61 = vector.extract_strided_slice %0 {offsets = [0, 112], sizes = [16, 16], strides = [1, 1]} : vector<16x256xf32> to vector<16x16xf32>
    %62 = vector.extract_strided_slice %1 {offsets = [0, 7], sizes = [16, 1], strides = [1, 1]} : vector<16x16xf32> to vector<16x1xf32>
    %63 = vector.broadcast %62 : vector<16x1xf32> to vector<16x16xf32>
    %64 = arith.mulf %61, %63 : vector<16x16xf32>
    %cst_21 = arith.constant dense<0.000000e+00> : vector<16x256xf32>
    %65 = tpu.matmul %64, %2, %cst_21 {dimension_numbers = #tpu.dot_dimension_numbers<[1], [0], [0], [1], [0, 0, 1, 1], [], []>} : vector<16x16xf32>, vector<16x256xf32>, vector<16x256xf32> -> vector<16x256xf32>
    %cst_22 = arith.constant dense<0.000000e+00> : vector<16x256xf32>
    %66 = tpu.matmul %61, %3, %cst_22 {dimension_numbers = #tpu.dot_dimension_numbers<[1], [0], [0], [1], [0, 0, 1, 1], [], []>} : vector<16x16xf32>, vector<16x256xf32>, vector<16x256xf32> -> vector<16x256xf32>
    %67 = arith.mulf %65, %66 : vector<16x256xf32>
    %68 = arith.addf %60, %67 : vector<16x256xf32>
    %69 = vector.extract_strided_slice %0 {offsets = [0, 128], sizes = [16, 16], strides = [1, 1]} : vector<16x256xf32> to vector<16x16xf32>
    %70 = vector.extract_strided_slice %1 {offsets = [0, 8], sizes = [16, 1], strides = [1, 1]} : vector<16x16xf32> to vector<16x1xf32>
    %71 = vector.broadcast %70 : vector<16x1xf32> to vector<16x16xf32>
    %72 = arith.mulf %69, %71 : vector<16x16xf32>
    %cst_23 = arith.constant dense<0.000000e+00> : vector<16x256xf32>
    %73 = tpu.matmul %72, %2, %cst_23 {dimension_numbers = #tpu.dot_dimension_numbers<[1], [0], [0], [1], [0, 0, 1, 1], [], []>} : vector<16x16xf32>, vector<16x256xf32>, vector<16x256xf32> -> vector<16x256xf32>
    %cst_24 = arith.constant dense<0.000000e+00> : vector<16x256xf32>
    %74 = tpu.matmul %69, %3, %cst_24 {dimension_numbers = #tpu.dot_dimension_numbers<[1], [0], [0], [1], [0, 0, 1, 1], [], []>} : vector<16x16xf32>, vector<16x256xf32>, vector<16x256xf32> -> vector<16x256xf32>
    %75 = arith.mulf %73, %74 : vector<16x256xf32>
    %76 = arith.addf %68, %75 : vector<16x256xf32>
    %77 = vector.extract_strided_slice %0 {offsets = [0, 144], sizes = [16, 16], strides = [1, 1]} : vector<16x256xf32> to vector<16x16xf32>
    %78 = vector.extract_strided_slice %1 {offsets = [0, 9], sizes = [16, 1], strides = [1, 1]} : vector<16x16xf32> to vector<16x1xf32>
    %79 = vector.broadcast %78 : vector<16x1xf32> to vector<16x16xf32>
    %80 = arith.mulf %77, %79 : vector<16x16xf32>
    %cst_25 = arith.constant dense<0.000000e+00> : vector<16x256xf32>
    %81 = tpu.matmul %80, %2, %cst_25 {dimension_numbers = #tpu.dot_dimension_numbers<[1], [0], [0], [1], [0, 0, 1, 1], [], []>} : vector<16x16xf32>, vector<16x256xf32>, vector<16x256xf32> -> vector<16x256xf32>
    %cst_26 = arith.constant dense<0.000000e+00> : vector<16x256xf32>
    %82 = tpu.matmul %77, %3, %cst_26 {dimension_numbers = #tpu.dot_dimension_numbers<[1], [0], [0], [1], [0, 0, 1, 1], [], []>} : vector<16x16xf32>, vector<16x256xf32>, vector<16x256xf32> -> vector<16x256xf32>
    %83 = arith.mulf %81, %82 : vector<16x256xf32>
    %84 = arith.addf %76, %83 : vector<16x256xf32>
    %85 = vector.extract_strided_slice %0 {offsets = [0, 160], sizes = [16, 16], strides = [1, 1]} : vector<16x256xf32> to vector<16x16xf32>
    %86 = vector.extract_strided_slice %1 {offsets = [0, 10], sizes = [16, 1], strides = [1, 1]} : vector<16x16xf32> to vector<16x1xf32>
    %87 = vector.broadcast %86 : vector<16x1xf32> to vector<16x16xf32>
    %88 = arith.mulf %85, %87 : vector<16x16xf32>
    %cst_27 = arith.constant dense<0.000000e+00> : vector<16x256xf32>
    %89 = tpu.matmul %88, %2, %cst_27 {dimension_numbers = #tpu.dot_dimension_numbers<[1], [0], [0], [1], [0, 0, 1, 1], [], []>} : vector<16x16xf32>, vector<16x256xf32>, vector<16x256xf32> -> vector<16x256xf32>
    %cst_28 = arith.constant dense<0.000000e+00> : vector<16x256xf32>
    %90 = tpu.matmul %85, %3, %cst_28 {dimension_numbers = #tpu.dot_dimension_numbers<[1], [0], [0], [1], [0, 0, 1, 1], [], []>} : vector<16x16xf32>, vector<16x256xf32>, vector<16x256xf32> -> vector<16x256xf32>
    %91 = arith.mulf %89, %90 : vector<16x256xf32>
    %92 = arith.addf %84, %91 : vector<16x256xf32>
    %93 = vector.extract_strided_slice %0 {offsets = [0, 176], sizes = [16, 16], strides = [1, 1]} : vector<16x256xf32> to vector<16x16xf32>
    %94 = vector.extract_strided_slice %1 {offsets = [0, 11], sizes = [16, 1], strides = [1, 1]} : vector<16x16xf32> to vector<16x1xf32>
    %95 = vector.broadcast %94 : vector<16x1xf32> to vector<16x16xf32>
    %96 = arith.mulf %93, %95 : vector<16x16xf32>
    %cst_29 = arith.constant dense<0.000000e+00> : vector<16x256xf32>
    %97 = tpu.matmul %96, %2, %cst_29 {dimension_numbers = #tpu.dot_dimension_numbers<[1], [0], [0], [1], [0, 0, 1, 1], [], []>} : vector<16x16xf32>, vector<16x256xf32>, vector<16x256xf32> -> vector<16x256xf32>
    %cst_30 = arith.constant dense<0.000000e+00> : vector<16x256xf32>
    %98 = tpu.matmul %93, %3, %cst_30 {dimension_numbers = #tpu.dot_dimension_numbers<[1], [0], [0], [1], [0, 0, 1, 1], [], []>} : vector<16x16xf32>, vector<16x256xf32>, vector<16x256xf32> -> vector<16x256xf32>
    %99 = arith.mulf %97, %98 : vector<16x256xf32>
    %100 = arith.addf %92, %99 : vector<16x256xf32>
    %101 = vector.extract_strided_slice %0 {offsets = [0, 192], sizes = [16, 16], strides = [1, 1]} : vector<16x256xf32> to vector<16x16xf32>
    %102 = vector.extract_strided_slice %1 {offsets = [0, 12], sizes = [16, 1], strides = [1, 1]} : vector<16x16xf32> to vector<16x1xf32>
    %103 = vector.broadcast %102 : vector<16x1xf32> to vector<16x16xf32>
    %104 = arith.mulf %101, %103 : vector<16x16xf32>
    %cst_31 = arith.constant dense<0.000000e+00> : vector<16x256xf32>
    %105 = tpu.matmul %104, %2, %cst_31 {dimension_numbers = #tpu.dot_dimension_numbers<[1], [0], [0], [1], [0, 0, 1, 1], [], []>} : vector<16x16xf32>, vector<16x256xf32>, vector<16x256xf32> -> vector<16x256xf32>
    %cst_32 = arith.constant dense<0.000000e+00> : vector<16x256xf32>
    %106 = tpu.matmul %101, %3, %cst_32 {dimension_numbers = #tpu.dot_dimension_numbers<[1], [0], [0], [1], [0, 0, 1, 1], [], []>} : vector<16x16xf32>, vector<16x256xf32>, vector<16x256xf32> -> vector<16x256xf32>
    %107 = arith.mulf %105, %106 : vector<16x256xf32>
    %108 = arith.addf %100, %107 : vector<16x256xf32>
    %109 = vector.extract_strided_slice %0 {offsets = [0, 208], sizes = [16, 16], strides = [1, 1]} : vector<16x256xf32> to vector<16x16xf32>
    %110 = vector.extract_strided_slice %1 {offsets = [0, 13], sizes = [16, 1], strides = [1, 1]} : vector<16x16xf32> to vector<16x1xf32>
    %111 = vector.broadcast %110 : vector<16x1xf32> to vector<16x16xf32>
    %112 = arith.mulf %109, %111 : vector<16x16xf32>
    %cst_33 = arith.constant dense<0.000000e+00> : vector<16x256xf32>
    %113 = tpu.matmul %112, %2, %cst_33 {dimension_numbers = #tpu.dot_dimension_numbers<[1], [0], [0], [1], [0, 0, 1, 1], [], []>} : vector<16x16xf32>, vector<16x256xf32>, vector<16x256xf32> -> vector<16x256xf32>
    %cst_34 = arith.constant dense<0.000000e+00> : vector<16x256xf32>
    %114 = tpu.matmul %109, %3, %cst_34 {dimension_numbers = #tpu.dot_dimension_numbers<[1], [0], [0], [1], [0, 0, 1, 1], [], []>} : vector<16x16xf32>, vector<16x256xf32>, vector<16x256xf32> -> vector<16x256xf32>
    %115 = arith.mulf %113, %114 : vector<16x256xf32>
    %116 = arith.addf %108, %115 : vector<16x256xf32>
    %117 = vector.extract_strided_slice %0 {offsets = [0, 224], sizes = [16, 16], strides = [1, 1]} : vector<16x256xf32> to vector<16x16xf32>
    %118 = vector.extract_strided_slice %1 {offsets = [0, 14], sizes = [16, 1], strides = [1, 1]} : vector<16x16xf32> to vector<16x1xf32>
    %119 = vector.broadcast %118 : vector<16x1xf32> to vector<16x16xf32>
    %120 = arith.mulf %117, %119 : vector<16x16xf32>
    %cst_35 = arith.constant dense<0.000000e+00> : vector<16x256xf32>
    %121 = tpu.matmul %120, %2, %cst_35 {dimension_numbers = #tpu.dot_dimension_numbers<[1], [0], [0], [1], [0, 0, 1, 1], [], []>} : vector<16x16xf32>, vector<16x256xf32>, vector<16x256xf32> -> vector<16x256xf32>
    %cst_36 = arith.constant dense<0.000000e+00> : vector<16x256xf32>
    %122 = tpu.matmul %117, %3, %cst_36 {dimension_numbers = #tpu.dot_dimension_numbers<[1], [0], [0], [1], [0, 0, 1, 1], [], []>} : vector<16x16xf32>, vector<16x256xf32>, vector<16x256xf32> -> vector<16x256xf32>
    %123 = arith.mulf %121, %122 : vector<16x256xf32>
    %124 = arith.addf %116, %123 : vector<16x256xf32>
    %125 = vector.extract_strided_slice %0 {offsets = [0, 240], sizes = [16, 16], strides = [1, 1]} : vector<16x256xf32> to vector<16x16xf32>
    %126 = vector.extract_strided_slice %1 {offsets = [0, 15], sizes = [16, 1], strides = [1, 1]} : vector<16x16xf32> to vector<16x1xf32>
    %127 = vector.broadcast %126 : vector<16x1xf32> to vector<16x16xf32>
    %128 = arith.mulf %125, %127 : vector<16x16xf32>
    %cst_37 = arith.constant dense<0.000000e+00> : vector<16x256xf32>
    %129 = tpu.matmul %128, %2, %cst_37 {dimension_numbers = #tpu.dot_dimension_numbers<[1], [0], [0], [1], [0, 0, 1, 1], [], []>} : vector<16x16xf32>, vector<16x256xf32>, vector<16x256xf32> -> vector<16x256xf32>
    %cst_38 = arith.constant dense<0.000000e+00> : vector<16x256xf32>
    %130 = tpu.matmul %125, %3, %cst_38 {dimension_numbers = #tpu.dot_dimension_numbers<[1], [0], [0], [1], [0, 0, 1, 1], [], []>} : vector<16x16xf32>, vector<16x256xf32>, vector<16x256xf32> -> vector<16x256xf32>
    %131 = arith.mulf %129, %130 : vector<16x256xf32>
    %132 = arith.addf %124, %131 : vector<16x256xf32>
    %c0_39 = arith.constant 0 : index
    %c0_40 = arith.constant 0 : index
    %133 = vector.load %arg5[%c0_39, %c0_40] : memref<256x256xf32, #tpu.memory_space<vmem>>, vector<256x256xf32>
    %cst_41 = arith.constant dense<0.000000e+00> : vector<16x256xf32>
    %134 = tpu.matmul %132, %133, %cst_41 {dimension_numbers = #tpu.dot_dimension_numbers<[1], [0], [0], [1], [0, 0, 1, 1], [], []>} : vector<16x256xf32>, vector<256x256xf32>, vector<16x256xf32> -> vector<16x256xf32>
    %c0_42 = arith.constant 0 : index
    %c0_43 = arith.constant 0 : index
    %135 = vector.load %arg6[%c0_42, %c0_43] : memref<16x256xf32, #tpu.memory_space<vmem>>, vector<16x256xf32>
    tpu.vector_store %arg6[%c0_42, %c0_43], %134 {strides = array<i32>} : memref<16x256xf32, #tpu.memory_space<vmem>>, vector<16x256xf32>,
    return
  }
  func.func @transform_0(%arg0: i32) -> (i32, i32) {
    %c0_i32 = arith.constant 0 : i32
    %c0_i32_0 = arith.constant 0 : i32
    return %arg0, %c0_i32 : i32, i32
  }
  func.func @transform_1(%arg0: i32) -> (i32, i32) {
    %c0_i32 = arith.constant 0 : i32
    %c0_i32_0 = arith.constant 0 : i32
    return %arg0, %c0_i32 : i32, i32
  }
  func.func @transform_2(%arg0: i32) -> (i32, i32) {
    %c0_i32 = arith.constant 0 : i32
    %c0_i32_0 = arith.constant 0 : i32
    %c0_i32_1 = arith.constant 0 : i32
    return %c0_i32, %c0_i32_0 : i32, i32
  }
  func.func @transform_3(%arg0: i32) -> (i32, i32) {
    %c0_i32 = arith.constant 0 : i32
    %c0_i32_0 = arith.constant 0 : i32
    %c0_i32_1 = arith.constant 0 : i32
    return %c0_i32, %c0_i32_0 : i32, i32
  }
  func.func @transform_4(%arg0: i32) -> (i32, i32) {
    %c0_i32 = arith.constant 0 : i32
    %c0_i32_0 = arith.constant 0 : i32
    %c0_i32_1 = arith.constant 0 : i32
    return %c0_i32, %c0_i32_0 : i32, i32
  }
  func.func @transform_5(%arg0: i32) -> (i32, i32) {
    %c0_i32 = arith.constant 0 : i32
    %c0_i32_0 = arith.constant 0 : i32
    return %arg0, %c0_i32 : i32, i32
  }
}

</mosaic_0001>

<llo_original>
// kernel: custom-call.4
$region0: #{custom-call.4}
  %s0 = inlined_call_operand.vmem [shape: f32[8,8], index: 0, kind: input, shape index: {}]
  %s1 = inlined_call_operand.vmem [shape: f32[8,8], index: 1, kind: input, shape index: {}]
  %s2 = inlined_call_operand.vmem [shape: f32[8,8], index: 2, kind: input, shape index: {}]
  %s3 = inlined_call_operand.vmem [shape: f32[8,8], index: 3, kind: input, shape index: {}]
  %s4 = inlined_call_operand.vmem [shape: f32[8], index: 4, kind: output, shape index: {0}]
  %s5 = inlined_call_operand.vmem [shape: f32[8], index: 5, kind: output, shape index: {1}]
  %s6 = inlined_call_operand.vmem [shape: f32[8,8], index: 6, kind: output, shape index: {2}]
  %s7 = inlined_call_operand.vmem [shape: f32[8,8], index: 7, kind: output, shape index: {3}]
  %s8 = inlined_call_operand.vmem [shape: f32[8,8], index: 8, kind: output, shape index: {4}]
  %s9 = inlined_call_operand.vmem [shape: f32[8,8], index: 9, kind: output, shape index: {5}]
  %10 = xla_tuple %s4, %s5, %s6, %s7, %s8, %s9
  $region1: #{custom-call.4} parent=0
    #allocation0 [shape = 'u8[4096]{0}', space=vmem, size = 0x1000, scoped, tag = 'operand span for operand 0']
    #allocation1 [shape = 'u8[4096]{0}', space=vmem, size = 0x1000, scoped, tag = 'operand span for operand 1']
    #allocation2 [shape = 'u8[4096]{0}', space=vmem, size = 0x1000, scoped, tag = 'operand span for operand 2']
    #allocation3 [shape = 'u8[4096]{0}', space=vmem, size = 0x1000, scoped, tag = 'operand span for operand 3']
    #allocation4 [shape = 'u8[4096]{0}', space=vmem, size = 0x1000, scoped, tag = 'operand span for operand 4']
    #allocation5 [shape = 'u8[512]{0}', space=vmem, size = 0x400, scoped, tag = 'packed  for operand 4']
    #allocation6 [shape = 'u8[4096]{0}', space=vmem, size = 0x1000, scoped, tag = 'operand span for operand 5']
    #allocation7 [shape = 'u8[512]{0}', space=vmem, size = 0x400, scoped, tag = 'packed  for operand 5']
    #allocation8 [shape = 'u8[4096]{0}', space=vmem, size = 0x1000, scoped, tag = 'operand span for operand 6']
    #allocation9 [shape = 'u8[4096]{0}', space=vmem, size = 0x1000, scoped, tag = 'operand span for operand 7']
    #allocation10 [shape = 'u8[4096]{0}', space=vmem, size = 0x1000, scoped, tag = 'operand span for operand 8']
    #allocation11 [shape = 'u8[4096]{0}', space=vmem, size = 0x1000, scoped, tag = 'operand span for operand 9']
    #allocation12 [shape = 'f32[8,8]{1,0}', space=vmem, size = 0x1000, scoped, tag = 'a top-left matrix']
    #allocation13 [shape = 'f32[8,8]{1,0}', space=vmem, size = 0x1000, scoped, tag = 'a top-right matrix']
    #allocation14 [shape = 'f32[8,8]{1,0}', space=vmem, size = 0x1000, scoped, tag = 'a bottom-left matrix']
    #allocation15 [shape = 'f32[8,8]{1,0}', space=vmem, size = 0x1000, scoped, tag = 'a bottom-right matrix']
    %p12 = scmp.gt.s32.totalorder 8, 0
    // Predicated region
    $region2: #{custom-call.4} parent=1 // pred_check
      %p13 = pneg %p12
    $region3: #{custom-call.4} parent=1 // pred_check_branch
      %15 = sbr.rel (%p13) target = $region5
    $region4: #{custom-call.4} parent=1 // pred_region
      %s16 = sshra.s32 8, 3
      %p17 = scmp.gt.s32.totalorder %s16, 0
      // Predicated region
      $region6: #{custom-call.4} parent=4 // pred_check
        %p18 = pneg %p17
      $region7: #{custom-call.4} parent=4 // pred_check_branch
        %20 = sbr.rel (%p18) target = $region9
      $region8: #{custom-call.4} parent=4 // pred_region
        %s21 = ssub.s32 %s16, 1
        %s22 = smul.u32 %s21, 128
        %s23 = sshra.s32 %s22, 4
        %s24 = scalar_lea.vmem %s0, %s23
        %v25 = vld [vmem:[%s0] sm:$0xff]
        // While loop
        $region10: #{custom-call.4} parent=8 // loop_pre_header
          _
        $region11: #{custom-call.4} parent=8 // loop_header
          %s26 = sphi %s0, %s48
          %s27 = sphi [#allocation0], %s49
          %v28 = vphi %v25, %v50
          %s29 = ssub.s32 %s24, 64
          %p30 = scmp.gt.s32.totalorder %s26, %s29
        $region12: #{custom-call.4} parent=8 // loop_header_branch
          %32 = sbr.rel (%p30) target = $region16
        $region13: #{custom-call.4} parent=8 // loop_body
          %33 = vst [vmem:[%s27] sm:$0xff] %v28
          %v34 = vld [vmem:[%s26 + $0x8] sm:$0xff]
          %35 = vst [vmem:[%s27 + $0x8] sm:$0xff] %v34
          %v36 = vld [vmem:[%s26 + $0x10] sm:$0xff]
          %37 = vst [vmem:[%s27 + $0x10] sm:$0xff] %v36
          %v38 = vld [vmem:[%s26 + $0x18] sm:$0xff]
          %39 = vst [vmem:[%s27 + $0x18] sm:$0xff] %v38
          %v40 = vld [vmem:[%s26 + $0x20] sm:$0xff]
          %41 = vst [vmem:[%s27 + $0x20] sm:$0xff] %v40
          %v42 = vld [vmem:[%s26 + $0x28] sm:$0xff]
          %43 = vst [vmem:[%s27 + $0x28] sm:$0xff] %v42
          %v44 = vld [vmem:[%s26 + $0x30] sm:$0xff]
          %45 = vst [vmem:[%s27 + $0x30] sm:$0xff] %v44
          %v46 = vld [vmem:[%s26 + $0x38] sm:$0xff]
          %47 = vst [vmem:[%s27 + $0x38] sm:$0xff] %v46
        $region14: #{custom-call.4} parent=8 // loop_footer
          %s48 = scalar_lea.vmem %s26, 64
          %s49 = scalar_lea.vmem %s27, 64
          %v50 = vld [vmem:[%s26 + $0x40] sm:$0xff]
        $region15: #{custom-call.4} parent=8 // loop_footer_branch
          %51 = sbr.rel target = $region11
        $region16: #{custom-call.4} parent=8 // loop_exit
          _
        // While loop
        $region17: #{custom-call.4} parent=8 // loop_pre_header
          _
        $region18: #{custom-call.4} parent=8 // loop_header
          %s52 = sphi %s26, %s60
          %s53 = sphi %s27, %s61
          %v54 = vphi %v28, %v54
          %p55 = scmp.gt.s32.totalorder %s52, %s24
        $region19: #{custom-call.4} parent=8 // loop_header_branch
          %57 = sbr.rel (%p55) target = $region23
        $region20: #{custom-call.4} parent=8 // loop_body
          %v58 = vld [vmem:[%s52] sm:$0xff]
          %59 = vst [vmem:[%s53] sm:$0xff] %v58
        $region21: #{custom-call.4} parent=8 // loop_footer
          %s60 = scalar_lea.vmem %s52, 8
          %s61 = scalar_lea.vmem %s53, 8
        $region22: #{custom-call.4} parent=8 // loop_footer_branch
          %62 = sbr.rel target = $region18
        $region23: #{custom-call.4} parent=8 // loop_exit
          _
      $region9: #{custom-call.4} parent=4 // pred_fallthru
        _
      %s63 = sand.u32 8, 7
      %s64 = sshllo.u32 0, %s63
      %s65 = smul.u32 %s16, 128
      %s66 = sshra.s32 %s65, 4
      %s67 = scalar_lea.vmem [#allocation0], %s66
      %s68 = smul.u32 %s16, 128
      %s69 = sshra.s32 %s68, 4
      %s70 = scalar_lea.vmem %s0, %s69
      %v71 = vld [vmem:[%s70] sm:%s64]
      %72 = vst [vmem:[%s67] sm:%s64] %v71
    $region5: #{custom-call.4} parent=1 // pred_fallthru
      _
    %p74 = scmp.gt.s32.totalorder 8, 0
    // Predicated region
    $region24: #{custom-call.4} parent=1 // pred_check
      %p75 = pneg %p74
    $region25: #{custom-call.4} parent=1 // pred_check_branch
      %77 = sbr.rel (%p75) target = $region27
    $region26: #{custom-call.4} parent=1 // pred_region
      %s78 = sshra.s32 8, 3
      %p79 = scmp.gt.s32.totalorder %s78, 0
      // Predicated region
      $region28: #{custom-call.4} parent=26 // pred_check
        %p80 = pneg %p79
      $region29: #{custom-call.4} parent=26 // pred_check_branch
        %82 = sbr.rel (%p80) target = $region31
      $region30: #{custom-call.4} parent=26 // pred_region
        %s83 = ssub.s32 %s78, 1
        %s84 = smul.u32 %s83, 128
        %s85 = sshra.s32 %s84, 4
        %s86 = scalar_lea.vmem %s1, %s85
        %v87 = vld [vmem:[%s1] sm:$0xff]
        // While loop
        $region32: #{custom-call.4} parent=30 // loop_pre_header
          _
        $region33: #{custom-call.4} parent=30 // loop_header
          %s88 = sphi %s1, %s110
          %s89 = sphi [#allocation1], %s111
          %v90 = vphi %v87, %v112
          %s91 = ssub.s32 %s86, 64
          %p92 = scmp.gt.s32.totalorder %s88, %s91
        $region34: #{custom-call.4} parent=30 // loop_header_branch
          %94 = sbr.rel (%p92) target = $region38
        $region35: #{custom-call.4} parent=30 // loop_body
          %95 = vst [vmem:[%s89] sm:$0xff] %v90
          %v96 = vld [vmem:[%s88 + $0x8] sm:$0xff]
          %97 = vst [vmem:[%s89 + $0x8] sm:$0xff] %v96
          %v98 = vld [vmem:[%s88 + $0x10] sm:$0xff]
          %99 = vst [vmem:[%s89 + $0x10] sm:$0xff] %v98
          %v100 = vld [vmem:[%s88 + $0x18] sm:$0xff]
          %101 = vst [vmem:[%s89 + $0x18] sm:$0xff] %v100
          %v102 = vld [vmem:[%s88 + $0x20] sm:$0xff]
          %103 = vst [vmem:[%s89 + $0x20] sm:$0xff] %v102
          %v104 = vld [vmem:[%s88 + $0x28] sm:$0xff]
          %105 = vst [vmem:[%s89 + $0x28] sm:$0xff] %v104
          %v106 = vld [vmem:[%s88 + $0x30] sm:$0xff]
          %107 = vst [vmem:[%s89 + $0x30] sm:$0xff] %v106
          %v108 = vld [vmem:[%s88 + $0x38] sm:$0xff]
          %109 = vst [vmem:[%s89 + $0x38] sm:$0xff] %v108
        $region36: #{custom-call.4} parent=30 // loop_footer
          %s110 = scalar_lea.vmem %s88, 64
          %s111 = scalar_lea.vmem %s89, 64
          %v112 = vld [vmem:[%s88 + $0x40] sm:$0xff]
        $region37: #{custom-call.4} parent=30 // loop_footer_branch
          %113 = sbr.rel target = $region33
        $region38: #{custom-call.4} parent=30 // loop_exit
          _
        // While loop
        $region39: #{custom-call.4} parent=30 // loop_pre_header
          _
        $region40: #{custom-call.4} parent=30 // loop_header
          %s114 = sphi %s88, %s122
          %s115 = sphi %s89, %s123
          %v116 = vphi %v90, %v116
          %p117 = scmp.gt.s32.totalorder %s114, %s86
        $region41: #{custom-call.4} parent=30 // loop_header_branch
          %119 = sbr.rel (%p117) target = $region45
        $region42: #{custom-call.4} parent=30 // loop_body
          %v120 = vld [vmem:[%s114] sm:$0xff]
          %121 = vst [vmem:[%s115] sm:$0xff] %v120
        $region43: #{custom-call.4} parent=30 // loop_footer
          %s122 = scalar_lea.vmem %s114, 8
          %s123 = scalar_lea.vmem %s115, 8
        $region44: #{custom-call.4} parent=30 // loop_footer_branch
          %124 = sbr.rel target = $region40
        $region45: #{custom-call.4} parent=30 // loop_exit
          _
      $region31: #{custom-call.4} parent=26 // pred_fallthru
        _
      %s125 = sand.u32 8, 7
      %s126 = sshllo.u32 0, %s125
      %s127 = smul.u32 %s78, 128
      %s128 = sshra.s32 %s127, 4
      %s129 = scalar_lea.vmem [#allocation1], %s128
      %s130 = smul.u32 %s78, 128
      %s131 = sshra.s32 %s130, 4
      %s132 = scalar_lea.vmem %s1, %s131
      %v133 = vld [vmem:[%s132] sm:%s126]
      %134 = vst [vmem:[%s129] sm:%s126] %v133
    $region27: #{custom-call.4} parent=1 // pred_fallthru
      _
    %p136 = scmp.gt.s32.totalorder 8, 0
    // Predicated region
    $region46: #{custom-call.4} parent=1 // pred_check
      %p137 = pneg %p136
    $region47: #{custom-call.4} parent=1 // pred_check_branch
      %139 = sbr.rel (%p137) target = $region49
    $region48: #{custom-call.4} parent=1 // pred_region
      %s140 = sshra.s32 8, 3
      %p141 = scmp.gt.s32.totalorder %s140, 0
      // Predicated region
      $region50: #{custom-call.4} parent=48 // pred_check
        %p142 = pneg %p141
      $region51: #{custom-call.4} parent=48 // pred_check_branch
        %144 = sbr.rel (%p142) target = $region53
      $region52: #{custom-call.4} parent=48 // pred_region
        %s145 = ssub.s32 %s140, 1
        %s146 = smul.u32 %s145, 128
        %s147 = sshra.s32 %s146, 4
        %s148 = scalar_lea.vmem %s2, %s147
        %v149 = vld [vmem:[%s2] sm:$0xff]
        // While loop
        $region54: #{custom-call.4} parent=52 // loop_pre_header
          _
        $region55: #{custom-call.4} parent=52 // loop_header
          %s150 = sphi %s2, %s172
          %s151 = sphi [#allocation2], %s173
          %v152 = vphi %v149, %v174
          %s153 = ssub.s32 %s148, 64
          %p154 = scmp.gt.s32.totalorder %s150, %s153
        $region56: #{custom-call.4} parent=52 // loop_header_branch
          %156 = sbr.rel (%p154) target = $region60
        $region57: #{custom-call.4} parent=52 // loop_body
          %157 = vst [vmem:[%s151] sm:$0xff] %v152
          %v158 = vld [vmem:[%s150 + $0x8] sm:$0xff]
          %159 = vst [vmem:[%s151 + $0x8] sm:$0xff] %v158
          %v160 = vld [vmem:[%s150 + $0x10] sm:$0xff]
          %161 = vst [vmem:[%s151 + $0x10] sm:$0xff] %v160
          %v162 = vld [vmem:[%s150 + $0x18] sm:$0xff]
          %163 = vst [vmem:[%s151 + $0x18] sm:$0xff] %v162
          %v164 = vld [vmem:[%s150 + $0x20] sm:$0xff]
          %165 = vst [vmem:[%s151 + $0x20] sm:$0xff] %v164
          %v166 = vld [vmem:[%s150 + $0x28] sm:$0xff]
          %167 = vst [vmem:[%s151 + $0x28] sm:$0xff] %v166
          %v168 = vld [vmem:[%s150 + $0x30] sm:$0xff]
          %169 = vst [vmem:[%s151 + $0x30] sm:$0xff] %v168
          %v170 = vld [vmem:[%s150 + $0x38] sm:$0xff]
          %171 = vst [vmem:[%s151 + $0x38] sm:$0xff] %v170
        $region58: #{custom-call.4} parent=52 // loop_footer
          %s172 = scalar_lea.vmem %s150, 64
          %s173 = scalar_lea.vmem %s151, 64
          %v174 = vld [vmem:[%s150 + $0x40] sm:$0xff]
        $region59: #{custom-call.4} parent=52 // loop_footer_branch
          %175 = sbr.rel target = $region55
        $region60: #{custom-call.4} parent=52 // loop_exit
          _
        // While loop
        $region61: #{custom-call.4} parent=52 // loop_pre_header
          _
        $region62: #{custom-call.4} parent=52 // loop_header
          %s176 = sphi %s150, %s184
          %s177 = sphi %s151, %s185
          %v178 = vphi %v152, %v178
          %p179 = scmp.gt.s32.totalorder %s176, %s148
        $region63: #{custom-call.4} parent=52 // loop_header_branch
          %181 = sbr.rel (%p179) target = $region67
        $region64: #{custom-call.4} parent=52 // loop_body
          %v182 = vld [vmem:[%s176] sm:$0xff]
          %183 = vst [vmem:[%s177] sm:$0xff] %v182
        $region65: #{custom-call.4} parent=52 // loop_footer
          %s184 = scalar_lea.vmem %s176, 8
          %s185 = scalar_lea.vmem %s177, 8
        $region66: #{custom-call.4} parent=52 // loop_footer_branch
          %186 = sbr.rel target = $region62
        $region67: #{custom-call.4} parent=52 // loop_exit
          _
      $region53: #{custom-call.4} parent=48 // pred_fallthru
        _
      %s187 = sand.u32 8, 7
      %s188 = sshllo.u32 0, %s187
      %s189 = smul.u32 %s140, 128
      %s190 = sshra.s32 %s189, 4
      %s191 = scalar_lea.vmem [#allocation2], %s190
      %s192 = smul.u32 %s140, 128
      %s193 = sshra.s32 %s192, 4
      %s194 = scalar_lea.vmem %s2, %s193
      %v195 = vld [vmem:[%s194] sm:%s188]
      %196 = vst [vmem:[%s191] sm:%s188] %v195
    $region49: #{custom-call.4} parent=1 // pred_fallthru
      _
    %p198 = scmp.gt.s32.totalorder 8, 0
    // Predicated region
    $region68: #{custom-call.4} parent=1 // pred_check
      %p199 = pneg %p198
    $region69: #{custom-call.4} parent=1 // pred_check_branch
      %201 = sbr.rel (%p199) target = $region71
    $region70: #{custom-call.4} parent=1 // pred_region
      %s202 = sshra.s32 8, 3
      %p203 = scmp.gt.s32.totalorder %s202, 0
      // Predicated region
      $region72: #{custom-call.4} parent=70 // pred_check
        %p204 = pneg %p203
      $region73: #{custom-call.4} parent=70 // pred_check_branch
        %206 = sbr.rel (%p204) target = $region75
      $region74: #{custom-call.4} parent=70 // pred_region
        %s207 = ssub.s32 %s202, 1
        %s208 = smul.u32 %s207, 128
        %s209 = sshra.s32 %s208, 4
        %s210 = scalar_lea.vmem %s3, %s209
        %v211 = vld [vmem:[%s3] sm:$0xff]
        // While loop
        $region76: #{custom-call.4} parent=74 // loop_pre_header
          _
        $region77: #{custom-call.4} parent=74 // loop_header
          %s212 = sphi %s3, %s234
          %s213 = sphi [#allocation3], %s235
          %v214 = vphi %v211, %v236
          %s215 = ssub.s32 %s210, 64
          %p216 = scmp.gt.s32.totalorder %s212, %s215
        $region78: #{custom-call.4} parent=74 // loop_header_branch
          %218 = sbr.rel (%p216) target = $region82
        $region79: #{custom-call.4} parent=74 // loop_body
          %219 = vst [vmem:[%s213] sm:$0xff] %v214
          %v220 = vld [vmem:[%s212 + $0x8] sm:$0xff]
          %221 = vst [vmem:[%s213 + $0x8] sm:$0xff] %v220
          %v222 = vld [vmem:[%s212 + $0x10] sm:$0xff]
          %223 = vst [vmem:[%s213 + $0x10] sm:$0xff] %v222
          %v224 = vld [vmem:[%s212 + $0x18] sm:$0xff]
          %225 = vst [vmem:[%s213 + $0x18] sm:$0xff] %v224
          %v226 = vld [vmem:[%s212 + $0x20] sm:$0xff]
          %227 = vst [vmem:[%s213 + $0x20] sm:$0xff] %v226
          %v228 = vld [vmem:[%s212 + $0x28] sm:$0xff]
          %229 = vst [vmem:[%s213 + $0x28] sm:$0xff] %v228
          %v230 = vld [vmem:[%s212 + $0x30] sm:$0xff]
          %231 = vst [vmem:[%s213 + $0x30] sm:$0xff] %v230
          %v232 = vld [vmem:[%s212 + $0x38] sm:$0xff]
          %233 = vst [vmem:[%s213 + $0x38] sm:$0xff] %v232
        $region80: #{custom-call.4} parent=74 // loop_footer
          %s234 = scalar_lea.vmem %s212, 64
          %s235 = scalar_lea.vmem %s213, 64
          %v236 = vld [vmem:[%s212 + $0x40] sm:$0xff]
        $region81: #{custom-call.4} parent=74 // loop_footer_branch
          %237 = sbr.rel target = $region77
        $region82: #{custom-call.4} parent=74 // loop_exit
          _
        // While loop
        $region83: #{custom-call.4} parent=74 // loop_pre_header
          _
        $region84: #{custom-call.4} parent=74 // loop_header
          %s238 = sphi %s212, %s246
          %s239 = sphi %s213, %s247
          %v240 = vphi %v214, %v240
          %p241 = scmp.gt.s32.totalorder %s238, %s210
        $region85: #{custom-call.4} parent=74 // loop_header_branch
          %243 = sbr.rel (%p241) target = $region89
        $region86: #{custom-call.4} parent=74 // loop_body
          %v244 = vld [vmem:[%s238] sm:$0xff]
          %245 = vst [vmem:[%s239] sm:$0xff] %v244
        $region87: #{custom-call.4} parent=74 // loop_footer
          %s246 = scalar_lea.vmem %s238, 8
          %s247 = scalar_lea.vmem %s239, 8
        $region88: #{custom-call.4} parent=74 // loop_footer_branch
          %248 = sbr.rel target = $region84
        $region89: #{custom-call.4} parent=74 // loop_exit
          _
      $region75: #{custom-call.4} parent=70 // pred_fallthru
        _
      %s249 = sand.u32 8, 7
      %s250 = sshllo.u32 0, %s249
      %s251 = smul.u32 %s202, 128
      %s252 = sshra.s32 %s251, 4
      %s253 = scalar_lea.vmem [#allocation3], %s252
      %s254 = smul.u32 %s202, 128
      %s255 = sshra.s32 %s254, 4
      %s256 = scalar_lea.vmem %s3, %s255
      %v257 = vld [vmem:[%s256] sm:%s250]
      %258 = vst [vmem:[%s253] sm:%s250] %v257
    $region71: #{custom-call.4} parent=1 // pred_fallthru
      _
    %s259 = smov [#allocation12]
    %v260 = vld [vmem:[#allocation0] sm:$0xff]
    %261 = vst [vmem:[%s259] sm:$0xff] %v260
    %s262 = smov [#allocation13]
    %v263 = vld [vmem:[#allocation1] sm:$0xff]
    %264 = vst [vmem:[%s262] sm:$0xff] %v263
    %s265 = smov [#allocation14]
    %v266 = vld [vmem:[#allocation2] sm:$0xff]
    %267 = vst [vmem:[%s265] sm:$0xff] %v266
    %s268 = smov [#allocation15]
    %v269 = vld [vmem:[#allocation3] sm:$0xff]
    %270 = vst [vmem:[%s268] sm:$0xff] %v269
    %271 = vst [vmem:[#allocation8] sm:$0xff] 0.0
    %272 = vst [vmem:[#allocation9] sm:$0xff] 0.0
    %273 = vst [vmem:[#allocation10] sm:$0xff] 0.0
    %274 = vst [vmem:[#allocation11] sm:$0xff] 0.0
    %s275 = smov [#allocation8]
    %v276 = vlaneseq
    %v277 = vand.u32 %v276, 127
    %v278 = vmov %v277
    %v279 = vlaneseq
    %v280 = vshrl.u32 %v279, 7
    %v281 = vmov %v280
    %v282 = vld [vmem:[%s275] sm:$0xff]
    %vm285 = vcmp.eq.s32.totalorder %v281, %v278
    %v286 = vsel %vm285, 1.0, %v282
    %287 = vst [vmem:[%s275] sm:$0xff] %v286
    %s288 = smov [#allocation11]
    %v289 = vlaneseq
    %v290 = vand.u32 %v289, 127
    %v291 = vmov %v290
    %v292 = vlaneseq
    %v293 = vshrl.u32 %v292, 7
    %v294 = vmov %v293
    %v295 = vld [vmem:[%s288] sm:$0xff]
    %vm298 = vcmp.eq.s32.totalorder %v294, %v291
    %v299 = vsel %vm298, 1.0, %v295
    %300 = vst [vmem:[%s288] sm:$0xff] %v299
    // While loop
    $region90: #{custom-call.4} parent=1 // loop_pre_header
      _
    $region91: #{custom-call.4} parent=1 // loop_header
      %s302 = sphi 0, %s844
      %v303 = vlaneseq
      %v304 = vand.u32 %v303, 127
      %v305 = vmov %v304
      %v306 = vlaneseq
      %v307 = vshrl.u32 %v306, 7
      %v308 = vmov %v307
      %s309 = smov [#allocation12]
      %v310 = vlaneseq
      %v311 = vand.u32 %v310, 127
      %vm312 = vcmp.ge.s32.totalorder %v311, 0
      %vm313 = vcmp.lt.s32.totalorder %v311, 8
      %vm314 = vmand %vm312, %vm313
      %v315 = vld [vmem:[%s309] sm:$0xff]
      %v316 = vsel %vm314, %v315, 0.0
      %v317 = vmul.f32 %v316, %v316
      %vm320 = vcmp.eq.s32.totalorder %v308, %v305
      %v321 = vsel %vm320, 0.0, %v317
      %v322 = vlaneseq
      %v323 = vand.u32 %v322, 127
      %v324 = vmov %v323
      %v325 = vlaneseq
      %v326 = vshrl.u32 %v325, 7
      %v327 = vmov %v326
      %s328 = smov [#allocation13]
      %v329 = vlaneseq
      %v330 = vand.u32 %v329, 127
      %vm331 = vcmp.ge.s32.totalorder %v330, 0
      %vm332 = vcmp.lt.s32.totalorder %v330, 8
      %vm333 = vmand %vm331, %vm332
      %v334 = vld [vmem:[%s328] sm:$0xff]
      %v335 = vsel %vm333, %v334, 0.0
      %v336 = vmul.f32 %v335, %v335
      %v337 = vadd.f32 %v321, %v336
      %v338 = vadd.f32 %v317, %v336
      %v339 = vlaneseq
      %v340 = vand.u32 %v339, 127
      %v341 = vmov %v340
      %v342 = vlaneseq
      %v343 = vshrl.u32 %v342, 7
      %v344 = vmov %v343
      %s345 = smov [#allocation14]
      %v346 = vlaneseq
      %v347 = vand.u32 %v346, 127
      %vm348 = vcmp.ge.s32.totalorder %v347, 0
      %vm349 = vcmp.lt.s32.totalorder %v347, 8
      %vm350 = vmand %vm348, %vm349
      %v351 = vld [vmem:[%s345] sm:$0xff]
      %v352 = vsel %vm350, %v351, 0.0
      %v353 = vmul.f32 %v352, %v352
      %v354 = vadd.f32 %v337, %v353
      %v355 = vadd.f32 %v338, %v353
      %v356 = vlaneseq
      %v357 = vand.u32 %v356, 127
      %v358 = vmov %v357
      %v359 = vlaneseq
      %v360 = vshrl.u32 %v359, 7
      %v361 = vmov %v360
      %s362 = smov [#allocation15]
      %v363 = vlaneseq
      %v364 = vand.u32 %v363, 127
      %vm365 = vcmp.ge.s32.totalorder %v364, 0
      %vm366 = vcmp.lt.s32.totalorder %v364, 8
      %vm367 = vmand %vm365, %vm366
      %v368 = vld [vmem:[%s362] sm:$0xff]
      %v369 = vsel %vm367, %v368, 0.0
      %v370 = vmul.f32 %v369, %v369
      %vm373 = vcmp.eq.s32.totalorder %v361, %v358
      %v374 = vsel %vm373, 0.0, %v370
      %v375 = vadd.f32 %v354, %v374
      %v376 = vadd.f32 %v355, %v370
      %377 = vadd.xlane.f32.xlu0 %v376
      %v378 = vpop.xlane.xlu0 %377
      %v379 = vrot.slane %v378, 4
      %v380 = vadd.f32 %v378, %v379
      %v381 = vrot.slane %v380, 2
      %v382 = vadd.f32 %v380, %v381
      %v383 = vrot.slane %v382, 1
      %v384 = vadd.f32 %v382, %v383
      %385 = vadd.xlane.f32.xlu0 %v375
      %v386 = vpop.xlane.xlu0 %385
      %v387 = vrot.slane %v386, 4
      %v388 = vadd.f32 %v386, %v387
      %v389 = vrot.slane %v388, 2
      %v390 = vadd.f32 %v388, %v389
      %v391 = vrot.slane %v390, 1
      %v392 = vadd.f32 %v390, %v391
      %s393 = vtos %v392
      %s394 = vtos %v384
      %s395 = smul.f32 1e-10, %s394
      %p396 = scmp.le.f32.partialorder %s393, %s395
      %p397 = scmp.ge.s32.totalorder %s302, 15
      %p398 = por %p396, %p397
    $region92: #{custom-call.4} parent=1 // loop_header_branch
      %846 = sbr.rel (%p398) target = $region96
    $region93: #{custom-call.4} parent=1 // loop_body
      loop: start=0, step=1, limit=15
      $region97: #{custom-call.4} parent=93 // loop_pre_header
        _
      $region98: #{custom-call.4} parent=93 // loop_header
        %s400 = sphi 0, %s404
        %p401 = scmp.ge.s32.totalorder %s400, 15
      $region99: #{custom-call.4} parent=93 // loop_header_branch
        %403 = sbr.rel (%p401) target = $region103
      $region100: #{custom-call.4} parent=93 // loop_body
        #allocation16 [shape = 'f32[1024]{0}', space=vmem, size = 0x1000, scoped, tag = 'a_tl_diag vmem']
        #allocation17 [shape = 'f32[1024]{0}', space=vmem, size = 0x1000, scoped, tag = 'a_tr_diag vmem']
        #allocation18 [shape = 'f32[1024]{0}', space=vmem, size = 0x1000, scoped, tag = 'a_br_diag vmem']
        #allocation19 [shape = 'f32[1024]{0}', space=vmem, size = 0x1000, scoped, tag = 'rt1 vmem']
        #allocation20 [shape = 'f32[1024]{0}', space=vmem, size = 0x1000, scoped, tag = 'rt2 vmem']
        #allocation21 [shape = 'f32[1024]{0}', space=vmem, size = 0x1000, scoped, tag = 'c vmem']
        #allocation22 [shape = 'f32[1024]{0}', space=vmem, size = 0x1000, scoped, tag = 's vmem']
        #allocation23 [shape = 'f32[4096]{0}', space=vmem, size = 0x4000, scoped, tag = 'c broadcast']
        #allocation24 [shape = 'f32[4096]{0}', space=vmem, size = 0x4000, scoped, tag = 's broadcast']
        %s405 = smov [#allocation12]
        %s406 = smov [#allocation16]
        %v407 = vlaneseq
        %v408 = vand.u32 %v407, 127
        %v409 = vmov %v408
        %v410 = vlaneseq
        %v411 = vshrl.u32 %v410, 7
        %v412 = vmov %v411
        %v413 = vld [vmem:[%s405] sm:$0xff]
        %vm416 = vcmp.eq.s32.totalorder %v412, %v409
        %v417 = vsel %vm416, %v413, 0.0
        %v418 = vrot.slane %v417, 4
        %v419 = vadd.f32 %v417, %v418
        %v420 = vrot.slane %v419, 2
        %v421 = vadd.f32 %v419, %v420
        %v422 = vrot.slane %v421, 1
        %v423 = vadd.f32 %v421, %v422
        %424 = vst [vmem:[%s406] sm:$0x1] %v423
        %s425 = smov [#allocation13]
        %s426 = smov [#allocation17]
        %v427 = vlaneseq
        %v428 = vand.u32 %v427, 127
        %v429 = vmov %v428
        %v430 = vlaneseq
        %v431 = vshrl.u32 %v430, 7
        %v432 = vmov %v431
        %v433 = vld [vmem:[%s425] sm:$0xff]
        %vm436 = vcmp.eq.s32.totalorder %v432, %v429
        %v437 = vsel %vm436, %v433, 0.0
        %v438 = vrot.slane %v437, 4
        %v439 = vadd.f32 %v437, %v438
        %v440 = vrot.slane %v439, 2
        %v441 = vadd.f32 %v439, %v440
        %v442 = vrot.slane %v441, 1
        %v443 = vadd.f32 %v441, %v442
        %444 = vst [vmem:[%s426] sm:$0x1] %v443
        %s445 = smov [#allocation15]
        %s446 = smov [#allocation18]
        %v447 = vlaneseq
        %v448 = vand.u32 %v447, 127
        %v449 = vmov %v448
        %v450 = vlaneseq
        %v451 = vshrl.u32 %v450, 7
        %v452 = vmov %v451
        %v453 = vld [vmem:[%s445] sm:$0xff]
        %vm456 = vcmp.eq.s32.totalorder %v452, %v449
        %v457 = vsel %vm456, %v453, 0.0
        %v458 = vrot.slane %v457, 4
        %v459 = vadd.f32 %v457, %v458
        %v460 = vrot.slane %v459, 2
        %v461 = vadd.f32 %v459, %v460
        %v462 = vrot.slane %v461, 1
        %v463 = vadd.f32 %v461, %v462
        %464 = vst [vmem:[%s446] sm:$0x1] %v463
        %s465 = smov [#allocation21]
        %s466 = smov [#allocation22]
        %s467 = smov [#allocation16]
        %v468 = vld [vmem:[%s467] sm:$0xff]
        %s469 = smov [#allocation17]
        %v470 = vld [vmem:[%s469] sm:$0xff]
        %s471 = smov [#allocation18]
        %v472 = vld [vmem:[%s471] sm:$0xff]
        %v473 = vsub.f32 %v472, %v468
        %v474 = vmul.f32 2.0, %v470
        %v475 = vrcp.pop %v474
        %v476 = vmul.f32 %v473, %v475
        %vm477 = vcmp.ge.f32.partialorder %v476, 0.0
        %v478 = vmul.f32 %v476, %v476
        %v479 = vadd.f32 1.0, %v478
        %v480 = vrsqrt.pop %v479
        %v481 = vmul.f32 %v479, %v480
        %vm482 = vcmp.eq.f32.partialorder %v479, inf
        %v483 = vsel %vm482, %v479, %v481
        %vm484 = vcmp.eq.f32.partialorder %v479, 0.0
        %v485 = vand.u32 %v479, 2147483648
        %v486 = vsel %vm484, %v485, %v483
        %v487 = vxor.u32 %v486, 2147483648
        %v488 = vsel %vm477, %v486, %v487
        %v489 = vadd.f32 %v476, %v488
        %v490 = vrcp.pop %v489
        %v491 = vand.u32 2147483647, %v468
        %v492 = vand.u32 2147483647, %v470
        %v493 = vand.u32 2147483647, %v472
        %v494 = vmin.f32 %v491, %v493
        %v495 = vmul.f32 1.1920929e-08, %v494
        %vm496 = vcmp.le.f32.partialorder %v492, %v495
        %v497 = vsel %vm496, 0.0, %v490
        %v498 = vmul.f32 %v497, %v497
        %v499 = vadd.f32 1.0, %v498
        %v500 = vrsqrt.pop %v499
        %v501 = vmul.f32 %v497, %v500
        %v502 = vmul.f32 %v497, %v470
        %v503 = vsub.f32 %v468, %v502
        %v504 = vmul.f32 %v497, %v470
        %v505 = vadd.f32 %v472, %v504
        %s506 = smov [#allocation19]
        %507 = vst [vmem:[%s506] sm:$0xff] %v503
        %s508 = smov [#allocation20]
        %509 = vst [vmem:[%s508] sm:$0xff] %v505
        %s510 = smov %s465
        %511 = vst [vmem:[%s510] sm:$0xff] %v500
        %s512 = smov %s466
        %513 = vst [vmem:[%s512] sm:$0xff] %v501
        %s514 = smov [#allocation21]
        %v515 = vld [vmem:[%s514] ss:$0 sm:$0xff]
        %v516 = vlaneseq
        %v517 = vand.u32 %v516, 127
        %v518 = vmov %v517
        %v519 = vlaneseq
        %v520 = vshrl.u32 %v519, 7
        %v521 = vmov %v520
        %vm523 = vcmp.eq.s32.totalorder %v521, %v518
        %v524 = vsel %vm523, %v515, 0.0
        %525 = vadd.xlane.f32.xlu0 %v524
        %v526 = vpop.xlane.xlu0 %525
        %s527 = smov [#allocation23]
        %528 = vst [vmem:[%s527] sm:$0xff] %v526
        %s529 = smov [#allocation22]
        %v530 = vld [vmem:[%s529] ss:$0 sm:$0xff]
        %v531 = vlaneseq
        %v532 = vand.u32 %v531, 127
        %v533 = vmov %v532
        %v534 = vlaneseq
        %v535 = vshrl.u32 %v534, 7
        %v536 = vmov %v535
        %vm538 = vcmp.eq.s32.totalorder %v536, %v533
        %v539 = vsel %vm538, %v530, 0.0
        %540 = vadd.xlane.f32.xlu0 %v539
        %v541 = vpop.xlane.xlu0 %540
        %s542 = smov [#allocation24]
        %543 = vst [vmem:[%s542] sm:$0xff] %v541
        %s544 = smov [#allocation23]
        %v545 = vld [vmem:[%s544] sm:$0xff]
        %s546 = smov [#allocation24]
        %v547 = vld [vmem:[%s546] sm:$0xff]
        %s548 = smov [#allocation12]
        %s549 = smov [#allocation13]
        %s550 = smov [#allocation14]
        %s551 = smov [#allocation15]
        %v552 = vld [vmem:[%s548] sm:$0xff]
        %v553 = vld [vmem:[%s549] sm:$0xff]
        %v554 = vld [vmem:[%s550] sm:$0xff]
        %v555 = vld [vmem:[%s551] sm:$0xff]
        %v556 = vmul.f32 %v545, %v552
        %v557 = vmul.f32 %v547, %v554
        %v558 = vsub.f32 %v556, %v557
        %v559 = vmul.f32 %v545, %v553
        %v560 = vmul.f32 %v547, %v555
        %v561 = vsub.f32 %v559, %v560
        %v562 = vmul.f32 %v547, %v552
        %v563 = vmul.f32 %v545, %v554
        %v564 = vadd.f32 %v562, %v563
        %v565 = vmul.f32 %v547, %v553
        %v566 = vmul.f32 %v545, %v555
        %v567 = vadd.f32 %v565, %v566
        %568 = vst [vmem:[%s548] sm:$0xff] %v558
        %569 = vst [vmem:[%s549] sm:$0xff] %v561
        %570 = vst [vmem:[%s550] sm:$0xff] %v564
        %571 = vst [vmem:[%s551] sm:$0xff] %v567
        %s572 = smov [#allocation21]
        %v573 = vld [vmem:[%s572] ss:$0 sm:$0xff]
        %s574 = smov [#allocation22]
        %v575 = vld [vmem:[%s574] ss:$0 sm:$0xff]
        %s576 = smov [#allocation12]
        %s577 = smov [#allocation13]
        %s578 = smov [#allocation14]
        %s579 = smov [#allocation15]
        %v580 = vld [vmem:[%s576] sm:$0xff]
        %v581 = vld [vmem:[%s577] sm:$0xff]
        %v582 = vld [vmem:[%s578] sm:$0xff]
        %v583 = vld [vmem:[%s579] sm:$0xff]
        %v584 = vmul.f32 %v573, %v580
        %v585 = vmul.f32 %v575, %v581
        %v586 = vsub.f32 %v584, %v585
        %v587 = vmul.f32 %v575, %v580
        %v588 = vmul.f32 %v573, %v581
        %v589 = vadd.f32 %v587, %v588
        %v590 = vmul.f32 %v573, %v582
        %v591 = vmul.f32 %v575, %v583
        %v592 = vsub.f32 %v590, %v591
        %v593 = vmul.f32 %v575, %v582
        %v594 = vmul.f32 %v573, %v583
        %v595 = vadd.f32 %v593, %v594
        %596 = vst [vmem:[%s576] sm:$0xff] %v586
        %597 = vst [vmem:[%s577] sm:$0xff] %v589
        %598 = vst [vmem:[%s578] sm:$0xff] %v592
        %599 = vst [vmem:[%s579] sm:$0xff] %v595
        %s600 = smov [#allocation12]
        %s601 = smov [#allocation19]
        %v602 = vlaneseq
        %v603 = vand.u32 %v602, 127
        %v604 = vmov %v603
        %v605 = vlaneseq
        %v606 = vshrl.u32 %v605, 7
        %v607 = vmov %v606
        %v608 = vld [vmem:[%s601] ss:$0 sm:$0xff]
        %v609 = vld [vmem:[%s600] sm:$0xff]
        %vm612 = vcmp.eq.s32.totalorder %v607, %v604
        %v613 = vsel %vm612, %v608, %v609
        %614 = vst [vmem:[%s600] sm:$0xff] %v613
        %s615 = smov [#allocation13]
        %v616 = vlaneseq
        %v617 = vand.u32 %v616, 127
        %v618 = vmov %v617
        %v619 = vlaneseq
        %v620 = vshrl.u32 %v619, 7
        %v621 = vmov %v620
        %v622 = vld [vmem:[%s615] sm:$0xff]
        %vm625 = vcmp.eq.s32.totalorder %v621, %v618
        %v626 = vsel %vm625, 0.0, %v622
        %627 = vst [vmem:[%s615] sm:$0xff] %v626
        %s628 = smov [#allocation14]
        %v629 = vlaneseq
        %v630 = vand.u32 %v629, 127
        %v631 = vmov %v630
        %v632 = vlaneseq
        %v633 = vshrl.u32 %v632, 7
        %v634 = vmov %v633
        %v635 = vld [vmem:[%s628] sm:$0xff]
        %vm638 = vcmp.eq.s32.totalorder %v634, %v631
        %v639 = vsel %vm638, 0.0, %v635
        %640 = vst [vmem:[%s628] sm:$0xff] %v639
        %s641 = smov [#allocation15]
        %s642 = smov [#allocation20]
        %v643 = vlaneseq
        %v644 = vand.u32 %v643, 127
        %v645 = vmov %v644
        %v646 = vlaneseq
        %v647 = vshrl.u32 %v646, 7
        %v648 = vmov %v647
        %v649 = vld [vmem:[%s642] ss:$0 sm:$0xff]
        %v650 = vld [vmem:[%s641] sm:$0xff]
        %vm653 = vcmp.eq.s32.totalorder %v648, %v645
        %v654 = vsel %vm653, %v649, %v650
        %655 = vst [vmem:[%s641] sm:$0xff] %v654
        %s656 = smov [#allocation12]
        %s657 = smov [#allocation13]
        %v658 = vld [vmem:[%s657] sm:$0xff]
        %659 = vrot.lane.b32.xlu0 %v658, 1
        %v660 = vpop.permute.xlu0 %659
        %v661 = vld [vmem:[%s656] sm:$0xff]
        %v662 = vld [vmem:[%s656] sm:$0xff]
        %663 = vrot.lane.b32.xlu0 %v662, 1
        %v664 = vpop.permute.xlu0 %663
        %v665 = vlaneseq
        %v666 = vand.u32 %v665, 127
        %vm667 = vcmp.eq.s32.totalorder %v666, 0
        %v668 = vsel %vm667, %v662, %v664
        %v669 = vlaneseq
        %v670 = vand.u32 %v669, 127
        %vm671 = vcmp.eq.s32.totalorder %v670, 1
        %v672 = vsel %vm671, %v660, %v668
        %v673 = vlaneseq
        %v674 = vand.u32 %v673, 127
        %vm675 = vcmp.ge.s32.totalorder %v674, 0
        %vm676 = vcmp.lt.s32.totalorder %v674, 8
        %vm677 = vmand %vm675, %vm676
        %v678 = vsel %vm677, %v672, 0.0
        %v679 = vld [vmem:[%s657] sm:$0xff]
        %680 = vrot.lane.b32.xlu0 %v679, 127
        %v681 = vpop.permute.xlu0 %680
        %v682 = vlaneseq
        %v683 = vand.u32 %v682, 127
        %vm684 = vcmp.eq.s32.totalorder %v683, 7
        %v685 = vsel %vm684, %v661, %v681
        %686 = vst [vmem:[%s656] sm:$0xff] %v678
        %687 = vst [vmem:[%s657] sm:$0xff] %v685
        %s688 = smov [#allocation14]
        %s689 = smov [#allocation15]
        %v690 = vld [vmem:[%s689] sm:$0xff]
        %691 = vrot.lane.b32.xlu0 %v690, 1
        %v692 = vpop.permute.xlu0 %691
        %v693 = vld [vmem:[%s688] sm:$0xff]
        %v694 = vld [vmem:[%s688] sm:$0xff]
        %695 = vrot.lane.b32.xlu0 %v694, 1
        %v696 = vpop.permute.xlu0 %695
        %v697 = vlaneseq
        %v698 = vand.u32 %v697, 127
        %vm699 = vcmp.eq.s32.totalorder %v698, 0
        %v700 = vsel %vm699, %v694, %v696
        %v701 = vlaneseq
        %v702 = vand.u32 %v701, 127
        %vm703 = vcmp.eq.s32.totalorder %v702, 1
        %v704 = vsel %vm703, %v692, %v700
        %v705 = vlaneseq
        %v706 = vand.u32 %v705, 127
        %vm707 = vcmp.ge.s32.totalorder %v706, 0
        %vm708 = vcmp.lt.s32.totalorder %v706, 8
        %vm709 = vmand %vm707, %vm708
        %v710 = vsel %vm709, %v704, 0.0
        %v711 = vld [vmem:[%s689] sm:$0xff]
        %712 = vrot.lane.b32.xlu0 %v711, 127
        %v713 = vpop.permute.xlu0 %712
        %v714 = vlaneseq
        %v715 = vand.u32 %v714, 127
        %vm716 = vcmp.eq.s32.totalorder %v715, 7
        %v717 = vsel %vm716, %v693, %v713
        %718 = vst [vmem:[%s688] sm:$0xff] %v710
        %719 = vst [vmem:[%s689] sm:$0xff] %v717
        %s720 = smov [#allocation12]
        %s721 = smov [#allocation14]
        %v722 = vld [vmem:[%s720] ss:$0 sm:$0xff]
        %s724 = scalar_lea.vmem %s720, 4294967295
        %v725 = vld [vmem:[%s724] sm:$0xfe]
        %v726 = vlaneseq
        %v727 = vshrl.u32 %v726, 7
        %vm728 = vcmp.eq.s32.totalorder %v727, 0
        %v729 = vsel %vm728, %v722, %v725
        %s730 = scalar_lea.vmem %s720, 7
        %v731 = vld [vmem:[%s730] ss:$0 sm:$0xff]
        %732 = vst [vmem:[%s720] sm:$0xff] %v729
        %v733 = vld [vmem:[%s721] ss:$0 sm:$0xff]
        %s734 = scalar_lea.vmem %s720, 1
        %735 = vst [vmem:[%s734] sm:$0x1] %v733
        %s736 = scalar_lea.vmem %s721, 1
        %v737 = vld [vmem:[%s736] sm:$0x7f]
        %v738 = vlaneseq
        %v739 = vshrl.u32 %v738, 7
        %vm740 = vcmp.eq.s32.totalorder %v739, 7
        %v741 = vsel %vm740, %v731, %v737
        %v742 = vld [vmem:[%s721] ss:$0 sm:$0xff]
        %743 = vst [vmem:[%s721] sm:$0xff] %v741
        %s744 = smov [#allocation13]
        %s745 = smov [#allocation15]
        %v746 = vld [vmem:[%s744] ss:$0 sm:$0xff]
        %s748 = scalar_lea.vmem %s744, 4294967295
        %v749 = vld [vmem:[%s748] sm:$0xfe]
        %v750 = vlaneseq
        %v751 = vshrl.u32 %v750, 7
        %vm752 = vcmp.eq.s32.totalorder %v751, 0
        %v753 = vsel %vm752, %v746, %v749
        %s754 = scalar_lea.vmem %s744, 7
        %v755 = vld [vmem:[%s754] ss:$0 sm:$0xff]
        %756 = vst [vmem:[%s744] sm:$0xff] %v753
        %v757 = vld [vmem:[%s745] ss:$0 sm:$0xff]
        %s758 = scalar_lea.vmem %s744, 1
        %759 = vst [vmem:[%s758] sm:$0x1] %v757
        %s760 = scalar_lea.vmem %s745, 1
        %v761 = vld [vmem:[%s760] sm:$0x7f]
        %v762 = vlaneseq
        %v763 = vshrl.u32 %v762, 7
        %vm764 = vcmp.eq.s32.totalorder %v763, 7
        %v765 = vsel %vm764, %v755, %v761
        %v766 = vld [vmem:[%s745] ss:$0 sm:$0xff]
        %767 = vst [vmem:[%s745] sm:$0xff] %v765
        %s768 = smov [#allocation23]
        %v769 = vld [vmem:[%s768] sm:$0xff]
        %s770 = smov [#allocation24]
        %v771 = vld [vmem:[%s770] sm:$0xff]
        %s772 = smov [#allocation8]
        %s773 = smov [#allocation9]
        %s774 = smov [#allocation10]
        %s775 = smov [#allocation11]
        %v776 = vld [vmem:[%s772] sm:$0xff]
        %v777 = vld [vmem:[%s773] sm:$0xff]
        %v778 = vld [vmem:[%s774] sm:$0xff]
        %v779 = vld [vmem:[%s775] sm:$0xff]
        %v780 = vmul.f32 %v769, %v776
        %v781 = vmul.f32 %v771, %v778
        %v782 = vsub.f32 %v780, %v781
        %v783 = vmul.f32 %v769, %v777
        %v784 = vmul.f32 %v771, %v779
        %v785 = vsub.f32 %v783, %v784
        %v786 = vmul.f32 %v771, %v776
        %v787 = vmul.f32 %v769, %v778
        %v788 = vadd.f32 %v786, %v787
        %v789 = vmul.f32 %v771, %v777
        %v790 = vmul.f32 %v769, %v779
        %v791 = vadd.f32 %v789, %v790
        %792 = vst [vmem:[%s772] sm:$0xff] %v782
        %793 = vst [vmem:[%s773] sm:$0xff] %v785
        %794 = vst [vmem:[%s774] sm:$0xff] %v788
        %795 = vst [vmem:[%s775] sm:$0xff] %v791
        %s796 = smov [#allocation8]
        %s797 = smov [#allocation10]
        %v798 = vld [vmem:[%s796] ss:$0 sm:$0xff]
        %s800 = scalar_lea.vmem %s796, 4294967295
        %v801 = vld [vmem:[%s800] sm:$0xfe]
        %v802 = vlaneseq
        %v803 = vshrl.u32 %v802, 7
        %vm804 = vcmp.eq.s32.totalorder %v803, 0
        %v805 = vsel %vm804, %v798, %v801
        %s806 = scalar_lea.vmem %s796, 7
        %v807 = vld [vmem:[%s806] ss:$0 sm:$0xff]
        %808 = vst [vmem:[%s796] sm:$0xff] %v805
        %v809 = vld [vmem:[%s797] ss:$0 sm:$0xff]
        %s810 = scalar_lea.vmem %s796, 1
        %811 = vst [vmem:[%s810] sm:$0x1] %v809
        %s812 = scalar_lea.vmem %s797, 1
        %v813 = vld [vmem:[%s812] sm:$0x7f]
        %v814 = vlaneseq
        %v815 = vshrl.u32 %v814, 7
        %vm816 = vcmp.eq.s32.totalorder %v815, 7
        %v817 = vsel %vm816, %v807, %v813
        %v818 = vld [vmem:[%s797] ss:$0 sm:$0xff]
        %819 = vst [vmem:[%s797] sm:$0xff] %v817
        %s820 = smov [#allocation9]
        %s821 = smov [#allocation11]
        %v822 = vld [vmem:[%s820] ss:$0 sm:$0xff]
        %s824 = scalar_lea.vmem %s820, 4294967295
        %v825 = vld [vmem:[%s824] sm:$0xfe]
        %v826 = vlaneseq
        %v827 = vshrl.u32 %v826, 7
        %vm828 = vcmp.eq.s32.totalorder %v827, 0
        %v829 = vsel %vm828, %v822, %v825
        %s830 = scalar_lea.vmem %s820, 7
        %v831 = vld [vmem:[%s830] ss:$0 sm:$0xff]
        %832 = vst [vmem:[%s820] sm:$0xff] %v829
        %v833 = vld [vmem:[%s821] ss:$0 sm:$0xff]
        %s834 = scalar_lea.vmem %s820, 1
        %835 = vst [vmem:[%s834] sm:$0x1] %v833
        %s836 = scalar_lea.vmem %s821, 1
        %v837 = vld [vmem:[%s836] sm:$0x7f]
        %v838 = vlaneseq
        %v839 = vshrl.u32 %v838, 7
        %vm840 = vcmp.eq.s32.totalorder %v839, 7
        %v841 = vsel %vm840, %v831, %v837
        %v842 = vld [vmem:[%s821] ss:$0 sm:$0xff]
        %843 = vst [vmem:[%s821] sm:$0xff] %v841
      $region101: #{custom-call.4} parent=93 // loop_footer
        %s404 = sadd.s32 1, %s400
      $region102: #{custom-call.4} parent=93 // loop_footer_branch
        %399 = sbr.rel target = $region98
      $region103: #{custom-call.4} parent=93 // loop_exit
        _
      %s844 = sadd.s32 %s302, 1
    $region94: #{custom-call.4} parent=1 // loop_footer
      _
    $region95: #{custom-call.4} parent=1 // loop_footer_branch
      %301 = sbr.rel target = $region91
    $region96: #{custom-call.4} parent=1 // loop_exit
      _
    %s847 = smov [#allocation12]
    %s848 = smov [#allocation4]
    %v849 = vlaneseq
    %v850 = vand.u32 %v849, 127
    %v851 = vmov %v850
    %v852 = vlaneseq
    %v853 = vshrl.u32 %v852, 7
    %v854 = vmov %v853
    %v855 = vld [vmem:[%s847] sm:$0xff]
    %vm858 = vcmp.eq.s32.totalorder %v854, %v851
    %v859 = vsel %vm858, %v855, 0.0
    %v860 = vrot.slane %v859, 4
    %v861 = vadd.f32 %v859, %v860
    %v862 = vrot.slane %v861, 2
    %v863 = vadd.f32 %v861, %v862
    %v864 = vrot.slane %v863, 1
    %v865 = vadd.f32 %v863, %v864
    %866 = vst [vmem:[%s848] sm:$0x1] %v865
    %s867 = smov [#allocation15]
    %s868 = smov [#allocation6]
    %v869 = vlaneseq
    %v870 = vand.u32 %v869, 127
    %v871 = vmov %v870
    %v872 = vlaneseq
    %v873 = vshrl.u32 %v872, 7
    %v874 = vmov %v873
    %v875 = vld [vmem:[%s867] sm:$0xff]
    %vm878 = vcmp.eq.s32.totalorder %v874, %v871
    %v879 = vsel %vm878, %v875, 0.0
    %v880 = vrot.slane %v879, 4
    %v881 = vadd.f32 %v879, %v880
    %v882 = vrot.slane %v881, 2
    %v883 = vadd.f32 %v881, %v882
    %v884 = vrot.slane %v883, 1
    %v885 = vadd.f32 %v883, %v884
    %886 = vst [vmem:[%s868] sm:$0x1] %v885
    %s888 = sshllo.u32 0, 1
    %v890 = vld [vmem:[#allocation4] sm:%s888]
    %s891 = sshllo.u32 0, 1
    %892 = vst [vmem:[#allocation5] sm:%s891] %v890
    %s894 = sshllo.u32 0, 1
    %v896 = vld [vmem:[#allocation6] sm:%s894]
    %s897 = sshllo.u32 0, 1
    %898 = vst [vmem:[#allocation7] sm:%s897] %v896
    // Predicated region
    $region104: #{custom-call.4} parent=1 // pred_check
      _
    $region105: #{custom-call.4} parent=1 // pred_check_branch
      %900 = sbr.rel (0) target = $region107
    $region106: #{custom-call.4} parent=1 // pred_region
      %p902 = scmp.gt.s32.totalorder 1, 0
      // Predicated region
      $region108: #{custom-call.4} parent=106 // pred_check
        %p903 = pneg %p902
      $region109: #{custom-call.4} parent=106 // pred_check_branch
        %905 = sbr.rel (%p903) target = $region111
      $region110: #{custom-call.4} parent=106 // pred_region
        %s906 = sshra.s32 1, 3
        %p907 = scmp.gt.s32.totalorder %s906, 0
        // Predicated region
        $region112: #{custom-call.4} parent=110 // pred_check
          %p908 = pneg %p907
        $region113: #{custom-call.4} parent=110 // pred_check_branch
          %910 = sbr.rel (%p908) target = $region115
        $region114: #{custom-call.4} parent=110 // pred_region
          %s911 = ssub.s32 %s906, 1
          %s912 = smul.u32 %s911, 128
          %s913 = sshra.s32 %s912, 4
          %s914 = scalar_lea.vmem [#allocation5], %s913
          %v915 = vld [vmem:[#allocation5] sm:$0xff]
          // While loop
          $region116: #{custom-call.4} parent=114 // loop_pre_header
            _
          $region117: #{custom-call.4} parent=114 // loop_header
            %s916 = sphi [#allocation5], %s938
            %s917 = sphi %s4, %s939
            %v918 = vphi %v915, %v940
            %s919 = ssub.s32 %s914, 64
            %p920 = scmp.gt.s32.totalorder %s916, %s919
          $region118: #{custom-call.4} parent=114 // loop_header_branch
            %922 = sbr.rel (%p920) target = $region122
          $region119: #{custom-call.4} parent=114 // loop_body
            %923 = vst [vmem:[%s917] sm:$0xff] %v918
            %v924 = vld [vmem:[%s916 + $0x8] sm:$0xff]
            %925 = vst [vmem:[%s917 + $0x8] sm:$0xff] %v924
            %v926 = vld [vmem:[%s916 + $0x10] sm:$0xff]
            %927 = vst [vmem:[%s917 + $0x10] sm:$0xff] %v926
            %v928 = vld [vmem:[%s916 + $0x18] sm:$0xff]
            %929 = vst [vmem:[%s917 + $0x18] sm:$0xff] %v928
            %v930 = vld [vmem:[%s916 + $0x20] sm:$0xff]
            %931 = vst [vmem:[%s917 + $0x20] sm:$0xff] %v930
            %v932 = vld [vmem:[%s916 + $0x28] sm:$0xff]
            %933 = vst [vmem:[%s917 + $0x28] sm:$0xff] %v932
            %v934 = vld [vmem:[%s916 + $0x30] sm:$0xff]
            %935 = vst [vmem:[%s917 + $0x30] sm:$0xff] %v934
            %v936 = vld [vmem:[%s916 + $0x38] sm:$0xff]
            %937 = vst [vmem:[%s917 + $0x38] sm:$0xff] %v936
          $region120: #{custom-call.4} parent=114 // loop_footer
            %s938 = scalar_lea.vmem %s916, 64
            %s939 = scalar_lea.vmem %s917, 64
            %v940 = vld [vmem:[%s916 + $0x40] sm:$0xff]
          $region121: #{custom-call.4} parent=114 // loop_footer_branch
            %941 = sbr.rel target = $region117
          $region122: #{custom-call.4} parent=114 // loop_exit
            _
          // While loop
          $region123: #{custom-call.4} parent=114 // loop_pre_header
            _
          $region124: #{custom-call.4} parent=114 // loop_header
            %s942 = sphi %s916, %s950
            %s943 = sphi %s917, %s951
            %v944 = vphi %v918, %v944
            %p945 = scmp.gt.s32.totalorder %s942, %s914
          $region125: #{custom-call.4} parent=114 // loop_header_branch
            %947 = sbr.rel (%p945) target = $region129
          $region126: #{custom-call.4} parent=114 // loop_body
            %v948 = vld [vmem:[%s942] sm:$0xff]
            %949 = vst [vmem:[%s943] sm:$0xff] %v948
          $region127: #{custom-call.4} parent=114 // loop_footer
            %s950 = scalar_lea.vmem %s942, 8
            %s951 = scalar_lea.vmem %s943, 8
          $region128: #{custom-call.4} parent=114 // loop_footer_branch
            %952 = sbr.rel target = $region124
          $region129: #{custom-call.4} parent=114 // loop_exit
            _
        $region115: #{custom-call.4} parent=110 // pred_fallthru
          _
        %s953 = sand.u32 1, 7
        %s954 = sshllo.u32 0, %s953
        %s955 = smul.u32 %s906, 128
        %s956 = sshra.s32 %s955, 4
        %s957 = scalar_lea.vmem %s4, %s956
        %s958 = smul.u32 %s906, 128
        %s959 = sshra.s32 %s958, 4
        %s960 = scalar_lea.vmem [#allocation5], %s959
        %v961 = vld [vmem:[%s960] sm:%s954]
        %962 = vst [vmem:[%s957] sm:%s954] %v961
      $region111: #{custom-call.4} parent=106 // pred_fallthru
        _
    $region107: #{custom-call.4} parent=1 // pred_fallthru
      _
    // Predicated region
    $region130: #{custom-call.4} parent=1 // pred_check
      _
    $region131: #{custom-call.4} parent=1 // pred_check_branch
      %964 = sbr.rel (0) target = $region133
    $region132: #{custom-call.4} parent=1 // pred_region
      %p966 = scmp.gt.s32.totalorder 1, 0
      // Predicated region
      $region134: #{custom-call.4} parent=132 // pred_check
        %p967 = pneg %p966
      $region135: #{custom-call.4} parent=132 // pred_check_branch
        %969 = sbr.rel (%p967) target = $region137
      $region136: #{custom-call.4} parent=132 // pred_region
        %s970 = sshra.s32 1, 3
        %p971 = scmp.gt.s32.totalorder %s970, 0
        // Predicated region
        $region138: #{custom-call.4} parent=136 // pred_check
          %p972 = pneg %p971
        $region139: #{custom-call.4} parent=136 // pred_check_branch
          %974 = sbr.rel (%p972) target = $region141
        $region140: #{custom-call.4} parent=136 // pred_region
          %s975 = ssub.s32 %s970, 1
          %s976 = smul.u32 %s975, 128
          %s977 = sshra.s32 %s976, 4
          %s978 = scalar_lea.vmem [#allocation7], %s977
          %v979 = vld [vmem:[#allocation7] sm:$0xff]
          // While loop
          $region142: #{custom-call.4} parent=140 // loop_pre_header
            _
          $region143: #{custom-call.4} parent=140 // loop_header
            %s980 = sphi [#allocation7], %s1002
            %s981 = sphi %s5, %s1003
            %v982 = vphi %v979, %v1004
            %s983 = ssub.s32 %s978, 64
            %p984 = scmp.gt.s32.totalorder %s980, %s983
          $region144: #{custom-call.4} parent=140 // loop_header_branch
            %986 = sbr.rel (%p984) target = $region148
          $region145: #{custom-call.4} parent=140 // loop_body
            %987 = vst [vmem:[%s981] sm:$0xff] %v982
            %v988 = vld [vmem:[%s980 + $0x8] sm:$0xff]
            %989 = vst [vmem:[%s981 + $0x8] sm:$0xff] %v988
            %v990 = vld [vmem:[%s980 + $0x10] sm:$0xff]
            %991 = vst [vmem:[%s981 + $0x10] sm:$0xff] %v990
            %v992 = vld [vmem:[%s980 + $0x18] sm:$0xff]
            %993 = vst [vmem:[%s981 + $0x18] sm:$0xff] %v992
            %v994 = vld [vmem:[%s980 + $0x20] sm:$0xff]
            %995 = vst [vmem:[%s981 + $0x20] sm:$0xff] %v994
            %v996 = vld [vmem:[%s980 + $0x28] sm:$0xff]
            %997 = vst [vmem:[%s981 + $0x28] sm:$0xff] %v996
            %v998 = vld [vmem:[%s980 + $0x30] sm:$0xff]
            %999 = vst [vmem:[%s981 + $0x30] sm:$0xff] %v998
            %v1000 = vld [vmem:[%s980 + $0x38] sm:$0xff]
            %1001 = vst [vmem:[%s981 + $0x38] sm:$0xff] %v1000
          $region146: #{custom-call.4} parent=140 // loop_footer
            %s1002 = scalar_lea.vmem %s980, 64
            %s1003 = scalar_lea.vmem %s981, 64
            %v1004 = vld [vmem:[%s980 + $0x40] sm:$0xff]
          $region147: #{custom-call.4} parent=140 // loop_footer_branch
            %1005 = sbr.rel target = $region143
          $region148: #{custom-call.4} parent=140 // loop_exit
            _
          // While loop
          $region149: #{custom-call.4} parent=140 // loop_pre_header
            _
          $region150: #{custom-call.4} parent=140 // loop_header
            %s1006 = sphi %s980, %s1014
            %s1007 = sphi %s981, %s1015
            %v1008 = vphi %v982, %v1008
            %p1009 = scmp.gt.s32.totalorder %s1006, %s978
          $region151: #{custom-call.4} parent=140 // loop_header_branch
            %1011 = sbr.rel (%p1009) target = $region155
          $region152: #{custom-call.4} parent=140 // loop_body
            %v1012 = vld [vmem:[%s1006] sm:$0xff]
            %1013 = vst [vmem:[%s1007] sm:$0xff] %v1012
          $region153: #{custom-call.4} parent=140 // loop_footer
            %s1014 = scalar_lea.vmem %s1006, 8
            %s1015 = scalar_lea.vmem %s1007, 8
          $region154: #{custom-call.4} parent=140 // loop_footer_branch
            %1016 = sbr.rel target = $region150
          $region155: #{custom-call.4} parent=140 // loop_exit
            _
        $region141: #{custom-call.4} parent=136 // pred_fallthru
          _
        %s1017 = sand.u32 1, 7
        %s1018 = sshllo.u32 0, %s1017
        %s1019 = smul.u32 %s970, 128
        %s1020 = sshra.s32 %s1019, 4
        %s1021 = scalar_lea.vmem %s5, %s1020
        %s1022 = smul.u32 %s970, 128
        %s1023 = sshra.s32 %s1022, 4
        %s1024 = scalar_lea.vmem [#allocation7], %s1023
        %v1025 = vld [vmem:[%s1024] sm:%s1018]
        %1026 = vst [vmem:[%s1021] sm:%s1018] %v1025
      $region137: #{custom-call.4} parent=132 // pred_fallthru
        _
    $region133: #{custom-call.4} parent=1 // pred_fallthru
      _
    %p1028 = scmp.gt.s32.totalorder 8, 0
    // Predicated region
    $region156: #{custom-call.4} parent=1 // pred_check
      %p1029 = pneg %p1028
    $region157: #{custom-call.4} parent=1 // pred_check_branch
      %1031 = sbr.rel (%p1029) target = $region159
    $region158: #{custom-call.4} parent=1 // pred_region
      %s1032 = sshra.s32 8, 3
      %p1033 = scmp.gt.s32.totalorder %s1032, 0
      // Predicated region
      $region160: #{custom-call.4} parent=158 // pred_check
        %p1034 = pneg %p1033
      $region161: #{custom-call.4} parent=158 // pred_check_branch
        %1036 = sbr.rel (%p1034) target = $region163
      $region162: #{custom-call.4} parent=158 // pred_region
        %s1037 = ssub.s32 %s1032, 1
        %s1038 = smul.u32 %s1037, 128
        %s1039 = sshra.s32 %s1038, 4
        %s1040 = scalar_lea.vmem [#allocation8], %s1039
        %v1041 = vld [vmem:[#allocation8] sm:$0xff]
        // While loop
        $region164: #{custom-call.4} parent=162 // loop_pre_header
          _
        $region165: #{custom-call.4} parent=162 // loop_header
          %s1042 = sphi [#allocation8], %s1064
          %s1043 = sphi %s6, %s1065
          %v1044 = vphi %v1041, %v1066
          %s1045 = ssub.s32 %s1040, 64
          %p1046 = scmp.gt.s32.totalorder %s1042, %s1045
        $region166: #{custom-call.4} parent=162 // loop_header_branch
          %1048 = sbr.rel (%p1046) target = $region170
        $region167: #{custom-call.4} parent=162 // loop_body
          %1049 = vst [vmem:[%s1043] sm:$0xff] %v1044
          %v1050 = vld [vmem:[%s1042 + $0x8] sm:$0xff]
          %1051 = vst [vmem:[%s1043 + $0x8] sm:$0xff] %v1050
          %v1052 = vld [vmem:[%s1042 + $0x10] sm:$0xff]
          %1053 = vst [vmem:[%s1043 + $0x10] sm:$0xff] %v1052
          %v1054 = vld [vmem:[%s1042 + $0x18] sm:$0xff]
          %1055 = vst [vmem:[%s1043 + $0x18] sm:$0xff] %v1054
          %v1056 = vld [vmem:[%s1042 + $0x20] sm:$0xff]
          %1057 = vst [vmem:[%s1043 + $0x20] sm:$0xff] %v1056
          %v1058 = vld [vmem:[%s1042 + $0x28] sm:$0xff]
          %1059 = vst [vmem:[%s1043 + $0x28] sm:$0xff] %v1058
          %v1060 = vld [vmem:[%s1042 + $0x30] sm:$0xff]
          %1061 = vst [vmem:[%s1043 + $0x30] sm:$0xff] %v1060
          %v1062 = vld [vmem:[%s1042 + $0x38] sm:$0xff]
          %1063 = vst [vmem:[%s1043 + $0x38] sm:$0xff] %v1062
        $region168: #{custom-call.4} parent=162 // loop_footer
          %s1064 = scalar_lea.vmem %s1042, 64
          %s1065 = scalar_lea.vmem %s1043, 64
          %v1066 = vld [vmem:[%s1042 + $0x40] sm:$0xff]
        $region169: #{custom-call.4} parent=162 // loop_footer_branch
          %1067 = sbr.rel target = $region165
        $region170: #{custom-call.4} parent=162 // loop_exit
          _
        // While loop
        $region171: #{custom-call.4} parent=162 // loop_pre_header
          _
        $region172: #{custom-call.4} parent=162 // loop_header
          %s1068 = sphi %s1042, %s1076
          %s1069 = sphi %s1043, %s1077
          %v1070 = vphi %v1044, %v1070
          %p1071 = scmp.gt.s32.totalorder %s1068, %s1040
        $region173: #{custom-call.4} parent=162 // loop_header_branch
          %1073 = sbr.rel (%p1071) target = $region177
        $region174: #{custom-call.4} parent=162 // loop_body
          %v1074 = vld [vmem:[%s1068] sm:$0xff]
          %1075 = vst [vmem:[%s1069] sm:$0xff] %v1074
        $region175: #{custom-call.4} parent=162 // loop_footer
          %s1076 = scalar_lea.vmem %s1068, 8
          %s1077 = scalar_lea.vmem %s1069, 8
        $region176: #{custom-call.4} parent=162 // loop_footer_branch
          %1078 = sbr.rel target = $region172
        $region177: #{custom-call.4} parent=162 // loop_exit
          _
      $region163: #{custom-call.4} parent=158 // pred_fallthru
        _
      %s1079 = sand.u32 8, 7
      %s1080 = sshllo.u32 0, %s1079
      %s1081 = smul.u32 %s1032, 128
      %s1082 = sshra.s32 %s1081, 4
      %s1083 = scalar_lea.vmem %s6, %s1082
      %s1084 = smul.u32 %s1032, 128
      %s1085 = sshra.s32 %s1084, 4
      %s1086 = scalar_lea.vmem [#allocation8], %s1085
      %v1087 = vld [vmem:[%s1086] sm:%s1080]
      %1088 = vst [vmem:[%s1083] sm:%s1080] %v1087
    $region159: #{custom-call.4} parent=1 // pred_fallthru
      _
    %p1090 = scmp.gt.s32.totalorder 8, 0
    // Predicated region
    $region178: #{custom-call.4} parent=1 // pred_check
      %p1091 = pneg %p1090
    $region179: #{custom-call.4} parent=1 // pred_check_branch
      %1093 = sbr.rel (%p1091) target = $region181
    $region180: #{custom-call.4} parent=1 // pred_region
      %s1094 = sshra.s32 8, 3
      %p1095 = scmp.gt.s32.totalorder %s1094, 0
      // Predicated region
      $region182: #{custom-call.4} parent=180 // pred_check
        %p1096 = pneg %p1095
      $region183: #{custom-call.4} parent=180 // pred_check_branch
        %1098 = sbr.rel (%p1096) target = $region185
      $region184: #{custom-call.4} parent=180 // pred_region
        %s1099 = ssub.s32 %s1094, 1
        %s1100 = smul.u32 %s1099, 128
        %s1101 = sshra.s32 %s1100, 4
        %s1102 = scalar_lea.vmem [#allocation9], %s1101
        %v1103 = vld [vmem:[#allocation9] sm:$0xff]
        // While loop
        $region186: #{custom-call.4} parent=184 // loop_pre_header
          _
        $region187: #{custom-call.4} parent=184 // loop_header
          %s1104 = sphi [#allocation9], %s1126
          %s1105 = sphi %s7, %s1127
          %v1106 = vphi %v1103, %v1128
          %s1107 = ssub.s32 %s1102, 64
          %p1108 = scmp.gt.s32.totalorder %s1104, %s1107
        $region188: #{custom-call.4} parent=184 // loop_header_branch
          %1110 = sbr.rel (%p1108) target = $region192
        $region189: #{custom-call.4} parent=184 // loop_body
          %1111 = vst [vmem:[%s1105] sm:$0xff] %v1106
          %v1112 = vld [vmem:[%s1104 + $0x8] sm:$0xff]
          %1113 = vst [vmem:[%s1105 + $0x8] sm:$0xff] %v1112
          %v1114 = vld [vmem:[%s1104 + $0x10] sm:$0xff]
          %1115 = vst [vmem:[%s1105 + $0x10] sm:$0xff] %v1114
          %v1116 = vld [vmem:[%s1104 + $0x18] sm:$0xff]
          %1117 = vst [vmem:[%s1105 + $0x18] sm:$0xff] %v1116
          %v1118 = vld [vmem:[%s1104 + $0x20] sm:$0xff]
          %1119 = vst [vmem:[%s1105 + $0x20] sm:$0xff] %v1118
          %v1120 = vld [vmem:[%s1104 + $0x28] sm:$0xff]
          %1121 = vst [vmem:[%s1105 + $0x28] sm:$0xff] %v1120
          %v1122 = vld [vmem:[%s1104 + $0x30] sm:$0xff]
          %1123 = vst [vmem:[%s1105 + $0x30] sm:$0xff] %v1122
          %v1124 = vld [vmem:[%s1104 + $0x38] sm:$0xff]
          %1125 = vst [vmem:[%s1105 + $0x38] sm:$0xff] %v1124
        $region190: #{custom-call.4} parent=184 // loop_footer
          %s1126 = scalar_lea.vmem %s1104, 64
          %s1127 = scalar_lea.vmem %s1105, 64
          %v1128 = vld [vmem:[%s1104 + $0x40] sm:$0xff]
        $region191: #{custom-call.4} parent=184 // loop_footer_branch
          %1129 = sbr.rel target = $region187
        $region192: #{custom-call.4} parent=184 // loop_exit
          _
        // While loop
        $region193: #{custom-call.4} parent=184 // loop_pre_header
          _
        $region194: #{custom-call.4} parent=184 // loop_header
          %s1130 = sphi %s1104, %s1138
          %s1131 = sphi %s1105, %s1139
          %v1132 = vphi %v1106, %v1132
          %p1133 = scmp.gt.s32.totalorder %s1130, %s1102
        $region195: #{custom-call.4} parent=184 // loop_header_branch
          %1135 = sbr.rel (%p1133) target = $region199
        $region196: #{custom-call.4} parent=184 // loop_body
          %v1136 = vld [vmem:[%s1130] sm:$0xff]
          %1137 = vst [vmem:[%s1131] sm:$0xff] %v1136
        $region197: #{custom-call.4} parent=184 // loop_footer
          %s1138 = scalar_lea.vmem %s1130, 8
          %s1139 = scalar_lea.vmem %s1131, 8
        $region198: #{custom-call.4} parent=184 // loop_footer_branch
          %1140 = sbr.rel target = $region194
        $region199: #{custom-call.4} parent=184 // loop_exit
          _
      $region185: #{custom-call.4} parent=180 // pred_fallthru
        _
      %s1141 = sand.u32 8, 7
      %s1142 = sshllo.u32 0, %s1141
      %s1143 = smul.u32 %s1094, 128
      %s1144 = sshra.s32 %s1143, 4
      %s1145 = scalar_lea.vmem %s7, %s1144
      %s1146 = smul.u32 %s1094, 128
      %s1147 = sshra.s32 %s1146, 4
      %s1148 = scalar_lea.vmem [#allocation9], %s1147
      %v1149 = vld [vmem:[%s1148] sm:%s1142]
      %1150 = vst [vmem:[%s1145] sm:%s1142] %v1149
    $region181: #{custom-call.4} parent=1 // pred_fallthru
      _
    %p1152 = scmp.gt.s32.totalorder 8, 0
    // Predicated region
    $region200: #{custom-call.4} parent=1 // pred_check
      %p1153 = pneg %p1152
    $region201: #{custom-call.4} parent=1 // pred_check_branch
      %1155 = sbr.rel (%p1153) target = $region203
    $region202: #{custom-call.4} parent=1 // pred_region
      %s1156 = sshra.s32 8, 3
      %p1157 = scmp.gt.s32.totalorder %s1156, 0
      // Predicated region
      $region204: #{custom-call.4} parent=202 // pred_check
        %p1158 = pneg %p1157
      $region205: #{custom-call.4} parent=202 // pred_check_branch
        %1160 = sbr.rel (%p1158) target = $region207
      $region206: #{custom-call.4} parent=202 // pred_region
        %s1161 = ssub.s32 %s1156, 1
        %s1162 = smul.u32 %s1161, 128
        %s1163 = sshra.s32 %s1162, 4
        %s1164 = scalar_lea.vmem [#allocation10], %s1163
        %v1165 = vld [vmem:[#allocation10] sm:$0xff]
        // While loop
        $region208: #{custom-call.4} parent=206 // loop_pre_header
          _
        $region209: #{custom-call.4} parent=206 // loop_header
          %s1166 = sphi [#allocation10], %s1188
          %s1167 = sphi %s8, %s1189
          %v1168 = vphi %v1165, %v1190
          %s1169 = ssub.s32 %s1164, 64
          %p1170 = scmp.gt.s32.totalorder %s1166, %s1169
        $region210: #{custom-call.4} parent=206 // loop_header_branch
          %1172 = sbr.rel (%p1170) target = $region214
        $region211: #{custom-call.4} parent=206 // loop_body
          %1173 = vst [vmem:[%s1167] sm:$0xff] %v1168
          %v1174 = vld [vmem:[%s1166 + $0x8] sm:$0xff]
          %1175 = vst [vmem:[%s1167 + $0x8] sm:$0xff] %v1174
          %v1176 = vld [vmem:[%s1166 + $0x10] sm:$0xff]
          %1177 = vst [vmem:[%s1167 + $0x10] sm:$0xff] %v1176
          %v1178 = vld [vmem:[%s1166 + $0x18] sm:$0xff]
          %1179 = vst [vmem:[%s1167 + $0x18] sm:$0xff] %v1178
          %v1180 = vld [vmem:[%s1166 + $0x20] sm:$0xff]
          %1181 = vst [vmem:[%s1167 + $0x20] sm:$0xff] %v1180
          %v1182 = vld [vmem:[%s1166 + $0x28] sm:$0xff]
          %1183 = vst [vmem:[%s1167 + $0x28] sm:$0xff] %v1182
          %v1184 = vld [vmem:[%s1166 + $0x30] sm:$0xff]
          %1185 = vst [vmem:[%s1167 + $0x30] sm:$0xff] %v1184
          %v1186 = vld [vmem:[%s1166 + $0x38] sm:$0xff]
          %1187 = vst [vmem:[%s1167 + $0x38] sm:$0xff] %v1186
        $region212: #{custom-call.4} parent=206 // loop_footer
          %s1188 = scalar_lea.vmem %s1166, 64
          %s1189 = scalar_lea.vmem %s1167, 64
          %v1190 = vld [vmem:[%s1166 + $0x40] sm:$0xff]
        $region213: #{custom-call.4} parent=206 // loop_footer_branch
          %1191 = sbr.rel target = $region209
        $region214: #{custom-call.4} parent=206 // loop_exit
          _
        // While loop
        $region215: #{custom-call.4} parent=206 // loop_pre_header
          _
        $region216: #{custom-call.4} parent=206 // loop_header
          %s1192 = sphi %s1166, %s1200
          %s1193 = sphi %s1167, %s1201
          %v1194 = vphi %v1168, %v1194
          %p1195 = scmp.gt.s32.totalorder %s1192, %s1164
        $region217: #{custom-call.4} parent=206 // loop_header_branch
          %1197 = sbr.rel (%p1195) target = $region221
        $region218: #{custom-call.4} parent=206 // loop_body
          %v1198 = vld [vmem:[%s1192] sm:$0xff]
          %1199 = vst [vmem:[%s1193] sm:$0xff] %v1198
        $region219: #{custom-call.4} parent=206 // loop_footer
          %s1200 = scalar_lea.vmem %s1192, 8
          %s1201 = scalar_lea.vmem %s1193, 8
        $region220: #{custom-call.4} parent=206 // loop_footer_branch
          %1202 = sbr.rel target = $region216
        $region221: #{custom-call.4} parent=206 // loop_exit
          _
      $region207: #{custom-call.4} parent=202 // pred_fallthru
        _
      %s1203 = sand.u32 8, 7
      %s1204 = sshllo.u32 0, %s1203
      %s1205 = smul.u32 %s1156, 128
      %s1206 = sshra.s32 %s1205, 4
      %s1207 = scalar_lea.vmem %s8, %s1206
      %s1208 = smul.u32 %s1156, 128
      %s1209 = sshra.s32 %s1208, 4
      %s1210 = scalar_lea.vmem [#allocation10], %s1209
      %v1211 = vld [vmem:[%s1210] sm:%s1204]
      %1212 = vst [vmem:[%s1207] sm:%s1204] %v1211
    $region203: #{custom-call.4} parent=1 // pred_fallthru
      _
    %p1214 = scmp.gt.s32.totalorder 8, 0
    // Predicated region
    $region222: #{custom-call.4} parent=1 // pred_check
      %p1215 = pneg %p1214
    $region223: #{custom-call.4} parent=1 // pred_check_branch
      %1217 = sbr.rel (%p1215) target = $region225
    $region224: #{custom-call.4} parent=1 // pred_region
      %s1218 = sshra.s32 8, 3
      %p1219 = scmp.gt.s32.totalorder %s1218, 0
      // Predicated region
      $region226: #{custom-call.4} parent=224 // pred_check
        %p1220 = pneg %p1219
      $region227: #{custom-call.4} parent=224 // pred_check_branch
        %1222 = sbr.rel (%p1220) target = $region229
      $region228: #{custom-call.4} parent=224 // pred_region
        %s1223 = ssub.s32 %s1218, 1
        %s1224 = smul.u32 %s1223, 128
        %s1225 = sshra.s32 %s1224, 4
        %s1226 = scalar_lea.vmem [#allocation11], %s1225
        %v1227 = vld [vmem:[#allocation11] sm:$0xff]
        // While loop
        $region230: #{custom-call.4} parent=228 // loop_pre_header
          _
        $region231: #{custom-call.4} parent=228 // loop_header
          %s1228 = sphi [#allocation11], %s1250
          %s1229 = sphi %s9, %s1251
          %v1230 = vphi %v1227, %v1252
          %s1231 = ssub.s32 %s1226, 64
          %p1232 = scmp.gt.s32.totalorder %s1228, %s1231
        $region232: #{custom-call.4} parent=228 // loop_header_branch
          %1234 = sbr.rel (%p1232) target = $region236
        $region233: #{custom-call.4} parent=228 // loop_body
          %1235 = vst [vmem:[%s1229] sm:$0xff] %v1230
          %v1236 = vld [vmem:[%s1228 + $0x8] sm:$0xff]
          %1237 = vst [vmem:[%s1229 + $0x8] sm:$0xff] %v1236
          %v1238 = vld [vmem:[%s1228 + $0x10] sm:$0xff]
          %1239 = vst [vmem:[%s1229 + $0x10] sm:$0xff] %v1238
          %v1240 = vld [vmem:[%s1228 + $0x18] sm:$0xff]
          %1241 = vst [vmem:[%s1229 + $0x18] sm:$0xff] %v1240
          %v1242 = vld [vmem:[%s1228 + $0x20] sm:$0xff]
          %1243 = vst [vmem:[%s1229 + $0x20] sm:$0xff] %v1242
          %v1244 = vld [vmem:[%s1228 + $0x28] sm:$0xff]
          %1245 = vst [vmem:[%s1229 + $0x28] sm:$0xff] %v1244
          %v1246 = vld [vmem:[%s1228 + $0x30] sm:$0xff]
          %1247 = vst [vmem:[%s1229 + $0x30] sm:$0xff] %v1246
          %v1248 = vld [vmem:[%s1228 + $0x38] sm:$0xff]
          %1249 = vst [vmem:[%s1229 + $0x38] sm:$0xff] %v1248
        $region234: #{custom-call.4} parent=228 // loop_footer
          %s1250 = scalar_lea.vmem %s1228, 64
          %s1251 = scalar_lea.vmem %s1229, 64
          %v1252 = vld [vmem:[%s1228 + $0x40] sm:$0xff]
        $region235: #{custom-call.4} parent=228 // loop_footer_branch
          %1253 = sbr.rel target = $region231
        $region236: #{custom-call.4} parent=228 // loop_exit
          _
        // While loop
        $region237: #{custom-call.4} parent=228 // loop_pre_header
          _
        $region238: #{custom-call.4} parent=228 // loop_header
          %s1254 = sphi %s1228, %s1262
          %s1255 = sphi %s1229, %s1263
          %v1256 = vphi %v1230, %v1256
          %p1257 = scmp.gt.s32.totalorder %s1254, %s1226
        $region239: #{custom-call.4} parent=228 // loop_header_branch
          %1259 = sbr.rel (%p1257) target = $region243
        $region240: #{custom-call.4} parent=228 // loop_body
          %v1260 = vld [vmem:[%s1254] sm:$0xff]
          %1261 = vst [vmem:[%s1255] sm:$0xff] %v1260
        $region241: #{custom-call.4} parent=228 // loop_footer
          %s1262 = scalar_lea.vmem %s1254, 8
          %s1263 = scalar_lea.vmem %s1255, 8
        $region242: #{custom-call.4} parent=228 // loop_footer_branch
          %1264 = sbr.rel target = $region238
        $region243: #{custom-call.4} parent=228 // loop_exit
          _
      $region229: #{custom-call.4} parent=224 // pred_fallthru
        _
      %s1265 = sand.u32 8, 7
      %s1266 = sshllo.u32 0, %s1265
      %s1267 = smul.u32 %s1218, 128
      %s1268 = sshra.s32 %s1267, 4
      %s1269 = scalar_lea.vmem %s9, %s1268
      %s1270 = smul.u32 %s1218, 128
      %s1271 = sshra.s32 %s1270, 4
      %s1272 = scalar_lea.vmem [#allocation11], %s1271
      %v1273 = vld [vmem:[%s1272] sm:%s1266]
      %1274 = vst [vmem:[%s1269] sm:%s1266] %v1273
    $region225: #{custom-call.4} parent=1 // pred_fallthru
      _
    // Predicated region
    $region244: #{custom-call.4} parent=1 // pred_check
      _
    $region245: #{custom-call.4} parent=1 // pred_check_branch
      %1276 = sbr.rel (0) target = $region247
    $region246: #{custom-call.4} parent=1 // pred_region
      _
    $region247: #{custom-call.4} parent=1 // pred_fallthru
      _
    // Predicated region
    $region248: #{custom-call.4} parent=1 // pred_check
      _
    $region249: #{custom-call.4} parent=1 // pred_check_branch
      %1278 = sbr.rel (0) target = $region251
    $region250: #{custom-call.4} parent=1 // pred_region
      _
    $region251: #{custom-call.4} parent=1 // pred_fallthru
      _

// kernel: tangent_space_forward.2
$region0: #{tangent_space_forward.2}
  #allocation0 [shape = 'u32[]', space=smem, size = 0x4, offset = 0x4, fixed_abs, tag = 'smem constant byte address 0x4 - core index']
  #allocation1 [shape = 'u32[144,128]{1,0:T(1,128)}', space=vmem, size = 0x12000, scoped, tag = 'internal scratch']
  %s0 = inlined_call_operand.vmem [shape: f32[32,256], index: 0, kind: input, shape index: {}]
  %s1 = inlined_call_operand.vmem [shape: f32[256,256], index: 1, kind: input, shape index: {}]
  %s2 = inlined_call_operand.vmem [shape: f32[1,256], index: 2, kind: input, shape index: {}]
  %s3 = inlined_call_operand.vmem [shape: f32[32,256], index: 3, kind: output, shape index: {}]
  %s4 = sld [smem:[#allocation0]]
  $region45: #{tangent_space_forward.2} parent=0
    _
  %s6 = ssub.s32 1, %s4
  %s7 = scalar_select 0, %s6, %s4
  loop: start=0, step=1, limit=4
  $region2: #{tangent_space_forward.2} parent=0 // loop_pre_header
    _
  $region3: #{tangent_space_forward.2} parent=0 // loop_header
    %s9 = sphi 0, %s13
    %p10 = scmp.ge.s32.totalorder %s9, 4
    %s19 = sphi 0, %s21
    %s22 = sphi 0, %s19
    %s23 = sphi 0, %s22
    %s39 = sphi 0, %s23
    %s43 = sphi 0, %s43
    %s45 = sphi 0, %s43
    %s46 = sphi 0, %s45
    %s60 = sphi 0, %s46
    %s64 = sphi 0, %s64
    %s66 = sphi 0, %s64
    %s67 = sphi 0, %s66
    %s81 = sphi 0, %s67
    %s87 = sphi 0, %s89
    %s90 = sphi 0, %s87
    %s91 = sphi 0, %s90
    %s107 = sphi 0, %s91
  $region4: #{tangent_space_forward.2} parent=0 // loop_header_branch
    %12 = sbr.rel (%p10) target = $region8
  $region5: #{tangent_space_forward.2} parent=0 // loop_body
    %s14 = ssub.s32 %s9, 1
    %s15 = ssub.s32 %s9, 2
    %s16 = sadd.s32 %s9, 1
    %s17 = ssub.s32 %s9, %s16
    %p18 = scmp.eq.s32.totalorder %s17, 0
    %s20 = sadd.s32 %s19, 1
    %s21 = scalar_select %p18, %s19, %s20
    %p24 = pneg %p18
    %p25 = scmp.eq.s32.totalorder %s9, 1
    %p26 = por %p24, %p25
    %p27 = scmp.ne.s32.totalorder %s19, %s22
    %p28 = scmp.eq.s32.totalorder %s9, 0
    %p29 = por %p27, %p28
    %p30 = scmp.ne.s32.totalorder %s19, %s22
    %p31 = scmp.eq.s32.totalorder %s14, 1
    %p32 = por %p30, %p31
    %p33 = scmp.ne.s32.totalorder %s22, %s23
    %p34 = scmp.eq.s32.totalorder %s14, 0
    %p35 = por %p33, %p34
    %p36 = scmp.ne.s32.totalorder %s22, %s23
    %p37 = scmp.eq.s32.totalorder %s15, 1
    %p38 = por %p36, %p37
    %p40 = scmp.ne.s32.totalorder %s23, %s39
    %p41 = scmp.eq.s32.totalorder %s15, 0
    %p42 = por %p40, %p41
    %s44 = sadd.s32 %s43, 1
    %p47 = scmp.eq.s32.totalorder %s9, 1
    %p48 = scmp.ne.s32.totalorder %s43, %s45
    %p49 = scmp.eq.s32.totalorder %s9, 0
    %p50 = por %p48, %p49
    %p51 = scmp.ne.s32.totalorder %s43, %s45
    %p52 = scmp.eq.s32.totalorder %s14, 1
    %p53 = por %p51, %p52
    %p54 = scmp.ne.s32.totalorder %s45, %s46
    %p55 = scmp.eq.s32.totalorder %s14, 0
    %p56 = por %p54, %p55
    %p57 = scmp.ne.s32.totalorder %s45, %s46
    %p58 = scmp.eq.s32.totalorder %s15, 1
    %p59 = por %p57, %p58
    %p61 = scmp.ne.s32.totalorder %s46, %s60
    %p62 = scmp.eq.s32.totalorder %s15, 0
    %p63 = por %p61, %p62
    %s65 = sadd.s32 %s64, 1
    %p68 = scmp.eq.s32.totalorder %s9, 1
    %p69 = scmp.ne.s32.totalorder %s64, %s66
    %p70 = scmp.eq.s32.totalorder %s9, 0
    %p71 = por %p69, %p70
    %p72 = scmp.ne.s32.totalorder %s64, %s66
    %p73 = scmp.eq.s32.totalorder %s14, 1
    %p74 = por %p72, %p73
    %p75 = scmp.ne.s32.totalorder %s66, %s67
    %p76 = scmp.eq.s32.totalorder %s14, 0
    %p77 = por %p75, %p76
    %p78 = scmp.ne.s32.totalorder %s66, %s67
    %p79 = scmp.eq.s32.totalorder %s15, 1
    %p80 = por %p78, %p79
    %p82 = scmp.ne.s32.totalorder %s67, %s81
    %p83 = scmp.eq.s32.totalorder %s15, 0
    %p84 = por %p82, %p83
    %s85 = ssub.s32 %s9, %s16
    %p86 = scmp.eq.s32.totalorder %s85, 0
    %s88 = sadd.s32 %s87, 1
    %s89 = scalar_select %p86, %s87, %s88
    %p92 = pneg %p86
    %p93 = scmp.eq.s32.totalorder %s9, 1
    %p94 = por %p92, %p93
    %p95 = scmp.ne.s32.totalorder %s87, %s90
    %p96 = scmp.eq.s32.totalorder %s9, 0
    %p97 = por %p95, %p96
    %p98 = scmp.ne.s32.totalorder %s87, %s90
    %p99 = scmp.eq.s32.totalorder %s14, 1
    %p100 = por %p98, %p99
    %p101 = scmp.ne.s32.totalorder %s90, %s91
    %p102 = scmp.eq.s32.totalorder %s14, 0
    %p103 = por %p101, %p102
    %p104 = scmp.ne.s32.totalorder %s90, %s91
    %p105 = scmp.eq.s32.totalorder %s15, 1
    %p106 = por %p104, %p105
    %p108 = scmp.ne.s32.totalorder %s91, %s107
    %p109 = scmp.eq.s32.totalorder %s15, 0
    %p110 = por %p108, %p109
    %p111 = scmp.le.s32.totalorder 1, %s9
    %p112 = scmp.lt.s32.totalorder %s9, 3
    %p113 = pnand %p111, %p112
    %p114 = pneg %p113
    // Predicated region
    $region9: #{tangent_space_forward.2} parent=5 // pred_check
      _
    $region10: #{tangent_space_forward.2} parent=5 // pred_check_branch
      %116 = sbr.rel (%p113) target = $region12
    $region11: #{tangent_space_forward.2} parent=5 // pred_region
      %s117 = ssub.s32 %s9, 1
      // Predicated region
      $region13: #{tangent_space_forward.2} parent=11 // pred_check
        %p118 = pneg %p56
      $region14: #{tangent_space_forward.2} parent=11 // pred_check_branch
        %120 = sbr.rel (%p118) target = $region16
      $region15: #{tangent_space_forward.2} parent=11 // pred_region
        _
      $region16: #{tangent_space_forward.2} parent=11 // pred_fallthru
        _
      // Predicated region
      $region17: #{tangent_space_forward.2} parent=11 // pred_check
        %p121 = pneg %p77
      $region18: #{tangent_space_forward.2} parent=11 // pred_check_branch
        %123 = sbr.rel (%p121) target = $region20
      $region19: #{tangent_space_forward.2} parent=11 // pred_region
        _
      $region20: #{tangent_space_forward.2} parent=11 // pred_fallthru
        _
    $region12: #{tangent_space_forward.2} parent=5 // pred_fallthru
      _
    %p124 = scmp.lt.s32.totalorder %s9, 2
    // Predicated region
    $region21: #{tangent_space_forward.2} parent=5 // pred_check
      %p125 = pneg %p124
    $region22: #{tangent_space_forward.2} parent=5 // pred_check_branch
      %127 = sbr.rel (%p125) target = $region24
    $region23: #{tangent_space_forward.2} parent=5 // pred_region
      // Predicated region
      $region25: #{tangent_space_forward.2} parent=23 // pred_check
        %p128 = pneg %p29
      $region26: #{tangent_space_forward.2} parent=23 // pred_check_branch
        %130 = sbr.rel (%p128) target = $region28
      $region27: #{tangent_space_forward.2} parent=23 // pred_region
        %s131 = smul.u32 2, %s9
        %p132 = scmp.lt.s32.totalorder %s131, 3
        %s133 = scalar_select %p132, %s131, 3
        %s134 = smul.addr %s133, 2
        %s135 = smul.addr %s134, 8
        %s136 = scalar_lea.vmem %s0, %s135
        %s137 = smul.u32 2, %s9
      $region28: #{tangent_space_forward.2} parent=23 // pred_fallthru
        _
    $region24: #{tangent_space_forward.2} parent=5 // pred_fallthru
      _
    %p138 = scmp.le.s32.totalorder 1, %s9
    %p139 = scmp.lt.s32.totalorder %s9, 3
    %p140 = pnand %p138, %p139
    %p141 = pneg %p140
    // Predicated region
    $region29: #{tangent_space_forward.2} parent=5 // pred_check
      _
    $region30: #{tangent_space_forward.2} parent=5 // pred_check_branch
      %143 = sbr.rel (%p140) target = $region32
    $region31: #{tangent_space_forward.2} parent=5 // pred_region
      %s144 = ssub.s32 %s9, 1
      %s145 = smul.u32 2, %s14
      %p146 = scmp.lt.s32.totalorder %s145, 3
      %s147 = scalar_select %p146, %s145, 3
      %s148 = smul.addr %s147, 2
      %s149 = smul.addr %s148, 8
      %s150 = scalar_lea.vmem %s0, %s149
      %p151 = pneg %p35
      %p152 = pneg %p32
      %p153 = pneg %p56
      %p154 = pneg %p53
      %p155 = pneg %p77
      %p156 = pneg %p74
      %p157 = pneg %p103
      %p158 = pneg %p100
      %s159 = smul.u32 2, %s14
      %p160 = scmp.lt.s32.totalorder %s159, 3
      %s161 = scalar_select %p160, %s159, 3
      %s162 = smul.addr %s161, 2
      %s163 = smul.addr %s162, 8
      %s164 = scalar_lea.vmem %s3, %s163
      %s165 = smul.u32 2, %s14
      %p166 = scmp.lt.s32.totalorder %s165, 3
      %s167 = scalar_select %p166, %s165, 3
      %s168 = smul.addr %s167, 2
      %s169 = smul.addr %s168, 8
      %s170 = scalar_lea.vmem %s0, %s169
      %s171 = smul.u32 2, %s14
      %s172 = smul.u32 2, %s14
      %p173 = scmp.lt.s32.totalorder %s172, 3
      %s174 = scalar_select %p173, %s172, 3
      %s175 = smul.addr %s174, 2
      %s176 = smul.addr %s175, 8
      %s177 = scalar_lea.vmem %s3, %s176
      %s178 = smul.u32 2, %s14
      %v179 = vld [vmem:[%s170] sm:$0xff]
      %v180 = vld [vmem:[%s170 + $0x8] sm:$0xff]
      %v181 = vld [vmem:[%s170 + $0x10] sm:$0xff]
      %v182 = vld [vmem:[%s170 + $0x18] sm:$0xff]
      %v183 = vld [vmem:[%s1] sm:$0xff]
      %v184 = vld [vmem:[%s1 + $0x8] sm:$0xff]
      %v185 = vld [vmem:[%s1 + $0x10] sm:$0xff]
      %v186 = vld [vmem:[%s1 + $0x18] sm:$0xff]
      %v187 = vld [vmem:[%s1 + $0x20] sm:$0xff]
      %v188 = vld [vmem:[%s1 + $0x28] sm:$0xff]
      %v189 = vld [vmem:[%s1 + $0x30] sm:$0xff]
      %v190 = vld [vmem:[%s1 + $0x38] sm:$0xff]
      %v191 = vld [vmem:[%s1 + $0x40] sm:$0xff]
      %v192 = vld [vmem:[%s1 + $0x48] sm:$0xff]
      %v193 = vld [vmem:[%s1 + $0x50] sm:$0xff]
      %v194 = vld [vmem:[%s1 + $0x58] sm:$0xff]
      %v195 = vld [vmem:[%s1 + $0x60] sm:$0xff]
      %v196 = vld [vmem:[%s1 + $0x68] sm:$0xff]
      %v197 = vld [vmem:[%s1 + $0x70] sm:$0xff]
      %v198 = vld [vmem:[%s1 + $0x78] sm:$0xff]
      %v199 = vld [vmem:[%s1 + $0x80] sm:$0xff]
      %v200 = vld [vmem:[%s1 + $0x88] sm:$0xff]
      %v201 = vld [vmem:[%s1 + $0x90] sm:$0xff]
      %v202 = vld [vmem:[%s1 + $0x98] sm:$0xff]
      %v203 = vld [vmem:[%s1 + $0xa0] sm:$0xff]
      %v204 = vld [vmem:[%s1 + $0xa8] sm:$0xff]
      %v205 = vld [vmem:[%s1 + $0xb0] sm:$0xff]
      %v206 = vld [vmem:[%s1 + $0xb8] sm:$0xff]
      %v207 = vld [vmem:[%s1 + $0xc0] sm:$0xff]
      %v208 = vld [vmem:[%s1 + $0xc8] sm:$0xff]
      %v209 = vld [vmem:[%s1 + $0xd0] sm:$0xff]
      %v210 = vld [vmem:[%s1 + $0xd8] sm:$0xff]
      %v211 = vld [vmem:[%s1 + $0xe0] sm:$0xff]
      %v212 = vld [vmem:[%s1 + $0xe8] sm:$0xff]
      %v213 = vld [vmem:[%s1 + $0xf0] sm:$0xff]
      %v214 = vld [vmem:[%s1 + $0xf8] sm:$0xff]
      %v215 = vld [vmem:[%s1 + $0x100] sm:$0xff]
      %v216 = vld [vmem:[%s1 + $0x108] sm:$0xff]
      %v217 = vld [vmem:[%s1 + $0x110] sm:$0xff]
      %v218 = vld [vmem:[%s1 + $0x118] sm:$0xff]
      %v219 = vld [vmem:[%s1 + $0x120] sm:$0xff]
      %v220 = vld [vmem:[%s1 + $0x128] sm:$0xff]
      %v221 = vld [vmem:[%s1 + $0x130] sm:$0xff]
      %v222 = vld [vmem:[%s1 + $0x138] sm:$0xff]
      %v223 = vld [vmem:[%s1 + $0x140] sm:$0xff]
      %v224 = vld [vmem:[%s1 + $0x148] sm:$0xff]
      %v225 = vld [vmem:[%s1 + $0x150] sm:$0xff]
      %v226 = vld [vmem:[%s1 + $0x158] sm:$0xff]
      %v227 = vld [vmem:[%s1 + $0x160] sm:$0xff]
      %v228 = vld [vmem:[%s1 + $0x168] sm:$0xff]
      %v229 = vld [vmem:[%s1 + $0x170] sm:$0xff]
      %v230 = vld [vmem:[%s1 + $0x178] sm:$0xff]
      %v231 = vld [vmem:[%s1 + $0x180] sm:$0xff]
      %v232 = vld [vmem:[%s1 + $0x188] sm:$0xff]
      %v233 = vld [vmem:[%s1 + $0x190] sm:$0xff]
      %v234 = vld [vmem:[%s1 + $0x198] sm:$0xff]
      %v235 = vld [vmem:[%s1 + $0x1a0] sm:$0xff]
      %v236 = vld [vmem:[%s1 + $0x1a8] sm:$0xff]
      %v237 = vld [vmem:[%s1 + $0x1b0] sm:$0xff]
      %v238 = vld [vmem:[%s1 + $0x1b8] sm:$0xff]
      %v239 = vld [vmem:[%s1 + $0x1c0] sm:$0xff]
      %v240 = vld [vmem:[%s1 + $0x1c8] sm:$0xff]
      %v241 = vld [vmem:[%s1 + $0x1d0] sm:$0xff]
      %v242 = vld [vmem:[%s1 + $0x1d8] sm:$0xff]
      %v243 = vld [vmem:[%s1 + $0x1e0] sm:$0xff]
      %v244 = vld [vmem:[%s1 + $0x1e8] sm:$0xff]
      %v245 = vld [vmem:[%s1 + $0x1f0] sm:$0xff]
      %v246 = vld [vmem:[%s1 + $0x1f8] sm:$0xff]
      %v247 = vld [vmem:[%s2] sm:$0x3]
      %v249 = vlaneseq
      %v250 = vshrl.u32 %v249, 7
      %v251 = vsub.s32 0, %v250
      %v252 = vrot.slane %v247, %v251
      %v253 = vlaneseq
      %v254 = vshrl.u32 %v253, 7
      %v255 = vsub.s32 1, %v254
      %v256 = vrot.slane %v247, %v255
      %259 = vmatprep.subr.mxu0 %v184
      %260 = vmatpush1.msra.mxu0 %v183
      %261 = vmatprep.subr.mxu0 %v186
      %262 = vmatpush1.msra.mxu0 %v185
      %263 = vmatprep.subr.mxu0 %v188
      %264 = vmatpush1.msra.mxu0 %v187
      %265 = vmatprep.subr.mxu0 %v190
      %266 = vmatpush1.msra.mxu0 %v189
      %267 = vmatprep.subr.mxu0 %v192
      %268 = vmatpush1.msra.mxu0 %v191
      %269 = vmatprep.subr.mxu0 %v194
      %270 = vmatpush1.msra.mxu0 %v193
      %271 = vmatprep.subr.mxu0 %v196
      %272 = vmatpush1.msra.mxu0 %v195
      %273 = vmatprep.subr.mxu0 %v198
      %274 = vmatpush1.msra.mxu0 %v197
      %275 = vmatprep.subr.mxu0 %v200
      %276 = vmatpush1.msra.mxu0 %v199
      %277 = vmatprep.subr.mxu0 %v202
      %278 = vmatpush1.msra.mxu0 %v201
      %279 = vmatprep.subr.mxu0 %v204
      %280 = vmatpush1.msra.mxu0 %v203
      %281 = vmatprep.subr.mxu0 %v206
      %282 = vmatpush1.msra.mxu0 %v205
      %283 = vmatprep.subr.mxu0 %v208
      %284 = vmatpush1.msra.mxu0 %v207
      %285 = vmatprep.subr.mxu0 %v210
      %286 = vmatpush1.msra.mxu0 %v209
      %287 = vmatprep.subr.mxu0 %v212
      %288 = vmatpush1.msra.mxu0 %v211
      %289 = vmatprep.subr.mxu0 %v214
      %290 = vmatpush1.msra.mxu0 %v213
      %291 = vmatprep.subr.mxu0 %v216
      %292 = vmatpush1.msra.mxu0 %v215
      %293 = vmatprep.subr.mxu0 %v218
      %294 = vmatpush1.msra.mxu0 %v217
      %295 = vmatprep.subr.mxu0 %v220
      %296 = vmatpush1.msra.mxu0 %v219
      %297 = vmatprep.subr.mxu0 %v222
      %298 = vmatpush1.msra.mxu0 %v221
      %299 = vmatprep.subr.mxu0 %v224
      %300 = vmatpush1.msra.mxu0 %v223
      %301 = vmatprep.subr.mxu0 %v226
      %302 = vmatpush1.msra.mxu0 %v225
      %303 = vmatprep.subr.mxu0 %v228
      %304 = vmatpush1.msra.mxu0 %v227
      %305 = vmatprep.subr.mxu0 %v230
      %306 = vmatpush1.msra.mxu0 %v229
      %307 = vmatprep.subr.mxu0 %v232
      %308 = vmatpush1.msra.mxu0 %v231
      %309 = vmatprep.subr.mxu0 %v234
      %310 = vmatpush1.msra.mxu0 %v233
      %311 = vmatprep.subr.mxu0 %v236
      %312 = vmatpush1.msra.mxu0 %v235
      %313 = vmatprep.subr.mxu0 %v238
      %314 = vmatpush1.msra.mxu0 %v237
      %315 = vmatprep.subr.mxu0 %v240
      %316 = vmatpush1.msra.mxu0 %v239
      %317 = vmatprep.subr.mxu0 %v242
      %318 = vmatpush1.msra.mxu0 %v241
      %319 = vmatprep.subr.mxu0 %v244
      %320 = vmatpush1.msra.mxu0 %v243
      %321 = vmatprep.subr.mxu0 %v246
      %322 = vmatpush1.msra.mxu0 %v245
      %323 = vmatprep.mubr.f32.mxu0 %v180
      %324 = vmatmul.mubr.f32.gmra.mrb[0].mxu0 %v179
      %v325 = vpop.f32.mrb[0].mxu0
      %v326 = vadd.f32 %v252, %v325
      %v327 = vpop.f32.mrb[0].mxu0
      %v328 = vadd.f32 %v256, %v327
      %329 = vmatprep.mubr.f32.mxu0 %v182
      %330 = vmatmul.mubr.f32.gmra.mrb[0].mxu0 %v181
      %v331 = vpop.f32.mrb[0].mxu0
      %v332 = vadd.f32 %v252, %v331
      %v333 = vpop.f32.mrb[0].mxu0
      %v334 = vadd.f32 %v256, %v333
      %335 = vdwg.mxu0
      %336 = vst [vmem:[%s177] sm:$0xff] %v326
      %337 = vst [vmem:[%s177 + $0x8] sm:$0xff] %v328
      %338 = vst [vmem:[%s177 + $0x10] sm:$0xff] %v332
      %339 = vst [vmem:[%s177 + $0x18] sm:$0xff] %v334
      %s340 = smul.u32 2, %s14
      %p341 = scmp.lt.s32.totalorder %s340, 3
      %s342 = scalar_select %p341, %s340, 3
      %s343 = smul.addr %s342, 2
      %s344 = smul.addr %s343, 8
      %s345 = scalar_lea.vmem %s3, %s344
      // Predicated region
      $region33: #{tangent_space_forward.2} parent=31 // pred_check
        %p346 = pneg %p100
      $region34: #{tangent_space_forward.2} parent=31 // pred_check_branch
        %348 = sbr.rel (%p346) target = $region36
      $region35: #{tangent_space_forward.2} parent=31 // pred_region
        %s349 = smul.u32 2, %s14
      $region36: #{tangent_space_forward.2} parent=31 // pred_fallthru
        _
    $region32: #{tangent_space_forward.2} parent=5 // pred_fallthru
      _
    %p350 = scmp.le.s32.totalorder 2, %s9
    // Predicated region
    $region37: #{tangent_space_forward.2} parent=5 // pred_check
      %p351 = pneg %p350
    $region38: #{tangent_space_forward.2} parent=5 // pred_check_branch
      %353 = sbr.rel (%p351) target = $region40
    $region39: #{tangent_space_forward.2} parent=5 // pred_region
      %s354 = ssub.s32 %s9, 2
      // Predicated region
      $region41: #{tangent_space_forward.2} parent=39 // pred_check
        %p355 = pneg %p106
      $region42: #{tangent_space_forward.2} parent=39 // pred_check_branch
        %357 = sbr.rel (%p355) target = $region44
      $region43: #{tangent_space_forward.2} parent=39 // pred_region
        %s358 = smul.u32 2, %s15
        %p359 = scmp.lt.s32.totalorder %s358, 3
        %s360 = scalar_select %p359, %s358, 3
        %s361 = smul.addr %s360, 2
        %s362 = smul.addr %s361, 8
        %s363 = scalar_lea.vmem %s3, %s362
      $region44: #{tangent_space_forward.2} parent=39 // pred_fallthru
        _
    $region40: #{tangent_space_forward.2} parent=5 // pred_fallthru
      _
  $region6: #{tangent_space_forward.2} parent=0 // loop_footer
    %s13 = sadd.s32 1, %s9
  $region7: #{tangent_space_forward.2} parent=0 // loop_footer_branch
    %8 = sbr.rel target = $region3
  $region8: #{tangent_space_forward.2} parent=0 // loop_exit
    _

// kernel: custom-call.5
$region0: #{custom-call.5}
  %s0 = inlined_call_operand.vmem [shape: f32[20,8,8], index: 0, kind: input, shape index: {}]
  %s1 = inlined_call_operand.vmem [shape: f32[20,8,8], index: 1, kind: input, shape index: {}]
  %s2 = inlined_call_operand.vmem [shape: f32[20,8,8], index: 2, kind: input, shape index: {}]
  %s3 = inlined_call_operand.vmem [shape: f32[20,8,8], index: 3, kind: input, shape index: {}]
  %s4 = inlined_call_operand.vmem [shape: f32[20,8], index: 4, kind: output, shape index: {0}]
  %s5 = inlined_call_operand.vmem [shape: f32[20,8], index: 5, kind: output, shape index: {1}]
  %s6 = inlined_call_operand.vmem [shape: f32[20,8,8], index: 6, kind: output, shape index: {2}]
  %s7 = inlined_call_operand.vmem [shape: f32[20,8,8], index: 7, kind: output, shape index: {3}]
  %s8 = inlined_call_operand.vmem [shape: f32[20,8,8], index: 8, kind: output, shape index: {4}]
  %s9 = inlined_call_operand.vmem [shape: f32[20,8,8], index: 9, kind: output, shape index: {5}]
  %10 = xla_tuple %s4, %s5, %s6, %s7, %s8, %s9
  $region1: #{custom-call.5} parent=0
    #allocation0 [shape = 'u8[8192]{0}', space=vmem, size = 0x2000, scoped, tag = 'operand span for operand 0']
    #allocation1 [shape = 'u8[8192]{0}', space=vmem, size = 0x2000, scoped, tag = 'operand span for operand 1']
    #allocation2 [shape = 'u8[8192]{0}', space=vmem, size = 0x2000, scoped, tag = 'operand span for operand 2']
    #allocation3 [shape = 'u8[8192]{0}', space=vmem, size = 0x2000, scoped, tag = 'operand span for operand 3']
    #allocation4 [shape = 'u8[8192]{0}', space=vmem, size = 0x2000, scoped, tag = 'operand span for operand 4']
    #allocation5 [shape = 'u8[8192]{0}', space=vmem, size = 0x2000, scoped, tag = 'operand span for operand 5']
    #allocation6 [shape = 'u8[8192]{0}', space=vmem, size = 0x2000, scoped, tag = 'operand span for operand 6']
    #allocation7 [shape = 'u8[8192]{0}', space=vmem, size = 0x2000, scoped, tag = 'operand span for operand 7']
    #allocation8 [shape = 'u8[8192]{0}', space=vmem, size = 0x2000, scoped, tag = 'operand span for operand 8']
    #allocation9 [shape = 'u8[8192]{0}', space=vmem, size = 0x2000, scoped, tag = 'operand span for operand 9']
    loop: start=0, step=1, limit=22
    $region2: #{custom-call.5} parent=1 // loop_pre_header
      _
    $region3: #{custom-call.5} parent=1 // loop_header
      %s12 = sphi 0, %s16
      %p13 = scmp.ge.s32.totalorder %s12, 22
      %s24 = sphi 0, %s26
      %s27 = sphi 0, %s24
      %s28 = sphi 0, %s27
      %s44 = sphi 0, %s28
      %s52 = sphi 0, %s54
      %s55 = sphi 0, %s52
      %s56 = sphi 0, %s55
      %s72 = sphi 0, %s56
    $region4: #{custom-call.5} parent=1 // loop_header_branch
      %15 = sbr.rel (%p13) target = $region8
    $region5: #{custom-call.5} parent=1 // loop_body
      %s17 = ssub.s32 %s12, 1
      %s18 = ssub.s32 %s12, 2
      %s19 = sadd.s32 %s12, 1
      %s20 = sshrl.u32 %s12, 3
      %s21 = sshrl.u32 %s19, 3
      %s22 = ssub.s32 %s20, %s21
      %p23 = scmp.eq.s32.totalorder %s22, 0
      %s25 = sadd.s32 %s24, 1
      %s26 = scalar_select %p23, %s24, %s25
      %p29 = pneg %p23
      %p30 = scmp.eq.s32.totalorder %s12, 19
      %p31 = por %p29, %p30
      %p32 = scmp.ne.s32.totalorder %s24, %s27
      %p33 = scmp.eq.s32.totalorder %s12, 0
      %p34 = por %p32, %p33
      %p35 = scmp.ne.s32.totalorder %s24, %s27
      %p36 = scmp.eq.s32.totalorder %s17, 19
      %p37 = por %p35, %p36
      %p38 = scmp.ne.s32.totalorder %s27, %s28
      %p39 = scmp.eq.s32.totalorder %s17, 0
      %p40 = por %p38, %p39
      %p41 = scmp.ne.s32.totalorder %s27, %s28
      %p42 = scmp.eq.s32.totalorder %s18, 19
      %p43 = por %p41, %p42
      %p45 = scmp.ne.s32.totalorder %s28, %s44
      %p46 = scmp.eq.s32.totalorder %s18, 0
      %p47 = por %p45, %p46
      %s48 = sshrl.u32 %s12, 3
      %s49 = sshrl.u32 %s19, 3
      %s50 = ssub.s32 %s48, %s49
      %p51 = scmp.eq.s32.totalorder %s50, 0
      %s53 = sadd.s32 %s52, 1
      %s54 = scalar_select %p51, %s52, %s53
      %p57 = pneg %p51
      %p58 = scmp.eq.s32.totalorder %s12, 19
      %p59 = por %p57, %p58
      %p60 = scmp.ne.s32.totalorder %s52, %s55
      %p61 = scmp.eq.s32.totalorder %s12, 0
      %p62 = por %p60, %p61
      %p63 = scmp.ne.s32.totalorder %s52, %s55
      %p64 = scmp.eq.s32.totalorder %s17, 19
      %p65 = por %p63, %p64
      %p66 = scmp.ne.s32.totalorder %s55, %s56
      %p67 = scmp.eq.s32.totalorder %s17, 0
      %p68 = por %p66, %p67
      %p69 = scmp.ne.s32.totalorder %s55, %s56
      %p70 = scmp.eq.s32.totalorder %s18, 19
      %p71 = por %p69, %p70
      %p73 = scmp.ne.s32.totalorder %s56, %s72
      %p74 = scmp.eq.s32.totalorder %s18, 0
      %p75 = por %p73, %p74
      %p76 = scmp.le.s32.totalorder 1, %s12
      %p77 = scmp.lt.s32.totalorder %s12, 21
      %p78 = pnand %p76, %p77
      %p79 = pneg %p78
      // Predicated region
      $region9: #{custom-call.5} parent=5 // pred_check
        _
      $region10: #{custom-call.5} parent=5 // pred_check_branch
        %81 = sbr.rel (%p78) target = $region12
      $region11: #{custom-call.5} parent=5 // pred_region
        %s82 = ssub.s32 %s12, 1
      $region12: #{custom-call.5} parent=5 // pred_fallthru
        _
      %p83 = scmp.lt.s32.totalorder %s12, 20
      // Predicated region
      $region13: #{custom-call.5} parent=5 // pred_check
        %p84 = pneg %p83
      $region14: #{custom-call.5} parent=5 // pred_check_branch
        %86 = sbr.rel (%p84) target = $region16
      $region15: #{custom-call.5} parent=5 // pred_region
        %s87 = sand.u32 %s12, 1
        %s88 = sand.u32 %s12, 1
        %s89 = smul.addr %s88, 8
        %s90 = scalar_lea.vmem [#allocation0], %s89
        %s91 = smul.addr %s12, 8
        %s92 = scalar_lea.vmem %s0, %s91
        // Predicated region
        $region17: #{custom-call.5} parent=15 // pred_check
          _
        $region18: #{custom-call.5} parent=15 // pred_check_branch
          %94 = sbr.rel (0) target = $region20
        $region19: #{custom-call.5} parent=15 // pred_region
          // Predicated region
          $region21: #{custom-call.5} parent=19 // pred_check
            _
          $region22: #{custom-call.5} parent=19 // pred_check_branch
            %96 = sbr.rel (0) target = $region24
          $region23: #{custom-call.5} parent=19 // pred_region
            // Predicated region
            $region36: #{custom-call.5} parent=23 // pred_check
              _
            $region37: #{custom-call.5} parent=23 // pred_check_branch
              %111 = sbr.rel (0) target = $region39
            $region38: #{custom-call.5} parent=23 // pred_region
              loop: start=0, step=1, limit=1
              $region40: #{custom-call.5} parent=38 // loop_pre_header
                _
              $region41: #{custom-call.5} parent=38 // loop_header
                %s113 = sphi 0, %s117
                %p114 = scmp.ge.s32.totalorder %s113, 1
                %s118 = sphi %s92, %s92
                %s119 = sphi %s90, %s90
              $region42: #{custom-call.5} parent=38 // loop_header_branch
                %116 = sbr.rel (%p114) target = $region46
              $region43: #{custom-call.5} parent=38 // loop_body
                %v120 = vld [vmem:[%s118] sm:$0xff]
                %121 = vst [vmem:[%s119] sm:$0xff] %v120
              $region44: #{custom-call.5} parent=38 // loop_footer
                %s117 = sadd.s32 1, %s113
              $region45: #{custom-call.5} parent=38 // loop_footer_branch
                %112 = sbr.rel target = $region41
              $region46: #{custom-call.5} parent=38 // loop_exit
                _
            $region39: #{custom-call.5} parent=23 // pred_fallthru
              _
            // Predicated region
            $region47: #{custom-call.5} parent=23 // pred_check
              _
            $region48: #{custom-call.5} parent=23 // pred_check_branch
              %123 = sbr.rel target = $region50
            $region49: #{custom-call.5} parent=23 // pred_region
              _
            $region50: #{custom-call.5} parent=23 // pred_fallthru
              _
          $region24: #{custom-call.5} parent=19 // pred_fallthru
            _
          // Predicated region
          $region25: #{custom-call.5} parent=19 // pred_check
            _
          $region26: #{custom-call.5} parent=19 // pred_check_branch
            %98 = sbr.rel target = $region28
          $region27: #{custom-call.5} parent=19 // pred_region
            loop: start=0, step=1, limit=1
            $region29: #{custom-call.5} parent=27 // loop_pre_header
              _
            $region30: #{custom-call.5} parent=27 // loop_header
              %s101 = sphi 0, %s105
              %p102 = scmp.ge.s32.totalorder %s101, 1
              %s106 = sphi %s92, %s92
              %s107 = sphi %s90, %s90
            $region31: #{custom-call.5} parent=27 // loop_header_branch
              %104 = sbr.rel (%p102) target = $region35
            $region32: #{custom-call.5} parent=27 // loop_body
              %v108 = vld [vmem:[%s106] sm:$0xff]
              %109 = vst [vmem:[%s107] sm:$0xff] %v108
            $region33: #{custom-call.5} parent=27 // loop_footer
              %s105 = sadd.s32 1, %s101
            $region34: #{custom-call.5} parent=27 // loop_footer_branch
              %100 = sbr.rel target = $region30
            $region35: #{custom-call.5} parent=27 // loop_exit
              _
          $region28: #{custom-call.5} parent=19 // pred_fallthru
            _
        $region20: #{custom-call.5} parent=15 // pred_fallthru
          _
        %124 = vnop
        %s125 = sand.u32 %s12, 1
        %s126 = sand.u32 %s12, 1
        %s127 = smul.addr %s126, 8
        %s128 = scalar_lea.vmem [#allocation1], %s127
        %s129 = smul.addr %s12, 8
        %s130 = scalar_lea.vmem %s1, %s129
        // Predicated region
        $region51: #{custom-call.5} parent=15 // pred_check
          _
        $region52: #{custom-call.5} parent=15 // pred_check_branch
          %132 = sbr.rel (0) target = $region54
        $region53: #{custom-call.5} parent=15 // pred_region
          // Predicated region
          $region55: #{custom-call.5} parent=53 // pred_check
            _
          $region56: #{custom-call.5} parent=53 // pred_check_branch
            %134 = sbr.rel (0) target = $region58
          $region57: #{custom-call.5} parent=53 // pred_region
            // Predicated region
            $region70: #{custom-call.5} parent=57 // pred_check
              _
            $region71: #{custom-call.5} parent=57 // pred_check_branch
              %149 = sbr.rel (0) target = $region73
            $region72: #{custom-call.5} parent=57 // pred_region
              loop: start=0, step=1, limit=1
              $region74: #{custom-call.5} parent=72 // loop_pre_header
                _
              $region75: #{custom-call.5} parent=72 // loop_header
                %s151 = sphi 0, %s155
                %p152 = scmp.ge.s32.totalorder %s151, 1
                %s156 = sphi %s130, %s130
                %s157 = sphi %s128, %s128
              $region76: #{custom-call.5} parent=72 // loop_header_branch
                %154 = sbr.rel (%p152) target = $region80
              $region77: #{custom-call.5} parent=72 // loop_body
                %v158 = vld [vmem:[%s156] sm:$0xff]
                %159 = vst [vmem:[%s157] sm:$0xff] %v158
              $region78: #{custom-call.5} parent=72 // loop_footer
                %s155 = sadd.s32 1, %s151
              $region79: #{custom-call.5} parent=72 // loop_footer_branch
                %150 = sbr.rel target = $region75
              $region80: #{custom-call.5} parent=72 // loop_exit
                _
            $region73: #{custom-call.5} parent=57 // pred_fallthru
              _
            // Predicated region
            $region81: #{custom-call.5} parent=57 // pred_check
              _
            $region82: #{custom-call.5} parent=57 // pred_check_branch
              %161 = sbr.rel target = $region84
            $region83: #{custom-call.5} parent=57 // pred_region
              _
            $region84: #{custom-call.5} parent=57 // pred_fallthru
              _
          $region58: #{custom-call.5} parent=53 // pred_fallthru
            _
          // Predicated region
          $region59: #{custom-call.5} parent=53 // pred_check
            _
          $region60: #{custom-call.5} parent=53 // pred_check_branch
            %136 = sbr.rel target = $region62
          $region61: #{custom-call.5} parent=53 // pred_region
            loop: start=0, step=1, limit=1
            $region63: #{custom-call.5} parent=61 // loop_pre_header
              _
            $region64: #{custom-call.5} parent=61 // loop_header
              %s139 = sphi 0, %s143
              %p140 = scmp.ge.s32.totalorder %s139, 1
              %s144 = sphi %s130, %s130
              %s145 = sphi %s128, %s128
            $region65: #{custom-call.5} parent=61 // loop_header_branch
              %142 = sbr.rel (%p140) target = $region69
            $region66: #{custom-call.5} parent=61 // loop_body
              %v146 = vld [vmem:[%s144] sm:$0xff]
              %147 = vst [vmem:[%s145] sm:$0xff] %v146
            $region67: #{custom-call.5} parent=61 // loop_footer
              %s143 = sadd.s32 1, %s139
            $region68: #{custom-call.5} parent=61 // loop_footer_branch
              %138 = sbr.rel target = $region64
            $region69: #{custom-call.5} parent=61 // loop_exit
              _
          $region62: #{custom-call.5} parent=53 // pred_fallthru
            _
        $region54: #{custom-call.5} parent=15 // pred_fallthru
          _
        %162 = vnop
        %s163 = sand.u32 %s12, 1
        %s164 = sand.u32 %s12, 1
        %s165 = smul.addr %s164, 8
        %s166 = scalar_lea.vmem [#allocation2], %s165
        %s167 = smul.addr %s12, 8
        %s168 = scalar_lea.vmem %s2, %s167
        // Predicated region
        $region85: #{custom-call.5} parent=15 // pred_check
          _
        $region86: #{custom-call.5} parent=15 // pred_check_branch
          %170 = sbr.rel (0) target = $region88
        $region87: #{custom-call.5} parent=15 // pred_region
          // Predicated region
          $region89: #{custom-call.5} parent=87 // pred_check
            _
          $region90: #{custom-call.5} parent=87 // pred_check_branch
            %172 = sbr.rel (0) target = $region92
          $region91: #{custom-call.5} parent=87 // pred_region
            // Predicated region
            $region104: #{custom-call.5} parent=91 // pred_check
              _
            $region105: #{custom-call.5} parent=91 // pred_check_branch
              %187 = sbr.rel (0) target = $region107
            $region106: #{custom-call.5} parent=91 // pred_region
              loop: start=0, step=1, limit=1
              $region108: #{custom-call.5} parent=106 // loop_pre_header
                _
              $region109: #{custom-call.5} parent=106 // loop_header
                %s189 = sphi 0, %s193
                %p190 = scmp.ge.s32.totalorder %s189, 1
                %s194 = sphi %s168, %s168
                %s195 = sphi %s166, %s166
              $region110: #{custom-call.5} parent=106 // loop_header_branch
                %192 = sbr.rel (%p190) target = $region114
              $region111: #{custom-call.5} parent=106 // loop_body
                %v196 = vld [vmem:[%s194] sm:$0xff]
                %197 = vst [vmem:[%s195] sm:$0xff] %v196
              $region112: #{custom-call.5} parent=106 // loop_footer
                %s193 = sadd.s32 1, %s189
              $region113: #{custom-call.5} parent=106 // loop_footer_branch
                %188 = sbr.rel target = $region109
              $region114: #{custom-call.5} parent=106 // loop_exit
                _
            $region107: #{custom-call.5} parent=91 // pred_fallthru
              _
            // Predicated region
            $region115: #{custom-call.5} parent=91 // pred_check
              _
            $region116: #{custom-call.5} parent=91 // pred_check_branch
              %199 = sbr.rel target = $region118
            $region117: #{custom-call.5} parent=91 // pred_region
              _
            $region118: #{custom-call.5} parent=91 // pred_fallthru
              _
          $region92: #{custom-call.5} parent=87 // pred_fallthru
            _
          // Predicated region
          $region93: #{custom-call.5} parent=87 // pred_check
            _
          $region94: #{custom-call.5} parent=87 // pred_check_branch
            %174 = sbr.rel target = $region96
          $region95: #{custom-call.5} parent=87 // pred_region
            loop: start=0, step=1, limit=1
            $region97: #{custom-call.5} parent=95 // loop_pre_header
              _
            $region98: #{custom-call.5} parent=95 // loop_header
              %s177 = sphi 0, %s181
              %p178 = scmp.ge.s32.totalorder %s177, 1
              %s182 = sphi %s168, %s168
              %s183 = sphi %s166, %s166
            $region99: #{custom-call.5} parent=95 // loop_header_branch
              %180 = sbr.rel (%p178) target = $region103
            $region100: #{custom-call.5} parent=95 // loop_body
              %v184 = vld [vmem:[%s182] sm:$0xff]
              %185 = vst [vmem:[%s183] sm:$0xff] %v184
            $region101: #{custom-call.5} parent=95 // loop_footer
              %s181 = sadd.s32 1, %s177
            $region102: #{custom-call.5} parent=95 // loop_footer_branch
              %176 = sbr.rel target = $region98
            $region103: #{custom-call.5} parent=95 // loop_exit
              _
          $region96: #{custom-call.5} parent=87 // pred_fallthru
            _
        $region88: #{custom-call.5} parent=15 // pred_fallthru
          _
        %200 = vnop
        %s201 = sand.u32 %s12, 1
        %s202 = sand.u32 %s12, 1
        %s203 = smul.addr %s202, 8
        %s204 = scalar_lea.vmem [#allocation3], %s203
        %s205 = smul.addr %s12, 8
        %s206 = scalar_lea.vmem %s3, %s205
        // Predicated region
        $region119: #{custom-call.5} parent=15 // pred_check
          _
        $region120: #{custom-call.5} parent=15 // pred_check_branch
          %208 = sbr.rel (0) target = $region122
        $region121: #{custom-call.5} parent=15 // pred_region
          // Predicated region
          $region123: #{custom-call.5} parent=121 // pred_check
            _
          $region124: #{custom-call.5} parent=121 // pred_check_branch
            %210 = sbr.rel (0) target = $region126
          $region125: #{custom-call.5} parent=121 // pred_region
            // Predicated region
            $region138: #{custom-call.5} parent=125 // pred_check
              _
            $region139: #{custom-call.5} parent=125 // pred_check_branch
              %225 = sbr.rel (0) target = $region141
            $region140: #{custom-call.5} parent=125 // pred_region
              loop: start=0, step=1, limit=1
              $region142: #{custom-call.5} parent=140 // loop_pre_header
                _
              $region143: #{custom-call.5} parent=140 // loop_header
                %s227 = sphi 0, %s231
                %p228 = scmp.ge.s32.totalorder %s227, 1
                %s232 = sphi %s206, %s206
                %s233 = sphi %s204, %s204
              $region144: #{custom-call.5} parent=140 // loop_header_branch
                %230 = sbr.rel (%p228) target = $region148
              $region145: #{custom-call.5} parent=140 // loop_body
                %v234 = vld [vmem:[%s232] sm:$0xff]
                %235 = vst [vmem:[%s233] sm:$0xff] %v234
              $region146: #{custom-call.5} parent=140 // loop_footer
                %s231 = sadd.s32 1, %s227
              $region147: #{custom-call.5} parent=140 // loop_footer_branch
                %226 = sbr.rel target = $region143
              $region148: #{custom-call.5} parent=140 // loop_exit
                _
            $region141: #{custom-call.5} parent=125 // pred_fallthru
              _
            // Predicated region
            $region149: #{custom-call.5} parent=125 // pred_check
              _
            $region150: #{custom-call.5} parent=125 // pred_check_branch
              %237 = sbr.rel target = $region152
            $region151: #{custom-call.5} parent=125 // pred_region
              _
            $region152: #{custom-call.5} parent=125 // pred_fallthru
              _
          $region126: #{custom-call.5} parent=121 // pred_fallthru
            _
          // Predicated region
          $region127: #{custom-call.5} parent=121 // pred_check
            _
          $region128: #{custom-call.5} parent=121 // pred_check_branch
            %212 = sbr.rel target = $region130
          $region129: #{custom-call.5} parent=121 // pred_region
            loop: start=0, step=1, limit=1
            $region131: #{custom-call.5} parent=129 // loop_pre_header
              _
            $region132: #{custom-call.5} parent=129 // loop_header
              %s215 = sphi 0, %s219
              %p216 = scmp.ge.s32.totalorder %s215, 1
              %s220 = sphi %s206, %s206
              %s221 = sphi %s204, %s204
            $region133: #{custom-call.5} parent=129 // loop_header_branch
              %218 = sbr.rel (%p216) target = $region137
            $region134: #{custom-call.5} parent=129 // loop_body
              %v222 = vld [vmem:[%s220] sm:$0xff]
              %223 = vst [vmem:[%s221] sm:$0xff] %v222
            $region135: #{custom-call.5} parent=129 // loop_footer
              %s219 = sadd.s32 1, %s215
            $region136: #{custom-call.5} parent=129 // loop_footer_branch
              %214 = sbr.rel target = $region132
            $region137: #{custom-call.5} parent=129 // loop_exit
              _
          $region130: #{custom-call.5} parent=121 // pred_fallthru
            _
        $region122: #{custom-call.5} parent=15 // pred_fallthru
          _
        %238 = vnop
      $region16: #{custom-call.5} parent=5 // pred_fallthru
        _
      %p239 = scmp.le.s32.totalorder 1, %s12
      %p240 = scmp.lt.s32.totalorder %s12, 21
      %p241 = pnand %p239, %p240
      %p242 = pneg %p241
      // Predicated region
      $region153: #{custom-call.5} parent=5 // pred_check
        _
      $region154: #{custom-call.5} parent=5 // pred_check_branch
        %244 = sbr.rel (%p241) target = $region156
      $region155: #{custom-call.5} parent=5 // pred_region
        #allocation10 [shape = 'f32[8,8]{1,0}', space=vmem, size = 0x1000, scoped, tag = 'a top-left matrix']
        #allocation11 [shape = 'f32[8,8]{1,0}', space=vmem, size = 0x1000, scoped, tag = 'a top-right matrix']
        #allocation12 [shape = 'f32[8,8]{1,0}', space=vmem, size = 0x1000, scoped, tag = 'a bottom-left matrix']
        #allocation13 [shape = 'f32[8,8]{1,0}', space=vmem, size = 0x1000, scoped, tag = 'a bottom-right matrix']
        %s245 = ssub.s32 %s12, 1
        %s246 = sand.u32 %s17, 1
        %s247 = sand.u32 %s17, 1
        %s248 = smul.addr %s247, 8
        %s249 = scalar_lea.vmem [#allocation0], %s248
        %s250 = sand.u32 %s17, 1
        %s251 = sand.u32 %s17, 1
        %s252 = smul.addr %s251, 8
        %s253 = scalar_lea.vmem [#allocation1], %s252
        %s254 = sand.u32 %s17, 1
        %s255 = sand.u32 %s17, 1
        %s256 = smul.addr %s255, 8
        %s257 = scalar_lea.vmem [#allocation2], %s256
        %s258 = sand.u32 %s17, 1
        %s259 = sand.u32 %s17, 1
        %s260 = smul.addr %s259, 8
        %s261 = scalar_lea.vmem [#allocation3], %s260
        %s262 = sand.u32 %s17, 1
        %s263 = sand.u32 %s17, 1
        %s264 = smul.addr %s263, 8
        %s265 = scalar_lea.vmem [#allocation0], %s264
        %s266 = sand.u32 %s17, 1
        %s267 = sand.u32 %s17, 1
        %s268 = smul.addr %s267, 8
        %s269 = scalar_lea.vmem [#allocation1], %s268
        %s270 = sand.u32 %s17, 1
        %s271 = sand.u32 %s17, 1
        %s272 = smul.addr %s271, 8
        %s273 = scalar_lea.vmem [#allocation2], %s272
        %s274 = sand.u32 %s17, 1
        %s275 = sand.u32 %s17, 1
        %s276 = smul.addr %s275, 8
        %s277 = scalar_lea.vmem [#allocation3], %s276
        %p278 = pneg %p40
        %p279 = pneg %p37
        %s280 = sand.u32 %s27, 1
        %s281 = sand.u32 %s27, 1
        %s282 = smul.addr %s281, 8
        %s283 = scalar_lea.vmem [#allocation4], %s282
        %p284 = pneg %p68
        %p285 = pneg %p65
        %s286 = sand.u32 %s55, 1
        %s287 = sand.u32 %s55, 1
        %s288 = smul.addr %s287, 8
        %s289 = scalar_lea.vmem [#allocation5], %s288
        %s290 = sand.u32 %s17, 1
        %s291 = sand.u32 %s17, 1
        %s292 = smul.addr %s291, 8
        %s293 = scalar_lea.vmem [#allocation6], %s292
        %s294 = sand.u32 %s17, 1
        %s295 = sand.u32 %s17, 1
        %s296 = smul.addr %s295, 8
        %s297 = scalar_lea.vmem [#allocation7], %s296
        %s298 = sand.u32 %s17, 1
        %s299 = sand.u32 %s17, 1
        %s300 = smul.addr %s299, 8
        %s301 = scalar_lea.vmem [#allocation8], %s300
        %s302 = sand.u32 %s17, 1
        %s303 = sand.u32 %s17, 1
        %s304 = smul.addr %s303, 8
        %s305 = scalar_lea.vmem [#allocation9], %s304
        %s306 = sshrl.u32 %s17, 3
        %s307 = sshrl.u32 %s17, 3
        %s308 = smov [#allocation10]
        %v309 = vld [vmem:[%s249] sm:$0xff]
        %310 = vst [vmem:[%s308] sm:$0xff] %v309
        %s311 = smov [#allocation11]
        %v312 = vld [vmem:[%s253] sm:$0xff]
        %313 = vst [vmem:[%s311] sm:$0xff] %v312
        %s314 = smov [#allocation12]
        %v315 = vld [vmem:[%s257] sm:$0xff]
        %316 = vst [vmem:[%s314] sm:$0xff] %v315
        %s317 = smov [#allocation13]
        %v318 = vld [vmem:[%s261] sm:$0xff]
        %319 = vst [vmem:[%s317] sm:$0xff] %v318
        %320 = vst [vmem:[%s293] sm:$0xff] 0.0
        %321 = vst [vmem:[%s297] sm:$0xff] 0.0
        %322 = vst [vmem:[%s301] sm:$0xff] 0.0
        %323 = vst [vmem:[%s305] sm:$0xff] 0.0
        %s324 = smov %s293
        %v325 = vlaneseq
        %v326 = vand.u32 %v325, 127
        %v327 = vmov %v326
        %v328 = vlaneseq
        %v329 = vshrl.u32 %v328, 7
        %v330 = vmov %v329
        %v331 = vld [vmem:[%s324] sm:$0xff]
        %vm334 = vcmp.eq.s32.totalorder %v330, %v327
        %v335 = vsel %vm334, 1.0, %v331
        %336 = vst [vmem:[%s324] sm:$0xff] %v335
        %s337 = smov %s305
        %v338 = vlaneseq
        %v339 = vand.u32 %v338, 127
        %v340 = vmov %v339
        %v341 = vlaneseq
        %v342 = vshrl.u32 %v341, 7
        %v343 = vmov %v342
        %v344 = vld [vmem:[%s337] sm:$0xff]
        %vm347 = vcmp.eq.s32.totalorder %v343, %v340
        %v348 = vsel %vm347, 1.0, %v344
        %349 = vst [vmem:[%s337] sm:$0xff] %v348
        // While loop
        $region157: #{custom-call.5} parent=155 // loop_pre_header
          _
        $region158: #{custom-call.5} parent=155 // loop_header
          %s351 = sphi 0, %s893
          %v352 = vlaneseq
          %v353 = vand.u32 %v352, 127
          %v354 = vmov %v353
          %v355 = vlaneseq
          %v356 = vshrl.u32 %v355, 7
          %v357 = vmov %v356
          %s358 = smov [#allocation10]
          %v359 = vlaneseq
          %v360 = vand.u32 %v359, 127
          %vm361 = vcmp.ge.s32.totalorder %v360, 0
          %vm362 = vcmp.lt.s32.totalorder %v360, 8
          %vm363 = vmand %vm361, %vm362
          %v364 = vld [vmem:[%s358] sm:$0xff]
          %v365 = vsel %vm363, %v364, 0.0
          %v366 = vmul.f32 %v365, %v365
          %vm369 = vcmp.eq.s32.totalorder %v357, %v354
          %v370 = vsel %vm369, 0.0, %v366
          %v371 = vlaneseq
          %v372 = vand.u32 %v371, 127
          %v373 = vmov %v372
          %v374 = vlaneseq
          %v375 = vshrl.u32 %v374, 7
          %v376 = vmov %v375
          %s377 = smov [#allocation11]
          %v378 = vlaneseq
          %v379 = vand.u32 %v378, 127
          %vm380 = vcmp.ge.s32.totalorder %v379, 0
          %vm381 = vcmp.lt.s32.totalorder %v379, 8
          %vm382 = vmand %vm380, %vm381
          %v383 = vld [vmem:[%s377] sm:$0xff]
          %v384 = vsel %vm382, %v383, 0.0
          %v385 = vmul.f32 %v384, %v384
          %v386 = vadd.f32 %v370, %v385
          %v387 = vadd.f32 %v366, %v385
          %v388 = vlaneseq
          %v389 = vand.u32 %v388, 127
          %v390 = vmov %v389
          %v391 = vlaneseq
          %v392 = vshrl.u32 %v391, 7
          %v393 = vmov %v392
          %s394 = smov [#allocation12]
          %v395 = vlaneseq
          %v396 = vand.u32 %v395, 127
          %vm397 = vcmp.ge.s32.totalorder %v396, 0
          %vm398 = vcmp.lt.s32.totalorder %v396, 8
          %vm399 = vmand %vm397, %vm398
          %v400 = vld [vmem:[%s394] sm:$0xff]
          %v401 = vsel %vm399, %v400, 0.0
          %v402 = vmul.f32 %v401, %v401
          %v403 = vadd.f32 %v386, %v402
          %v404 = vadd.f32 %v387, %v402
          %v405 = vlaneseq
          %v406 = vand.u32 %v405, 127
          %v407 = vmov %v406
          %v408 = vlaneseq
          %v409 = vshrl.u32 %v408, 7
          %v410 = vmov %v409
          %s411 = smov [#allocation13]
          %v412 = vlaneseq
          %v413 = vand.u32 %v412, 127
          %vm414 = vcmp.ge.s32.totalorder %v413, 0
          %vm415 = vcmp.lt.s32.totalorder %v413, 8
          %vm416 = vmand %vm414, %vm415
          %v417 = vld [vmem:[%s411] sm:$0xff]
          %v418 = vsel %vm416, %v417, 0.0
          %v419 = vmul.f32 %v418, %v418
          %vm422 = vcmp.eq.s32.totalorder %v410, %v407
          %v423 = vsel %vm422, 0.0, %v419
          %v424 = vadd.f32 %v403, %v423
          %v425 = vadd.f32 %v404, %v419
          %426 = vadd.xlane.f32.xlu0 %v425
          %v427 = vpop.xlane.xlu0 %426
          %v428 = vrot.slane %v427, 4
          %v429 = vadd.f32 %v427, %v428
          %v430 = vrot.slane %v429, 2
          %v431 = vadd.f32 %v429, %v430
          %v432 = vrot.slane %v431, 1
          %v433 = vadd.f32 %v431, %v432
          %434 = vadd.xlane.f32.xlu0 %v424
          %v435 = vpop.xlane.xlu0 %434
          %v436 = vrot.slane %v435, 4
          %v437 = vadd.f32 %v435, %v436
          %v438 = vrot.slane %v437, 2
          %v439 = vadd.f32 %v437, %v438
          %v440 = vrot.slane %v439, 1
          %v441 = vadd.f32 %v439, %v440
          %s442 = vtos %v441
          %s443 = vtos %v433
          %s444 = smul.f32 1e-10, %s443
          %p445 = scmp.le.f32.partialorder %s442, %s444
          %p446 = scmp.ge.s32.totalorder %s351, 15
          %p447 = por %p445, %p446
        $region159: #{custom-call.5} parent=155 // loop_header_branch
          %895 = sbr.rel (%p447) target = $region163
        $region160: #{custom-call.5} parent=155 // loop_body
          loop: start=0, step=1, limit=15
          $region164: #{custom-call.5} parent=160 // loop_pre_header
            _
          $region165: #{custom-call.5} parent=160 // loop_header
            %s449 = sphi 0, %s453
            %p450 = scmp.ge.s32.totalorder %s449, 15
          $region166: #{custom-call.5} parent=160 // loop_header_branch
            %452 = sbr.rel (%p450) target = $region170
          $region167: #{custom-call.5} parent=160 // loop_body
            #allocation14 [shape = 'f32[1024]{0}', space=vmem, size = 0x1000, scoped, tag = 'a_tl_diag vmem']
            #allocation15 [shape = 'f32[1024]{0}', space=vmem, size = 0x1000, scoped, tag = 'a_tr_diag vmem']
            #allocation16 [shape = 'f32[1024]{0}', space=vmem, size = 0x1000, scoped, tag = 'a_br_diag vmem']
            #allocation17 [shape = 'f32[1024]{0}', space=vmem, size = 0x1000, scoped, tag = 'rt1 vmem']
            #allocation18 [shape = 'f32[1024]{0}', space=vmem, size = 0x1000, scoped, tag = 'rt2 vmem']
            #allocation19 [shape = 'f32[1024]{0}', space=vmem, size = 0x1000, scoped, tag = 'c vmem']
            #allocation20 [shape = 'f32[1024]{0}', space=vmem, size = 0x1000, scoped, tag = 's vmem']
            #allocation21 [shape = 'f32[4096]{0}', space=vmem, size = 0x4000, scoped, tag = 'c broadcast']
            #allocation22 [shape = 'f32[4096]{0}', space=vmem, size = 0x4000, scoped, tag = 's broadcast']
            %s454 = smov [#allocation10]
            %s455 = smov [#allocation14]
            %v456 = vlaneseq
            %v457 = vand.u32 %v456, 127
            %v458 = vmov %v457
            %v459 = vlaneseq
            %v460 = vshrl.u32 %v459, 7
            %v461 = vmov %v460
            %v462 = vld [vmem:[%s454] sm:$0xff]
            %vm465 = vcmp.eq.s32.totalorder %v461, %v458
            %v466 = vsel %vm465, %v462, 0.0
            %v467 = vrot.slane %v466, 4
            %v468 = vadd.f32 %v466, %v467
            %v469 = vrot.slane %v468, 2
            %v470 = vadd.f32 %v468, %v469
            %v471 = vrot.slane %v470, 1
            %v472 = vadd.f32 %v470, %v471
            %473 = vst [vmem:[%s455] sm:$0x1] %v472
            %s474 = smov [#allocation11]
            %s475 = smov [#allocation15]
            %v476 = vlaneseq
            %v477 = vand.u32 %v476, 127
            %v478 = vmov %v477
            %v479 = vlaneseq
            %v480 = vshrl.u32 %v479, 7
            %v481 = vmov %v480
            %v482 = vld [vmem:[%s474] sm:$0xff]
            %vm485 = vcmp.eq.s32.totalorder %v481, %v478
            %v486 = vsel %vm485, %v482, 0.0
            %v487 = vrot.slane %v486, 4
            %v488 = vadd.f32 %v486, %v487
            %v489 = vrot.slane %v488, 2
            %v490 = vadd.f32 %v488, %v489
            %v491 = vrot.slane %v490, 1
            %v492 = vadd.f32 %v490, %v491
            %493 = vst [vmem:[%s475] sm:$0x1] %v492
            %s494 = smov [#allocation13]
            %s495 = smov [#allocation16]
            %v496 = vlaneseq
            %v497 = vand.u32 %v496, 127
            %v498 = vmov %v497
            %v499 = vlaneseq
            %v500 = vshrl.u32 %v499, 7
            %v501 = vmov %v500
            %v502 = vld [vmem:[%s494] sm:$0xff]
            %vm505 = vcmp.eq.s32.totalorder %v501, %v498
            %v506 = vsel %vm505, %v502, 0.0
            %v507 = vrot.slane %v506, 4
            %v508 = vadd.f32 %v506, %v507
            %v509 = vrot.slane %v508, 2
            %v510 = vadd.f32 %v508, %v509
            %v511 = vrot.slane %v510, 1
            %v512 = vadd.f32 %v510, %v511
            %513 = vst [vmem:[%s495] sm:$0x1] %v512
            %s514 = smov [#allocation19]
            %s515 = smov [#allocation20]
            %s516 = smov [#allocation14]
            %v517 = vld [vmem:[%s516] sm:$0xff]
            %s518 = smov [#allocation15]
            %v519 = vld [vmem:[%s518] sm:$0xff]
            %s520 = smov [#allocation16]
            %v521 = vld [vmem:[%s520] sm:$0xff]
            %v522 = vsub.f32 %v521, %v517
            %v523 = vmul.f32 2.0, %v519
            %v524 = vrcp.pop %v523
            %v525 = vmul.f32 %v522, %v524
            %vm526 = vcmp.ge.f32.partialorder %v525, 0.0
            %v527 = vmul.f32 %v525, %v525
            %v528 = vadd.f32 1.0, %v527
            %v529 = vrsqrt.pop %v528
            %v530 = vmul.f32 %v528, %v529
            %vm531 = vcmp.eq.f32.partialorder %v528, inf
            %v532 = vsel %vm531, %v528, %v530
            %vm533 = vcmp.eq.f32.partialorder %v528, 0.0
            %v534 = vand.u32 %v528, 2147483648
            %v535 = vsel %vm533, %v534, %v532
            %v536 = vxor.u32 %v535, 2147483648
            %v537 = vsel %vm526, %v535, %v536
            %v538 = vadd.f32 %v525, %v537
            %v539 = vrcp.pop %v538
            %v540 = vand.u32 2147483647, %v517
            %v541 = vand.u32 2147483647, %v519
            %v542 = vand.u32 2147483647, %v521
            %v543 = vmin.f32 %v540, %v542
            %v544 = vmul.f32 1.1920929e-08, %v543
            %vm545 = vcmp.le.f32.partialorder %v541, %v544
            %v546 = vsel %vm545, 0.0, %v539
            %v547 = vmul.f32 %v546, %v546
            %v548 = vadd.f32 1.0, %v547
            %v549 = vrsqrt.pop %v548
            %v550 = vmul.f32 %v546, %v549
            %v551 = vmul.f32 %v546, %v519
            %v552 = vsub.f32 %v517, %v551
            %v553 = vmul.f32 %v546, %v519
            %v554 = vadd.f32 %v521, %v553
            %s555 = smov [#allocation17]
            %556 = vst [vmem:[%s555] sm:$0xff] %v552
            %s557 = smov [#allocation18]
            %558 = vst [vmem:[%s557] sm:$0xff] %v554
            %s559 = smov %s514
            %560 = vst [vmem:[%s559] sm:$0xff] %v549
            %s561 = smov %s515
            %562 = vst [vmem:[%s561] sm:$0xff] %v550
            %s563 = smov [#allocation19]
            %v564 = vld [vmem:[%s563] ss:$0 sm:$0xff]
            %v565 = vlaneseq
            %v566 = vand.u32 %v565, 127
            %v567 = vmov %v566
            %v568 = vlaneseq
            %v569 = vshrl.u32 %v568, 7
            %v570 = vmov %v569
            %vm572 = vcmp.eq.s32.totalorder %v570, %v567
            %v573 = vsel %vm572, %v564, 0.0
            %574 = vadd.xlane.f32.xlu0 %v573
            %v575 = vpop.xlane.xlu0 %574
            %s576 = smov [#allocation21]
            %577 = vst [vmem:[%s576] sm:$0xff] %v575
            %s578 = smov [#allocation20]
            %v579 = vld [vmem:[%s578] ss:$0 sm:$0xff]
            %v580 = vlaneseq
            %v581 = vand.u32 %v580, 127
            %v582 = vmov %v581
            %v583 = vlaneseq
            %v584 = vshrl.u32 %v583, 7
            %v585 = vmov %v584
            %vm587 = vcmp.eq.s32.totalorder %v585, %v582
            %v588 = vsel %vm587, %v579, 0.0
            %589 = vadd.xlane.f32.xlu0 %v588
            %v590 = vpop.xlane.xlu0 %589
            %s591 = smov [#allocation22]
            %592 = vst [vmem:[%s591] sm:$0xff] %v590
            %s593 = smov [#allocation21]
            %v594 = vld [vmem:[%s593] sm:$0xff]
            %s595 = smov [#allocation22]
            %v596 = vld [vmem:[%s595] sm:$0xff]
            %s597 = smov [#allocation10]
            %s598 = smov [#allocation11]
            %s599 = smov [#allocation12]
            %s600 = smov [#allocation13]
            %v601 = vld [vmem:[%s597] sm:$0xff]
            %v602 = vld [vmem:[%s598] sm:$0xff]
            %v603 = vld [vmem:[%s599] sm:$0xff]
            %v604 = vld [vmem:[%s600] sm:$0xff]
            %v605 = vmul.f32 %v594, %v601
            %v606 = vmul.f32 %v596, %v603
            %v607 = vsub.f32 %v605, %v606
            %v608 = vmul.f32 %v594, %v602
            %v609 = vmul.f32 %v596, %v604
            %v610 = vsub.f32 %v608, %v609
            %v611 = vmul.f32 %v596, %v601
            %v612 = vmul.f32 %v594, %v603
            %v613 = vadd.f32 %v611, %v612
            %v614 = vmul.f32 %v596, %v602
            %v615 = vmul.f32 %v594, %v604
            %v616 = vadd.f32 %v614, %v615
            %617 = vst [vmem:[%s597] sm:$0xff] %v607
            %618 = vst [vmem:[%s598] sm:$0xff] %v610
            %619 = vst [vmem:[%s599] sm:$0xff] %v613
            %620 = vst [vmem:[%s600] sm:$0xff] %v616
            %s621 = smov [#allocation19]
            %v622 = vld [vmem:[%s621] ss:$0 sm:$0xff]
            %s623 = smov [#allocation20]
            %v624 = vld [vmem:[%s623] ss:$0 sm:$0xff]
            %s625 = smov [#allocation10]
            %s626 = smov [#allocation11]
            %s627 = smov [#allocation12]
            %s628 = smov [#allocation13]
            %v629 = vld [vmem:[%s625] sm:$0xff]
            %v630 = vld [vmem:[%s626] sm:$0xff]
            %v631 = vld [vmem:[%s627] sm:$0xff]
            %v632 = vld [vmem:[%s628] sm:$0xff]
            %v633 = vmul.f32 %v622, %v629
            %v634 = vmul.f32 %v624, %v630
            %v635 = vsub.f32 %v633, %v634
            %v636 = vmul.f32 %v624, %v629
            %v637 = vmul.f32 %v622, %v630
            %v638 = vadd.f32 %v636, %v637
            %v639 = vmul.f32 %v622, %v631
            %v640 = vmul.f32 %v624, %v632
            %v641 = vsub.f32 %v639, %v640
            %v642 = vmul.f32 %v624, %v631
            %v643 = vmul.f32 %v622, %v632
            %v644 = vadd.f32 %v642, %v643
            %645 = vst [vmem:[%s625] sm:$0xff] %v635
            %646 = vst [vmem:[%s626] sm:$0xff] %v638
            %647 = vst [vmem:[%s627] sm:$0xff] %v641
            %648 = vst [vmem:[%s628] sm:$0xff] %v644
            %s649 = smov [#allocation10]
            %s650 = smov [#allocation17]
            %v651 = vlaneseq
            %v652 = vand.u32 %v651, 127
            %v653 = vmov %v652
            %v654 = vlaneseq
            %v655 = vshrl.u32 %v654, 7
            %v656 = vmov %v655
            %v657 = vld [vmem:[%s650] ss:$0 sm:$0xff]
            %v658 = vld [vmem:[%s649] sm:$0xff]
            %vm661 = vcmp.eq.s32.totalorder %v656, %v653
            %v662 = vsel %vm661, %v657, %v658
            %663 = vst [vmem:[%s649] sm:$0xff] %v662
            %s664 = smov [#allocation11]
            %v665 = vlaneseq
            %v666 = vand.u32 %v665, 127
            %v667 = vmov %v666
            %v668 = vlaneseq
            %v669 = vshrl.u32 %v668, 7
            %v670 = vmov %v669
            %v671 = vld [vmem:[%s664] sm:$0xff]
            %vm674 = vcmp.eq.s32.totalorder %v670, %v667
            %v675 = vsel %vm674, 0.0, %v671
            %676 = vst [vmem:[%s664] sm:$0xff] %v675
            %s677 = smov [#allocation12]
            %v678 = vlaneseq
            %v679 = vand.u32 %v678, 127
            %v680 = vmov %v679
            %v681 = vlaneseq
            %v682 = vshrl.u32 %v681, 7
            %v683 = vmov %v682
            %v684 = vld [vmem:[%s677] sm:$0xff]
            %vm687 = vcmp.eq.s32.totalorder %v683, %v680
            %v688 = vsel %vm687, 0.0, %v684
            %689 = vst [vmem:[%s677] sm:$0xff] %v688
            %s690 = smov [#allocation13]
            %s691 = smov [#allocation18]
            %v692 = vlaneseq
            %v693 = vand.u32 %v692, 127
            %v694 = vmov %v693
            %v695 = vlaneseq
            %v696 = vshrl.u32 %v695, 7
            %v697 = vmov %v696
            %v698 = vld [vmem:[%s691] ss:$0 sm:$0xff]
            %v699 = vld [vmem:[%s690] sm:$0xff]
            %vm702 = vcmp.eq.s32.totalorder %v697, %v694
            %v703 = vsel %vm702, %v698, %v699
            %704 = vst [vmem:[%s690] sm:$0xff] %v703
            %s705 = smov [#allocation10]
            %s706 = smov [#allocation11]
            %v707 = vld [vmem:[%s706] sm:$0xff]
            %708 = vrot.lane.b32.xlu0 %v707, 1
            %v709 = vpop.permute.xlu0 %708
            %v710 = vld [vmem:[%s705] sm:$0xff]
            %v711 = vld [vmem:[%s705] sm:$0xff]
            %712 = vrot.lane.b32.xlu0 %v711, 1
            %v713 = vpop.permute.xlu0 %712
            %v714 = vlaneseq
            %v715 = vand.u32 %v714, 127
            %vm716 = vcmp.eq.s32.totalorder %v715, 0
            %v717 = vsel %vm716, %v711, %v713
            %v718 = vlaneseq
            %v719 = vand.u32 %v718, 127
            %vm720 = vcmp.eq.s32.totalorder %v719, 1
            %v721 = vsel %vm720, %v709, %v717
            %v722 = vlaneseq
            %v723 = vand.u32 %v722, 127
            %vm724 = vcmp.ge.s32.totalorder %v723, 0
            %vm725 = vcmp.lt.s32.totalorder %v723, 8
            %vm726 = vmand %vm724, %vm725
            %v727 = vsel %vm726, %v721, 0.0
            %v728 = vld [vmem:[%s706] sm:$0xff]
            %729 = vrot.lane.b32.xlu0 %v728, 127
            %v730 = vpop.permute.xlu0 %729
            %v731 = vlaneseq
            %v732 = vand.u32 %v731, 127
            %vm733 = vcmp.eq.s32.totalorder %v732, 7
            %v734 = vsel %vm733, %v710, %v730
            %735 = vst [vmem:[%s705] sm:$0xff] %v727
            %736 = vst [vmem:[%s706] sm:$0xff] %v734
            %s737 = smov [#allocation12]
            %s738 = smov [#allocation13]
            %v739 = vld [vmem:[%s738] sm:$0xff]
            %740 = vrot.lane.b32.xlu0 %v739, 1
            %v741 = vpop.permute.xlu0 %740
            %v742 = vld [vmem:[%s737] sm:$0xff]
            %v743 = vld [vmem:[%s737] sm:$0xff]
            %744 = vrot.lane.b32.xlu0 %v743, 1
            %v745 = vpop.permute.xlu0 %744
            %v746 = vlaneseq
            %v747 = vand.u32 %v746, 127
            %vm748 = vcmp.eq.s32.totalorder %v747, 0
            %v749 = vsel %vm748, %v743, %v745
            %v750 = vlaneseq
            %v751 = vand.u32 %v750, 127
            %vm752 = vcmp.eq.s32.totalorder %v751, 1
            %v753 = vsel %vm752, %v741, %v749
            %v754 = vlaneseq
            %v755 = vand.u32 %v754, 127
            %vm756 = vcmp.ge.s32.totalorder %v755, 0
            %vm757 = vcmp.lt.s32.totalorder %v755, 8
            %vm758 = vmand %vm756, %vm757
            %v759 = vsel %vm758, %v753, 0.0
            %v760 = vld [vmem:[%s738] sm:$0xff]
            %761 = vrot.lane.b32.xlu0 %v760, 127
            %v762 = vpop.permute.xlu0 %761
            %v763 = vlaneseq
            %v764 = vand.u32 %v763, 127
            %vm765 = vcmp.eq.s32.totalorder %v764, 7
            %v766 = vsel %vm765, %v742, %v762
            %767 = vst [vmem:[%s737] sm:$0xff] %v759
            %768 = vst [vmem:[%s738] sm:$0xff] %v766
            %s769 = smov [#allocation10]
            %s770 = smov [#allocation12]
            %v771 = vld [vmem:[%s769] ss:$0 sm:$0xff]
            %s773 = scalar_lea.vmem %s769, 4294967295
            %v774 = vld [vmem:[%s773] sm:$0xfe]
            %v775 = vlaneseq
            %v776 = vshrl.u32 %v775, 7
            %vm777 = vcmp.eq.s32.totalorder %v776, 0
            %v778 = vsel %vm777, %v771, %v774
            %s779 = scalar_lea.vmem %s769, 7
            %v780 = vld [vmem:[%s779] ss:$0 sm:$0xff]
            %781 = vst [vmem:[%s769] sm:$0xff] %v778
            %v782 = vld [vmem:[%s770] ss:$0 sm:$0xff]
            %s783 = scalar_lea.vmem %s769, 1
            %784 = vst [vmem:[%s783] sm:$0x1] %v782
            %s785 = scalar_lea.vmem %s770, 1
            %v786 = vld [vmem:[%s785] sm:$0x7f]
            %v787 = vlaneseq
            %v788 = vshrl.u32 %v787, 7
            %vm789 = vcmp.eq.s32.totalorder %v788, 7
            %v790 = vsel %vm789, %v780, %v786
            %v791 = vld [vmem:[%s770] ss:$0 sm:$0xff]
            %792 = vst [vmem:[%s770] sm:$0xff] %v790
            %s793 = smov [#allocation11]
            %s794 = smov [#allocation13]
            %v795 = vld [vmem:[%s793] ss:$0 sm:$0xff]
            %s797 = scalar_lea.vmem %s793, 4294967295
            %v798 = vld [vmem:[%s797] sm:$0xfe]
            %v799 = vlaneseq
            %v800 = vshrl.u32 %v799, 7
            %vm801 = vcmp.eq.s32.totalorder %v800, 0
            %v802 = vsel %vm801, %v795, %v798
            %s803 = scalar_lea.vmem %s793, 7
            %v804 = vld [vmem:[%s803] ss:$0 sm:$0xff]
            %805 = vst [vmem:[%s793] sm:$0xff] %v802
            %v806 = vld [vmem:[%s794] ss:$0 sm:$0xff]
            %s807 = scalar_lea.vmem %s793, 1
            %808 = vst [vmem:[%s807] sm:$0x1] %v806
            %s809 = scalar_lea.vmem %s794, 1
            %v810 = vld [vmem:[%s809] sm:$0x7f]
            %v811 = vlaneseq
            %v812 = vshrl.u32 %v811, 7
            %vm813 = vcmp.eq.s32.totalorder %v812, 7
            %v814 = vsel %vm813, %v804, %v810
            %v815 = vld [vmem:[%s794] ss:$0 sm:$0xff]
            %816 = vst [vmem:[%s794] sm:$0xff] %v814
            %s817 = smov [#allocation21]
            %v818 = vld [vmem:[%s817] sm:$0xff]
            %s819 = smov [#allocation22]
            %v820 = vld [vmem:[%s819] sm:$0xff]
            %s821 = smov %s293
            %s822 = smov %s297
            %s823 = smov %s301
            %s824 = smov %s305
            %v825 = vld [vmem:[%s821] sm:$0xff]
            %v826 = vld [vmem:[%s822] sm:$0xff]
            %v827 = vld [vmem:[%s823] sm:$0xff]
            %v828 = vld [vmem:[%s824] sm:$0xff]
            %v829 = vmul.f32 %v818, %v825
            %v830 = vmul.f32 %v820, %v827
            %v831 = vsub.f32 %v829, %v830
            %v832 = vmul.f32 %v818, %v826
            %v833 = vmul.f32 %v820, %v828
            %v834 = vsub.f32 %v832, %v833
            %v835 = vmul.f32 %v820, %v825
            %v836 = vmul.f32 %v818, %v827
            %v837 = vadd.f32 %v835, %v836
            %v838 = vmul.f32 %v820, %v826
            %v839 = vmul.f32 %v818, %v828
            %v840 = vadd.f32 %v838, %v839
            %841 = vst [vmem:[%s821] sm:$0xff] %v831
            %842 = vst [vmem:[%s822] sm:$0xff] %v834
            %843 = vst [vmem:[%s823] sm:$0xff] %v837
            %844 = vst [vmem:[%s824] sm:$0xff] %v840
            %s845 = smov %s293
            %s846 = smov %s301
            %v847 = vld [vmem:[%s845] ss:$0 sm:$0xff]
            %s849 = scalar_lea.vmem %s845, 4294967295
            %v850 = vld [vmem:[%s849] sm:$0xfe]
            %v851 = vlaneseq
            %v852 = vshrl.u32 %v851, 7
            %vm853 = vcmp.eq.s32.totalorder %v852, 0
            %v854 = vsel %vm853, %v847, %v850
            %s855 = scalar_lea.vmem %s845, 7
            %v856 = vld [vmem:[%s855] ss:$0 sm:$0xff]
            %857 = vst [vmem:[%s845] sm:$0xff] %v854
            %v858 = vld [vmem:[%s846] ss:$0 sm:$0xff]
            %s859 = scalar_lea.vmem %s845, 1
            %860 = vst [vmem:[%s859] sm:$0x1] %v858
            %s861 = scalar_lea.vmem %s846, 1
            %v862 = vld [vmem:[%s861] sm:$0x7f]
            %v863 = vlaneseq
            %v864 = vshrl.u32 %v863, 7
            %vm865 = vcmp.eq.s32.totalorder %v864, 7
            %v866 = vsel %vm865, %v856, %v862
            %v867 = vld [vmem:[%s846] ss:$0 sm:$0xff]
            %868 = vst [vmem:[%s846] sm:$0xff] %v866
            %s869 = smov %s297
            %s870 = smov %s305
            %v871 = vld [vmem:[%s869] ss:$0 sm:$0xff]
            %s873 = scalar_lea.vmem %s869, 4294967295
            %v874 = vld [vmem:[%s873] sm:$0xfe]
            %v875 = vlaneseq
            %v876 = vshrl.u32 %v875, 7
            %vm877 = vcmp.eq.s32.totalorder %v876, 0
            %v878 = vsel %vm877, %v871, %v874
            %s879 = scalar_lea.vmem %s869, 7
            %v880 = vld [vmem:[%s879] ss:$0 sm:$0xff]
            %881 = vst [vmem:[%s869] sm:$0xff] %v878
            %v882 = vld [vmem:[%s870] ss:$0 sm:$0xff]
            %s883 = scalar_lea.vmem %s869, 1
            %884 = vst [vmem:[%s883] sm:$0x1] %v882
            %s885 = scalar_lea.vmem %s870, 1
            %v886 = vld [vmem:[%s885] sm:$0x7f]
            %v887 = vlaneseq
            %v888 = vshrl.u32 %v887, 7
            %vm889 = vcmp.eq.s32.totalorder %v888, 7
            %v890 = vsel %vm889, %v880, %v886
            %v891 = vld [vmem:[%s870] ss:$0 sm:$0xff]
            %892 = vst [vmem:[%s870] sm:$0xff] %v890
          $region168: #{custom-call.5} parent=160 // loop_footer
            %s453 = sadd.s32 1, %s449
          $region169: #{custom-call.5} parent=160 // loop_footer_branch
            %448 = sbr.rel target = $region165
          $region170: #{custom-call.5} parent=160 // loop_exit
            _
          %s893 = sadd.s32 %s351, 1
        $region161: #{custom-call.5} parent=155 // loop_footer
          _
        $region162: #{custom-call.5} parent=155 // loop_footer_branch
          %350 = sbr.rel target = $region158
        $region163: #{custom-call.5} parent=155 // loop_exit
          _
        %s896 = sand.u32 %s17, 7
        %s897 = scalar_lea.vmem %s283, %s896 [#allocation4]
        %s898 = sand.u32 %s17, 7
        %s899 = scalar_lea.vmem %s289, %s898 [#allocation5]
        %s900 = smov [#allocation10]
        %s901 = smov %s897
        %v902 = vlaneseq
        %v903 = vand.u32 %v902, 127
        %v904 = vmov %v903
        %v905 = vlaneseq
        %v906 = vshrl.u32 %v905, 7
        %v907 = vmov %v906
        %v908 = vld [vmem:[%s900] sm:$0xff]
        %vm911 = vcmp.eq.s32.totalorder %v907, %v904
        %v912 = vsel %vm911, %v908, 0.0
        %v913 = vrot.slane %v912, 4
        %v914 = vadd.f32 %v912, %v913
        %v915 = vrot.slane %v914, 2
        %v916 = vadd.f32 %v914, %v915
        %v917 = vrot.slane %v916, 1
        %v918 = vadd.f32 %v916, %v917
        %919 = vst [vmem:[%s901] sm:$0x1] %v918
        %s920 = smov [#allocation13]
        %s921 = smov %s899
        %v922 = vlaneseq
        %v923 = vand.u32 %v922, 127
        %v924 = vmov %v923
        %v925 = vlaneseq
        %v926 = vshrl.u32 %v925, 7
        %v927 = vmov %v926
        %v928 = vld [vmem:[%s920] sm:$0xff]
        %vm931 = vcmp.eq.s32.totalorder %v927, %v924
        %v932 = vsel %vm931, %v928, 0.0
        %v933 = vrot.slane %v932, 4
        %v934 = vadd.f32 %v932, %v933
        %v935 = vrot.slane %v934, 2
        %v936 = vadd.f32 %v934, %v935
        %v937 = vrot.slane %v936, 1
        %v938 = vadd.f32 %v936, %v937
        %939 = vst [vmem:[%s921] sm:$0x1] %v938
        %s940 = sand.u32 %s27, 1
        %s941 = sand.u32 %s27, 1
        %s942 = smul.addr %s941, 8
        %s943 = scalar_lea.vmem [#allocation4], %s942
        %s944 = sand.u32 %s55, 1
        %s945 = sand.u32 %s55, 1
        %s946 = smul.addr %s945, 8
        %s947 = scalar_lea.vmem [#allocation5], %s946
        %s948 = sand.u32 %s17, 1
        %s949 = sand.u32 %s17, 1
        %s950 = smul.addr %s949, 8
        %s951 = scalar_lea.vmem [#allocation6], %s950
        %s952 = sand.u32 %s17, 1
        %s953 = sand.u32 %s17, 1
        %s954 = smul.addr %s953, 8
        %s955 = scalar_lea.vmem [#allocation7], %s954
        %s956 = sand.u32 %s17, 1
        %s957 = sand.u32 %s17, 1
        %s958 = smul.addr %s957, 8
        %s959 = scalar_lea.vmem [#allocation8], %s958
        %s960 = sand.u32 %s17, 1
        %s961 = sand.u32 %s17, 1
        %s962 = smul.addr %s961, 8
        %s963 = scalar_lea.vmem [#allocation9], %s962
        // Predicated region
        $region171: #{custom-call.5} parent=155 // pred_check
          %p964 = pneg %p37
        $region172: #{custom-call.5} parent=155 // pred_check_branch
          %966 = sbr.rel (%p964) target = $region174
        $region173: #{custom-call.5} parent=155 // pred_region
          %s967 = sshrl.u32 %s17, 3
          %s968 = smul.addr %s967, 8
          %s969 = scalar_lea.vmem %s4, %s968
          // Predicated region
          $region175: #{custom-call.5} parent=173 // pred_check
            _
          $region176: #{custom-call.5} parent=173 // pred_check_branch
            %971 = sbr.rel (0) target = $region178
          $region177: #{custom-call.5} parent=173 // pred_region
            // Predicated region
            $region179: #{custom-call.5} parent=177 // pred_check
              _
            $region180: #{custom-call.5} parent=177 // pred_check_branch
              %973 = sbr.rel (0) target = $region182
            $region181: #{custom-call.5} parent=177 // pred_region
              // Predicated region
              $region194: #{custom-call.5} parent=181 // pred_check
                _
              $region195: #{custom-call.5} parent=181 // pred_check_branch
                %988 = sbr.rel (0) target = $region197
              $region196: #{custom-call.5} parent=181 // pred_region
                loop: start=0, step=1, limit=1
                $region198: #{custom-call.5} parent=196 // loop_pre_header
                  _
                $region199: #{custom-call.5} parent=196 // loop_header
                  %s990 = sphi 0, %s994
                  %p991 = scmp.ge.s32.totalorder %s990, 1
                  %s995 = sphi %s943, %s943
                  %s996 = sphi %s969, %s969
                $region200: #{custom-call.5} parent=196 // loop_header_branch
                  %993 = sbr.rel (%p991) target = $region204
                $region201: #{custom-call.5} parent=196 // loop_body
                  %v997 = vld [vmem:[%s995] sm:$0xff]
                  %998 = vst [vmem:[%s996] sm:$0xff] %v997
                $region202: #{custom-call.5} parent=196 // loop_footer
                  %s994 = sadd.s32 1, %s990
                $region203: #{custom-call.5} parent=196 // loop_footer_branch
                  %989 = sbr.rel target = $region199
                $region204: #{custom-call.5} parent=196 // loop_exit
                  _
              $region197: #{custom-call.5} parent=181 // pred_fallthru
                _
              // Predicated region
              $region205: #{custom-call.5} parent=181 // pred_check
                _
              $region206: #{custom-call.5} parent=181 // pred_check_branch
                %1000 = sbr.rel target = $region208
              $region207: #{custom-call.5} parent=181 // pred_region
                _
              $region208: #{custom-call.5} parent=181 // pred_fallthru
                _
            $region182: #{custom-call.5} parent=177 // pred_fallthru
              _
            // Predicated region
            $region183: #{custom-call.5} parent=177 // pred_check
              _
            $region184: #{custom-call.5} parent=177 // pred_check_branch
              %975 = sbr.rel target = $region186
            $region185: #{custom-call.5} parent=177 // pred_region
              loop: start=0, step=1, limit=1
              $region187: #{custom-call.5} parent=185 // loop_pre_header
                _
              $region188: #{custom-call.5} parent=185 // loop_header
                %s978 = sphi 0, %s982
                %p979 = scmp.ge.s32.totalorder %s978, 1
                %s983 = sphi %s943, %s943
                %s984 = sphi %s969, %s969
              $region189: #{custom-call.5} parent=185 // loop_header_branch
                %981 = sbr.rel (%p979) target = $region193
              $region190: #{custom-call.5} parent=185 // loop_body
                %v985 = vld [vmem:[%s983] sm:$0xff]
                %986 = vst [vmem:[%s984] sm:$0xff] %v985
              $region191: #{custom-call.5} parent=185 // loop_footer
                %s982 = sadd.s32 1, %s978
              $region192: #{custom-call.5} parent=185 // loop_footer_branch
                %977 = sbr.rel target = $region188
              $region193: #{custom-call.5} parent=185 // loop_exit
                _
            $region186: #{custom-call.5} parent=177 // pred_fallthru
              _
          $region178: #{custom-call.5} parent=173 // pred_fallthru
            _
          %1001 = vnop
        $region174: #{custom-call.5} parent=155 // pred_fallthru
          _
        // Predicated region
        $region209: #{custom-call.5} parent=155 // pred_check
          %p1002 = pneg %p65
        $region210: #{custom-call.5} parent=155 // pred_check_branch
          %1004 = sbr.rel (%p1002) target = $region212
        $region211: #{custom-call.5} parent=155 // pred_region
          %s1005 = sshrl.u32 %s17, 3
          %s1006 = smul.addr %s1005, 8
          %s1007 = scalar_lea.vmem %s5, %s1006
          // Predicated region
          $region213: #{custom-call.5} parent=211 // pred_check
            _
          $region214: #{custom-call.5} parent=211 // pred_check_branch
            %1009 = sbr.rel (0) target = $region216
          $region215: #{custom-call.5} parent=211 // pred_region
            // Predicated region
            $region217: #{custom-call.5} parent=215 // pred_check
              _
            $region218: #{custom-call.5} parent=215 // pred_check_branch
              %1011 = sbr.rel (0) target = $region220
            $region219: #{custom-call.5} parent=215 // pred_region
              // Predicated region
              $region232: #{custom-call.5} parent=219 // pred_check
                _
              $region233: #{custom-call.5} parent=219 // pred_check_branch
                %1026 = sbr.rel (0) target = $region235
              $region234: #{custom-call.5} parent=219 // pred_region
                loop: start=0, step=1, limit=1
                $region236: #{custom-call.5} parent=234 // loop_pre_header
                  _
                $region237: #{custom-call.5} parent=234 // loop_header
                  %s1028 = sphi 0, %s1032
                  %p1029 = scmp.ge.s32.totalorder %s1028, 1
                  %s1033 = sphi %s947, %s947
                  %s1034 = sphi %s1007, %s1007
                $region238: #{custom-call.5} parent=234 // loop_header_branch
                  %1031 = sbr.rel (%p1029) target = $region242
                $region239: #{custom-call.5} parent=234 // loop_body
                  %v1035 = vld [vmem:[%s1033] sm:$0xff]
                  %1036 = vst [vmem:[%s1034] sm:$0xff] %v1035
                $region240: #{custom-call.5} parent=234 // loop_footer
                  %s1032 = sadd.s32 1, %s1028
                $region241: #{custom-call.5} parent=234 // loop_footer_branch
                  %1027 = sbr.rel target = $region237
                $region242: #{custom-call.5} parent=234 // loop_exit
                  _
              $region235: #{custom-call.5} parent=219 // pred_fallthru
                _
              // Predicated region
              $region243: #{custom-call.5} parent=219 // pred_check
                _
              $region244: #{custom-call.5} parent=219 // pred_check_branch
                %1038 = sbr.rel target = $region246
              $region245: #{custom-call.5} parent=219 // pred_region
                _
              $region246: #{custom-call.5} parent=219 // pred_fallthru
                _
            $region220: #{custom-call.5} parent=215 // pred_fallthru
              _
            // Predicated region
            $region221: #{custom-call.5} parent=215 // pred_check
              _
            $region222: #{custom-call.5} parent=215 // pred_check_branch
              %1013 = sbr.rel target = $region224
            $region223: #{custom-call.5} parent=215 // pred_region
              loop: start=0, step=1, limit=1
              $region225: #{custom-call.5} parent=223 // loop_pre_header
                _
              $region226: #{custom-call.5} parent=223 // loop_header
                %s1016 = sphi 0, %s1020
                %p1017 = scmp.ge.s32.totalorder %s1016, 1
                %s1021 = sphi %s947, %s947
                %s1022 = sphi %s1007, %s1007
              $region227: #{custom-call.5} parent=223 // loop_header_branch
                %1019 = sbr.rel (%p1017) target = $region231
              $region228: #{custom-call.5} parent=223 // loop_body
                %v1023 = vld [vmem:[%s1021] sm:$0xff]
                %1024 = vst [vmem:[%s1022] sm:$0xff] %v1023
              $region229: #{custom-call.5} parent=223 // loop_footer
                %s1020 = sadd.s32 1, %s1016
              $region230: #{custom-call.5} parent=223 // loop_footer_branch
                %1015 = sbr.rel target = $region226
              $region231: #{custom-call.5} parent=223 // loop_exit
                _
            $region224: #{custom-call.5} parent=215 // pred_fallthru
              _
          $region216: #{custom-call.5} parent=211 // pred_fallthru
            _
          %1039 = vnop
        $region212: #{custom-call.5} parent=155 // pred_fallthru
          _
        %s1040 = smul.addr %s17, 8
        %s1041 = scalar_lea.vmem %s6, %s1040
        // Predicated region
        $region247: #{custom-call.5} parent=155 // pred_check
          _
        $region248: #{custom-call.5} parent=155 // pred_check_branch
          %1043 = sbr.rel (0) target = $region250
        $region249: #{custom-call.5} parent=155 // pred_region
          // Predicated region
          $region251: #{custom-call.5} parent=249 // pred_check
            _
          $region252: #{custom-call.5} parent=249 // pred_check_branch
            %1045 = sbr.rel (0) target = $region254
          $region253: #{custom-call.5} parent=249 // pred_region
            // Predicated region
            $region266: #{custom-call.5} parent=253 // pred_check
              _
            $region267: #{custom-call.5} parent=253 // pred_check_branch
              %1060 = sbr.rel (0) target = $region269
            $region268: #{custom-call.5} parent=253 // pred_region
              loop: start=0, step=1, limit=1
              $region270: #{custom-call.5} parent=268 // loop_pre_header
                _
              $region271: #{custom-call.5} parent=268 // loop_header
                %s1062 = sphi 0, %s1066
                %p1063 = scmp.ge.s32.totalorder %s1062, 1
                %s1067 = sphi %s951, %s951
                %s1068 = sphi %s1041, %s1041
              $region272: #{custom-call.5} parent=268 // loop_header_branch
                %1065 = sbr.rel (%p1063) target = $region276
              $region273: #{custom-call.5} parent=268 // loop_body
                %v1069 = vld [vmem:[%s1067] sm:$0xff]
                %1070 = vst [vmem:[%s1068] sm:$0xff] %v1069
              $region274: #{custom-call.5} parent=268 // loop_footer
                %s1066 = sadd.s32 1, %s1062
              $region275: #{custom-call.5} parent=268 // loop_footer_branch
                %1061 = sbr.rel target = $region271
              $region276: #{custom-call.5} parent=268 // loop_exit
                _
            $region269: #{custom-call.5} parent=253 // pred_fallthru
              _
            // Predicated region
            $region277: #{custom-call.5} parent=253 // pred_check
              _
            $region278: #{custom-call.5} parent=253 // pred_check_branch
              %1072 = sbr.rel target = $region280
            $region279: #{custom-call.5} parent=253 // pred_region
              _
            $region280: #{custom-call.5} parent=253 // pred_fallthru
              _
          $region254: #{custom-call.5} parent=249 // pred_fallthru
            _
          // Predicated region
          $region255: #{custom-call.5} parent=249 // pred_check
            _
          $region256: #{custom-call.5} parent=249 // pred_check_branch
            %1047 = sbr.rel target = $region258
          $region257: #{custom-call.5} parent=249 // pred_region
            loop: start=0, step=1, limit=1
            $region259: #{custom-call.5} parent=257 // loop_pre_header
              _
            $region260: #{custom-call.5} parent=257 // loop_header
              %s1050 = sphi 0, %s1054
              %p1051 = scmp.ge.s32.totalorder %s1050, 1
              %s1055 = sphi %s951, %s951
              %s1056 = sphi %s1041, %s1041
            $region261: #{custom-call.5} parent=257 // loop_header_branch
              %1053 = sbr.rel (%p1051) target = $region265
            $region262: #{custom-call.5} parent=257 // loop_body
              %v1057 = vld [vmem:[%s1055] sm:$0xff]
              %1058 = vst [vmem:[%s1056] sm:$0xff] %v1057
            $region263: #{custom-call.5} parent=257 // loop_footer
              %s1054 = sadd.s32 1, %s1050
            $region264: #{custom-call.5} parent=257 // loop_footer_branch
              %1049 = sbr.rel target = $region260
            $region265: #{custom-call.5} parent=257 // loop_exit
              _
          $region258: #{custom-call.5} parent=249 // pred_fallthru
            _
        $region250: #{custom-call.5} parent=155 // pred_fallthru
          _
        %1073 = vnop
        %s1074 = smul.addr %s17, 8
        %s1075 = scalar_lea.vmem %s7, %s1074
        // Predicated region
        $region281: #{custom-call.5} parent=155 // pred_check
          _
        $region282: #{custom-call.5} parent=155 // pred_check_branch
          %1077 = sbr.rel (0) target = $region284
        $region283: #{custom-call.5} parent=155 // pred_region
          // Predicated region
          $region285: #{custom-call.5} parent=283 // pred_check
            _
          $region286: #{custom-call.5} parent=283 // pred_check_branch
            %1079 = sbr.rel (0) target = $region288
          $region287: #{custom-call.5} parent=283 // pred_region
            // Predicated region
            $region300: #{custom-call.5} parent=287 // pred_check
              _
            $region301: #{custom-call.5} parent=287 // pred_check_branch
              %1094 = sbr.rel (0) target = $region303
            $region302: #{custom-call.5} parent=287 // pred_region
              loop: start=0, step=1, limit=1
              $region304: #{custom-call.5} parent=302 // loop_pre_header
                _
              $region305: #{custom-call.5} parent=302 // loop_header
                %s1096 = sphi 0, %s1100
                %p1097 = scmp.ge.s32.totalorder %s1096, 1
                %s1101 = sphi %s955, %s955
                %s1102 = sphi %s1075, %s1075
              $region306: #{custom-call.5} parent=302 // loop_header_branch
                %1099 = sbr.rel (%p1097) target = $region310
              $region307: #{custom-call.5} parent=302 // loop_body
                %v1103 = vld [vmem:[%s1101] sm:$0xff]
                %1104 = vst [vmem:[%s1102] sm:$0xff] %v1103
              $region308: #{custom-call.5} parent=302 // loop_footer
                %s1100 = sadd.s32 1, %s1096
              $region309: #{custom-call.5} parent=302 // loop_footer_branch
                %1095 = sbr.rel target = $region305
              $region310: #{custom-call.5} parent=302 // loop_exit
                _
            $region303: #{custom-call.5} parent=287 // pred_fallthru
              _
            // Predicated region
            $region311: #{custom-call.5} parent=287 // pred_check
              _
            $region312: #{custom-call.5} parent=287 // pred_check_branch
              %1106 = sbr.rel target = $region314
            $region313: #{custom-call.5} parent=287 // pred_region
              _
            $region314: #{custom-call.5} parent=287 // pred_fallthru
              _
          $region288: #{custom-call.5} parent=283 // pred_fallthru
            _
          // Predicated region
          $region289: #{custom-call.5} parent=283 // pred_check
            _
          $region290: #{custom-call.5} parent=283 // pred_check_branch
            %1081 = sbr.rel target = $region292
          $region291: #{custom-call.5} parent=283 // pred_region
            loop: start=0, step=1, limit=1
            $region293: #{custom-call.5} parent=291 // loop_pre_header
              _
            $region294: #{custom-call.5} parent=291 // loop_header
              %s1084 = sphi 0, %s1088
              %p1085 = scmp.ge.s32.totalorder %s1084, 1
              %s1089 = sphi %s955, %s955
              %s1090 = sphi %s1075, %s1075
            $region295: #{custom-call.5} parent=291 // loop_header_branch
              %1087 = sbr.rel (%p1085) target = $region299
            $region296: #{custom-call.5} parent=291 // loop_body
              %v1091 = vld [vmem:[%s1089] sm:$0xff]
              %1092 = vst [vmem:[%s1090] sm:$0xff] %v1091
            $region297: #{custom-call.5} parent=291 // loop_footer
              %s1088 = sadd.s32 1, %s1084
            $region298: #{custom-call.5} parent=291 // loop_footer_branch
              %1083 = sbr.rel target = $region294
            $region299: #{custom-call.5} parent=291 // loop_exit
              _
          $region292: #{custom-call.5} parent=283 // pred_fallthru
            _
        $region284: #{custom-call.5} parent=155 // pred_fallthru
          _
        %1107 = vnop
        %s1108 = smul.addr %s17, 8
        %s1109 = scalar_lea.vmem %s8, %s1108
        // Predicated region
        $region315: #{custom-call.5} parent=155 // pred_check
          _
        $region316: #{custom-call.5} parent=155 // pred_check_branch
          %1111 = sbr.rel (0) target = $region318
        $region317: #{custom-call.5} parent=155 // pred_region
          // Predicated region
          $region319: #{custom-call.5} parent=317 // pred_check
            _
          $region320: #{custom-call.5} parent=317 // pred_check_branch
            %1113 = sbr.rel (0) target = $region322
          $region321: #{custom-call.5} parent=317 // pred_region
            // Predicated region
            $region334: #{custom-call.5} parent=321 // pred_check
              _
            $region335: #{custom-call.5} parent=321 // pred_check_branch
              %1128 = sbr.rel (0) target = $region337
            $region336: #{custom-call.5} parent=321 // pred_region
              loop: start=0, step=1, limit=1
              $region338: #{custom-call.5} parent=336 // loop_pre_header
                _
              $region339: #{custom-call.5} parent=336 // loop_header
                %s1130 = sphi 0, %s1134
                %p1131 = scmp.ge.s32.totalorder %s1130, 1
                %s1135 = sphi %s959, %s959
                %s1136 = sphi %s1109, %s1109
              $region340: #{custom-call.5} parent=336 // loop_header_branch
                %1133 = sbr.rel (%p1131) target = $region344
              $region341: #{custom-call.5} parent=336 // loop_body
                %v1137 = vld [vmem:[%s1135] sm:$0xff]
                %1138 = vst [vmem:[%s1136] sm:$0xff] %v1137
              $region342: #{custom-call.5} parent=336 // loop_footer
                %s1134 = sadd.s32 1, %s1130
              $region343: #{custom-call.5} parent=336 // loop_footer_branch
                %1129 = sbr.rel target = $region339
              $region344: #{custom-call.5} parent=336 // loop_exit
                _
            $region337: #{custom-call.5} parent=321 // pred_fallthru
              _
            // Predicated region
            $region345: #{custom-call.5} parent=321 // pred_check
              _
            $region346: #{custom-call.5} parent=321 // pred_check_branch
              %1140 = sbr.rel target = $region348
            $region347: #{custom-call.5} parent=321 // pred_region
              _
            $region348: #{custom-call.5} parent=321 // pred_fallthru
              _
          $region322: #{custom-call.5} parent=317 // pred_fallthru
            _
          // Predicated region
          $region323: #{custom-call.5} parent=317 // pred_check
            _
          $region324: #{custom-call.5} parent=317 // pred_check_branch
            %1115 = sbr.rel target = $region326
          $region325: #{custom-call.5} parent=317 // pred_region
            loop: start=0, step=1, limit=1
            $region327: #{custom-call.5} parent=325 // loop_pre_header
              _
            $region328: #{custom-call.5} parent=325 // loop_header
              %s1118 = sphi 0, %s1122
              %p1119 = scmp.ge.s32.totalorder %s1118, 1
              %s1123 = sphi %s959, %s959
              %s1124 = sphi %s1109, %s1109
            $region329: #{custom-call.5} parent=325 // loop_header_branch
              %1121 = sbr.rel (%p1119) target = $region333
            $region330: #{custom-call.5} parent=325 // loop_body
              %v1125 = vld [vmem:[%s1123] sm:$0xff]
              %1126 = vst [vmem:[%s1124] sm:$0xff] %v1125
            $region331: #{custom-call.5} parent=325 // loop_footer
              %s1122 = sadd.s32 1, %s1118
            $region332: #{custom-call.5} parent=325 // loop_footer_branch
              %1117 = sbr.rel target = $region328
            $region333: #{custom-call.5} parent=325 // loop_exit
              _
          $region326: #{custom-call.5} parent=317 // pred_fallthru
            _
        $region318: #{custom-call.5} parent=155 // pred_fallthru
          _
        %1141 = vnop
        %s1142 = smul.addr %s17, 8
        %s1143 = scalar_lea.vmem %s9, %s1142
        // Predicated region
        $region349: #{custom-call.5} parent=155 // pred_check
          _
        $region350: #{custom-call.5} parent=155 // pred_check_branch
          %1145 = sbr.rel (0) target = $region352
        $region351: #{custom-call.5} parent=155 // pred_region
          // Predicated region
          $region353: #{custom-call.5} parent=351 // pred_check
            _
          $region354: #{custom-call.5} parent=351 // pred_check_branch
            %1147 = sbr.rel (0) target = $region356
          $region355: #{custom-call.5} parent=351 // pred_region
            // Predicated region
            $region368: #{custom-call.5} parent=355 // pred_check
              _
            $region369: #{custom-call.5} parent=355 // pred_check_branch
              %1162 = sbr.rel (0) target = $region371
            $region370: #{custom-call.5} parent=355 // pred_region
              loop: start=0, step=1, limit=1
              $region372: #{custom-call.5} parent=370 // loop_pre_header
                _
              $region373: #{custom-call.5} parent=370 // loop_header
                %s1164 = sphi 0, %s1168
                %p1165 = scmp.ge.s32.totalorder %s1164, 1
                %s1169 = sphi %s963, %s963
                %s1170 = sphi %s1143, %s1143
              $region374: #{custom-call.5} parent=370 // loop_header_branch
                %1167 = sbr.rel (%p1165) target = $region378
              $region375: #{custom-call.5} parent=370 // loop_body
                %v1171 = vld [vmem:[%s1169] sm:$0xff]
                %1172 = vst [vmem:[%s1170] sm:$0xff] %v1171
              $region376: #{custom-call.5} parent=370 // loop_footer
                %s1168 = sadd.s32 1, %s1164
              $region377: #{custom-call.5} parent=370 // loop_footer_branch
                %1163 = sbr.rel target = $region373
              $region378: #{custom-call.5} parent=370 // loop_exit
                _
            $region371: #{custom-call.5} parent=355 // pred_fallthru
              _
            // Predicated region
            $region379: #{custom-call.5} parent=355 // pred_check
              _
            $region380: #{custom-call.5} parent=355 // pred_check_branch
              %1174 = sbr.rel target = $region382
            $region381: #{custom-call.5} parent=355 // pred_region
              _
            $region382: #{custom-call.5} parent=355 // pred_fallthru
              _
          $region356: #{custom-call.5} parent=351 // pred_fallthru
            _
          // Predicated region
          $region357: #{custom-call.5} parent=351 // pred_check
            _
          $region358: #{custom-call.5} parent=351 // pred_check_branch
            %1149 = sbr.rel target = $region360
          $region359: #{custom-call.5} parent=351 // pred_region
            loop: start=0, step=1, limit=1
            $region361: #{custom-call.5} parent=359 // loop_pre_header
              _
            $region362: #{custom-call.5} parent=359 // loop_header
              %s1152 = sphi 0, %s1156
              %p1153 = scmp.ge.s32.totalorder %s1152, 1
              %s1157 = sphi %s963, %s963
              %s1158 = sphi %s1143, %s1143
            $region363: #{custom-call.5} parent=359 // loop_header_branch
              %1155 = sbr.rel (%p1153) target = $region367
            $region364: #{custom-call.5} parent=359 // loop_body
              %v1159 = vld [vmem:[%s1157] sm:$0xff]
              %1160 = vst [vmem:[%s1158] sm:$0xff] %v1159
            $region365: #{custom-call.5} parent=359 // loop_footer
              %s1156 = sadd.s32 1, %s1152
            $region366: #{custom-call.5} parent=359 // loop_footer_branch
              %1151 = sbr.rel target = $region362
            $region367: #{custom-call.5} parent=359 // loop_exit
              _
          $region360: #{custom-call.5} parent=351 // pred_fallthru
            _
        $region352: #{custom-call.5} parent=155 // pred_fallthru
          _
        %1175 = vnop
      $region156: #{custom-call.5} parent=5 // pred_fallthru
        _
      %p1176 = scmp.le.s32.totalorder 2, %s12
      // Predicated region
      $region383: #{custom-call.5} parent=5 // pred_check
        %p1177 = pneg %p1176
      $region384: #{custom-call.5} parent=5 // pred_check_branch
        %1179 = sbr.rel (%p1177) target = $region386
      $region385: #{custom-call.5} parent=5 // pred_region
        %s1180 = ssub.s32 %s12, 2
        // Predicated region
        $region387: #{custom-call.5} parent=385 // pred_check
          %p1181 = pneg %p43
        $region388: #{custom-call.5} parent=385 // pred_check_branch
          %1183 = sbr.rel (%p1181) target = $region390
        $region389: #{custom-call.5} parent=385 // pred_region
          %s1184 = sand.u32 %s28, 1
          %s1185 = sand.u32 %s28, 1
          %s1186 = smul.addr %s1185, 8
          %s1187 = scalar_lea.vmem [#allocation4], %s1186
        $region390: #{custom-call.5} parent=385 // pred_fallthru
          _
        // Predicated region
        $region391: #{custom-call.5} parent=385 // pred_check
          %p1188 = pneg %p71
        $region392: #{custom-call.5} parent=385 // pred_check_branch
          %1190 = sbr.rel (%p1188) target = $region394
        $region393: #{custom-call.5} parent=385 // pred_region
          %s1191 = sand.u32 %s56, 1
          %s1192 = sand.u32 %s56, 1
          %s1193 = smul.addr %s1192, 8
          %s1194 = scalar_lea.vmem [#allocation5], %s1193
        $region394: #{custom-call.5} parent=385 // pred_fallthru
          _
        %s1195 = sand.u32 %s18, 1
        %s1196 = sand.u32 %s18, 1
        %s1197 = smul.addr %s1196, 8
        %s1198 = scalar_lea.vmem [#allocation6], %s1197
        %s1199 = sand.u32 %s18, 1
        %s1200 = sand.u32 %s18, 1
        %s1201 = smul.addr %s1200, 8
        %s1202 = scalar_lea.vmem [#allocation7], %s1201
        %s1203 = sand.u32 %s18, 1
        %s1204 = sand.u32 %s18, 1
        %s1205 = smul.addr %s1204, 8
        %s1206 = scalar_lea.vmem [#allocation8], %s1205
        %s1207 = sand.u32 %s18, 1
        %s1208 = sand.u32 %s18, 1
        %s1209 = smul.addr %s1208, 8
        %s1210 = scalar_lea.vmem [#allocation9], %s1209
      $region386: #{custom-call.5} parent=5 // pred_fallthru
        _
    $region6: #{custom-call.5} parent=1 // loop_footer
      %s16 = sadd.s32 1, %s12
    $region7: #{custom-call.5} parent=1 // loop_footer_branch
      %11 = sbr.rel target = $region3
    $region8: #{custom-call.5} parent=1 // loop_exit
      _

// kernel: tangent_space_forward.3
$region0: #{tangent_space_forward.3}
  #allocation0 [shape = 'u32[]', space=smem, size = 0x4, offset = 0x4, fixed_abs, tag = 'smem constant byte address 0x4 - core index']
  #allocation1 [shape = 'u32[144,128]{1,0:T(1,128)}', space=vmem, size = 0x12000, scoped, tag = 'internal scratch']
  %s0 = inlined_call_operand.vmem [shape: f32[32,256], index: 0, kind: input, shape index: {}]
  %s1 = inlined_call_operand.vmem [shape: f32[32,16], index: 1, kind: input, shape index: {}]
  %s2 = inlined_call_operand.vmem [shape: f32[16,256], index: 2, kind: input, shape index: {}]
  %s3 = inlined_call_operand.vmem [shape: f32[16,256], index: 3, kind: input, shape index: {}]
  %s4 = inlined_call_operand.vmem [shape: f32[256,256], index: 4, kind: input, shape index: {}]
  %s5 = inlined_call_operand.vmem [shape: f32[32,256], index: 5, kind: output, shape index: {}]
  %s6 = sld [smem:[#allocation0]]
  $region53: #{tangent_space_forward.3} parent=0
    _
  %s8 = ssub.s32 1, %s6
  %s9 = scalar_select 0, %s8, %s6
  loop: start=0, step=1, limit=4
  $region2: #{tangent_space_forward.3} parent=0 // loop_pre_header
    _
  $region3: #{tangent_space_forward.3} parent=0 // loop_header
    %s11 = sphi 0, %s15
    %p12 = scmp.ge.s32.totalorder %s11, 4
    %s21 = sphi 0, %s23
    %s24 = sphi 0, %s21
    %s25 = sphi 0, %s24
    %s41 = sphi 0, %s25
    %s47 = sphi 0, %s49
    %s50 = sphi 0, %s47
    %s51 = sphi 0, %s50
    %s67 = sphi 0, %s51
    %s71 = sphi 0, %s71
    %s73 = sphi 0, %s71
    %s74 = sphi 0, %s73
    %s88 = sphi 0, %s74
    %s92 = sphi 0, %s92
    %s94 = sphi 0, %s92
    %s95 = sphi 0, %s94
    %s109 = sphi 0, %s95
    %s113 = sphi 0, %s113
    %s115 = sphi 0, %s113
    %s116 = sphi 0, %s115
    %s130 = sphi 0, %s116
    %s136 = sphi 0, %s138
    %s139 = sphi 0, %s136
    %s140 = sphi 0, %s139
    %s156 = sphi 0, %s140
  $region4: #{tangent_space_forward.3} parent=0 // loop_header_branch
    %14 = sbr.rel (%p12) target = $region8
  $region5: #{tangent_space_forward.3} parent=0 // loop_body
    %s16 = ssub.s32 %s11, 1
    %s17 = ssub.s32 %s11, 2
    %s18 = sadd.s32 %s11, 1
    %s19 = ssub.s32 %s11, %s18
    %p20 = scmp.eq.s32.totalorder %s19, 0
    %s22 = sadd.s32 %s21, 1
    %s23 = scalar_select %p20, %s21, %s22
    %p26 = pneg %p20
    %p27 = scmp.eq.s32.totalorder %s11, 1
    %p28 = por %p26, %p27
    %p29 = scmp.ne.s32.totalorder %s21, %s24
    %p30 = scmp.eq.s32.totalorder %s11, 0
    %p31 = por %p29, %p30
    %p32 = scmp.ne.s32.totalorder %s21, %s24
    %p33 = scmp.eq.s32.totalorder %s16, 1
    %p34 = por %p32, %p33
    %p35 = scmp.ne.s32.totalorder %s24, %s25
    %p36 = scmp.eq.s32.totalorder %s16, 0
    %p37 = por %p35, %p36
    %p38 = scmp.ne.s32.totalorder %s24, %s25
    %p39 = scmp.eq.s32.totalorder %s17, 1
    %p40 = por %p38, %p39
    %p42 = scmp.ne.s32.totalorder %s25, %s41
    %p43 = scmp.eq.s32.totalorder %s17, 0
    %p44 = por %p42, %p43
    %s45 = ssub.s32 %s11, %s18
    %p46 = scmp.eq.s32.totalorder %s45, 0
    %s48 = sadd.s32 %s47, 1
    %s49 = scalar_select %p46, %s47, %s48
    %p52 = pneg %p46
    %p53 = scmp.eq.s32.totalorder %s11, 1
    %p54 = por %p52, %p53
    %p55 = scmp.ne.s32.totalorder %s47, %s50
    %p56 = scmp.eq.s32.totalorder %s11, 0
    %p57 = por %p55, %p56
    %p58 = scmp.ne.s32.totalorder %s47, %s50
    %p59 = scmp.eq.s32.totalorder %s16, 1
    %p60 = por %p58, %p59
    %p61 = scmp.ne.s32.totalorder %s50, %s51
    %p62 = scmp.eq.s32.totalorder %s16, 0
    %p63 = por %p61, %p62
    %p64 = scmp.ne.s32.totalorder %s50, %s51
    %p65 = scmp.eq.s32.totalorder %s17, 1
    %p66 = por %p64, %p65
    %p68 = scmp.ne.s32.totalorder %s51, %s67
    %p69 = scmp.eq.s32.totalorder %s17, 0
    %p70 = por %p68, %p69
    %s72 = sadd.s32 %s71, 1
    %p75 = scmp.eq.s32.totalorder %s11, 1
    %p76 = scmp.ne.s32.totalorder %s71, %s73
    %p77 = scmp.eq.s32.totalorder %s11, 0
    %p78 = por %p76, %p77
    %p79 = scmp.ne.s32.totalorder %s71, %s73
    %p80 = scmp.eq.s32.totalorder %s16, 1
    %p81 = por %p79, %p80
    %p82 = scmp.ne.s32.totalorder %s73, %s74
    %p83 = scmp.eq.s32.totalorder %s16, 0
    %p84 = por %p82, %p83
    %p85 = scmp.ne.s32.totalorder %s73, %s74
    %p86 = scmp.eq.s32.totalorder %s17, 1
    %p87 = por %p85, %p86
    %p89 = scmp.ne.s32.totalorder %s74, %s88
    %p90 = scmp.eq.s32.totalorder %s17, 0
    %p91 = por %p89, %p90
    %s93 = sadd.s32 %s92, 1
    %p96 = scmp.eq.s32.totalorder %s11, 1
    %p97 = scmp.ne.s32.totalorder %s92, %s94
    %p98 = scmp.eq.s32.totalorder %s11, 0
    %p99 = por %p97, %p98
    %p100 = scmp.ne.s32.totalorder %s92, %s94
    %p101 = scmp.eq.s32.totalorder %s16, 1
    %p102 = por %p100, %p101
    %p103 = scmp.ne.s32.totalorder %s94, %s95
    %p104 = scmp.eq.s32.totalorder %s16, 0
    %p105 = por %p103, %p104
    %p106 = scmp.ne.s32.totalorder %s94, %s95
    %p107 = scmp.eq.s32.totalorder %s17, 1
    %p108 = por %p106, %p107
    %p110 = scmp.ne.s32.totalorder %s95, %s109
    %p111 = scmp.eq.s32.totalorder %s17, 0
    %p112 = por %p110, %p111
    %s114 = sadd.s32 %s113, 1
    %p117 = scmp.eq.s32.totalorder %s11, 1
    %p118 = scmp.ne.s32.totalorder %s113, %s115
    %p119 = scmp.eq.s32.totalorder %s11, 0
    %p120 = por %p118, %p119
    %p121 = scmp.ne.s32.totalorder %s113, %s115
    %p122 = scmp.eq.s32.totalorder %s16, 1
    %p123 = por %p121, %p122
    %p124 = scmp.ne.s32.totalorder %s115, %s116
    %p125 = scmp.eq.s32.totalorder %s16, 0
    %p126 = por %p124, %p125
    %p127 = scmp.ne.s32.totalorder %s115, %s116
    %p128 = scmp.eq.s32.totalorder %s17, 1
    %p129 = por %p127, %p128
    %p131 = scmp.ne.s32.totalorder %s116, %s130
    %p132 = scmp.eq.s32.totalorder %s17, 0
    %p133 = por %p131, %p132
    %s134 = ssub.s32 %s11, %s18
    %p135 = scmp.eq.s32.totalorder %s134, 0
    %s137 = sadd.s32 %s136, 1
    %s138 = scalar_select %p135, %s136, %s137
    %p141 = pneg %p135
    %p142 = scmp.eq.s32.totalorder %s11, 1
    %p143 = por %p141, %p142
    %p144 = scmp.ne.s32.totalorder %s136, %s139
    %p145 = scmp.eq.s32.totalorder %s11, 0
    %p146 = por %p144, %p145
    %p147 = scmp.ne.s32.totalorder %s136, %s139
    %p148 = scmp.eq.s32.totalorder %s16, 1
    %p149 = por %p147, %p148
    %p150 = scmp.ne.s32.totalorder %s139, %s140
    %p151 = scmp.eq.s32.totalorder %s16, 0
    %p152 = por %p150, %p151
    %p153 = scmp.ne.s32.totalorder %s139, %s140
    %p154 = scmp.eq.s32.totalorder %s17, 1
    %p155 = por %p153, %p154
    %p157 = scmp.ne.s32.totalorder %s140, %s156
    %p158 = scmp.eq.s32.totalorder %s17, 0
    %p159 = por %p157, %p158
    %p160 = scmp.le.s32.totalorder 1, %s11
    %p161 = scmp.lt.s32.totalorder %s11, 3
    %p162 = pnand %p160, %p161
    %p163 = pneg %p162
    // Predicated region
    $region9: #{tangent_space_forward.3} parent=5 // pred_check
      _
    $region10: #{tangent_space_forward.3} parent=5 // pred_check_branch
      %165 = sbr.rel (%p162) target = $region12
    $region11: #{tangent_space_forward.3} parent=5 // pred_region
      %s166 = ssub.s32 %s11, 1
      // Predicated region
      $region13: #{tangent_space_forward.3} parent=11 // pred_check
        %p167 = pneg %p84
      $region14: #{tangent_space_forward.3} parent=11 // pred_check_branch
        %169 = sbr.rel (%p167) target = $region16
      $region15: #{tangent_space_forward.3} parent=11 // pred_region
        _
      $region16: #{tangent_space_forward.3} parent=11 // pred_fallthru
        _
      // Predicated region
      $region17: #{tangent_space_forward.3} parent=11 // pred_check
        %p170 = pneg %p105
      $region18: #{tangent_space_forward.3} parent=11 // pred_check_branch
        %172 = sbr.rel (%p170) target = $region20
      $region19: #{tangent_space_forward.3} parent=11 // pred_region
        _
      $region20: #{tangent_space_forward.3} parent=11 // pred_fallthru
        _
      // Predicated region
      $region21: #{tangent_space_forward.3} parent=11 // pred_check
        %p173 = pneg %p126
      $region22: #{tangent_space_forward.3} parent=11 // pred_check_branch
        %175 = sbr.rel (%p173) target = $region24
      $region23: #{tangent_space_forward.3} parent=11 // pred_region
        _
      $region24: #{tangent_space_forward.3} parent=11 // pred_fallthru
        _
    $region12: #{tangent_space_forward.3} parent=5 // pred_fallthru
      _
    %p176 = scmp.lt.s32.totalorder %s11, 2
    // Predicated region
    $region25: #{tangent_space_forward.3} parent=5 // pred_check
      %p177 = pneg %p176
    $region26: #{tangent_space_forward.3} parent=5 // pred_check_branch
      %179 = sbr.rel (%p177) target = $region28
    $region27: #{tangent_space_forward.3} parent=5 // pred_region
      // Predicated region
      $region29: #{tangent_space_forward.3} parent=27 // pred_check
        %p180 = pneg %p31
      $region30: #{tangent_space_forward.3} parent=27 // pred_check_branch
        %182 = sbr.rel (%p180) target = $region32
      $region31: #{tangent_space_forward.3} parent=27 // pred_region
        %s183 = smul.u32 2, %s11
        %p184 = scmp.lt.s32.totalorder %s183, 3
        %s185 = scalar_select %p184, %s183, 3
        %s186 = smul.addr %s185, 2
        %s187 = smul.addr %s186, 8
        %s188 = scalar_lea.vmem %s0, %s187
        %s189 = smul.u32 2, %s11
      $region32: #{tangent_space_forward.3} parent=27 // pred_fallthru
        _
      // Predicated region
      $region33: #{tangent_space_forward.3} parent=27 // pred_check
        %p190 = pneg %p57
      $region34: #{tangent_space_forward.3} parent=27 // pred_check_branch
        %192 = sbr.rel (%p190) target = $region36
      $region35: #{tangent_space_forward.3} parent=27 // pred_region
        %s193 = smul.u32 2, %s11
        %p194 = scmp.lt.s32.totalorder %s193, 3
        %s195 = scalar_select %p194, %s193, 3
        %s196 = smul.addr %s195, 8
        %s197 = scalar_lea.vmem %s1, %s196
        %s198 = smul.u32 2, %s11
      $region36: #{tangent_space_forward.3} parent=27 // pred_fallthru
        _
    $region28: #{tangent_space_forward.3} parent=5 // pred_fallthru
      _
    %p199 = scmp.le.s32.totalorder 1, %s11
    %p200 = scmp.lt.s32.totalorder %s11, 3
    %p201 = pnand %p199, %p200
    %p202 = pneg %p201
    // Predicated region
    $region37: #{tangent_space_forward.3} parent=5 // pred_check
      _
    $region38: #{tangent_space_forward.3} parent=5 // pred_check_branch
      %204 = sbr.rel (%p201) target = $region40
    $region39: #{tangent_space_forward.3} parent=5 // pred_region
      %s205 = ssub.s32 %s11, 1
      %s206 = smul.u32 2, %s16
      %p207 = scmp.lt.s32.totalorder %s206, 3
      %s208 = scalar_select %p207, %s206, 3
      %s209 = smul.addr %s208, 2
      %s210 = smul.addr %s209, 8
      %s211 = scalar_lea.vmem %s0, %s210
      %p212 = pneg %p37
      %p213 = pneg %p34
      %s214 = smul.u32 2, %s16
      %p215 = scmp.lt.s32.totalorder %s214, 3
      %s216 = scalar_select %p215, %s214, 3
      %s217 = smul.addr %s216, 8
      %s218 = scalar_lea.vmem %s1, %s217
      %p219 = pneg %p63
      %p220 = pneg %p60
      %p221 = pneg %p84
      %p222 = pneg %p81
      %p223 = pneg %p105
      %p224 = pneg %p102
      %p225 = pneg %p126
      %p226 = pneg %p123
      %p227 = pneg %p152
      %p228 = pneg %p149
      %s229 = smul.u32 2, %s16
      %p230 = scmp.lt.s32.totalorder %s229, 3
      %s231 = scalar_select %p230, %s229, 3
      %s232 = smul.addr %s231, 2
      %s233 = smul.addr %s232, 8
      %s234 = scalar_lea.vmem %s5, %s233
      %s235 = smul.u32 2, %s16
      %p236 = scmp.lt.s32.totalorder %s235, 3
      %s237 = scalar_select %p236, %s235, 3
      %s238 = smul.addr %s237, 2
      %s239 = smul.addr %s238, 8
      %s240 = scalar_lea.vmem %s0, %s239
      %s241 = smul.u32 2, %s16
      %s242 = smul.u32 2, %s16
      %p243 = scmp.lt.s32.totalorder %s242, 3
      %s244 = scalar_select %p243, %s242, 3
      %s245 = smul.addr %s244, 8
      %s246 = scalar_lea.vmem %s1, %s245
      %s247 = smul.u32 2, %s16
      %s248 = smul.u32 2, %s16
      %p249 = scmp.lt.s32.totalorder %s248, 3
      %s250 = scalar_select %p249, %s248, 3
      %s251 = smul.addr %s250, 2
      %s252 = smul.addr %s251, 8
      %s253 = scalar_lea.vmem %s5, %s252
      %s254 = smul.u32 2, %s16
      %v255 = vld [vmem:[%s240] sm:$0xff]
      %v256 = vld [vmem:[%s240 + $0x8] sm:$0xff]
      %v257 = vld [vmem:[%s240 + $0x10] sm:$0xff]
      %v258 = vld [vmem:[%s240 + $0x18] sm:$0xff]
      %v259 = vld [vmem:[%s246] sm:$0xff]
      %v260 = vld [vmem:[%s246 + $0x8] sm:$0xff]
      %v261 = vld [vmem:[%s2] sm:$0xff]
      %v262 = vld [vmem:[%s2 + $0x8] sm:$0xff]
      %v263 = vld [vmem:[%s2 + $0x10] sm:$0xff]
      %v264 = vld [vmem:[%s2 + $0x18] sm:$0xff]
      %v265 = vld [vmem:[%s3] sm:$0xff]
      %v266 = vld [vmem:[%s3 + $0x8] sm:$0xff]
      %v267 = vld [vmem:[%s3 + $0x10] sm:$0xff]
      %v268 = vld [vmem:[%s3 + $0x18] sm:$0xff]
      %270 = vset.pattern.permute.xlu0 0
      %271 = vperm.xlu0 %270, %v259
      %v272 = vpop.permute.xlu0 %271
      %275 = vset.pattern.permute.xlu0 0
      %276 = vperm.xlu0 %275, %v260
      %v277 = vpop.permute.xlu0 %276
      %v279 = vmul.f32 %v255, %v272
      %v280 = vmul.f32 %v257, %v277
      %vm281 = vcmask 130048
      %v283 = vsel %vm281, %v279, 0
      %v286 = vsel %vm281, %v280, 0
      %288 = vmatprep.subr.mxu0 %v262
      %289 = vmatpush1.msra.mxu0 %v261
      %290 = vmatprep.subr.mxu0 %v264
      %291 = vmatpush1.msra.mxu0 %v263
      %292 = vmatprep.subr.mxu0 0.0
      %293 = vmatpush1.msra.mxu0 0.0
      %294 = vmatprep.subr.mxu0 0.0
      %295 = vmatpush1.msra.mxu0 0.0
      %296 = vmatprep.subr.mxu0 0.0
      %297 = vmatpush1.msra.mxu0 0.0
      %298 = vmatprep.subr.mxu0 0.0
      %299 = vmatpush1.msra.mxu0 0.0
      %300 = vmatprep.subr.mxu0 0.0
      %301 = vmatpush1.msra.mxu0 0.0
      %302 = vmatprep.subr.mxu0 0.0
      %303 = vmatpush1.msra.mxu0 0.0
      %304 = vmatprep.subr.mxu0 0.0
      %305 = vmatpush1.msra.mxu0 0.0
      %306 = vmatprep.subr.mxu0 0.0
      %307 = vmatpush1.msra.mxu0 0.0
      %308 = vmatprep.subr.mxu0 0.0
      %309 = vmatpush1.msra.mxu0 0.0
      %310 = vmatprep.subr.mxu0 0.0
      %311 = vmatpush1.msra.mxu0 0.0
      %312 = vmatprep.subr.mxu0 0.0
      %313 = vmatpush1.msra.mxu0 0.0
      %314 = vmatprep.subr.mxu0 0.0
      %315 = vmatpush1.msra.mxu0 0.0
      %316 = vmatprep.subr.mxu0 0.0
      %317 = vmatpush1.msra.mxu0 0.0
      %318 = vmatprep.subr.mxu0 0.0
      %319 = vmatpush1.msra.mxu0 0.0
      %320 = vmatprep.subr.mxu0 0.0
      %321 = vmatpush1.msra.mxu0 0.0
      %322 = vmatprep.subr.mxu0 0.0
      %323 = vmatpush1.msra.mxu0 0.0
      %324 = vmatprep.subr.mxu0 0.0
      %325 = vmatpush1.msra.mxu0 0.0
      %326 = vmatprep.subr.mxu0 0.0
      %327 = vmatpush1.msra.mxu0 0.0
      %328 = vmatprep.subr.mxu0 0.0
      %329 = vmatpush1.msra.mxu0 0.0
      %330 = vmatprep.subr.mxu0 0.0
      %331 = vmatpush1.msra.mxu0 0.0
      %332 = vmatprep.subr.mxu0 0.0
      %333 = vmatpush1.msra.mxu0 0.0
      %334 = vmatprep.subr.mxu0 0.0
      %335 = vmatpush1.msra.mxu0 0.0
      %336 = vmatprep.subr.mxu0 0.0
      %337 = vmatpush1.msra.mxu0 0.0
      %338 = vmatprep.subr.mxu0 0.0
      %339 = vmatpush1.msra.mxu0 0.0
      %340 = vmatprep.subr.mxu0 0.0
      %341 = vmatpush1.msra.mxu0 0.0
      %342 = vmatprep.subr.mxu0 0.0
      %343 = vmatpush1.msra.mxu0 0.0
      %344 = vmatprep.subr.mxu0 0.0
      %345 = vmatpush1.msra.mxu0 0.0
      %346 = vmatprep.subr.mxu0 0.0
      %347 = vmatpush1.msra.mxu0 0.0
      %348 = vmatprep.subr.mxu0 0.0
      %349 = vmatpush1.msra.mxu0 0.0
      %350 = vmatprep.subr.mxu0 0.0
      %351 = vmatpush1.msra.mxu0 0.0
      %352 = vmatprep.mubr.f32.mxu0 0.0
      %353 = vmatmul.mubr.f32.gmra.mrb[0].mxu0 %v283
      %v354 = vpop.f32.mrb[0].mxu0
      %v355 = vadd.f32 0.0, %v354
      %v356 = vpop.f32.mrb[0].mxu0
      %v357 = vadd.f32 0.0, %v356
      %358 = vmatprep.mubr.f32.mxu0 0.0
      %359 = vmatmul.mubr.f32.gmra.mrb[0].mxu0 %v286
      %v360 = vpop.f32.mrb[0].mxu0
      %v361 = vadd.f32 0.0, %v360
      %v362 = vpop.f32.mrb[0].mxu0
      %v363 = vadd.f32 0.0, %v362
      %364 = vdwg.mxu0
      %v366 = vsel %vm281, %v255, 0
      %v369 = vsel %vm281, %v257, 0
      %371 = vmatprep.subr.mxu0 %v266
      %372 = vmatpush1.msra.mxu0 %v265
      %373 = vmatprep.subr.mxu0 %v268
      %374 = vmatpush1.msra.mxu0 %v267
      %375 = vmatprep.subr.mxu0 0.0
      %376 = vmatpush1.msra.mxu0 0.0
      %377 = vmatprep.subr.mxu0 0.0
      %378 = vmatpush1.msra.mxu0 0.0
      %379 = vmatprep.subr.mxu0 0.0
      %380 = vmatpush1.msra.mxu0 0.0
      %381 = vmatprep.subr.mxu0 0.0
      %382 = vmatpush1.msra.mxu0 0.0
      %383 = vmatprep.subr.mxu0 0.0
      %384 = vmatpush1.msra.mxu0 0.0
      %385 = vmatprep.subr.mxu0 0.0
      %386 = vmatpush1.msra.mxu0 0.0
      %387 = vmatprep.subr.mxu0 0.0
      %388 = vmatpush1.msra.mxu0 0.0
      %389 = vmatprep.subr.mxu0 0.0
      %390 = vmatpush1.msra.mxu0 0.0
      %391 = vmatprep.subr.mxu0 0.0
      %392 = vmatpush1.msra.mxu0 0.0
      %393 = vmatprep.subr.mxu0 0.0
      %394 = vmatpush1.msra.mxu0 0.0
      %395 = vmatprep.subr.mxu0 0.0
      %396 = vmatpush1.msra.mxu0 0.0
      %397 = vmatprep.subr.mxu0 0.0
      %398 = vmatpush1.msra.mxu0 0.0
      %399 = vmatprep.subr.mxu0 0.0
      %400 = vmatpush1.msra.mxu0 0.0
      %401 = vmatprep.subr.mxu0 0.0
      %402 = vmatpush1.msra.mxu0 0.0
      %403 = vmatprep.subr.mxu0 0.0
      %404 = vmatpush1.msra.mxu0 0.0
      %405 = vmatprep.subr.mxu0 0.0
      %406 = vmatpush1.msra.mxu0 0.0
      %407 = vmatprep.subr.mxu0 0.0
      %408 = vmatpush1.msra.mxu0 0.0
      %409 = vmatprep.subr.mxu0 0.0
      %410 = vmatpush1.msra.mxu0 0.0
      %411 = vmatprep.subr.mxu0 0.0
      %412 = vmatpush1.msra.mxu0 0.0
      %413 = vmatprep.subr.mxu0 0.0
      %414 = vmatpush1.msra.mxu0 0.0
      %415 = vmatprep.subr.mxu0 0.0
      %416 = vmatpush1.msra.mxu0 0.0
      %417 = vmatprep.subr.mxu0 0.0
      %418 = vmatpush1.msra.mxu0 0.0
      %419 = vmatprep.subr.mxu0 0.0
      %420 = vmatpush1.msra.mxu0 0.0
      %421 = vmatprep.subr.mxu0 0.0
      %422 = vmatpush1.msra.mxu0 0.0
      %423 = vmatprep.subr.mxu0 0.0
      %424 = vmatpush1.msra.mxu0 0.0
      %425 = vmatprep.subr.mxu0 0.0
      %426 = vmatpush1.msra.mxu0 0.0
      %427 = vmatprep.subr.mxu0 0.0
      %428 = vmatpush1.msra.mxu0 0.0
      %429 = vmatprep.subr.mxu0 0.0
      %430 = vmatpush1.msra.mxu0 0.0
      %431 = vmatprep.subr.mxu0 0.0
      %432 = vmatpush1.msra.mxu0 0.0
      %433 = vmatprep.subr.mxu0 0.0
      %434 = vmatpush1.msra.mxu0 0.0
      %435 = vmatprep.mubr.f32.mxu0 0.0
      %436 = vmatmul.mubr.f32.gmra.mrb[0].mxu0 %v366
      %v437 = vpop.f32.mrb[0].mxu0
      %v438 = vadd.f32 0.0, %v437
      %v439 = vpop.f32.mrb[0].mxu0
      %v440 = vadd.f32 0.0, %v439
      %441 = vmatprep.mubr.f32.mxu0 0.0
      %442 = vmatmul.mubr.f32.gmra.mrb[0].mxu0 %v369
      %v443 = vpop.f32.mrb[0].mxu0
      %v444 = vadd.f32 0.0, %v443
      %v445 = vpop.f32.mrb[0].mxu0
      %v446 = vadd.f32 0.0, %v445
      %447 = vdwg.mxu0
      %v448 = vmul.f32 %v355, %v438
      %v449 = vmul.f32 %v357, %v440
      %v450 = vmul.f32 %v361, %v444
      %v451 = vmul.f32 %v363, %v446
      %v452 = vadd.f32 %v448, 0.0
      %v453 = vadd.f32 %v449, 0.0
      %v454 = vadd.f32 %v450, 0.0
      %v455 = vadd.f32 %v451, 0.0
      %456 = vset.pattern.permute.xlu0 1
      %457 = vperm.xlu0 %456, %v259
      %v458 = vpop.permute.xlu0 %457
      %460 = vset.pattern.permute.xlu0 1
      %461 = vperm.xlu0 %460, %v260
      %v462 = vpop.permute.xlu0 %461
      %v464 = vmul.f32 %v255, %v458
      %v465 = vmul.f32 %v257, %v462
      %468 = vrot.lane.b32.xlu0 %v464, 112
      %v469 = vpop.permute.xlu0 %468
      %470 = vrot.lane.b32.xlu0 %v465, 112
      %v471 = vpop.permute.xlu0 %470
      %v472 = vsel %vm281, %v469, 0
      %v474 = vsel %vm281, %v471, 0
      %476 = vmatprep.subr.mxu0 %v262
      %477 = vmatpush1.msra.mxu0 %v261
      %478 = vmatprep.subr.mxu0 %v264
      %479 = vmatpush1.msra.mxu0 %v263
      %480 = vmatprep.subr.mxu0 0.0
      %481 = vmatpush1.msra.mxu0 0.0
      %482 = vmatprep.subr.mxu0 0.0
      %483 = vmatpush1.msra.mxu0 0.0
      %484 = vmatprep.subr.mxu0 0.0
      %485 = vmatpush1.msra.mxu0 0.0
      %486 = vmatprep.subr.mxu0 0.0
      %487 = vmatpush1.msra.mxu0 0.0
      %488 = vmatprep.subr.mxu0 0.0
      %489 = vmatpush1.msra.mxu0 0.0
      %490 = vmatprep.subr.mxu0 0.0
      %491 = vmatpush1.msra.mxu0 0.0
      %492 = vmatprep.subr.mxu0 0.0
      %493 = vmatpush1.msra.mxu0 0.0
      %494 = vmatprep.subr.mxu0 0.0
      %495 = vmatpush1.msra.mxu0 0.0
      %496 = vmatprep.subr.mxu0 0.0
      %497 = vmatpush1.msra.mxu0 0.0
      %498 = vmatprep.subr.mxu0 0.0
      %499 = vmatpush1.msra.mxu0 0.0
      %500 = vmatprep.subr.mxu0 0.0
      %501 = vmatpush1.msra.mxu0 0.0
      %502 = vmatprep.subr.mxu0 0.0
      %503 = vmatpush1.msra.mxu0 0.0
      %504 = vmatprep.subr.mxu0 0.0
      %505 = vmatpush1.msra.mxu0 0.0
      %506 = vmatprep.subr.mxu0 0.0
      %507 = vmatpush1.msra.mxu0 0.0
      %508 = vmatprep.subr.mxu0 0.0
      %509 = vmatpush1.msra.mxu0 0.0
      %510 = vmatprep.subr.mxu0 0.0
      %511 = vmatpush1.msra.mxu0 0.0
      %512 = vmatprep.subr.mxu0 0.0
      %513 = vmatpush1.msra.mxu0 0.0
      %514 = vmatprep.subr.mxu0 0.0
      %515 = vmatpush1.msra.mxu0 0.0
      %516 = vmatprep.subr.mxu0 0.0
      %517 = vmatpush1.msra.mxu0 0.0
      %518 = vmatprep.subr.mxu0 0.0
      %519 = vmatpush1.msra.mxu0 0.0
      %520 = vmatprep.subr.mxu0 0.0
      %521 = vmatpush1.msra.mxu0 0.0
      %522 = vmatprep.subr.mxu0 0.0
      %523 = vmatpush1.msra.mxu0 0.0
      %524 = vmatprep.subr.mxu0 0.0
      %525 = vmatpush1.msra.mxu0 0.0
      %526 = vmatprep.subr.mxu0 0.0
      %527 = vmatpush1.msra.mxu0 0.0
      %528 = vmatprep.subr.mxu0 0.0
      %529 = vmatpush1.msra.mxu0 0.0
      %530 = vmatprep.subr.mxu0 0.0
      %531 = vmatpush1.msra.mxu0 0.0
      %532 = vmatprep.subr.mxu0 0.0
      %533 = vmatpush1.msra.mxu0 0.0
      %534 = vmatprep.subr.mxu0 0.0
      %535 = vmatpush1.msra.mxu0 0.0
      %536 = vmatprep.subr.mxu0 0.0
      %537 = vmatpush1.msra.mxu0 0.0
      %538 = vmatprep.subr.mxu0 0.0
      %539 = vmatpush1.msra.mxu0 0.0
      %540 = vmatprep.mubr.f32.mxu0 0.0
      %541 = vmatmul.mubr.f32.gmra.mrb[0].mxu0 %v472
      %v542 = vpop.f32.mrb[0].mxu0
      %v543 = vadd.f32 0.0, %v542
      %v544 = vpop.f32.mrb[0].mxu0
      %v545 = vadd.f32 0.0, %v544
      %546 = vmatprep.mubr.f32.mxu0 0.0
      %547 = vmatmul.mubr.f32.gmra.mrb[0].mxu0 %v474
      %v548 = vpop.f32.mrb[0].mxu0
      %v549 = vadd.f32 0.0, %v548
      %v550 = vpop.f32.mrb[0].mxu0
      %v551 = vadd.f32 0.0, %v550
      %552 = vdwg.mxu0
      %553 = vrot.lane.b32.xlu0 %v255, 112
      %v554 = vpop.permute.xlu0 %553
      %555 = vrot.lane.b32.xlu0 %v257, 112
      %v556 = vpop.permute.xlu0 %555
      %v557 = vsel %vm281, %v554, 0
      %v559 = vsel %vm281, %v556, 0
      %561 = vmatprep.subr.mxu0 %v266
      %562 = vmatpush1.msra.mxu0 %v265
      %563 = vmatprep.subr.mxu0 %v268
      %564 = vmatpush1.msra.mxu0 %v267
      %565 = vmatprep.subr.mxu0 0.0
      %566 = vmatpush1.msra.mxu0 0.0
      %567 = vmatprep.subr.mxu0 0.0
      %568 = vmatpush1.msra.mxu0 0.0
      %569 = vmatprep.subr.mxu0 0.0
      %570 = vmatpush1.msra.mxu0 0.0
      %571 = vmatprep.subr.mxu0 0.0
      %572 = vmatpush1.msra.mxu0 0.0
      %573 = vmatprep.subr.mxu0 0.0
      %574 = vmatpush1.msra.mxu0 0.0
      %575 = vmatprep.subr.mxu0 0.0
      %576 = vmatpush1.msra.mxu0 0.0
      %577 = vmatprep.subr.mxu0 0.0
      %578 = vmatpush1.msra.mxu0 0.0
      %579 = vmatprep.subr.mxu0 0.0
      %580 = vmatpush1.msra.mxu0 0.0
      %581 = vmatprep.subr.mxu0 0.0
      %582 = vmatpush1.msra.mxu0 0.0
      %583 = vmatprep.subr.mxu0 0.0
      %584 = vmatpush1.msra.mxu0 0.0
      %585 = vmatprep.subr.mxu0 0.0
      %586 = vmatpush1.msra.mxu0 0.0
      %587 = vmatprep.subr.mxu0 0.0
      %588 = vmatpush1.msra.mxu0 0.0
      %589 = vmatprep.subr.mxu0 0.0
      %590 = vmatpush1.msra.mxu0 0.0
      %591 = vmatprep.subr.mxu0 0.0
      %592 = vmatpush1.msra.mxu0 0.0
      %593 = vmatprep.subr.mxu0 0.0
      %594 = vmatpush1.msra.mxu0 0.0
      %595 = vmatprep.subr.mxu0 0.0
      %596 = vmatpush1.msra.mxu0 0.0
      %597 = vmatprep.subr.mxu0 0.0
      %598 = vmatpush1.msra.mxu0 0.0
      %599 = vmatprep.subr.mxu0 0.0
      %600 = vmatpush1.msra.mxu0 0.0
      %601 = vmatprep.subr.mxu0 0.0
      %602 = vmatpush1.msra.mxu0 0.0
      %603 = vmatprep.subr.mxu0 0.0
      %604 = vmatpush1.msra.mxu0 0.0
      %605 = vmatprep.subr.mxu0 0.0
      %606 = vmatpush1.msra.mxu0 0.0
      %607 = vmatprep.subr.mxu0 0.0
      %608 = vmatpush1.msra.mxu0 0.0
      %609 = vmatprep.subr.mxu0 0.0
      %610 = vmatpush1.msra.mxu0 0.0
      %611 = vmatprep.subr.mxu0 0.0
      %612 = vmatpush1.msra.mxu0 0.0
      %613 = vmatprep.subr.mxu0 0.0
      %614 = vmatpush1.msra.mxu0 0.0
      %615 = vmatprep.subr.mxu0 0.0
      %616 = vmatpush1.msra.mxu0 0.0
      %617 = vmatprep.subr.mxu0 0.0
      %618 = vmatpush1.msra.mxu0 0.0
      %619 = vmatprep.subr.mxu0 0.0
      %620 = vmatpush1.msra.mxu0 0.0
      %621 = vmatprep.subr.mxu0 0.0
      %622 = vmatpush1.msra.mxu0 0.0
      %623 = vmatprep.subr.mxu0 0.0
      %624 = vmatpush1.msra.mxu0 0.0
      %625 = vmatprep.mubr.f32.mxu0 0.0
      %626 = vmatmul.mubr.f32.gmra.mrb[0].mxu0 %v557
      %v627 = vpop.f32.mrb[0].mxu0
      %v628 = vadd.f32 0.0, %v627
      %v629 = vpop.f32.mrb[0].mxu0
      %v630 = vadd.f32 0.0, %v629
      %631 = vmatprep.mubr.f32.mxu0 0.0
      %632 = vmatmul.mubr.f32.gmra.mrb[0].mxu0 %v559
      %v633 = vpop.f32.mrb[0].mxu0
      %v634 = vadd.f32 0.0, %v633
      %v635 = vpop.f32.mrb[0].mxu0
      %v636 = vadd.f32 0.0, %v635
      %637 = vdwg.mxu0
      %v638 = vmul.f32 %v543, %v628
      %v639 = vmul.f32 %v545, %v630
      %v640 = vmul.f32 %v549, %v634
      %v641 = vmul.f32 %v551, %v636
      %v642 = vadd.f32 %v452, %v638
      %v643 = vadd.f32 %v453, %v639
      %v644 = vadd.f32 %v454, %v640
      %v645 = vadd.f32 %v455, %v641
      %646 = vset.pattern.permute.xlu0 2
      %647 = vperm.xlu0 %646, %v259
      %v648 = vpop.permute.xlu0 %647
      %650 = vset.pattern.permute.xlu0 2
      %651 = vperm.xlu0 %650, %v260
      %v652 = vpop.permute.xlu0 %651
      %v654 = vmul.f32 %v255, %v648
      %v655 = vmul.f32 %v257, %v652
      %658 = vrot.lane.b32.xlu0 %v654, 96
      %v659 = vpop.permute.xlu0 %658
      %660 = vrot.lane.b32.xlu0 %v655, 96
      %v661 = vpop.permute.xlu0 %660
      %v662 = vsel %vm281, %v659, 0
      %v664 = vsel %vm281, %v661, 0
      %666 = vmatprep.subr.mxu0 %v262
      %667 = vmatpush1.msra.mxu0 %v261
      %668 = vmatprep.subr.mxu0 %v264
      %669 = vmatpush1.msra.mxu0 %v263
      %670 = vmatprep.subr.mxu0 0.0
      %671 = vmatpush1.msra.mxu0 0.0
      %672 = vmatprep.subr.mxu0 0.0
      %673 = vmatpush1.msra.mxu0 0.0
      %674 = vmatprep.subr.mxu0 0.0
      %675 = vmatpush1.msra.mxu0 0.0
      %676 = vmatprep.subr.mxu0 0.0
      %677 = vmatpush1.msra.mxu0 0.0
      %678 = vmatprep.subr.mxu0 0.0
      %679 = vmatpush1.msra.mxu0 0.0
      %680 = vmatprep.subr.mxu0 0.0
      %681 = vmatpush1.msra.mxu0 0.0
      %682 = vmatprep.subr.mxu0 0.0
      %683 = vmatpush1.msra.mxu0 0.0
      %684 = vmatprep.subr.mxu0 0.0
      %685 = vmatpush1.msra.mxu0 0.0
      %686 = vmatprep.subr.mxu0 0.0
      %687 = vmatpush1.msra.mxu0 0.0
      %688 = vmatprep.subr.mxu0 0.0
      %689 = vmatpush1.msra.mxu0 0.0
      %690 = vmatprep.subr.mxu0 0.0
      %691 = vmatpush1.msra.mxu0 0.0
      %692 = vmatprep.subr.mxu0 0.0
      %693 = vmatpush1.msra.mxu0 0.0
      %694 = vmatprep.subr.mxu0 0.0
      %695 = vmatpush1.msra.mxu0 0.0
      %696 = vmatprep.subr.mxu0 0.0
      %697 = vmatpush1.msra.mxu0 0.0
      %698 = vmatprep.subr.mxu0 0.0
      %699 = vmatpush1.msra.mxu0 0.0
      %700 = vmatprep.subr.mxu0 0.0
      %701 = vmatpush1.msra.mxu0 0.0
      %702 = vmatprep.subr.mxu0 0.0
      %703 = vmatpush1.msra.mxu0 0.0
      %704 = vmatprep.subr.mxu0 0.0
      %705 = vmatpush1.msra.mxu0 0.0
      %706 = vmatprep.subr.mxu0 0.0
      %707 = vmatpush1.msra.mxu0 0.0
      %708 = vmatprep.subr.mxu0 0.0
      %709 = vmatpush1.msra.mxu0 0.0
      %710 = vmatprep.subr.mxu0 0.0
      %711 = vmatpush1.msra.mxu0 0.0
      %712 = vmatprep.subr.mxu0 0.0
      %713 = vmatpush1.msra.mxu0 0.0
      %714 = vmatprep.subr.mxu0 0.0
      %715 = vmatpush1.msra.mxu0 0.0
      %716 = vmatprep.subr.mxu0 0.0
      %717 = vmatpush1.msra.mxu0 0.0
      %718 = vmatprep.subr.mxu0 0.0
      %719 = vmatpush1.msra.mxu0 0.0
      %720 = vmatprep.subr.mxu0 0.0
      %721 = vmatpush1.msra.mxu0 0.0
      %722 = vmatprep.subr.mxu0 0.0
      %723 = vmatpush1.msra.mxu0 0.0
      %724 = vmatprep.subr.mxu0 0.0
      %725 = vmatpush1.msra.mxu0 0.0
      %726 = vmatprep.subr.mxu0 0.0
      %727 = vmatpush1.msra.mxu0 0.0
      %728 = vmatprep.subr.mxu0 0.0
      %729 = vmatpush1.msra.mxu0 0.0
      %730 = vmatprep.mubr.f32.mxu0 0.0
      %731 = vmatmul.mubr.f32.gmra.mrb[0].mxu0 %v662
      %v732 = vpop.f32.mrb[0].mxu0
      %v733 = vadd.f32 0.0, %v732
      %v734 = vpop.f32.mrb[0].mxu0
      %v735 = vadd.f32 0.0, %v734
      %736 = vmatprep.mubr.f32.mxu0 0.0
      %737 = vmatmul.mubr.f32.gmra.mrb[0].mxu0 %v664
      %v738 = vpop.f32.mrb[0].mxu0
      %v739 = vadd.f32 0.0, %v738
      %v740 = vpop.f32.mrb[0].mxu0
      %v741 = vadd.f32 0.0, %v740
      %742 = vdwg.mxu0
      %743 = vrot.lane.b32.xlu0 %v255, 96
      %v744 = vpop.permute.xlu0 %743
      %745 = vrot.lane.b32.xlu0 %v257, 96
      %v746 = vpop.permute.xlu0 %745
      %v747 = vsel %vm281, %v744, 0
      %v749 = vsel %vm281, %v746, 0
      %751 = vmatprep.subr.mxu0 %v266
      %752 = vmatpush1.msra.mxu0 %v265
      %753 = vmatprep.subr.mxu0 %v268
      %754 = vmatpush1.msra.mxu0 %v267
      %755 = vmatprep.subr.mxu0 0.0
      %756 = vmatpush1.msra.mxu0 0.0
      %757 = vmatprep.subr.mxu0 0.0
      %758 = vmatpush1.msra.mxu0 0.0
      %759 = vmatprep.subr.mxu0 0.0
      %760 = vmatpush1.msra.mxu0 0.0
      %761 = vmatprep.subr.mxu0 0.0
      %762 = vmatpush1.msra.mxu0 0.0
      %763 = vmatprep.subr.mxu0 0.0
      %764 = vmatpush1.msra.mxu0 0.0
      %765 = vmatprep.subr.mxu0 0.0
      %766 = vmatpush1.msra.mxu0 0.0
      %767 = vmatprep.subr.mxu0 0.0
      %768 = vmatpush1.msra.mxu0 0.0
      %769 = vmatprep.subr.mxu0 0.0
      %770 = vmatpush1.msra.mxu0 0.0
      %771 = vmatprep.subr.mxu0 0.0
      %772 = vmatpush1.msra.mxu0 0.0
      %773 = vmatprep.subr.mxu0 0.0
      %774 = vmatpush1.msra.mxu0 0.0
      %775 = vmatprep.subr.mxu0 0.0
      %776 = vmatpush1.msra.mxu0 0.0
      %777 = vmatprep.subr.mxu0 0.0
      %778 = vmatpush1.msra.mxu0 0.0
      %779 = vmatprep.subr.mxu0 0.0
      %780 = vmatpush1.msra.mxu0 0.0
      %781 = vmatprep.subr.mxu0 0.0
      %782 = vmatpush1.msra.mxu0 0.0
      %783 = vmatprep.subr.mxu0 0.0
      %784 = vmatpush1.msra.mxu0 0.0
      %785 = vmatprep.subr.mxu0 0.0
      %786 = vmatpush1.msra.mxu0 0.0
      %787 = vmatprep.subr.mxu0 0.0
      %788 = vmatpush1.msra.mxu0 0.0
      %789 = vmatprep.subr.mxu0 0.0
      %790 = vmatpush1.msra.mxu0 0.0
      %791 = vmatprep.subr.mxu0 0.0
      %792 = vmatpush1.msra.mxu0 0.0
      %793 = vmatprep.subr.mxu0 0.0
      %794 = vmatpush1.msra.mxu0 0.0
      %795 = vmatprep.subr.mxu0 0.0
      %796 = vmatpush1.msra.mxu0 0.0
      %797 = vmatprep.subr.mxu0 0.0
      %798 = vmatpush1.msra.mxu0 0.0
      %799 = vmatprep.subr.mxu0 0.0
      %800 = vmatpush1.msra.mxu0 0.0
      %801 = vmatprep.subr.mxu0 0.0
      %802 = vmatpush1.msra.mxu0 0.0
      %803 = vmatprep.subr.mxu0 0.0
      %804 = vmatpush1.msra.mxu0 0.0
      %805 = vmatprep.subr.mxu0 0.0
      %806 = vmatpush1.msra.mxu0 0.0
      %807 = vmatprep.subr.mxu0 0.0
      %808 = vmatpush1.msra.mxu0 0.0
      %809 = vmatprep.subr.mxu0 0.0
      %810 = vmatpush1.msra.mxu0 0.0
      %811 = vmatprep.subr.mxu0 0.0
      %812 = vmatpush1.msra.mxu0 0.0
      %813 = vmatprep.subr.mxu0 0.0
      %814 = vmatpush1.msra.mxu0 0.0
      %815 = vmatprep.mubr.f32.mxu0 0.0
      %816 = vmatmul.mubr.f32.gmra.mrb[0].mxu0 %v747
      %v817 = vpop.f32.mrb[0].mxu0
      %v818 = vadd.f32 0.0, %v817
      %v819 = vpop.f32.mrb[0].mxu0
      %v820 = vadd.f32 0.0, %v819
      %821 = vmatprep.mubr.f32.mxu0 0.0
      %822 = vmatmul.mubr.f32.gmra.mrb[0].mxu0 %v749
      %v823 = vpop.f32.mrb[0].mxu0
      %v824 = vadd.f32 0.0, %v823
      %v825 = vpop.f32.mrb[0].mxu0
      %v826 = vadd.f32 0.0, %v825
      %827 = vdwg.mxu0
      %v828 = vmul.f32 %v733, %v818
      %v829 = vmul.f32 %v735, %v820
      %v830 = vmul.f32 %v739, %v824
      %v831 = vmul.f32 %v741, %v826
      %v832 = vadd.f32 %v642, %v828
      %v833 = vadd.f32 %v643, %v829
      %v834 = vadd.f32 %v644, %v830
      %v835 = vadd.f32 %v645, %v831
      %836 = vset.pattern.permute.xlu0 3
      %837 = vperm.xlu0 %836, %v259
      %v838 = vpop.permute.xlu0 %837
      %840 = vset.pattern.permute.xlu0 3
      %841 = vperm.xlu0 %840, %v260
      %v842 = vpop.permute.xlu0 %841
      %v844 = vmul.f32 %v255, %v838
      %v845 = vmul.f32 %v257, %v842
      %848 = vrot.lane.b32.xlu0 %v844, 80
      %v849 = vpop.permute.xlu0 %848
      %850 = vrot.lane.b32.xlu0 %v845, 80
      %v851 = vpop.permute.xlu0 %850
      %v852 = vsel %vm281, %v849, 0
      %v854 = vsel %vm281, %v851, 0
      %856 = vmatprep.subr.mxu0 %v262
      %857 = vmatpush1.msra.mxu0 %v261
      %858 = vmatprep.subr.mxu0 %v264
      %859 = vmatpush1.msra.mxu0 %v263
      %860 = vmatprep.subr.mxu0 0.0
      %861 = vmatpush1.msra.mxu0 0.0
      %862 = vmatprep.subr.mxu0 0.0
      %863 = vmatpush1.msra.mxu0 0.0
      %864 = vmatprep.subr.mxu0 0.0
      %865 = vmatpush1.msra.mxu0 0.0
      %866 = vmatprep.subr.mxu0 0.0
      %867 = vmatpush1.msra.mxu0 0.0
      %868 = vmatprep.subr.mxu0 0.0
      %869 = vmatpush1.msra.mxu0 0.0
      %870 = vmatprep.subr.mxu0 0.0
      %871 = vmatpush1.msra.mxu0 0.0
      %872 = vmatprep.subr.mxu0 0.0
      %873 = vmatpush1.msra.mxu0 0.0
      %874 = vmatprep.subr.mxu0 0.0
      %875 = vmatpush1.msra.mxu0 0.0
      %876 = vmatprep.subr.mxu0 0.0
      %877 = vmatpush1.msra.mxu0 0.0
      %878 = vmatprep.subr.mxu0 0.0
      %879 = vmatpush1.msra.mxu0 0.0
      %880 = vmatprep.subr.mxu0 0.0
      %881 = vmatpush1.msra.mxu0 0.0
      %882 = vmatprep.subr.mxu0 0.0
      %883 = vmatpush1.msra.mxu0 0.0
      %884 = vmatprep.subr.mxu0 0.0
      %885 = vmatpush1.msra.mxu0 0.0
      %886 = vmatprep.subr.mxu0 0.0
      %887 = vmatpush1.msra.mxu0 0.0
      %888 = vmatprep.subr.mxu0 0.0
      %889 = vmatpush1.msra.mxu0 0.0
      %890 = vmatprep.subr.mxu0 0.0
      %891 = vmatpush1.msra.mxu0 0.0
      %892 = vmatprep.subr.mxu0 0.0
      %893 = vmatpush1.msra.mxu0 0.0
      %894 = vmatprep.subr.mxu0 0.0
      %895 = vmatpush1.msra.mxu0 0.0
      %896 = vmatprep.subr.mxu0 0.0
      %897 = vmatpush1.msra.mxu0 0.0
      %898 = vmatprep.subr.mxu0 0.0
      %899 = vmatpush1.msra.mxu0 0.0
      %900 = vmatprep.subr.mxu0 0.0
      %901 = vmatpush1.msra.mxu0 0.0
      %902 = vmatprep.subr.mxu0 0.0
      %903 = vmatpush1.msra.mxu0 0.0
      %904 = vmatprep.subr.mxu0 0.0
      %905 = vmatpush1.msra.mxu0 0.0
      %906 = vmatprep.subr.mxu0 0.0
      %907 = vmatpush1.msra.mxu0 0.0
      %908 = vmatprep.subr.mxu0 0.0
      %909 = vmatpush1.msra.mxu0 0.0
      %910 = vmatprep.subr.mxu0 0.0
      %911 = vmatpush1.msra.mxu0 0.0
      %912 = vmatprep.subr.mxu0 0.0
      %913 = vmatpush1.msra.mxu0 0.0
      %914 = vmatprep.subr.mxu0 0.0
      %915 = vmatpush1.msra.mxu0 0.0
      %916 = vmatprep.subr.mxu0 0.0
      %917 = vmatpush1.msra.mxu0 0.0
      %918 = vmatprep.subr.mxu0 0.0
      %919 = vmatpush1.msra.mxu0 0.0
      %920 = vmatprep.mubr.f32.mxu0 0.0
      %921 = vmatmul.mubr.f32.gmra.mrb[0].mxu0 %v852
      %v922 = vpop.f32.mrb[0].mxu0
      %v923 = vadd.f32 0.0, %v922
      %v924 = vpop.f32.mrb[0].mxu0
      %v925 = vadd.f32 0.0, %v924
      %926 = vmatprep.mubr.f32.mxu0 0.0
      %927 = vmatmul.mubr.f32.gmra.mrb[0].mxu0 %v854
      %v928 = vpop.f32.mrb[0].mxu0
      %v929 = vadd.f32 0.0, %v928
      %v930 = vpop.f32.mrb[0].mxu0
      %v931 = vadd.f32 0.0, %v930
      %932 = vdwg.mxu0
      %933 = vrot.lane.b32.xlu0 %v255, 80
      %v934 = vpop.permute.xlu0 %933
      %935 = vrot.lane.b32.xlu0 %v257, 80
      %v936 = vpop.permute.xlu0 %935
      %v937 = vsel %vm281, %v934, 0
      %v939 = vsel %vm281, %v936, 0
      %941 = vmatprep.subr.mxu0 %v266
      %942 = vmatpush1.msra.mxu0 %v265
      %943 = vmatprep.subr.mxu0 %v268
      %944 = vmatpush1.msra.mxu0 %v267
      %945 = vmatprep.subr.mxu0 0.0
      %946 = vmatpush1.msra.mxu0 0.0
      %947 = vmatprep.subr.mxu0 0.0
      %948 = vmatpush1.msra.mxu0 0.0
      %949 = vmatprep.subr.mxu0 0.0
      %950 = vmatpush1.msra.mxu0 0.0
      %951 = vmatprep.subr.mxu0 0.0
      %952 = vmatpush1.msra.mxu0 0.0
      %953 = vmatprep.subr.mxu0 0.0
      %954 = vmatpush1.msra.mxu0 0.0
      %955 = vmatprep.subr.mxu0 0.0
      %956 = vmatpush1.msra.mxu0 0.0
      %957 = vmatprep.subr.mxu0 0.0
      %958 = vmatpush1.msra.mxu0 0.0
      %959 = vmatprep.subr.mxu0 0.0
      %960 = vmatpush1.msra.mxu0 0.0
      %961 = vmatprep.subr.mxu0 0.0
      %962 = vmatpush1.msra.mxu0 0.0
      %963 = vmatprep.subr.mxu0 0.0
      %964 = vmatpush1.msra.mxu0 0.0
      %965 = vmatprep.subr.mxu0 0.0
      %966 = vmatpush1.msra.mxu0 0.0
      %967 = vmatprep.subr.mxu0 0.0
      %968 = vmatpush1.msra.mxu0 0.0
      %969 = vmatprep.subr.mxu0 0.0
      %970 = vmatpush1.msra.mxu0 0.0
      %971 = vmatprep.subr.mxu0 0.0
      %972 = vmatpush1.msra.mxu0 0.0
      %973 = vmatprep.subr.mxu0 0.0
      %974 = vmatpush1.msra.mxu0 0.0
      %975 = vmatprep.subr.mxu0 0.0
      %976 = vmatpush1.msra.mxu0 0.0
      %977 = vmatprep.subr.mxu0 0.0
      %978 = vmatpush1.msra.mxu0 0.0
      %979 = vmatprep.subr.mxu0 0.0
      %980 = vmatpush1.msra.mxu0 0.0
      %981 = vmatprep.subr.mxu0 0.0
      %982 = vmatpush1.msra.mxu0 0.0
      %983 = vmatprep.subr.mxu0 0.0
      %984 = vmatpush1.msra.mxu0 0.0
      %985 = vmatprep.subr.mxu0 0.0
      %986 = vmatpush1.msra.mxu0 0.0
      %987 = vmatprep.subr.mxu0 0.0
      %988 = vmatpush1.msra.mxu0 0.0
      %989 = vmatprep.subr.mxu0 0.0
      %990 = vmatpush1.msra.mxu0 0.0
      %991 = vmatprep.subr.mxu0 0.0
      %992 = vmatpush1.msra.mxu0 0.0
      %993 = vmatprep.subr.mxu0 0.0
      %994 = vmatpush1.msra.mxu0 0.0
      %995 = vmatprep.subr.mxu0 0.0
      %996 = vmatpush1.msra.mxu0 0.0
      %997 = vmatprep.subr.mxu0 0.0
      %998 = vmatpush1.msra.mxu0 0.0
      %999 = vmatprep.subr.mxu0 0.0
      %1000 = vmatpush1.msra.mxu0 0.0
      %1001 = vmatprep.subr.mxu0 0.0
      %1002 = vmatpush1.msra.mxu0 0.0
      %1003 = vmatprep.subr.mxu0 0.0
      %1004 = vmatpush1.msra.mxu0 0.0
      %1005 = vmatprep.mubr.f32.mxu0 0.0
      %1006 = vmatmul.mubr.f32.gmra.mrb[0].mxu0 %v937
      %v1007 = vpop.f32.mrb[0].mxu0
      %v1008 = vadd.f32 0.0, %v1007
      %v1009 = vpop.f32.mrb[0].mxu0
      %v1010 = vadd.f32 0.0, %v1009
      %1011 = vmatprep.mubr.f32.mxu0 0.0
      %1012 = vmatmul.mubr.f32.gmra.mrb[0].mxu0 %v939
      %v1013 = vpop.f32.mrb[0].mxu0
      %v1014 = vadd.f32 0.0, %v1013
      %v1015 = vpop.f32.mrb[0].mxu0
      %v1016 = vadd.f32 0.0, %v1015
      %1017 = vdwg.mxu0
      %v1018 = vmul.f32 %v923, %v1008
      %v1019 = vmul.f32 %v925, %v1010
      %v1020 = vmul.f32 %v929, %v1014
      %v1021 = vmul.f32 %v931, %v1016
      %v1022 = vadd.f32 %v832, %v1018
      %v1023 = vadd.f32 %v833, %v1019
      %v1024 = vadd.f32 %v834, %v1020
      %v1025 = vadd.f32 %v835, %v1021
      %1026 = vset.pattern.permute.xlu0 4
      %1027 = vperm.xlu0 %1026, %v259
      %v1028 = vpop.permute.xlu0 %1027
      %1030 = vset.pattern.permute.xlu0 4
      %1031 = vperm.xlu0 %1030, %v260
      %v1032 = vpop.permute.xlu0 %1031
      %v1034 = vmul.f32 %v255, %v1028
      %v1035 = vmul.f32 %v257, %v1032
      %1038 = vrot.lane.b32.xlu0 %v1034, 64
      %v1039 = vpop.permute.xlu0 %1038
      %1040 = vrot.lane.b32.xlu0 %v1035, 64
      %v1041 = vpop.permute.xlu0 %1040
      %v1042 = vsel %vm281, %v1039, 0
      %v1044 = vsel %vm281, %v1041, 0
      %1046 = vmatprep.subr.mxu0 %v262
      %1047 = vmatpush1.msra.mxu0 %v261
      %1048 = vmatprep.subr.mxu0 %v264
      %1049 = vmatpush1.msra.mxu0 %v263
      %1050 = vmatprep.subr.mxu0 0.0
      %1051 = vmatpush1.msra.mxu0 0.0
      %1052 = vmatprep.subr.mxu0 0.0
      %1053 = vmatpush1.msra.mxu0 0.0
      %1054 = vmatprep.subr.mxu0 0.0
      %1055 = vmatpush1.msra.mxu0 0.0
      %1056 = vmatprep.subr.mxu0 0.0
      %1057 = vmatpush1.msra.mxu0 0.0
      %1058 = vmatprep.subr.mxu0 0.0
      %1059 = vmatpush1.msra.mxu0 0.0
      %1060 = vmatprep.subr.mxu0 0.0
      %1061 = vmatpush1.msra.mxu0 0.0
      %1062 = vmatprep.subr.mxu0 0.0
      %1063 = vmatpush1.msra.mxu0 0.0
      %1064 = vmatprep.subr.mxu0 0.0
      %1065 = vmatpush1.msra.mxu0 0.0
      %1066 = vmatprep.subr.mxu0 0.0
      %1067 = vmatpush1.msra.mxu0 0.0
      %1068 = vmatprep.subr.mxu0 0.0
      %1069 = vmatpush1.msra.mxu0 0.0
      %1070 = vmatprep.subr.mxu0 0.0
      %1071 = vmatpush1.msra.mxu0 0.0
      %1072 = vmatprep.subr.mxu0 0.0
      %1073 = vmatpush1.msra.mxu0 0.0
      %1074 = vmatprep.subr.mxu0 0.0
      %1075 = vmatpush1.msra.mxu0 0.0
      %1076 = vmatprep.subr.mxu0 0.0
      %1077 = vmatpush1.msra.mxu0 0.0
      %1078 = vmatprep.subr.mxu0 0.0
      %1079 = vmatpush1.msra.mxu0 0.0
      %1080 = vmatprep.subr.mxu0 0.0
      %1081 = vmatpush1.msra.mxu0 0.0
      %1082 = vmatprep.subr.mxu0 0.0
      %1083 = vmatpush1.msra.mxu0 0.0
      %1084 = vmatprep.subr.mxu0 0.0
      %1085 = vmatpush1.msra.mxu0 0.0
      %1086 = vmatprep.subr.mxu0 0.0
      %1087 = vmatpush1.msra.mxu0 0.0
      %1088 = vmatprep.subr.mxu0 0.0
      %1089 = vmatpush1.msra.mxu0 0.0
      %1090 = vmatprep.subr.mxu0 0.0
      %1091 = vmatpush1.msra.mxu0 0.0
      %1092 = vmatprep.subr.mxu0 0.0
      %1093 = vmatpush1.msra.mxu0 0.0
      %1094 = vmatprep.subr.mxu0 0.0
      %1095 = vmatpush1.msra.mxu0 0.0
      %1096 = vmatprep.subr.mxu0 0.0
      %1097 = vmatpush1.msra.mxu0 0.0
      %1098 = vmatprep.subr.mxu0 0.0
      %1099 = vmatpush1.msra.mxu0 0.0
      %1100 = vmatprep.subr.mxu0 0.0
      %1101 = vmatpush1.msra.mxu0 0.0
      %1102 = vmatprep.subr.mxu0 0.0
      %1103 = vmatpush1.msra.mxu0 0.0
      %1104 = vmatprep.subr.mxu0 0.0
      %1105 = vmatpush1.msra.mxu0 0.0
      %1106 = vmatprep.subr.mxu0 0.0
      %1107 = vmatpush1.msra.mxu0 0.0
      %1108 = vmatprep.subr.mxu0 0.0
      %1109 = vmatpush1.msra.mxu0 0.0
      %1110 = vmatprep.mubr.f32.mxu0 0.0
      %1111 = vmatmul.mubr.f32.gmra.mrb[0].mxu0 %v1042
      %v1112 = vpop.f32.mrb[0].mxu0
      %v1113 = vadd.f32 0.0, %v1112
      %v1114 = vpop.f32.mrb[0].mxu0
      %v1115 = vadd.f32 0.0, %v1114
      %1116 = vmatprep.mubr.f32.mxu0 0.0
      %1117 = vmatmul.mubr.f32.gmra.mrb[0].mxu0 %v1044
      %v1118 = vpop.f32.mrb[0].mxu0
      %v1119 = vadd.f32 0.0, %v1118
      %v1120 = vpop.f32.mrb[0].mxu0
      %v1121 = vadd.f32 0.0, %v1120
      %1122 = vdwg.mxu0
      %1123 = vrot.lane.b32.xlu0 %v255, 64
      %v1124 = vpop.permute.xlu0 %1123
      %1125 = vrot.lane.b32.xlu0 %v257, 64
      %v1126 = vpop.permute.xlu0 %1125
      %v1127 = vsel %vm281, %v1124, 0
      %v1129 = vsel %vm281, %v1126, 0
      %1131 = vmatprep.subr.mxu0 %v266
      %1132 = vmatpush1.msra.mxu0 %v265
      %1133 = vmatprep.subr.mxu0 %v268
      %1134 = vmatpush1.msra.mxu0 %v267
      %1135 = vmatprep.subr.mxu0 0.0
      %1136 = vmatpush1.msra.mxu0 0.0
      %1137 = vmatprep.subr.mxu0 0.0
      %1138 = vmatpush1.msra.mxu0 0.0
      %1139 = vmatprep.subr.mxu0 0.0
      %1140 = vmatpush1.msra.mxu0 0.0
      %1141 = vmatprep.subr.mxu0 0.0
      %1142 = vmatpush1.msra.mxu0 0.0
      %1143 = vmatprep.subr.mxu0 0.0
      %1144 = vmatpush1.msra.mxu0 0.0
      %1145 = vmatprep.subr.mxu0 0.0
      %1146 = vmatpush1.msra.mxu0 0.0
      %1147 = vmatprep.subr.mxu0 0.0
      %1148 = vmatpush1.msra.mxu0 0.0
      %1149 = vmatprep.subr.mxu0 0.0
      %1150 = vmatpush1.msra.mxu0 0.0
      %1151 = vmatprep.subr.mxu0 0.0
      %1152 = vmatpush1.msra.mxu0 0.0
      %1153 = vmatprep.subr.mxu0 0.0
      %1154 = vmatpush1.msra.mxu0 0.0
      %1155 = vmatprep.subr.mxu0 0.0
      %1156 = vmatpush1.msra.mxu0 0.0
      %1157 = vmatprep.subr.mxu0 0.0
      %1158 = vmatpush1.msra.mxu0 0.0
      %1159 = vmatprep.subr.mxu0 0.0
      %1160 = vmatpush1.msra.mxu0 0.0
      %1161 = vmatprep.subr.mxu0 0.0
      %1162 = vmatpush1.msra.mxu0 0.0
      %1163 = vmatprep.subr.mxu0 0.0
      %1164 = vmatpush1.msra.mxu0 0.0
      %1165 = vmatprep.subr.mxu0 0.0
      %1166 = vmatpush1.msra.mxu0 0.0
      %1167 = vmatprep.subr.mxu0 0.0
      %1168 = vmatpush1.msra.mxu0 0.0
      %1169 = vmatprep.subr.mxu0 0.0
      %1170 = vmatpush1.msra.mxu0 0.0
      %1171 = vmatprep.subr.mxu0 0.0
      %1172 = vmatpush1.msra.mxu0 0.0
      %1173 = vmatprep.subr.mxu0 0.0
      %1174 = vmatpush1.msra.mxu0 0.0
      %1175 = vmatprep.subr.mxu0 0.0
      %1176 = vmatpush1.msra.mxu0 0.0
      %1177 = vmatprep.subr.mxu0 0.0
      %1178 = vmatpush1.msra.mxu0 0.0
      %1179 = vmatprep.subr.mxu0 0.0
      %1180 = vmatpush1.msra.mxu0 0.0
      %1181 = vmatprep.subr.mxu0 0.0
      %1182 = vmatpush1.msra.mxu0 0.0
      %1183 = vmatprep.subr.mxu0 0.0
      %1184 = vmatpush1.msra.mxu0 0.0
      %1185 = vmatprep.subr.mxu0 0.0
      %1186 = vmatpush1.msra.mxu0 0.0
      %1187 = vmatprep.subr.mxu0 0.0
      %1188 = vmatpush1.msra.mxu0 0.0
      %1189 = vmatprep.subr.mxu0 0.0
      %1190 = vmatpush1.msra.mxu0 0.0
      %1191 = vmatprep.subr.mxu0 0.0
      %1192 = vmatpush1.msra.mxu0 0.0
      %1193 = vmatprep.subr.mxu0 0.0
      %1194 = vmatpush1.msra.mxu0 0.0
      %1195 = vmatprep.mubr.f32.mxu0 0.0
      %1196 = vmatmul.mubr.f32.gmra.mrb[0].mxu0 %v1127
      %v1197 = vpop.f32.mrb[0].mxu0
      %v1198 = vadd.f32 0.0, %v1197
      %v1199 = vpop.f32.mrb[0].mxu0
      %v1200 = vadd.f32 0.0, %v1199
      %1201 = vmatprep.mubr.f32.mxu0 0.0
      %1202 = vmatmul.mubr.f32.gmra.mrb[0].mxu0 %v1129
      %v1203 = vpop.f32.mrb[0].mxu0
      %v1204 = vadd.f32 0.0, %v1203
      %v1205 = vpop.f32.mrb[0].mxu0
      %v1206 = vadd.f32 0.0, %v1205
      %1207 = vdwg.mxu0
      %v1208 = vmul.f32 %v1113, %v1198
      %v1209 = vmul.f32 %v1115, %v1200
      %v1210 = vmul.f32 %v1119, %v1204
      %v1211 = vmul.f32 %v1121, %v1206
      %v1212 = vadd.f32 %v1022, %v1208
      %v1213 = vadd.f32 %v1023, %v1209
      %v1214 = vadd.f32 %v1024, %v1210
      %v1215 = vadd.f32 %v1025, %v1211
      %1216 = vset.pattern.permute.xlu0 5
      %1217 = vperm.xlu0 %1216, %v259
      %v1218 = vpop.permute.xlu0 %1217
      %1220 = vset.pattern.permute.xlu0 5
      %1221 = vperm.xlu0 %1220, %v260
      %v1222 = vpop.permute.xlu0 %1221
      %v1224 = vmul.f32 %v255, %v1218
      %v1225 = vmul.f32 %v257, %v1222
      %1228 = vrot.lane.b32.xlu0 %v1224, 48
      %v1229 = vpop.permute.xlu0 %1228
      %1230 = vrot.lane.b32.xlu0 %v1225, 48
      %v1231 = vpop.permute.xlu0 %1230
      %v1232 = vsel %vm281, %v1229, 0
      %v1234 = vsel %vm281, %v1231, 0
      %1236 = vmatprep.subr.mxu0 %v262
      %1237 = vmatpush1.msra.mxu0 %v261
      %1238 = vmatprep.subr.mxu0 %v264
      %1239 = vmatpush1.msra.mxu0 %v263
      %1240 = vmatprep.subr.mxu0 0.0
      %1241 = vmatpush1.msra.mxu0 0.0
      %1242 = vmatprep.subr.mxu0 0.0
      %1243 = vmatpush1.msra.mxu0 0.0
      %1244 = vmatprep.subr.mxu0 0.0
      %1245 = vmatpush1.msra.mxu0 0.0
      %1246 = vmatprep.subr.mxu0 0.0
      %1247 = vmatpush1.msra.mxu0 0.0
      %1248 = vmatprep.subr.mxu0 0.0
      %1249 = vmatpush1.msra.mxu0 0.0
      %1250 = vmatprep.subr.mxu0 0.0
      %1251 = vmatpush1.msra.mxu0 0.0
      %1252 = vmatprep.subr.mxu0 0.0
      %1253 = vmatpush1.msra.mxu0 0.0
      %1254 = vmatprep.subr.mxu0 0.0
      %1255 = vmatpush1.msra.mxu0 0.0
      %1256 = vmatprep.subr.mxu0 0.0
      %1257 = vmatpush1.msra.mxu0 0.0
      %1258 = vmatprep.subr.mxu0 0.0
      %1259 = vmatpush1.msra.mxu0 0.0
      %1260 = vmatprep.subr.mxu0 0.0
      %1261 = vmatpush1.msra.mxu0 0.0
      %1262 = vmatprep.subr.mxu0 0.0
      %1263 = vmatpush1.msra.mxu0 0.0
      %1264 = vmatprep.subr.mxu0 0.0
      %1265 = vmatpush1.msra.mxu0 0.0
      %1266 = vmatprep.subr.mxu0 0.0
      %1267 = vmatpush1.msra.mxu0 0.0
      %1268 = vmatprep.subr.mxu0 0.0
      %1269 = vmatpush1.msra.mxu0 0.0
      %1270 = vmatprep.subr.mxu0 0.0
      %1271 = vmatpush1.msra.mxu0 0.0
      %1272 = vmatprep.subr.mxu0 0.0
      %1273 = vmatpush1.msra.mxu0 0.0
      %1274 = vmatprep.subr.mxu0 0.0
      %1275 = vmatpush1.msra.mxu0 0.0
      %1276 = vmatprep.subr.mxu0 0.0
      %1277 = vmatpush1.msra.mxu0 0.0
      %1278 = vmatprep.subr.mxu0 0.0
      %1279 = vmatpush1.msra.mxu0 0.0
      %1280 = vmatprep.subr.mxu0 0.0
      %1281 = vmatpush1.msra.mxu0 0.0
      %1282 = vmatprep.subr.mxu0 0.0
      %1283 = vmatpush1.msra.mxu0 0.0
      %1284 = vmatprep.subr.mxu0 0.0
      %1285 = vmatpush1.msra.mxu0 0.0
      %1286 = vmatprep.subr.mxu0 0.0
      %1287 = vmatpush1.msra.mxu0 0.0
      %1288 = vmatprep.subr.mxu0 0.0
      %1289 = vmatpush1.msra.mxu0 0.0
      %1290 = vmatprep.subr.mxu0 0.0
      %1291 = vmatpush1.msra.mxu0 0.0
      %1292 = vmatprep.subr.mxu0 0.0
      %1293 = vmatpush1.msra.mxu0 0.0
      %1294 = vmatprep.subr.mxu0 0.0
      %1295 = vmatpush1.msra.mxu0 0.0
      %1296 = vmatprep.subr.mxu0 0.0
      %1297 = vmatpush1.msra.mxu0 0.0
      %1298 = vmatprep.subr.mxu0 0.0
      %1299 = vmatpush1.msra.mxu0 0.0
      %1300 = vmatprep.mubr.f32.mxu0 0.0
      %1301 = vmatmul.mubr.f32.gmra.mrb[0].mxu0 %v1232
      %v1302 = vpop.f32.mrb[0].mxu0
      %v1303 = vadd.f32 0.0, %v1302
      %v1304 = vpop.f32.mrb[0].mxu0
      %v1305 = vadd.f32 0.0, %v1304
      %1306 = vmatprep.mubr.f32.mxu0 0.0
      %1307 = vmatmul.mubr.f32.gmra.mrb[0].mxu0 %v1234
      %v1308 = vpop.f32.mrb[0].mxu0
      %v1309 = vadd.f32 0.0, %v1308
      %v1310 = vpop.f32.mrb[0].mxu0
      %v1311 = vadd.f32 0.0, %v1310
      %1312 = vdwg.mxu0
      %1313 = vrot.lane.b32.xlu0 %v255, 48
      %v1314 = vpop.permute.xlu0 %1313
      %1315 = vrot.lane.b32.xlu0 %v257, 48
      %v1316 = vpop.permute.xlu0 %1315
      %v1317 = vsel %vm281, %v1314, 0
      %v1319 = vsel %vm281, %v1316, 0
      %1321 = vmatprep.subr.mxu0 %v266
      %1322 = vmatpush1.msra.mxu0 %v265
      %1323 = vmatprep.subr.mxu0 %v268
      %1324 = vmatpush1.msra.mxu0 %v267
      %1325 = vmatprep.subr.mxu0 0.0
      %1326 = vmatpush1.msra.mxu0 0.0
      %1327 = vmatprep.subr.mxu0 0.0
      %1328 = vmatpush1.msra.mxu0 0.0
      %1329 = vmatprep.subr.mxu0 0.0
      %1330 = vmatpush1.msra.mxu0 0.0
      %1331 = vmatprep.subr.mxu0 0.0
      %1332 = vmatpush1.msra.mxu0 0.0
      %1333 = vmatprep.subr.mxu0 0.0
      %1334 = vmatpush1.msra.mxu0 0.0
      %1335 = vmatprep.subr.mxu0 0.0
      %1336 = vmatpush1.msra.mxu0 0.0
      %1337 = vmatprep.subr.mxu0 0.0
      %1338 = vmatpush1.msra.mxu0 0.0
      %1339 = vmatprep.subr.mxu0 0.0
      %1340 = vmatpush1.msra.mxu0 0.0
      %1341 = vmatprep.subr.mxu0 0.0
      %1342 = vmatpush1.msra.mxu0 0.0
      %1343 = vmatprep.subr.mxu0 0.0
      %1344 = vmatpush1.msra.mxu0 0.0
      %1345 = vmatprep.subr.mxu0 0.0
      %1346 = vmatpush1.msra.mxu0 0.0
      %1347 = vmatprep.subr.mxu0 0.0
      %1348 = vmatpush1.msra.mxu0 0.0
      %1349 = vmatprep.subr.mxu0 0.0
      %1350 = vmatpush1.msra.mxu0 0.0
      %1351 = vmatprep.subr.mxu0 0.0
      %1352 = vmatpush1.msra.mxu0 0.0
      %1353 = vmatprep.subr.mxu0 0.0
      %1354 = vmatpush1.msra.mxu0 0.0
      %1355 = vmatprep.subr.mxu0 0.0
      %1356 = vmatpush1.msra.mxu0 0.0
      %1357 = vmatprep.subr.mxu0 0.0
      %1358 = vmatpush1.msra.mxu0 0.0
      %1359 = vmatprep.subr.mxu0 0.0
      %1360 = vmatpush1.msra.mxu0 0.0
      %1361 = vmatprep.subr.mxu0 0.0
      %1362 = vmatpush1.msra.mxu0 0.0
      %1363 = vmatprep.subr.mxu0 0.0
      %1364 = vmatpush1.msra.mxu0 0.0
      %1365 = vmatprep.subr.mxu0 0.0
      %1366 = vmatpush1.msra.mxu0 0.0
      %1367 = vmatprep.subr.mxu0 0.0
      %1368 = vmatpush1.msra.mxu0 0.0
      %1369 = vmatprep.subr.mxu0 0.0
      %1370 = vmatpush1.msra.mxu0 0.0
      %1371 = vmatprep.subr.mxu0 0.0
      %1372 = vmatpush1.msra.mxu0 0.0
      %1373 = vmatprep.subr.mxu0 0.0
      %1374 = vmatpush1.msra.mxu0 0.0
      %1375 = vmatprep.subr.mxu0 0.0
      %1376 = vmatpush1.msra.mxu0 0.0
      %1377 = vmatprep.subr.mxu0 0.0
      %1378 = vmatpush1.msra.mxu0 0.0
      %1379 = vmatprep.subr.mxu0 0.0
      %1380 = vmatpush1.msra.mxu0 0.0
      %1381 = vmatprep.subr.mxu0 0.0
      %1382 = vmatpush1.msra.mxu0 0.0
      %1383 = vmatprep.subr.mxu0 0.0
      %1384 = vmatpush1.msra.mxu0 0.0
      %1385 = vmatprep.mubr.f32.mxu0 0.0
      %1386 = vmatmul.mubr.f32.gmra.mrb[0].mxu0 %v1317
      %v1387 = vpop.f32.mrb[0].mxu0
      %v1388 = vadd.f32 0.0, %v1387
      %v1389 = vpop.f32.mrb[0].mxu0
      %v1390 = vadd.f32 0.0, %v1389
      %1391 = vmatprep.mubr.f32.mxu0 0.0
      %1392 = vmatmul.mubr.f32.gmra.mrb[0].mxu0 %v1319
      %v1393 = vpop.f32.mrb[0].mxu0
      %v1394 = vadd.f32 0.0, %v1393
      %v1395 = vpop.f32.mrb[0].mxu0
      %v1396 = vadd.f32 0.0, %v1395
      %1397 = vdwg.mxu0
      %v1398 = vmul.f32 %v1303, %v1388
      %v1399 = vmul.f32 %v1305, %v1390
      %v1400 = vmul.f32 %v1309, %v1394
      %v1401 = vmul.f32 %v1311, %v1396
      %v1402 = vadd.f32 %v1212, %v1398
      %v1403 = vadd.f32 %v1213, %v1399
      %v1404 = vadd.f32 %v1214, %v1400
      %v1405 = vadd.f32 %v1215, %v1401
      %1406 = vset.pattern.permute.xlu0 6
      %1407 = vperm.xlu0 %1406, %v259
      %v1408 = vpop.permute.xlu0 %1407
      %1410 = vset.pattern.permute.xlu0 6
      %1411 = vperm.xlu0 %1410, %v260
      %v1412 = vpop.permute.xlu0 %1411
      %v1414 = vmul.f32 %v255, %v1408
      %v1415 = vmul.f32 %v257, %v1412
      %1418 = vrot.lane.b32.xlu0 %v1414, 32
      %v1419 = vpop.permute.xlu0 %1418
      %1420 = vrot.lane.b32.xlu0 %v1415, 32
      %v1421 = vpop.permute.xlu0 %1420
      %v1422 = vsel %vm281, %v1419, 0
      %v1424 = vsel %vm281, %v1421, 0
      %1426 = vmatprep.subr.mxu0 %v262
      %1427 = vmatpush1.msra.mxu0 %v261
      %1428 = vmatprep.subr.mxu0 %v264
      %1429 = vmatpush1.msra.mxu0 %v263
      %1430 = vmatprep.subr.mxu0 0.0
      %1431 = vmatpush1.msra.mxu0 0.0
      %1432 = vmatprep.subr.mxu0 0.0
      %1433 = vmatpush1.msra.mxu0 0.0
      %1434 = vmatprep.subr.mxu0 0.0
      %1435 = vmatpush1.msra.mxu0 0.0
      %1436 = vmatprep.subr.mxu0 0.0
      %1437 = vmatpush1.msra.mxu0 0.0
      %1438 = vmatprep.subr.mxu0 0.0
      %1439 = vmatpush1.msra.mxu0 0.0
      %1440 = vmatprep.subr.mxu0 0.0
      %1441 = vmatpush1.msra.mxu0 0.0
      %1442 = vmatprep.subr.mxu0 0.0
      %1443 = vmatpush1.msra.mxu0 0.0
      %1444 = vmatprep.subr.mxu0 0.0
      %1445 = vmatpush1.msra.mxu0 0.0
      %1446 = vmatprep.subr.mxu0 0.0
      %1447 = vmatpush1.msra.mxu0 0.0
      %1448 = vmatprep.subr.mxu0 0.0
      %1449 = vmatpush1.msra.mxu0 0.0
      %1450 = vmatprep.subr.mxu0 0.0
      %1451 = vmatpush1.msra.mxu0 0.0
      %1452 = vmatprep.subr.mxu0 0.0
      %1453 = vmatpush1.msra.mxu0 0.0
      %1454 = vmatprep.subr.mxu0 0.0
      %1455 = vmatpush1.msra.mxu0 0.0
      %1456 = vmatprep.subr.mxu0 0.0
      %1457 = vmatpush1.msra.mxu0 0.0
      %1458 = vmatprep.subr.mxu0 0.0
      %1459 = vmatpush1.msra.mxu0 0.0
      %1460 = vmatprep.subr.mxu0 0.0
      %1461 = vmatpush1.msra.mxu0 0.0
      %1462 = vmatprep.subr.mxu0 0.0
      %1463 = vmatpush1.msra.mxu0 0.0
      %1464 = vmatprep.subr.mxu0 0.0
      %1465 = vmatpush1.msra.mxu0 0.0
      %1466 = vmatprep.subr.mxu0 0.0
      %1467 = vmatpush1.msra.mxu0 0.0
      %1468 = vmatprep.subr.mxu0 0.0
      %1469 = vmatpush1.msra.mxu0 0.0
      %1470 = vmatprep.subr.mxu0 0.0
      %1471 = vmatpush1.msra.mxu0 0.0
      %1472 = vmatprep.subr.mxu0 0.0
      %1473 = vmatpush1.msra.mxu0 0.0
      %1474 = vmatprep.subr.mxu0 0.0
      %1475 = vmatpush1.msra.mxu0 0.0
      %1476 = vmatprep.subr.mxu0 0.0
      %1477 = vmatpush1.msra.mxu0 0.0
      %1478 = vmatprep.subr.mxu0 0.0
      %1479 = vmatpush1.msra.mxu0 0.0
      %1480 = vmatprep.subr.mxu0 0.0
      %1481 = vmatpush1.msra.mxu0 0.0
      %1482 = vmatprep.subr.mxu0 0.0
      %1483 = vmatpush1.msra.mxu0 0.0
      %1484 = vmatprep.subr.mxu0 0.0
      %1485 = vmatpush1.msra.mxu0 0.0
      %1486 = vmatprep.subr.mxu0 0.0
      %1487 = vmatpush1.msra.mxu0 0.0
      %1488 = vmatprep.subr.mxu0 0.0
      %1489 = vmatpush1.msra.mxu0 0.0
      %1490 = vmatprep.mubr.f32.mxu0 0.0
      %1491 = vmatmul.mubr.f32.gmra.mrb[0].mxu0 %v1422
      %v1492 = vpop.f32.mrb[0].mxu0
      %v1493 = vadd.f32 0.0, %v1492
      %v1494 = vpop.f32.mrb[0].mxu0
      %v1495 = vadd.f32 0.0, %v1494
      %1496 = vmatprep.mubr.f32.mxu0 0.0
      %1497 = vmatmul.mubr.f32.gmra.mrb[0].mxu0 %v1424
      %v1498 = vpop.f32.mrb[0].mxu0
      %v1499 = vadd.f32 0.0, %v1498
      %v1500 = vpop.f32.mrb[0].mxu0
      %v1501 = vadd.f32 0.0, %v1500
      %1502 = vdwg.mxu0
      %1503 = vrot.lane.b32.xlu0 %v255, 32
      %v1504 = vpop.permute.xlu0 %1503
      %1505 = vrot.lane.b32.xlu0 %v257, 32
      %v1506 = vpop.permute.xlu0 %1505
      %v1507 = vsel %vm281, %v1504, 0
      %v1509 = vsel %vm281, %v1506, 0
      %1511 = vmatprep.subr.mxu0 %v266
      %1512 = vmatpush1.msra.mxu0 %v265
      %1513 = vmatprep.subr.mxu0 %v268
      %1514 = vmatpush1.msra.mxu0 %v267
      %1515 = vmatprep.subr.mxu0 0.0
      %1516 = vmatpush1.msra.mxu0 0.0
      %1517 = vmatprep.subr.mxu0 0.0
      %1518 = vmatpush1.msra.mxu0 0.0
      %1519 = vmatprep.subr.mxu0 0.0
      %1520 = vmatpush1.msra.mxu0 0.0
      %1521 = vmatprep.subr.mxu0 0.0
      %1522 = vmatpush1.msra.mxu0 0.0
      %1523 = vmatprep.subr.mxu0 0.0
      %1524 = vmatpush1.msra.mxu0 0.0
      %1525 = vmatprep.subr.mxu0 0.0
      %1526 = vmatpush1.msra.mxu0 0.0
      %1527 = vmatprep.subr.mxu0 0.0
      %1528 = vmatpush1.msra.mxu0 0.0
      %1529 = vmatprep.subr.mxu0 0.0
      %1530 = vmatpush1.msra.mxu0 0.0
      %1531 = vmatprep.subr.mxu0 0.0
      %1532 = vmatpush1.msra.mxu0 0.0
      %1533 = vmatprep.subr.mxu0 0.0
      %1534 = vmatpush1.msra.mxu0 0.0
      %1535 = vmatprep.subr.mxu0 0.0
      %1536 = vmatpush1.msra.mxu0 0.0
      %1537 = vmatprep.subr.mxu0 0.0
      %1538 = vmatpush1.msra.mxu0 0.0
      %1539 = vmatprep.subr.mxu0 0.0
      %1540 = vmatpush1.msra.mxu0 0.0
      %1541 = vmatprep.subr.mxu0 0.0
      %1542 = vmatpush1.msra.mxu0 0.0
      %1543 = vmatprep.subr.mxu0 0.0
      %1544 = vmatpush1.msra.mxu0 0.0
      %1545 = vmatprep.subr.mxu0 0.0
      %1546 = vmatpush1.msra.mxu0 0.0
      %1547 = vmatprep.subr.mxu0 0.0
      %1548 = vmatpush1.msra.mxu0 0.0
      %1549 = vmatprep.subr.mxu0 0.0
      %1550 = vmatpush1.msra.mxu0 0.0
      %1551 = vmatprep.subr.mxu0 0.0
      %1552 = vmatpush1.msra.mxu0 0.0
      %1553 = vmatprep.subr.mxu0 0.0
      %1554 = vmatpush1.msra.mxu0 0.0
      %1555 = vmatprep.subr.mxu0 0.0
      %1556 = vmatpush1.msra.mxu0 0.0
      %1557 = vmatprep.subr.mxu0 0.0
      %1558 = vmatpush1.msra.mxu0 0.0
      %1559 = vmatprep.subr.mxu0 0.0
      %1560 = vmatpush1.msra.mxu0 0.0
      %1561 = vmatprep.subr.mxu0 0.0
      %1562 = vmatpush1.msra.mxu0 0.0
      %1563 = vmatprep.subr.mxu0 0.0
      %1564 = vmatpush1.msra.mxu0 0.0
      %1565 = vmatprep.subr.mxu0 0.0
      %1566 = vmatpush1.msra.mxu0 0.0
      %1567 = vmatprep.subr.mxu0 0.0
      %1568 = vmatpush1.msra.mxu0 0.0
      %1569 = vmatprep.subr.mxu0 0.0
      %1570 = vmatpush1.msra.mxu0 0.0
      %1571 = vmatprep.subr.mxu0 0.0
      %1572 = vmatpush1.msra.mxu0 0.0
      %1573 = vmatprep.subr.mxu0 0.0
      %1574 = vmatpush1.msra.mxu0 0.0
      %1575 = vmatprep.mubr.f32.mxu0 0.0
      %1576 = vmatmul.mubr.f32.gmra.mrb[0].mxu0 %v1507
      %v1577 = vpop.f32.mrb[0].mxu0
      %v1578 = vadd.f32 0.0, %v1577
      %v1579 = vpop.f32.mrb[0].mxu0
      %v1580 = vadd.f32 0.0, %v1579
      %1581 = vmatprep.mubr.f32.mxu0 0.0
      %1582 = vmatmul.mubr.f32.gmra.mrb[0].mxu0 %v1509
      %v1583 = vpop.f32.mrb[0].mxu0
      %v1584 = vadd.f32 0.0, %v1583
      %v1585 = vpop.f32.mrb[0].mxu0
      %v1586 = vadd.f32 0.0, %v1585
      %1587 = vdwg.mxu0
      %v1588 = vmul.f32 %v1493, %v1578
      %v1589 = vmul.f32 %v1495, %v1580
      %v1590 = vmul.f32 %v1499, %v1584
      %v1591 = vmul.f32 %v1501, %v1586
      %v1592 = vadd.f32 %v1402, %v1588
      %v1593 = vadd.f32 %v1403, %v1589
      %v1594 = vadd.f32 %v1404, %v1590
      %v1595 = vadd.f32 %v1405, %v1591
      %1596 = vset.pattern.permute.xlu0 7
      %1597 = vperm.xlu0 %1596, %v259
      %v1598 = vpop.permute.xlu0 %1597
      %1600 = vset.pattern.permute.xlu0 7
      %1601 = vperm.xlu0 %1600, %v260
      %v1602 = vpop.permute.xlu0 %1601
      %v1604 = vmul.f32 %v255, %v1598
      %v1605 = vmul.f32 %v257, %v1602
      %1608 = vrot.lane.b32.xlu0 %v1604, 16
      %v1609 = vpop.permute.xlu0 %1608
      %1610 = vrot.lane.b32.xlu0 %v1605, 16
      %v1611 = vpop.permute.xlu0 %1610
      %v1612 = vsel %vm281, %v1609, 0
      %v1614 = vsel %vm281, %v1611, 0
      %1616 = vmatprep.subr.mxu0 %v262
      %1617 = vmatpush1.msra.mxu0 %v261
      %1618 = vmatprep.subr.mxu0 %v264
      %1619 = vmatpush1.msra.mxu0 %v263
      %1620 = vmatprep.subr.mxu0 0.0
      %1621 = vmatpush1.msra.mxu0 0.0
      %1622 = vmatprep.subr.mxu0 0.0
      %1623 = vmatpush1.msra.mxu0 0.0
      %1624 = vmatprep.subr.mxu0 0.0
      %1625 = vmatpush1.msra.mxu0 0.0
      %1626 = vmatprep.subr.mxu0 0.0
      %1627 = vmatpush1.msra.mxu0 0.0
      %1628 = vmatprep.subr.mxu0 0.0
      %1629 = vmatpush1.msra.mxu0 0.0
      %1630 = vmatprep.subr.mxu0 0.0
      %1631 = vmatpush1.msra.mxu0 0.0
      %1632 = vmatprep.subr.mxu0 0.0
      %1633 = vmatpush1.msra.mxu0 0.0
      %1634 = vmatprep.subr.mxu0 0.0
      %1635 = vmatpush1.msra.mxu0 0.0
      %1636 = vmatprep.subr.mxu0 0.0
      %1637 = vmatpush1.msra.mxu0 0.0
      %1638 = vmatprep.subr.mxu0 0.0
      %1639 = vmatpush1.msra.mxu0 0.0
      %1640 = vmatprep.subr.mxu0 0.0
      %1641 = vmatpush1.msra.mxu0 0.0
      %1642 = vmatprep.subr.mxu0 0.0
      %1643 = vmatpush1.msra.mxu0 0.0
      %1644 = vmatprep.subr.mxu0 0.0
      %1645 = vmatpush1.msra.mxu0 0.0
      %1646 = vmatprep.subr.mxu0 0.0
      %1647 = vmatpush1.msra.mxu0 0.0
      %1648 = vmatprep.subr.mxu0 0.0
      %1649 = vmatpush1.msra.mxu0 0.0
      %1650 = vmatprep.subr.mxu0 0.0
      %1651 = vmatpush1.msra.mxu0 0.0
      %1652 = vmatprep.subr.mxu0 0.0
      %1653 = vmatpush1.msra.mxu0 0.0
      %1654 = vmatprep.subr.mxu0 0.0
      %1655 = vmatpush1.msra.mxu0 0.0
      %1656 = vmatprep.subr.mxu0 0.0
      %1657 = vmatpush1.msra.mxu0 0.0
      %1658 = vmatprep.subr.mxu0 0.0
      %1659 = vmatpush1.msra.mxu0 0.0
      %1660 = vmatprep.subr.mxu0 0.0
      %1661 = vmatpush1.msra.mxu0 0.0
      %1662 = vmatprep.subr.mxu0 0.0
      %1663 = vmatpush1.msra.mxu0 0.0
      %1664 = vmatprep.subr.mxu0 0.0
      %1665 = vmatpush1.msra.mxu0 0.0
      %1666 = vmatprep.subr.mxu0 0.0
      %1667 = vmatpush1.msra.mxu0 0.0
      %1668 = vmatprep.subr.mxu0 0.0
      %1669 = vmatpush1.msra.mxu0 0.0
      %1670 = vmatprep.subr.mxu0 0.0
      %1671 = vmatpush1.msra.mxu0 0.0
      %1672 = vmatprep.subr.mxu0 0.0
      %1673 = vmatpush1.msra.mxu0 0.0
      %1674 = vmatprep.subr.mxu0 0.0
      %1675 = vmatpush1.msra.mxu0 0.0
      %1676 = vmatprep.subr.mxu0 0.0
      %1677 = vmatpush1.msra.mxu0 0.0
      %1678 = vmatprep.subr.mxu0 0.0
      %1679 = vmatpush1.msra.mxu0 0.0
      %1680 = vmatprep.mubr.f32.mxu0 0.0
      %1681 = vmatmul.mubr.f32.gmra.mrb[0].mxu0 %v1612
      %v1682 = vpop.f32.mrb[0].mxu0
      %v1683 = vadd.f32 0.0, %v1682
      %v1684 = vpop.f32.mrb[0].mxu0
      %v1685 = vadd.f32 0.0, %v1684
      %1686 = vmatprep.mubr.f32.mxu0 0.0
      %1687 = vmatmul.mubr.f32.gmra.mrb[0].mxu0 %v1614
      %v1688 = vpop.f32.mrb[0].mxu0
      %v1689 = vadd.f32 0.0, %v1688
      %v1690 = vpop.f32.mrb[0].mxu0
      %v1691 = vadd.f32 0.0, %v1690
      %1692 = vdwg.mxu0
      %1693 = vrot.lane.b32.xlu0 %v255, 16
      %v1694 = vpop.permute.xlu0 %1693
      %1695 = vrot.lane.b32.xlu0 %v257, 16
      %v1696 = vpop.permute.xlu0 %1695
      %v1697 = vsel %vm281, %v1694, 0
      %v1699 = vsel %vm281, %v1696, 0
      %1701 = vmatprep.subr.mxu0 %v266
      %1702 = vmatpush1.msra.mxu0 %v265
      %1703 = vmatprep.subr.mxu0 %v268
      %1704 = vmatpush1.msra.mxu0 %v267
      %1705 = vmatprep.subr.mxu0 0.0
      %1706 = vmatpush1.msra.mxu0 0.0
      %1707 = vmatprep.subr.mxu0 0.0
      %1708 = vmatpush1.msra.mxu0 0.0
      %1709 = vmatprep.subr.mxu0 0.0
      %1710 = vmatpush1.msra.mxu0 0.0
      %1711 = vmatprep.subr.mxu0 0.0
      %1712 = vmatpush1.msra.mxu0 0.0
      %1713 = vmatprep.subr.mxu0 0.0
      %1714 = vmatpush1.msra.mxu0 0.0
      %1715 = vmatprep.subr.mxu0 0.0
      %1716 = vmatpush1.msra.mxu0 0.0
      %1717 = vmatprep.subr.mxu0 0.0
      %1718 = vmatpush1.msra.mxu0 0.0
      %1719 = vmatprep.subr.mxu0 0.0
      %1720 = vmatpush1.msra.mxu0 0.0
      %1721 = vmatprep.subr.mxu0 0.0
      %1722 = vmatpush1.msra.mxu0 0.0
      %1723 = vmatprep.subr.mxu0 0.0
      %1724 = vmatpush1.msra.mxu0 0.0
      %1725 = vmatprep.subr.mxu0 0.0
      %1726 = vmatpush1.msra.mxu0 0.0
      %1727 = vmatprep.subr.mxu0 0.0
      %1728 = vmatpush1.msra.mxu0 0.0
      %1729 = vmatprep.subr.mxu0 0.0
      %1730 = vmatpush1.msra.mxu0 0.0
      %1731 = vmatprep.subr.mxu0 0.0
      %1732 = vmatpush1.msra.mxu0 0.0
      %1733 = vmatprep.subr.mxu0 0.0
      %1734 = vmatpush1.msra.mxu0 0.0
      %1735 = vmatprep.subr.mxu0 0.0
      %1736 = vmatpush1.msra.mxu0 0.0
      %1737 = vmatprep.subr.mxu0 0.0
      %1738 = vmatpush1.msra.mxu0 0.0
      %1739 = vmatprep.subr.mxu0 0.0
      %1740 = vmatpush1.msra.mxu0 0.0
      %1741 = vmatprep.subr.mxu0 0.0
      %1742 = vmatpush1.msra.mxu0 0.0
      %1743 = vmatprep.subr.mxu0 0.0
      %1744 = vmatpush1.msra.mxu0 0.0
      %1745 = vmatprep.subr.mxu0 0.0
      %1746 = vmatpush1.msra.mxu0 0.0
      %1747 = vmatprep.subr.mxu0 0.0
      %1748 = vmatpush1.msra.mxu0 0.0
      %1749 = vmatprep.subr.mxu0 0.0
      %1750 = vmatpush1.msra.mxu0 0.0
      %1751 = vmatprep.subr.mxu0 0.0
      %1752 = vmatpush1.msra.mxu0 0.0
      %1753 = vmatprep.subr.mxu0 0.0
      %1754 = vmatpush1.msra.mxu0 0.0
      %1755 = vmatprep.subr.mxu0 0.0
      %1756 = vmatpush1.msra.mxu0 0.0
      %1757 = vmatprep.subr.mxu0 0.0
      %1758 = vmatpush1.msra.mxu0 0.0
      %1759 = vmatprep.subr.mxu0 0.0
      %1760 = vmatpush1.msra.mxu0 0.0
      %1761 = vmatprep.subr.mxu0 0.0
      %1762 = vmatpush1.msra.mxu0 0.0
      %1763 = vmatprep.subr.mxu0 0.0
      %1764 = vmatpush1.msra.mxu0 0.0
      %1765 = vmatprep.mubr.f32.mxu0 0.0
      %1766 = vmatmul.mubr.f32.gmra.mrb[0].mxu0 %v1697
      %v1767 = vpop.f32.mrb[0].mxu0
      %v1768 = vadd.f32 0.0, %v1767
      %v1769 = vpop.f32.mrb[0].mxu0
      %v1770 = vadd.f32 0.0, %v1769
      %1771 = vmatprep.mubr.f32.mxu0 0.0
      %1772 = vmatmul.mubr.f32.gmra.mrb[0].mxu0 %v1699
      %v1773 = vpop.f32.mrb[0].mxu0
      %v1774 = vadd.f32 0.0, %v1773
      %v1775 = vpop.f32.mrb[0].mxu0
      %v1776 = vadd.f32 0.0, %v1775
      %1777 = vdwg.mxu0
      %v1778 = vmul.f32 %v1683, %v1768
      %v1779 = vmul.f32 %v1685, %v1770
      %v1780 = vmul.f32 %v1689, %v1774
      %v1781 = vmul.f32 %v1691, %v1776
      %v1782 = vadd.f32 %v1592, %v1778
      %v1783 = vadd.f32 %v1593, %v1779
      %v1784 = vadd.f32 %v1594, %v1780
      %v1785 = vadd.f32 %v1595, %v1781
      %1786 = vset.pattern.permute.xlu0 8
      %1787 = vperm.xlu0 %1786, %v259
      %v1788 = vpop.permute.xlu0 %1787
      %1790 = vset.pattern.permute.xlu0 8
      %1791 = vperm.xlu0 %1790, %v260
      %v1792 = vpop.permute.xlu0 %1791
      %v1794 = vmul.f32 %v256, %v1788
      %v1795 = vmul.f32 %v258, %v1792
      %v1797 = vsel %vm281, %v1794, 0
      %v1800 = vsel %vm281, %v1795, 0
      %1802 = vmatprep.subr.mxu0 %v262
      %1803 = vmatpush1.msra.mxu0 %v261
      %1804 = vmatprep.subr.mxu0 %v264
      %1805 = vmatpush1.msra.mxu0 %v263
      %1806 = vmatprep.subr.mxu0 0.0
      %1807 = vmatpush1.msra.mxu0 0.0
      %1808 = vmatprep.subr.mxu0 0.0
      %1809 = vmatpush1.msra.mxu0 0.0
      %1810 = vmatprep.subr.mxu0 0.0
      %1811 = vmatpush1.msra.mxu0 0.0
      %1812 = vmatprep.subr.mxu0 0.0
      %1813 = vmatpush1.msra.mxu0 0.0
      %1814 = vmatprep.subr.mxu0 0.0
      %1815 = vmatpush1.msra.mxu0 0.0
      %1816 = vmatprep.subr.mxu0 0.0
      %1817 = vmatpush1.msra.mxu0 0.0
      %1818 = vmatprep.subr.mxu0 0.0
      %1819 = vmatpush1.msra.mxu0 0.0
      %1820 = vmatprep.subr.mxu0 0.0
      %1821 = vmatpush1.msra.mxu0 0.0
      %1822 = vmatprep.subr.mxu0 0.0
      %1823 = vmatpush1.msra.mxu0 0.0
      %1824 = vmatprep.subr.mxu0 0.0
      %1825 = vmatpush1.msra.mxu0 0.0
      %1826 = vmatprep.subr.mxu0 0.0
      %1827 = vmatpush1.msra.mxu0 0.0
      %1828 = vmatprep.subr.mxu0 0.0
      %1829 = vmatpush1.msra.mxu0 0.0
      %1830 = vmatprep.subr.mxu0 0.0
      %1831 = vmatpush1.msra.mxu0 0.0
      %1832 = vmatprep.subr.mxu0 0.0
      %1833 = vmatpush1.msra.mxu0 0.0
      %1834 = vmatprep.subr.mxu0 0.0
      %1835 = vmatpush1.msra.mxu0 0.0
      %1836 = vmatprep.subr.mxu0 0.0
      %1837 = vmatpush1.msra.mxu0 0.0
      %1838 = vmatprep.subr.mxu0 0.0
      %1839 = vmatpush1.msra.mxu0 0.0
      %1840 = vmatprep.subr.mxu0 0.0
      %1841 = vmatpush1.msra.mxu0 0.0
      %1842 = vmatprep.subr.mxu0 0.0
      %1843 = vmatpush1.msra.mxu0 0.0
      %1844 = vmatprep.subr.mxu0 0.0
      %1845 = vmatpush1.msra.mxu0 0.0
      %1846 = vmatprep.subr.mxu0 0.0
      %1847 = vmatpush1.msra.mxu0 0.0
      %1848 = vmatprep.subr.mxu0 0.0
      %1849 = vmatpush1.msra.mxu0 0.0
      %1850 = vmatprep.subr.mxu0 0.0
      %1851 = vmatpush1.msra.mxu0 0.0
      %1852 = vmatprep.subr.mxu0 0.0
      %1853 = vmatpush1.msra.mxu0 0.0
      %1854 = vmatprep.subr.mxu0 0.0
      %1855 = vmatpush1.msra.mxu0 0.0
      %1856 = vmatprep.subr.mxu0 0.0
      %1857 = vmatpush1.msra.mxu0 0.0
      %1858 = vmatprep.subr.mxu0 0.0
      %1859 = vmatpush1.msra.mxu0 0.0
      %1860 = vmatprep.subr.mxu0 0.0
      %1861 = vmatpush1.msra.mxu0 0.0
      %1862 = vmatprep.subr.mxu0 0.0
      %1863 = vmatpush1.msra.mxu0 0.0
      %1864 = vmatprep.subr.mxu0 0.0
      %1865 = vmatpush1.msra.mxu0 0.0
      %1866 = vmatprep.mubr.f32.mxu0 0.0
      %1867 = vmatmul.mubr.f32.gmra.mrb[0].mxu0 %v1797
      %v1868 = vpop.f32.mrb[0].mxu0
      %v1869 = vadd.f32 0.0, %v1868
      %v1870 = vpop.f32.mrb[0].mxu0
      %v1871 = vadd.f32 0.0, %v1870
      %1872 = vmatprep.mubr.f32.mxu0 0.0
      %1873 = vmatmul.mubr.f32.gmra.mrb[0].mxu0 %v1800
      %v1874 = vpop.f32.mrb[0].mxu0
      %v1875 = vadd.f32 0.0, %v1874
      %v1876 = vpop.f32.mrb[0].mxu0
      %v1877 = vadd.f32 0.0, %v1876
      %1878 = vdwg.mxu0
      %v1880 = vsel %vm281, %v256, 0
      %v1883 = vsel %vm281, %v258, 0
      %1885 = vmatprep.subr.mxu0 %v266
      %1886 = vmatpush1.msra.mxu0 %v265
      %1887 = vmatprep.subr.mxu0 %v268
      %1888 = vmatpush1.msra.mxu0 %v267
      %1889 = vmatprep.subr.mxu0 0.0
      %1890 = vmatpush1.msra.mxu0 0.0
      %1891 = vmatprep.subr.mxu0 0.0
      %1892 = vmatpush1.msra.mxu0 0.0
      %1893 = vmatprep.subr.mxu0 0.0
      %1894 = vmatpush1.msra.mxu0 0.0
      %1895 = vmatprep.subr.mxu0 0.0
      %1896 = vmatpush1.msra.mxu0 0.0
      %1897 = vmatprep.subr.mxu0 0.0
      %1898 = vmatpush1.msra.mxu0 0.0
      %1899 = vmatprep.subr.mxu0 0.0
      %1900 = vmatpush1.msra.mxu0 0.0
      %1901 = vmatprep.subr.mxu0 0.0
      %1902 = vmatpush1.msra.mxu0 0.0
      %1903 = vmatprep.subr.mxu0 0.0
      %1904 = vmatpush1.msra.mxu0 0.0
      %1905 = vmatprep.subr.mxu0 0.0
      %1906 = vmatpush1.msra.mxu0 0.0
      %1907 = vmatprep.subr.mxu0 0.0
      %1908 = vmatpush1.msra.mxu0 0.0
      %1909 = vmatprep.subr.mxu0 0.0
      %1910 = vmatpush1.msra.mxu0 0.0
      %1911 = vmatprep.subr.mxu0 0.0
      %1912 = vmatpush1.msra.mxu0 0.0
      %1913 = vmatprep.subr.mxu0 0.0
      %1914 = vmatpush1.msra.mxu0 0.0
      %1915 = vmatprep.subr.mxu0 0.0
      %1916 = vmatpush1.msra.mxu0 0.0
      %1917 = vmatprep.subr.mxu0 0.0
      %1918 = vmatpush1.msra.mxu0 0.0
      %1919 = vmatprep.subr.mxu0 0.0
      %1920 = vmatpush1.msra.mxu0 0.0
      %1921 = vmatprep.subr.mxu0 0.0
      %1922 = vmatpush1.msra.mxu0 0.0
      %1923 = vmatprep.subr.mxu0 0.0
      %1924 = vmatpush1.msra.mxu0 0.0
      %1925 = vmatprep.subr.mxu0 0.0
      %1926 = vmatpush1.msra.mxu0 0.0
      %1927 = vmatprep.subr.mxu0 0.0
      %1928 = vmatpush1.msra.mxu0 0.0
      %1929 = vmatprep.subr.mxu0 0.0
      %1930 = vmatpush1.msra.mxu0 0.0
      %1931 = vmatprep.subr.mxu0 0.0
      %1932 = vmatpush1.msra.mxu0 0.0
      %1933 = vmatprep.subr.mxu0 0.0
      %1934 = vmatpush1.msra.mxu0 0.0
      %1935 = vmatprep.subr.mxu0 0.0
      %1936 = vmatpush1.msra.mxu0 0.0
      %1937 = vmatprep.subr.mxu0 0.0
      %1938 = vmatpush1.msra.mxu0 0.0
      %1939 = vmatprep.subr.mxu0 0.0
      %1940 = vmatpush1.msra.mxu0 0.0
      %1941 = vmatprep.subr.mxu0 0.0
      %1942 = vmatpush1.msra.mxu0 0.0
      %1943 = vmatprep.subr.mxu0 0.0
      %1944 = vmatpush1.msra.mxu0 0.0
      %1945 = vmatprep.subr.mxu0 0.0
      %1946 = vmatpush1.msra.mxu0 0.0
      %1947 = vmatprep.subr.mxu0 0.0
      %1948 = vmatpush1.msra.mxu0 0.0
      %1949 = vmatprep.mubr.f32.mxu0 0.0
      %1950 = vmatmul.mubr.f32.gmra.mrb[0].mxu0 %v1880
      %v1951 = vpop.f32.mrb[0].mxu0
      %v1952 = vadd.f32 0.0, %v1951
      %v1953 = vpop.f32.mrb[0].mxu0
      %v1954 = vadd.f32 0.0, %v1953
      %1955 = vmatprep.mubr.f32.mxu0 0.0
      %1956 = vmatmul.mubr.f32.gmra.mrb[0].mxu0 %v1883
      %v1957 = vpop.f32.mrb[0].mxu0
      %v1958 = vadd.f32 0.0, %v1957
      %v1959 = vpop.f32.mrb[0].mxu0
      %v1960 = vadd.f32 0.0, %v1959
      %1961 = vdwg.mxu0
      %v1962 = vmul.f32 %v1869, %v1952
      %v1963 = vmul.f32 %v1871, %v1954
      %v1964 = vmul.f32 %v1875, %v1958
      %v1965 = vmul.f32 %v1877, %v1960
      %v1966 = vadd.f32 %v1782, %v1962
      %v1967 = vadd.f32 %v1783, %v1963
      %v1968 = vadd.f32 %v1784, %v1964
      %v1969 = vadd.f32 %v1785, %v1965
      %1970 = vset.pattern.permute.xlu0 9
      %1971 = vperm.xlu0 %1970, %v259
      %v1972 = vpop.permute.xlu0 %1971
      %1974 = vset.pattern.permute.xlu0 9
      %1975 = vperm.xlu0 %1974, %v260
      %v1976 = vpop.permute.xlu0 %1975
      %v1978 = vmul.f32 %v256, %v1972
      %v1979 = vmul.f32 %v258, %v1976
      %1982 = vrot.lane.b32.xlu0 %v1978, 112
      %v1983 = vpop.permute.xlu0 %1982
      %1984 = vrot.lane.b32.xlu0 %v1979, 112
      %v1985 = vpop.permute.xlu0 %1984
      %v1986 = vsel %vm281, %v1983, 0
      %v1988 = vsel %vm281, %v1985, 0
      %1990 = vmatprep.subr.mxu0 %v262
      %1991 = vmatpush1.msra.mxu0 %v261
      %1992 = vmatprep.subr.mxu0 %v264
      %1993 = vmatpush1.msra.mxu0 %v263
      %1994 = vmatprep.subr.mxu0 0.0
      %1995 = vmatpush1.msra.mxu0 0.0
      %1996 = vmatprep.subr.mxu0 0.0
      %1997 = vmatpush1.msra.mxu0 0.0
      %1998 = vmatprep.subr.mxu0 0.0
      %1999 = vmatpush1.msra.mxu0 0.0
      %2000 = vmatprep.subr.mxu0 0.0
      %2001 = vmatpush1.msra.mxu0 0.0
      %2002 = vmatprep.subr.mxu0 0.0
      %2003 = vmatpush1.msra.mxu0 0.0
      %2004 = vmatprep.subr.mxu0 0.0
      %2005 = vmatpush1.msra.mxu0 0.0
      %2006 = vmatprep.subr.mxu0 0.0
      %2007 = vmatpush1.msra.mxu0 0.0
      %2008 = vmatprep.subr.mxu0 0.0
      %2009 = vmatpush1.msra.mxu0 0.0
      %2010 = vmatprep.subr.mxu0 0.0
      %2011 = vmatpush1.msra.mxu0 0.0
      %2012 = vmatprep.subr.mxu0 0.0
      %2013 = vmatpush1.msra.mxu0 0.0
      %2014 = vmatprep.subr.mxu0 0.0
      %2015 = vmatpush1.msra.mxu0 0.0
      %2016 = vmatprep.subr.mxu0 0.0
      %2017 = vmatpush1.msra.mxu0 0.0
      %2018 = vmatprep.subr.mxu0 0.0
      %2019 = vmatpush1.msra.mxu0 0.0
      %2020 = vmatprep.subr.mxu0 0.0
      %2021 = vmatpush1.msra.mxu0 0.0
      %2022 = vmatprep.subr.mxu0 0.0
      %2023 = vmatpush1.msra.mxu0 0.0
      %2024 = vmatprep.subr.mxu0 0.0
      %2025 = vmatpush1.msra.mxu0 0.0
      %2026 = vmatprep.subr.mxu0 0.0
      %2027 = vmatpush1.msra.mxu0 0.0
      %2028 = vmatprep.subr.mxu0 0.0
      %2029 = vmatpush1.msra.mxu0 0.0
      %2030 = vmatprep.subr.mxu0 0.0
      %2031 = vmatpush1.msra.mxu0 0.0
      %2032 = vmatprep.subr.mxu0 0.0
      %2033 = vmatpush1.msra.mxu0 0.0
      %2034 = vmatprep.subr.mxu0 0.0
      %2035 = vmatpush1.msra.mxu0 0.0
      %2036 = vmatprep.subr.mxu0 0.0
      %2037 = vmatpush1.msra.mxu0 0.0
      %2038 = vmatprep.subr.mxu0 0.0
      %2039 = vmatpush1.msra.mxu0 0.0
      %2040 = vmatprep.subr.mxu0 0.0
      %2041 = vmatpush1.msra.mxu0 0.0
      %2042 = vmatprep.subr.mxu0 0.0
      %2043 = vmatpush1.msra.mxu0 0.0
      %2044 = vmatprep.subr.mxu0 0.0
      %2045 = vmatpush1.msra.mxu0 0.0
      %2046 = vmatprep.subr.mxu0 0.0
      %2047 = vmatpush1.msra.mxu0 0.0
      %2048 = vmatprep.subr.mxu0 0.0
      %2049 = vmatpush1.msra.mxu0 0.0
      %2050 = vmatprep.subr.mxu0 0.0
      %2051 = vmatpush1.msra.mxu0 0.0
      %2052 = vmatprep.subr.mxu0 0.0
      %2053 = vmatpush1.msra.mxu0 0.0
      %2054 = vmatprep.mubr.f32.mxu0 0.0
      %2055 = vmatmul.mubr.f32.gmra.mrb[0].mxu0 %v1986
      %v2056 = vpop.f32.mrb[0].mxu0
      %v2057 = vadd.f32 0.0, %v2056
      %v2058 = vpop.f32.mrb[0].mxu0
      %v2059 = vadd.f32 0.0, %v2058
      %2060 = vmatprep.mubr.f32.mxu0 0.0
      %2061 = vmatmul.mubr.f32.gmra.mrb[0].mxu0 %v1988
      %v2062 = vpop.f32.mrb[0].mxu0
      %v2063 = vadd.f32 0.0, %v2062
      %v2064 = vpop.f32.mrb[0].mxu0
      %v2065 = vadd.f32 0.0, %v2064
      %2066 = vdwg.mxu0
      %2067 = vrot.lane.b32.xlu0 %v256, 112
      %v2068 = vpop.permute.xlu0 %2067
      %2069 = vrot.lane.b32.xlu0 %v258, 112
      %v2070 = vpop.permute.xlu0 %2069
      %v2071 = vsel %vm281, %v2068, 0
      %v2073 = vsel %vm281, %v2070, 0
      %2075 = vmatprep.subr.mxu0 %v266
      %2076 = vmatpush1.msra.mxu0 %v265
      %2077 = vmatprep.subr.mxu0 %v268
      %2078 = vmatpush1.msra.mxu0 %v267
      %2079 = vmatprep.subr.mxu0 0.0
      %2080 = vmatpush1.msra.mxu0 0.0
      %2081 = vmatprep.subr.mxu0 0.0
      %2082 = vmatpush1.msra.mxu0 0.0
      %2083 = vmatprep.subr.mxu0 0.0
      %2084 = vmatpush1.msra.mxu0 0.0
      %2085 = vmatprep.subr.mxu0 0.0
      %2086 = vmatpush1.msra.mxu0 0.0
      %2087 = vmatprep.subr.mxu0 0.0
      %2088 = vmatpush1.msra.mxu0 0.0
      %2089 = vmatprep.subr.mxu0 0.0
      %2090 = vmatpush1.msra.mxu0 0.0
      %2091 = vmatprep.subr.mxu0 0.0
      %2092 = vmatpush1.msra.mxu0 0.0
      %2093 = vmatprep.subr.mxu0 0.0
      %2094 = vmatpush1.msra.mxu0 0.0
      %2095 = vmatprep.subr.mxu0 0.0
      %2096 = vmatpush1.msra.mxu0 0.0
      %2097 = vmatprep.subr.mxu0 0.0
      %2098 = vmatpush1.msra.mxu0 0.0
      %2099 = vmatprep.subr.mxu0 0.0
      %2100 = vmatpush1.msra.mxu0 0.0
      %2101 = vmatprep.subr.mxu0 0.0
      %2102 = vmatpush1.msra.mxu0 0.0
      %2103 = vmatprep.subr.mxu0 0.0
      %2104 = vmatpush1.msra.mxu0 0.0
      %2105 = vmatprep.subr.mxu0 0.0
      %2106 = vmatpush1.msra.mxu0 0.0
      %2107 = vmatprep.subr.mxu0 0.0
      %2108 = vmatpush1.msra.mxu0 0.0
      %2109 = vmatprep.subr.mxu0 0.0
      %2110 = vmatpush1.msra.mxu0 0.0
      %2111 = vmatprep.subr.mxu0 0.0
      %2112 = vmatpush1.msra.mxu0 0.0
      %2113 = vmatprep.subr.mxu0 0.0
      %2114 = vmatpush1.msra.mxu0 0.0
      %2115 = vmatprep.subr.mxu0 0.0
      %2116 = vmatpush1.msra.mxu0 0.0
      %2117 = vmatprep.subr.mxu0 0.0
      %2118 = vmatpush1.msra.mxu0 0.0
      %2119 = vmatprep.subr.mxu0 0.0
      %2120 = vmatpush1.msra.mxu0 0.0
      %2121 = vmatprep.subr.mxu0 0.0
      %2122 = vmatpush1.msra.mxu0 0.0
      %2123 = vmatprep.subr.mxu0 0.0
      %2124 = vmatpush1.msra.mxu0 0.0
      %2125 = vmatprep.subr.mxu0 0.0
      %2126 = vmatpush1.msra.mxu0 0.0
      %2127 = vmatprep.subr.mxu0 0.0
      %2128 = vmatpush1.msra.mxu0 0.0
      %2129 = vmatprep.subr.mxu0 0.0
      %2130 = vmatpush1.msra.mxu0 0.0
      %2131 = vmatprep.subr.mxu0 0.0
      %2132 = vmatpush1.msra.mxu0 0.0
      %2133 = vmatprep.subr.mxu0 0.0
      %2134 = vmatpush1.msra.mxu0 0.0
      %2135 = vmatprep.subr.mxu0 0.0
      %2136 = vmatpush1.msra.mxu0 0.0
      %2137 = vmatprep.subr.mxu0 0.0
      %2138 = vmatpush1.msra.mxu0 0.0
      %2139 = vmatprep.mubr.f32.mxu0 0.0
      %2140 = vmatmul.mubr.f32.gmra.mrb[0].mxu0 %v2071
      %v2141 = vpop.f32.mrb[0].mxu0
      %v2142 = vadd.f32 0.0, %v2141
      %v2143 = vpop.f32.mrb[0].mxu0
      %v2144 = vadd.f32 0.0, %v2143
      %2145 = vmatprep.mubr.f32.mxu0 0.0
      %2146 = vmatmul.mubr.f32.gmra.mrb[0].mxu0 %v2073
      %v2147 = vpop.f32.mrb[0].mxu0
      %v2148 = vadd.f32 0.0, %v2147
      %v2149 = vpop.f32.mrb[0].mxu0
      %v2150 = vadd.f32 0.0, %v2149
      %2151 = vdwg.mxu0
      %v2152 = vmul.f32 %v2057, %v2142
      %v2153 = vmul.f32 %v2059, %v2144
      %v2154 = vmul.f32 %v2063, %v2148
      %v2155 = vmul.f32 %v2065, %v2150
      %v2156 = vadd.f32 %v1966, %v2152
      %v2157 = vadd.f32 %v1967, %v2153
      %v2158 = vadd.f32 %v1968, %v2154
      %v2159 = vadd.f32 %v1969, %v2155
      %2160 = vset.pattern.permute.xlu0 10
      %2161 = vperm.xlu0 %2160, %v259
      %v2162 = vpop.permute.xlu0 %2161
      %2164 = vset.pattern.permute.xlu0 10
      %2165 = vperm.xlu0 %2164, %v260
      %v2166 = vpop.permute.xlu0 %2165
      %v2168 = vmul.f32 %v256, %v2162
      %v2169 = vmul.f32 %v258, %v2166
      %2172 = vrot.lane.b32.xlu0 %v2168, 96
      %v2173 = vpop.permute.xlu0 %2172
      %2174 = vrot.lane.b32.xlu0 %v2169, 96
      %v2175 = vpop.permute.xlu0 %2174
      %v2176 = vsel %vm281, %v2173, 0
      %v2178 = vsel %vm281, %v2175, 0
      %2180 = vmatprep.subr.mxu0 %v262
      %2181 = vmatpush1.msra.mxu0 %v261
      %2182 = vmatprep.subr.mxu0 %v264
      %2183 = vmatpush1.msra.mxu0 %v263
      %2184 = vmatprep.subr.mxu0 0.0
      %2185 = vmatpush1.msra.mxu0 0.0
      %2186 = vmatprep.subr.mxu0 0.0
      %2187 = vmatpush1.msra.mxu0 0.0
      %2188 = vmatprep.subr.mxu0 0.0
      %2189 = vmatpush1.msra.mxu0 0.0
      %2190 = vmatprep.subr.mxu0 0.0
      %2191 = vmatpush1.msra.mxu0 0.0
      %2192 = vmatprep.subr.mxu0 0.0
      %2193 = vmatpush1.msra.mxu0 0.0
      %2194 = vmatprep.subr.mxu0 0.0
      %2195 = vmatpush1.msra.mxu0 0.0
      %2196 = vmatprep.subr.mxu0 0.0
      %2197 = vmatpush1.msra.mxu0 0.0
      %2198 = vmatprep.subr.mxu0 0.0
      %2199 = vmatpush1.msra.mxu0 0.0
      %2200 = vmatprep.subr.mxu0 0.0
      %2201 = vmatpush1.msra.mxu0 0.0
      %2202 = vmatprep.subr.mxu0 0.0
      %2203 = vmatpush1.msra.mxu0 0.0
      %2204 = vmatprep.subr.mxu0 0.0
      %2205 = vmatpush1.msra.mxu0 0.0
      %2206 = vmatprep.subr.mxu0 0.0
      %2207 = vmatpush1.msra.mxu0 0.0
      %2208 = vmatprep.subr.mxu0 0.0
      %2209 = vmatpush1.msra.mxu0 0.0
      %2210 = vmatprep.subr.mxu0 0.0
      %2211 = vmatpush1.msra.mxu0 0.0
      %2212 = vmatprep.subr.mxu0 0.0
      %2213 = vmatpush1.msra.mxu0 0.0
      %2214 = vmatprep.subr.mxu0 0.0
      %2215 = vmatpush1.msra.mxu0 0.0
      %2216 = vmatprep.subr.mxu0 0.0
      %2217 = vmatpush1.msra.mxu0 0.0
      %2218 = vmatprep.subr.mxu0 0.0
      %2219 = vmatpush1.msra.mxu0 0.0
      %2220 = vmatprep.subr.mxu0 0.0
      %2221 = vmatpush1.msra.mxu0 0.0
      %2222 = vmatprep.subr.mxu0 0.0
      %2223 = vmatpush1.msra.mxu0 0.0
      %2224 = vmatprep.subr.mxu0 0.0
      %2225 = vmatpush1.msra.mxu0 0.0
      %2226 = vmatprep.subr.mxu0 0.0
      %2227 = vmatpush1.msra.mxu0 0.0
      %2228 = vmatprep.subr.mxu0 0.0
      %2229 = vmatpush1.msra.mxu0 0.0
      %2230 = vmatprep.subr.mxu0 0.0
      %2231 = vmatpush1.msra.mxu0 0.0
      %2232 = vmatprep.subr.mxu0 0.0
      %2233 = vmatpush1.msra.mxu0 0.0
      %2234 = vmatprep.subr.mxu0 0.0
      %2235 = vmatpush1.msra.mxu0 0.0
      %2236 = vmatprep.subr.mxu0 0.0
      %2237 = vmatpush1.msra.mxu0 0.0
      %2238 = vmatprep.subr.mxu0 0.0
      %2239 = vmatpush1.msra.mxu0 0.0
      %2240 = vmatprep.subr.mxu0 0.0
      %2241 = vmatpush1.msra.mxu0 0.0
      %2242 = vmatprep.subr.mxu0 0.0
      %2243 = vmatpush1.msra.mxu0 0.0
      %2244 = vmatprep.mubr.f32.mxu0 0.0
      %2245 = vmatmul.mubr.f32.gmra.mrb[0].mxu0 %v2176
      %v2246 = vpop.f32.mrb[0].mxu0
      %v2247 = vadd.f32 0.0, %v2246
      %v2248 = vpop.f32.mrb[0].mxu0
      %v2249 = vadd.f32 0.0, %v2248
      %2250 = vmatprep.mubr.f32.mxu0 0.0
      %2251 = vmatmul.mubr.f32.gmra.mrb[0].mxu0 %v2178
      %v2252 = vpop.f32.mrb[0].mxu0
      %v2253 = vadd.f32 0.0, %v2252
      %v2254 = vpop.f32.mrb[0].mxu0
      %v2255 = vadd.f32 0.0, %v2254
      %2256 = vdwg.mxu0
      %2257 = vrot.lane.b32.xlu0 %v256, 96
      %v2258 = vpop.permute.xlu0 %2257
      %2259 = vrot.lane.b32.xlu0 %v258, 96
      %v2260 = vpop.permute.xlu0 %2259
      %v2261 = vsel %vm281, %v2258, 0
      %v2263 = vsel %vm281, %v2260, 0
      %2265 = vmatprep.subr.mxu0 %v266
      %2266 = vmatpush1.msra.mxu0 %v265
      %2267 = vmatprep.subr.mxu0 %v268
      %2268 = vmatpush1.msra.mxu0 %v267
      %2269 = vmatprep.subr.mxu0 0.0
      %2270 = vmatpush1.msra.mxu0 0.0
      %2271 = vmatprep.subr.mxu0 0.0
      %2272 = vmatpush1.msra.mxu0 0.0
      %2273 = vmatprep.subr.mxu0 0.0
      %2274 = vmatpush1.msra.mxu0 0.0
      %2275 = vmatprep.subr.mxu0 0.0
      %2276 = vmatpush1.msra.mxu0 0.0
      %2277 = vmatprep.subr.mxu0 0.0
      %2278 = vmatpush1.msra.mxu0 0.0
      %2279 = vmatprep.subr.mxu0 0.0
      %2280 = vmatpush1.msra.mxu0 0.0
      %2281 = vmatprep.subr.mxu0 0.0
      %2282 = vmatpush1.msra.mxu0 0.0
      %2283 = vmatprep.subr.mxu0 0.0
      %2284 = vmatpush1.msra.mxu0 0.0
      %2285 = vmatprep.subr.mxu0 0.0
      %2286 = vmatpush1.msra.mxu0 0.0
      %2287 = vmatprep.subr.mxu0 0.0
      %2288 = vmatpush1.msra.mxu0 0.0
      %2289 = vmatprep.subr.mxu0 0.0
      %2290 = vmatpush1.msra.mxu0 0.0
      %2291 = vmatprep.subr.mxu0 0.0
      %2292 = vmatpush1.msra.mxu0 0.0
      %2293 = vmatprep.subr.mxu0 0.0
      %2294 = vmatpush1.msra.mxu0 0.0
      %2295 = vmatprep.subr.mxu0 0.0
      %2296 = vmatpush1.msra.mxu0 0.0
      %2297 = vmatprep.subr.mxu0 0.0
      %2298 = vmatpush1.msra.mxu0 0.0
      %2299 = vmatprep.subr.mxu0 0.0
      %2300 = vmatpush1.msra.mxu0 0.0
      %2301 = vmatprep.subr.mxu0 0.0
      %2302 = vmatpush1.msra.mxu0 0.0
      %2303 = vmatprep.subr.mxu0 0.0
      %2304 = vmatpush1.msra.mxu0 0.0
      %2305 = vmatprep.subr.mxu0 0.0
      %2306 = vmatpush1.msra.mxu0 0.0
      %2307 = vmatprep.subr.mxu0 0.0
      %2308 = vmatpush1.msra.mxu0 0.0
      %2309 = vmatprep.subr.mxu0 0.0
      %2310 = vmatpush1.msra.mxu0 0.0
      %2311 = vmatprep.subr.mxu0 0.0
      %2312 = vmatpush1.msra.mxu0 0.0
      %2313 = vmatprep.subr.mxu0 0.0
      %2314 = vmatpush1.msra.mxu0 0.0
      %2315 = vmatprep.subr.mxu0 0.0
      %2316 = vmatpush1.msra.mxu0 0.0
      %2317 = vmatprep.subr.mxu0 0.0
      %2318 = vmatpush1.msra.mxu0 0.0
      %2319 = vmatprep.subr.mxu0 0.0
      %2320 = vmatpush1.msra.mxu0 0.0
      %2321 = vmatprep.subr.mxu0 0.0
      %2322 = vmatpush1.msra.mxu0 0.0
      %2323 = vmatprep.subr.mxu0 0.0
      %2324 = vmatpush1.msra.mxu0 0.0
      %2325 = vmatprep.subr.mxu0 0.0
      %2326 = vmatpush1.msra.mxu0 0.0
      %2327 = vmatprep.subr.mxu0 0.0
      %2328 = vmatpush1.msra.mxu0 0.0
      %2329 = vmatprep.mubr.f32.mxu0 0.0
      %2330 = vmatmul.mubr.f32.gmra.mrb[0].mxu0 %v2261
      %v2331 = vpop.f32.mrb[0].mxu0
      %v2332 = vadd.f32 0.0, %v2331
      %v2333 = vpop.f32.mrb[0].mxu0
      %v2334 = vadd.f32 0.0, %v2333
      %2335 = vmatprep.mubr.f32.mxu0 0.0
      %2336 = vmatmul.mubr.f32.gmra.mrb[0].mxu0 %v2263
      %v2337 = vpop.f32.mrb[0].mxu0
      %v2338 = vadd.f32 0.0, %v2337
      %v2339 = vpop.f32.mrb[0].mxu0
      %v2340 = vadd.f32 0.0, %v2339
      %2341 = vdwg.mxu0
      %v2342 = vmul.f32 %v2247, %v2332
      %v2343 = vmul.f32 %v2249, %v2334
      %v2344 = vmul.f32 %v2253, %v2338
      %v2345 = vmul.f32 %v2255, %v2340
      %v2346 = vadd.f32 %v2156, %v2342
      %v2347 = vadd.f32 %v2157, %v2343
      %v2348 = vadd.f32 %v2158, %v2344
      %v2349 = vadd.f32 %v2159, %v2345
      %2350 = vset.pattern.permute.xlu0 11
      %2351 = vperm.xlu0 %2350, %v259
      %v2352 = vpop.permute.xlu0 %2351
      %2354 = vset.pattern.permute.xlu0 11
      %2355 = vperm.xlu0 %2354, %v260
      %v2356 = vpop.permute.xlu0 %2355
      %v2358 = vmul.f32 %v256, %v2352
      %v2359 = vmul.f32 %v258, %v2356
      %2362 = vrot.lane.b32.xlu0 %v2358, 80
      %v2363 = vpop.permute.xlu0 %2362
      %2364 = vrot.lane.b32.xlu0 %v2359, 80
      %v2365 = vpop.permute.xlu0 %2364
      %v2366 = vsel %vm281, %v2363, 0
      %v2368 = vsel %vm281, %v2365, 0
      %2370 = vmatprep.subr.mxu0 %v262
      %2371 = vmatpush1.msra.mxu0 %v261
      %2372 = vmatprep.subr.mxu0 %v264
      %2373 = vmatpush1.msra.mxu0 %v263
      %2374 = vmatprep.subr.mxu0 0.0
      %2375 = vmatpush1.msra.mxu0 0.0
      %2376 = vmatprep.subr.mxu0 0.0
      %2377 = vmatpush1.msra.mxu0 0.0
      %2378 = vmatprep.subr.mxu0 0.0
      %2379 = vmatpush1.msra.mxu0 0.0
      %2380 = vmatprep.subr.mxu0 0.0
      %2381 = vmatpush1.msra.mxu0 0.0
      %2382 = vmatprep.subr.mxu0 0.0
      %2383 = vmatpush1.msra.mxu0 0.0
      %2384 = vmatprep.subr.mxu0 0.0
      %2385 = vmatpush1.msra.mxu0 0.0
      %2386 = vmatprep.subr.mxu0 0.0
      %2387 = vmatpush1.msra.mxu0 0.0
      %2388 = vmatprep.subr.mxu0 0.0
      %2389 = vmatpush1.msra.mxu0 0.0
      %2390 = vmatprep.subr.mxu0 0.0
      %2391 = vmatpush1.msra.mxu0 0.0
      %2392 = vmatprep.subr.mxu0 0.0
      %2393 = vmatpush1.msra.mxu0 0.0
      %2394 = vmatprep.subr.mxu0 0.0
      %2395 = vmatpush1.msra.mxu0 0.0
      %2396 = vmatprep.subr.mxu0 0.0
      %2397 = vmatpush1.msra.mxu0 0.0
      %2398 = vmatprep.subr.mxu0 0.0
      %2399 = vmatpush1.msra.mxu0 0.0
      %2400 = vmatprep.subr.mxu0 0.0
      %2401 = vmatpush1.msra.mxu0 0.0
      %2402 = vmatprep.subr.mxu0 0.0
      %2403 = vmatpush1.msra.mxu0 0.0
      %2404 = vmatprep.subr.mxu0 0.0
      %2405 = vmatpush1.msra.mxu0 0.0
      %2406 = vmatprep.subr.mxu0 0.0
      %2407 = vmatpush1.msra.mxu0 0.0
      %2408 = vmatprep.subr.mxu0 0.0
      %2409 = vmatpush1.msra.mxu0 0.0
      %2410 = vmatprep.subr.mxu0 0.0
      %2411 = vmatpush1.msra.mxu0 0.0
      %2412 = vmatprep.subr.mxu0 0.0
      %2413 = vmatpush1.msra.mxu0 0.0
      %2414 = vmatprep.subr.mxu0 0.0
      %2415 = vmatpush1.msra.mxu0 0.0
      %2416 = vmatprep.subr.mxu0 0.0
      %2417 = vmatpush1.msra.mxu0 0.0
      %2418 = vmatprep.subr.mxu0 0.0
      %2419 = vmatpush1.msra.mxu0 0.0
      %2420 = vmatprep.subr.mxu0 0.0
      %2421 = vmatpush1.msra.mxu0 0.0
      %2422 = vmatprep.subr.mxu0 0.0
      %2423 = vmatpush1.msra.mxu0 0.0
      %2424 = vmatprep.subr.mxu0 0.0
      %2425 = vmatpush1.msra.mxu0 0.0
      %2426 = vmatprep.subr.mxu0 0.0
      %2427 = vmatpush1.msra.mxu0 0.0
      %2428 = vmatprep.subr.mxu0 0.0
      %2429 = vmatpush1.msra.mxu0 0.0
      %2430 = vmatprep.subr.mxu0 0.0
      %2431 = vmatpush1.msra.mxu0 0.0
      %2432 = vmatprep.subr.mxu0 0.0
      %2433 = vmatpush1.msra.mxu0 0.0
      %2434 = vmatprep.mubr.f32.mxu0 0.0
      %2435 = vmatmul.mubr.f32.gmra.mrb[0].mxu0 %v2366
      %v2436 = vpop.f32.mrb[0].mxu0
      %v2437 = vadd.f32 0.0, %v2436
      %v2438 = vpop.f32.mrb[0].mxu0
      %v2439 = vadd.f32 0.0, %v2438
      %2440 = vmatprep.mubr.f32.mxu0 0.0
      %2441 = vmatmul.mubr.f32.gmra.mrb[0].mxu0 %v2368
      %v2442 = vpop.f32.mrb[0].mxu0
      %v2443 = vadd.f32 0.0, %v2442
      %v2444 = vpop.f32.mrb[0].mxu0
      %v2445 = vadd.f32 0.0, %v2444
      %2446 = vdwg.mxu0
      %2447 = vrot.lane.b32.xlu0 %v256, 80
      %v2448 = vpop.permute.xlu0 %2447
      %2449 = vrot.lane.b32.xlu0 %v258, 80
      %v2450 = vpop.permute.xlu0 %2449
      %v2451 = vsel %vm281, %v2448, 0
      %v2453 = vsel %vm281, %v2450, 0
      %2455 = vmatprep.subr.mxu0 %v266
      %2456 = vmatpush1.msra.mxu0 %v265
      %2457 = vmatprep.subr.mxu0 %v268
      %2458 = vmatpush1.msra.mxu0 %v267
      %2459 = vmatprep.subr.mxu0 0.0
      %2460 = vmatpush1.msra.mxu0 0.0
      %2461 = vmatprep.subr.mxu0 0.0
      %2462 = vmatpush1.msra.mxu0 0.0
      %2463 = vmatprep.subr.mxu0 0.0
      %2464 = vmatpush1.msra.mxu0 0.0
      %2465 = vmatprep.subr.mxu0 0.0
      %2466 = vmatpush1.msra.mxu0 0.0
      %2467 = vmatprep.subr.mxu0 0.0
      %2468 = vmatpush1.msra.mxu0 0.0
      %2469 = vmatprep.subr.mxu0 0.0
      %2470 = vmatpush1.msra.mxu0 0.0
      %2471 = vmatprep.subr.mxu0 0.0
      %2472 = vmatpush1.msra.mxu0 0.0
      %2473 = vmatprep.subr.mxu0 0.0
      %2474 = vmatpush1.msra.mxu0 0.0
      %2475 = vmatprep.subr.mxu0 0.0
      %2476 = vmatpush1.msra.mxu0 0.0
      %2477 = vmatprep.subr.mxu0 0.0
      %2478 = vmatpush1.msra.mxu0 0.0
      %2479 = vmatprep.subr.mxu0 0.0
      %2480 = vmatpush1.msra.mxu0 0.0
      %2481 = vmatprep.subr.mxu0 0.0
      %2482 = vmatpush1.msra.mxu0 0.0
      %2483 = vmatprep.subr.mxu0 0.0
      %2484 = vmatpush1.msra.mxu0 0.0
      %2485 = vmatprep.subr.mxu0 0.0
      %2486 = vmatpush1.msra.mxu0 0.0
      %2487 = vmatprep.subr.mxu0 0.0
      %2488 = vmatpush1.msra.mxu0 0.0
      %2489 = vmatprep.subr.mxu0 0.0
      %2490 = vmatpush1.msra.mxu0 0.0
      %2491 = vmatprep.subr.mxu0 0.0
      %2492 = vmatpush1.msra.mxu0 0.0
      %2493 = vmatprep.subr.mxu0 0.0
      %2494 = vmatpush1.msra.mxu0 0.0
      %2495 = vmatprep.subr.mxu0 0.0
      %2496 = vmatpush1.msra.mxu0 0.0
      %2497 = vmatprep.subr.mxu0 0.0
      %2498 = vmatpush1.msra.mxu0 0.0
      %2499 = vmatprep.subr.mxu0 0.0
      %2500 = vmatpush1.msra.mxu0 0.0
      %2501 = vmatprep.subr.mxu0 0.0
      %2502 = vmatpush1.msra.mxu0 0.0
      %2503 = vmatprep.subr.mxu0 0.0
      %2504 = vmatpush1.msra.mxu0 0.0
      %2505 = vmatprep.subr.mxu0 0.0
      %2506 = vmatpush1.msra.mxu0 0.0
      %2507 = vmatprep.subr.mxu0 0.0
      %2508 = vmatpush1.msra.mxu0 0.0
      %2509 = vmatprep.subr.mxu0 0.0
      %2510 = vmatpush1.msra.mxu0 0.0
      %2511 = vmatprep.subr.mxu0 0.0
      %2512 = vmatpush1.msra.mxu0 0.0
      %2513 = vmatprep.subr.mxu0 0.0
      %2514 = vmatpush1.msra.mxu0 0.0
      %2515 = vmatprep.subr.mxu0 0.0
      %2516 = vmatpush1.msra.mxu0 0.0
      %2517 = vmatprep.subr.mxu0 0.0
      %2518 = vmatpush1.msra.mxu0 0.0
      %2519 = vmatprep.mubr.f32.mxu0 0.0
      %2520 = vmatmul.mubr.f32.gmra.mrb[0].mxu0 %v2451
      %v2521 = vpop.f32.mrb[0].mxu0
      %v2522 = vadd.f32 0.0, %v2521
      %v2523 = vpop.f32.mrb[0].mxu0
      %v2524 = vadd.f32 0.0, %v2523
      %2525 = vmatprep.mubr.f32.mxu0 0.0
      %2526 = vmatmul.mubr.f32.gmra.mrb[0].mxu0 %v2453
      %v2527 = vpop.f32.mrb[0].mxu0
      %v2528 = vadd.f32 0.0, %v2527
      %v2529 = vpop.f32.mrb[0].mxu0
      %v2530 = vadd.f32 0.0, %v2529
      %2531 = vdwg.mxu0
      %v2532 = vmul.f32 %v2437, %v2522
      %v2533 = vmul.f32 %v2439, %v2524
      %v2534 = vmul.f32 %v2443, %v2528
      %v2535 = vmul.f32 %v2445, %v2530
      %v2536 = vadd.f32 %v2346, %v2532
      %v2537 = vadd.f32 %v2347, %v2533
      %v2538 = vadd.f32 %v2348, %v2534
      %v2539 = vadd.f32 %v2349, %v2535
      %2540 = vset.pattern.permute.xlu0 12
      %2541 = vperm.xlu0 %2540, %v259
      %v2542 = vpop.permute.xlu0 %2541
      %2544 = vset.pattern.permute.xlu0 12
      %2545 = vperm.xlu0 %2544, %v260
      %v2546 = vpop.permute.xlu0 %2545
      %v2548 = vmul.f32 %v256, %v2542
      %v2549 = vmul.f32 %v258, %v2546
      %2552 = vrot.lane.b32.xlu0 %v2548, 64
      %v2553 = vpop.permute.xlu0 %2552
      %2554 = vrot.lane.b32.xlu0 %v2549, 64
      %v2555 = vpop.permute.xlu0 %2554
      %v2556 = vsel %vm281, %v2553, 0
      %v2558 = vsel %vm281, %v2555, 0
      %2560 = vmatprep.subr.mxu0 %v262
      %2561 = vmatpush1.msra.mxu0 %v261
      %2562 = vmatprep.subr.mxu0 %v264
      %2563 = vmatpush1.msra.mxu0 %v263
      %2564 = vmatprep.subr.mxu0 0.0
      %2565 = vmatpush1.msra.mxu0 0.0
      %2566 = vmatprep.subr.mxu0 0.0
      %2567 = vmatpush1.msra.mxu0 0.0
      %2568 = vmatprep.subr.mxu0 0.0
      %2569 = vmatpush1.msra.mxu0 0.0
      %2570 = vmatprep.subr.mxu0 0.0
      %2571 = vmatpush1.msra.mxu0 0.0
      %2572 = vmatprep.subr.mxu0 0.0
      %2573 = vmatpush1.msra.mxu0 0.0
      %2574 = vmatprep.subr.mxu0 0.0
      %2575 = vmatpush1.msra.mxu0 0.0
      %2576 = vmatprep.subr.mxu0 0.0
      %2577 = vmatpush1.msra.mxu0 0.0
      %2578 = vmatprep.subr.mxu0 0.0
      %2579 = vmatpush1.msra.mxu0 0.0
      %2580 = vmatprep.subr.mxu0 0.0
      %2581 = vmatpush1.msra.mxu0 0.0
      %2582 = vmatprep.subr.mxu0 0.0
      %2583 = vmatpush1.msra.mxu0 0.0
      %2584 = vmatprep.subr.mxu0 0.0
      %2585 = vmatpush1.msra.mxu0 0.0
      %2586 = vmatprep.subr.mxu0 0.0
      %2587 = vmatpush1.msra.mxu0 0.0
      %2588 = vmatprep.subr.mxu0 0.0
      %2589 = vmatpush1.msra.mxu0 0.0
      %2590 = vmatprep.subr.mxu0 0.0
      %2591 = vmatpush1.msra.mxu0 0.0
      %2592 = vmatprep.subr.mxu0 0.0
      %2593 = vmatpush1.msra.mxu0 0.0
      %2594 = vmatprep.subr.mxu0 0.0
      %2595 = vmatpush1.msra.mxu0 0.0
      %2596 = vmatprep.subr.mxu0 0.0
      %2597 = vmatpush1.msra.mxu0 0.0
      %2598 = vmatprep.subr.mxu0 0.0
      %2599 = vmatpush1.msra.mxu0 0.0
      %2600 = vmatprep.subr.mxu0 0.0
      %2601 = vmatpush1.msra.mxu0 0.0
      %2602 = vmatprep.subr.mxu0 0.0
      %2603 = vmatpush1.msra.mxu0 0.0
      %2604 = vmatprep.subr.mxu0 0.0
      %2605 = vmatpush1.msra.mxu0 0.0
      %2606 = vmatprep.subr.mxu0 0.0
      %2607 = vmatpush1.msra.mxu0 0.0
      %2608 = vmatprep.subr.mxu0 0.0
      %2609 = vmatpush1.msra.mxu0 0.0
      %2610 = vmatprep.subr.mxu0 0.0
      %2611 = vmatpush1.msra.mxu0 0.0
      %2612 = vmatprep.subr.mxu0 0.0
      %2613 = vmatpush1.msra.mxu0 0.0
      %2614 = vmatprep.subr.mxu0 0.0
      %2615 = vmatpush1.msra.mxu0 0.0
      %2616 = vmatprep.subr.mxu0 0.0
      %2617 = vmatpush1.msra.mxu0 0.0
      %2618 = vmatprep.subr.mxu0 0.0
      %2619 = vmatpush1.msra.mxu0 0.0
      %2620 = vmatprep.subr.mxu0 0.0
      %2621 = vmatpush1.msra.mxu0 0.0
      %2622 = vmatprep.subr.mxu0 0.0
      %2623 = vmatpush1.msra.mxu0 0.0
      %2624 = vmatprep.mubr.f32.mxu0 0.0
      %2625 = vmatmul.mubr.f32.gmra.mrb[0].mxu0 %v2556
      %v2626 = vpop.f32.mrb[0].mxu0
      %v2627 = vadd.f32 0.0, %v2626
      %v2628 = vpop.f32.mrb[0].mxu0
      %v2629 = vadd.f32 0.0, %v2628
      %2630 = vmatprep.mubr.f32.mxu0 0.0
      %2631 = vmatmul.mubr.f32.gmra.mrb[0].mxu0 %v2558
      %v2632 = vpop.f32.mrb[0].mxu0
      %v2633 = vadd.f32 0.0, %v2632
      %v2634 = vpop.f32.mrb[0].mxu0
      %v2635 = vadd.f32 0.0, %v2634
      %2636 = vdwg.mxu0
      %2637 = vrot.lane.b32.xlu0 %v256, 64
      %v2638 = vpop.permute.xlu0 %2637
      %2639 = vrot.lane.b32.xlu0 %v258, 64
      %v2640 = vpop.permute.xlu0 %2639
      %v2641 = vsel %vm281, %v2638, 0
      %v2643 = vsel %vm281, %v2640, 0
      %2645 = vmatprep.subr.mxu0 %v266
      %2646 = vmatpush1.msra.mxu0 %v265
      %2647 = vmatprep.subr.mxu0 %v268
      %2648 = vmatpush1.msra.mxu0 %v267
      %2649 = vmatprep.subr.mxu0 0.0
      %2650 = vmatpush1.msra.mxu0 0.0
      %2651 = vmatprep.subr.mxu0 0.0
      %2652 = vmatpush1.msra.mxu0 0.0
      %2653 = vmatprep.subr.mxu0 0.0
      %2654 = vmatpush1.msra.mxu0 0.0
      %2655 = vmatprep.subr.mxu0 0.0
      %2656 = vmatpush1.msra.mxu0 0.0
      %2657 = vmatprep.subr.mxu0 0.0
      %2658 = vmatpush1.msra.mxu0 0.0
      %2659 = vmatprep.subr.mxu0 0.0
      %2660 = vmatpush1.msra.mxu0 0.0
      %2661 = vmatprep.subr.mxu0 0.0
      %2662 = vmatpush1.msra.mxu0 0.0
      %2663 = vmatprep.subr.mxu0 0.0
      %2664 = vmatpush1.msra.mxu0 0.0
      %2665 = vmatprep.subr.mxu0 0.0
      %2666 = vmatpush1.msra.mxu0 0.0
      %2667 = vmatprep.subr.mxu0 0.0
      %2668 = vmatpush1.msra.mxu0 0.0
      %2669 = vmatprep.subr.mxu0 0.0
      %2670 = vmatpush1.msra.mxu0 0.0
      %2671 = vmatprep.subr.mxu0 0.0
      %2672 = vmatpush1.msra.mxu0 0.0
      %2673 = vmatprep.subr.mxu0 0.0
      %2674 = vmatpush1.msra.mxu0 0.0
      %2675 = vmatprep.subr.mxu0 0.0
      %2676 = vmatpush1.msra.mxu0 0.0
      %2677 = vmatprep.subr.mxu0 0.0
      %2678 = vmatpush1.msra.mxu0 0.0
      %2679 = vmatprep.subr.mxu0 0.0
      %2680 = vmatpush1.msra.mxu0 0.0
      %2681 = vmatprep.subr.mxu0 0.0
      %2682 = vmatpush1.msra.mxu0 0.0
      %2683 = vmatprep.subr.mxu0 0.0
      %2684 = vmatpush1.msra.mxu0 0.0
      %2685 = vmatprep.subr.mxu0 0.0
      %2686 = vmatpush1.msra.mxu0 0.0
      %2687 = vmatprep.subr.mxu0 0.0
      %2688 = vmatpush1.msra.mxu0 0.0
      %2689 = vmatprep.subr.mxu0 0.0
      %2690 = vmatpush1.msra.mxu0 0.0
      %2691 = vmatprep.subr.mxu0 0.0
      %2692 = vmatpush1.msra.mxu0 0.0
      %2693 = vmatprep.subr.mxu0 0.0
      %2694 = vmatpush1.msra.mxu0 0.0
      %2695 = vmatprep.subr.mxu0 0.0
      %2696 = vmatpush1.msra.mxu0 0.0
      %2697 = vmatprep.subr.mxu0 0.0
      %2698 = vmatpush1.msra.mxu0 0.0
      %2699 = vmatprep.subr.mxu0 0.0
      %2700 = vmatpush1.msra.mxu0 0.0
      %2701 = vmatprep.subr.mxu0 0.0
      %2702 = vmatpush1.msra.mxu0 0.0
      %2703 = vmatprep.subr.mxu0 0.0
      %2704 = vmatpush1.msra.mxu0 0.0
      %2705 = vmatprep.subr.mxu0 0.0
      %2706 = vmatpush1.msra.mxu0 0.0
      %2707 = vmatprep.subr.mxu0 0.0
      %2708 = vmatpush1.msra.mxu0 0.0
      %2709 = vmatprep.mubr.f32.mxu0 0.0
      %2710 = vmatmul.mubr.f32.gmra.mrb[0].mxu0 %v2641
      %v2711 = vpop.f32.mrb[0].mxu0
      %v2712 = vadd.f32 0.0, %v2711
      %v2713 = vpop.f32.mrb[0].mxu0
      %v2714 = vadd.f32 0.0, %v2713
      %2715 = vmatprep.mubr.f32.mxu0 0.0
      %2716 = vmatmul.mubr.f32.gmra.mrb[0].mxu0 %v2643
      %v2717 = vpop.f32.mrb[0].mxu0
      %v2718 = vadd.f32 0.0, %v2717
      %v2719 = vpop.f32.mrb[0].mxu0
      %v2720 = vadd.f32 0.0, %v2719
      %2721 = vdwg.mxu0
      %v2722 = vmul.f32 %v2627, %v2712
      %v2723 = vmul.f32 %v2629, %v2714
      %v2724 = vmul.f32 %v2633, %v2718
      %v2725 = vmul.f32 %v2635, %v2720
      %v2726 = vadd.f32 %v2536, %v2722
      %v2727 = vadd.f32 %v2537, %v2723
      %v2728 = vadd.f32 %v2538, %v2724
      %v2729 = vadd.f32 %v2539, %v2725
      %2730 = vset.pattern.permute.xlu0 13
      %2731 = vperm.xlu0 %2730, %v259
      %v2732 = vpop.permute.xlu0 %2731
      %2734 = vset.pattern.permute.xlu0 13
      %2735 = vperm.xlu0 %2734, %v260
      %v2736 = vpop.permute.xlu0 %2735
      %v2738 = vmul.f32 %v256, %v2732
      %v2739 = vmul.f32 %v258, %v2736
      %2742 = vrot.lane.b32.xlu0 %v2738, 48
      %v2743 = vpop.permute.xlu0 %2742
      %2744 = vrot.lane.b32.xlu0 %v2739, 48
      %v2745 = vpop.permute.xlu0 %2744
      %v2746 = vsel %vm281, %v2743, 0
      %v2748 = vsel %vm281, %v2745, 0
      %2750 = vmatprep.subr.mxu0 %v262
      %2751 = vmatpush1.msra.mxu0 %v261
      %2752 = vmatprep.subr.mxu0 %v264
      %2753 = vmatpush1.msra.mxu0 %v263
      %2754 = vmatprep.subr.mxu0 0.0
      %2755 = vmatpush1.msra.mxu0 0.0
      %2756 = vmatprep.subr.mxu0 0.0
      %2757 = vmatpush1.msra.mxu0 0.0
      %2758 = vmatprep.subr.mxu0 0.0
      %2759 = vmatpush1.msra.mxu0 0.0
      %2760 = vmatprep.subr.mxu0 0.0
      %2761 = vmatpush1.msra.mxu0 0.0
      %2762 = vmatprep.subr.mxu0 0.0
      %2763 = vmatpush1.msra.mxu0 0.0
      %2764 = vmatprep.subr.mxu0 0.0
      %2765 = vmatpush1.msra.mxu0 0.0
      %2766 = vmatprep.subr.mxu0 0.0
      %2767 = vmatpush1.msra.mxu0 0.0
      %2768 = vmatprep.subr.mxu0 0.0
      %2769 = vmatpush1.msra.mxu0 0.0
      %2770 = vmatprep.subr.mxu0 0.0
      %2771 = vmatpush1.msra.mxu0 0.0
      %2772 = vmatprep.subr.mxu0 0.0
      %2773 = vmatpush1.msra.mxu0 0.0
      %2774 = vmatprep.subr.mxu0 0.0
      %2775 = vmatpush1.msra.mxu0 0.0
      %2776 = vmatprep.subr.mxu0 0.0
      %2777 = vmatpush1.msra.mxu0 0.0
      %2778 = vmatprep.subr.mxu0 0.0
      %2779 = vmatpush1.msra.mxu0 0.0
      %2780 = vmatprep.subr.mxu0 0.0
      %2781 = vmatpush1.msra.mxu0 0.0
      %2782 = vmatprep.subr.mxu0 0.0
      %2783 = vmatpush1.msra.mxu0 0.0
      %2784 = vmatprep.subr.mxu0 0.0
      %2785 = vmatpush1.msra.mxu0 0.0
      %2786 = vmatprep.subr.mxu0 0.0
      %2787 = vmatpush1.msra.mxu0 0.0
      %2788 = vmatprep.subr.mxu0 0.0
      %2789 = vmatpush1.msra.mxu0 0.0
      %2790 = vmatprep.subr.mxu0 0.0
      %2791 = vmatpush1.msra.mxu0 0.0
      %2792 = vmatprep.subr.mxu0 0.0
      %2793 = vmatpush1.msra.mxu0 0.0
      %2794 = vmatprep.subr.mxu0 0.0
      %2795 = vmatpush1.msra.mxu0 0.0
      %2796 = vmatprep.subr.mxu0 0.0
      %2797 = vmatpush1.msra.mxu0 0.0
      %2798 = vmatprep.subr.mxu0 0.0
      %2799 = vmatpush1.msra.mxu0 0.0
      %2800 = vmatprep.subr.mxu0 0.0
      %2801 = vmatpush1.msra.mxu0 0.0
      %2802 = vmatprep.subr.mxu0 0.0
      %2803 = vmatpush1.msra.mxu0 0.0
      %2804 = vmatprep.subr.mxu0 0.0
      %2805 = vmatpush1.msra.mxu0 0.0
      %2806 = vmatprep.subr.mxu0 0.0
      %2807 = vmatpush1.msra.mxu0 0.0
      %2808 = vmatprep.subr.mxu0 0.0
      %2809 = vmatpush1.msra.mxu0 0.0
      %2810 = vmatprep.subr.mxu0 0.0
      %2811 = vmatpush1.msra.mxu0 0.0
      %2812 = vmatprep.subr.mxu0 0.0
      %2813 = vmatpush1.msra.mxu0 0.0
      %2814 = vmatprep.mubr.f32.mxu0 0.0
      %2815 = vmatmul.mubr.f32.gmra.mrb[0].mxu0 %v2746
      %v2816 = vpop.f32.mrb[0].mxu0
      %v2817 = vadd.f32 0.0, %v2816
      %v2818 = vpop.f32.mrb[0].mxu0
      %v2819 = vadd.f32 0.0, %v2818
      %2820 = vmatprep.mubr.f32.mxu0 0.0
      %2821 = vmatmul.mubr.f32.gmra.mrb[0].mxu0 %v2748
      %v2822 = vpop.f32.mrb[0].mxu0
      %v2823 = vadd.f32 0.0, %v2822
      %v2824 = vpop.f32.mrb[0].mxu0
      %v2825 = vadd.f32 0.0, %v2824
      %2826 = vdwg.mxu0
      %2827 = vrot.lane.b32.xlu0 %v256, 48
      %v2828 = vpop.permute.xlu0 %2827
      %2829 = vrot.lane.b32.xlu0 %v258, 48
      %v2830 = vpop.permute.xlu0 %2829
      %v2831 = vsel %vm281, %v2828, 0
      %v2833 = vsel %vm281, %v2830, 0
      %2835 = vmatprep.subr.mxu0 %v266
      %2836 = vmatpush1.msra.mxu0 %v265
      %2837 = vmatprep.subr.mxu0 %v268
      %2838 = vmatpush1.msra.mxu0 %v267
      %2839 = vmatprep.subr.mxu0 0.0
      %2840 = vmatpush1.msra.mxu0 0.0
      %2841 = vmatprep.subr.mxu0 0.0
      %2842 = vmatpush1.msra.mxu0 0.0
      %2843 = vmatprep.subr.mxu0 0.0
      %2844 = vmatpush1.msra.mxu0 0.0
      %2845 = vmatprep.subr.mxu0 0.0
      %2846 = vmatpush1.msra.mxu0 0.0
      %2847 = vmatprep.subr.mxu0 0.0
      %2848 = vmatpush1.msra.mxu0 0.0
      %2849 = vmatprep.subr.mxu0 0.0
      %2850 = vmatpush1.msra.mxu0 0.0
      %2851 = vmatprep.subr.mxu0 0.0
      %2852 = vmatpush1.msra.mxu0 0.0
      %2853 = vmatprep.subr.mxu0 0.0
      %2854 = vmatpush1.msra.mxu0 0.0
      %2855 = vmatprep.subr.mxu0 0.0
      %2856 = vmatpush1.msra.mxu0 0.0
      %2857 = vmatprep.subr.mxu0 0.0
      %2858 = vmatpush1.msra.mxu0 0.0
      %2859 = vmatprep.subr.mxu0 0.0
      %2860 = vmatpush1.msra.mxu0 0.0
      %2861 = vmatprep.subr.mxu0 0.0
      %2862 = vmatpush1.msra.mxu0 0.0
      %2863 = vmatprep.subr.mxu0 0.0
      %2864 = vmatpush1.msra.mxu0 0.0
      %2865 = vmatprep.subr.mxu0 0.0
      %2866 = vmatpush1.msra.mxu0 0.0
      %2867 = vmatprep.subr.mxu0 0.0
      %2868 = vmatpush1.msra.mxu0 0.0
      %2869 = vmatprep.subr.mxu0 0.0
      %2870 = vmatpush1.msra.mxu0 0.0
      %2871 = vmatprep.subr.mxu0 0.0
      %2872 = vmatpush1.msra.mxu0 0.0
      %2873 = vmatprep.subr.mxu0 0.0
      %2874 = vmatpush1.msra.mxu0 0.0
      %2875 = vmatprep.subr.mxu0 0.0
      %2876 = vmatpush1.msra.mxu0 0.0
      %2877 = vmatprep.subr.mxu0 0.0
      %2878 = vmatpush1.msra.mxu0 0.0
      %2879 = vmatprep.subr.mxu0 0.0
      %2880 = vmatpush1.msra.mxu0 0.0
      %2881 = vmatprep.subr.mxu0 0.0
      %2882 = vmatpush1.msra.mxu0 0.0
      %2883 = vmatprep.subr.mxu0 0.0
      %2884 = vmatpush1.msra.mxu0 0.0
      %2885 = vmatprep.subr.mxu0 0.0
      %2886 = vmatpush1.msra.mxu0 0.0
      %2887 = vmatprep.subr.mxu0 0.0
      %2888 = vmatpush1.msra.mxu0 0.0
      %2889 = vmatprep.subr.mxu0 0.0
      %2890 = vmatpush1.msra.mxu0 0.0
      %2891 = vmatprep.subr.mxu0 0.0
      %2892 = vmatpush1.msra.mxu0 0.0
      %2893 = vmatprep.subr.mxu0 0.0
      %2894 = vmatpush1.msra.mxu0 0.0
      %2895 = vmatprep.subr.mxu0 0.0
      %2896 = vmatpush1.msra.mxu0 0.0
      %2897 = vmatprep.subr.mxu0 0.0
      %2898 = vmatpush1.msra.mxu0 0.0
      %2899 = vmatprep.mubr.f32.mxu0 0.0
      %2900 = vmatmul.mubr.f32.gmra.mrb[0].mxu0 %v2831
      %v2901 = vpop.f32.mrb[0].mxu0
      %v2902 = vadd.f32 0.0, %v2901
      %v2903 = vpop.f32.mrb[0].mxu0
      %v2904 = vadd.f32 0.0, %v2903
      %2905 = vmatprep.mubr.f32.mxu0 0.0
      %2906 = vmatmul.mubr.f32.gmra.mrb[0].mxu0 %v2833
      %v2907 = vpop.f32.mrb[0].mxu0
      %v2908 = vadd.f32 0.0, %v2907
      %v2909 = vpop.f32.mrb[0].mxu0
      %v2910 = vadd.f32 0.0, %v2909
      %2911 = vdwg.mxu0
      %v2912 = vmul.f32 %v2817, %v2902
      %v2913 = vmul.f32 %v2819, %v2904
      %v2914 = vmul.f32 %v2823, %v2908
      %v2915 = vmul.f32 %v2825, %v2910
      %v2916 = vadd.f32 %v2726, %v2912
      %v2917 = vadd.f32 %v2727, %v2913
      %v2918 = vadd.f32 %v2728, %v2914
      %v2919 = vadd.f32 %v2729, %v2915
      %2920 = vset.pattern.permute.xlu0 14
      %2921 = vperm.xlu0 %2920, %v259
      %v2922 = vpop.permute.xlu0 %2921
      %2924 = vset.pattern.permute.xlu0 14
      %2925 = vperm.xlu0 %2924, %v260
      %v2926 = vpop.permute.xlu0 %2925
      %v2928 = vmul.f32 %v256, %v2922
      %v2929 = vmul.f32 %v258, %v2926
      %2932 = vrot.lane.b32.xlu0 %v2928, 32
      %v2933 = vpop.permute.xlu0 %2932
      %2934 = vrot.lane.b32.xlu0 %v2929, 32
      %v2935 = vpop.permute.xlu0 %2934
      %v2936 = vsel %vm281, %v2933, 0
      %v2938 = vsel %vm281, %v2935, 0
      %2940 = vmatprep.subr.mxu0 %v262
      %2941 = vmatpush1.msra.mxu0 %v261
      %2942 = vmatprep.subr.mxu0 %v264
      %2943 = vmatpush1.msra.mxu0 %v263
      %2944 = vmatprep.subr.mxu0 0.0
      %2945 = vmatpush1.msra.mxu0 0.0
      %2946 = vmatprep.subr.mxu0 0.0
      %2947 = vmatpush1.msra.mxu0 0.0
      %2948 = vmatprep.subr.mxu0 0.0
      %2949 = vmatpush1.msra.mxu0 0.0
      %2950 = vmatprep.subr.mxu0 0.0
      %2951 = vmatpush1.msra.mxu0 0.0
      %2952 = vmatprep.subr.mxu0 0.0
      %2953 = vmatpush1.msra.mxu0 0.0
      %2954 = vmatprep.subr.mxu0 0.0
      %2955 = vmatpush1.msra.mxu0 0.0
      %2956 = vmatprep.subr.mxu0 0.0
      %2957 = vmatpush1.msra.mxu0 0.0
      %2958 = vmatprep.subr.mxu0 0.0
      %2959 = vmatpush1.msra.mxu0 0.0
      %2960 = vmatprep.subr.mxu0 0.0
      %2961 = vmatpush1.msra.mxu0 0.0
      %2962 = vmatprep.subr.mxu0 0.0
      %2963 = vmatpush1.msra.mxu0 0.0
      %2964 = vmatprep.subr.mxu0 0.0
      %2965 = vmatpush1.msra.mxu0 0.0
      %2966 = vmatprep.subr.mxu0 0.0
      %2967 = vmatpush1.msra.mxu0 0.0
      %2968 = vmatprep.subr.mxu0 0.0
      %2969 = vmatpush1.msra.mxu0 0.0
      %2970 = vmatprep.subr.mxu0 0.0
      %2971 = vmatpush1.msra.mxu0 0.0
      %2972 = vmatprep.subr.mxu0 0.0
      %2973 = vmatpush1.msra.mxu0 0.0
      %2974 = vmatprep.subr.mxu0 0.0
      %2975 = vmatpush1.msra.mxu0 0.0
      %2976 = vmatprep.subr.mxu0 0.0
      %2977 = vmatpush1.msra.mxu0 0.0
      %2978 = vmatprep.subr.mxu0 0.0
      %2979 = vmatpush1.msra.mxu0 0.0
      %2980 = vmatprep.subr.mxu0 0.0
      %2981 = vmatpush1.msra.mxu0 0.0
      %2982 = vmatprep.subr.mxu0 0.0
      %2983 = vmatpush1.msra.mxu0 0.0
      %2984 = vmatprep.subr.mxu0 0.0
      %2985 = vmatpush1.msra.mxu0 0.0
      %2986 = vmatprep.subr.mxu0 0.0
      %2987 = vmatpush1.msra.mxu0 0.0
      %2988 = vmatprep.subr.mxu0 0.0
      %2989 = vmatpush1.msra.mxu0 0.0
      %2990 = vmatprep.subr.mxu0 0.0
      %2991 = vmatpush1.msra.mxu0 0.0
      %2992 = vmatprep.subr.mxu0 0.0
      %2993 = vmatpush1.msra.mxu0 0.0
      %2994 = vmatprep.subr.mxu0 0.0
      %2995 = vmatpush1.msra.mxu0 0.0
      %2996 = vmatprep.subr.mxu0 0.0
      %2997 = vmatpush1.msra.mxu0 0.0
      %2998 = vmatprep.subr.mxu0 0.0
      %2999 = vmatpush1.msra.mxu0 0.0
      %3000 = vmatprep.subr.mxu0 0.0
      %3001 = vmatpush1.msra.mxu0 0.0
      %3002 = vmatprep.subr.mxu0 0.0
      %3003 = vmatpush1.msra.mxu0 0.0
      %3004 = vmatprep.mubr.f32.mxu0 0.0
      %3005 = vmatmul.mubr.f32.gmra.mrb[0].mxu0 %v2936
      %v3006 = vpop.f32.mrb[0].mxu0
      %v3007 = vadd.f32 0.0, %v3006
      %v3008 = vpop.f32.mrb[0].mxu0
      %v3009 = vadd.f32 0.0, %v3008
      %3010 = vmatprep.mubr.f32.mxu0 0.0
      %3011 = vmatmul.mubr.f32.gmra.mrb[0].mxu0 %v2938
      %v3012 = vpop.f32.mrb[0].mxu0
      %v3013 = vadd.f32 0.0, %v3012
      %v3014 = vpop.f32.mrb[0].mxu0
      %v3015 = vadd.f32 0.0, %v3014
      %3016 = vdwg.mxu0
      %3017 = vrot.lane.b32.xlu0 %v256, 32
      %v3018 = vpop.permute.xlu0 %3017
      %3019 = vrot.lane.b32.xlu0 %v258, 32
      %v3020 = vpop.permute.xlu0 %3019
      %v3021 = vsel %vm281, %v3018, 0
      %v3023 = vsel %vm281, %v3020, 0
      %3025 = vmatprep.subr.mxu0 %v266
      %3026 = vmatpush1.msra.mxu0 %v265
      %3027 = vmatprep.subr.mxu0 %v268
      %3028 = vmatpush1.msra.mxu0 %v267
      %3029 = vmatprep.subr.mxu0 0.0
      %3030 = vmatpush1.msra.mxu0 0.0
      %3031 = vmatprep.subr.mxu0 0.0
      %3032 = vmatpush1.msra.mxu0 0.0
      %3033 = vmatprep.subr.mxu0 0.0
      %3034 = vmatpush1.msra.mxu0 0.0
      %3035 = vmatprep.subr.mxu0 0.0
      %3036 = vmatpush1.msra.mxu0 0.0
      %3037 = vmatprep.subr.mxu0 0.0
      %3038 = vmatpush1.msra.mxu0 0.0
      %3039 = vmatprep.subr.mxu0 0.0
      %3040 = vmatpush1.msra.mxu0 0.0
      %3041 = vmatprep.subr.mxu0 0.0
      %3042 = vmatpush1.msra.mxu0 0.0
      %3043 = vmatprep.subr.mxu0 0.0
      %3044 = vmatpush1.msra.mxu0 0.0
      %3045 = vmatprep.subr.mxu0 0.0
      %3046 = vmatpush1.msra.mxu0 0.0
      %3047 = vmatprep.subr.mxu0 0.0
      %3048 = vmatpush1.msra.mxu0 0.0
      %3049 = vmatprep.subr.mxu0 0.0
      %3050 = vmatpush1.msra.mxu0 0.0
      %3051 = vmatprep.subr.mxu0 0.0
      %3052 = vmatpush1.msra.mxu0 0.0
      %3053 = vmatprep.subr.mxu0 0.0
      %3054 = vmatpush1.msra.mxu0 0.0
      %3055 = vmatprep.subr.mxu0 0.0
      %3056 = vmatpush1.msra.mxu0 0.0
      %3057 = vmatprep.subr.mxu0 0.0
      %3058 = vmatpush1.msra.mxu0 0.0
      %3059 = vmatprep.subr.mxu0 0.0
      %3060 = vmatpush1.msra.mxu0 0.0
      %3061 = vmatprep.subr.mxu0 0.0
      %3062 = vmatpush1.msra.mxu0 0.0
      %3063 = vmatprep.subr.mxu0 0.0
      %3064 = vmatpush1.msra.mxu0 0.0
      %3065 = vmatprep.subr.mxu0 0.0
      %3066 = vmatpush1.msra.mxu0 0.0
      %3067 = vmatprep.subr.mxu0 0.0
      %3068 = vmatpush1.msra.mxu0 0.0
      %3069 = vmatprep.subr.mxu0 0.0
      %3070 = vmatpush1.msra.mxu0 0.0
      %3071 = vmatprep.subr.mxu0 0.0
      %3072 = vmatpush1.msra.mxu0 0.0
      %3073 = vmatprep.subr.mxu0 0.0
      %3074 = vmatpush1.msra.mxu0 0.0
      %3075 = vmatprep.subr.mxu0 0.0
      %3076 = vmatpush1.msra.mxu0 0.0
      %3077 = vmatprep.subr.mxu0 0.0
      %3078 = vmatpush1.msra.mxu0 0.0
      %3079 = vmatprep.subr.mxu0 0.0
      %3080 = vmatpush1.msra.mxu0 0.0
      %3081 = vmatprep.subr.mxu0 0.0
      %3082 = vmatpush1.msra.mxu0 0.0
      %3083 = vmatprep.subr.mxu0 0.0
      %3084 = vmatpush1.msra.mxu0 0.0
      %3085 = vmatprep.subr.mxu0 0.0
      %3086 = vmatpush1.msra.mxu0 0.0
      %3087 = vmatprep.subr.mxu0 0.0
      %3088 = vmatpush1.msra.mxu0 0.0
      %3089 = vmatprep.mubr.f32.mxu0 0.0
      %3090 = vmatmul.mubr.f32.gmra.mrb[0].mxu0 %v3021
      %v3091 = vpop.f32.mrb[0].mxu0
      %v3092 = vadd.f32 0.0, %v3091
      %v3093 = vpop.f32.mrb[0].mxu0
      %v3094 = vadd.f32 0.0, %v3093
      %3095 = vmatprep.mubr.f32.mxu0 0.0
      %3096 = vmatmul.mubr.f32.gmra.mrb[0].mxu0 %v3023
      %v3097 = vpop.f32.mrb[0].mxu0
      %v3098 = vadd.f32 0.0, %v3097
      %v3099 = vpop.f32.mrb[0].mxu0
      %v3100 = vadd.f32 0.0, %v3099
      %3101 = vdwg.mxu0
      %v3102 = vmul.f32 %v3007, %v3092
      %v3103 = vmul.f32 %v3009, %v3094
      %v3104 = vmul.f32 %v3013, %v3098
      %v3105 = vmul.f32 %v3015, %v3100
      %v3106 = vadd.f32 %v2916, %v3102
      %v3107 = vadd.f32 %v2917, %v3103
      %v3108 = vadd.f32 %v2918, %v3104
      %v3109 = vadd.f32 %v2919, %v3105
      %3110 = vset.pattern.permute.xlu0 15
      %3111 = vperm.xlu0 %3110, %v259
      %v3112 = vpop.permute.xlu0 %3111
      %3114 = vset.pattern.permute.xlu0 15
      %3115 = vperm.xlu0 %3114, %v260
      %v3116 = vpop.permute.xlu0 %3115
      %v3118 = vmul.f32 %v256, %v3112
      %v3119 = vmul.f32 %v258, %v3116
      %3122 = vrot.lane.b32.xlu0 %v3118, 16
      %v3123 = vpop.permute.xlu0 %3122
      %3124 = vrot.lane.b32.xlu0 %v3119, 16
      %v3125 = vpop.permute.xlu0 %3124
      %v3126 = vsel %vm281, %v3123, 0
      %v3128 = vsel %vm281, %v3125, 0
      %3130 = vmatprep.subr.mxu0 %v262
      %3131 = vmatpush1.msra.mxu0 %v261
      %3132 = vmatprep.subr.mxu0 %v264
      %3133 = vmatpush1.msra.mxu0 %v263
      %3134 = vmatprep.subr.mxu0 0.0
      %3135 = vmatpush1.msra.mxu0 0.0
      %3136 = vmatprep.subr.mxu0 0.0
      %3137 = vmatpush1.msra.mxu0 0.0
      %3138 = vmatprep.subr.mxu0 0.0
      %3139 = vmatpush1.msra.mxu0 0.0
      %3140 = vmatprep.subr.mxu0 0.0
      %3141 = vmatpush1.msra.mxu0 0.0
      %3142 = vmatprep.subr.mxu0 0.0
      %3143 = vmatpush1.msra.mxu0 0.0
      %3144 = vmatprep.subr.mxu0 0.0
      %3145 = vmatpush1.msra.mxu0 0.0
      %3146 = vmatprep.subr.mxu0 0.0
      %3147 = vmatpush1.msra.mxu0 0.0
      %3148 = vmatprep.subr.mxu0 0.0
      %3149 = vmatpush1.msra.mxu0 0.0
      %3150 = vmatprep.subr.mxu0 0.0
      %3151 = vmatpush1.msra.mxu0 0.0
      %3152 = vmatprep.subr.mxu0 0.0
      %3153 = vmatpush1.msra.mxu0 0.0
      %3154 = vmatprep.subr.mxu0 0.0
      %3155 = vmatpush1.msra.mxu0 0.0
      %3156 = vmatprep.subr.mxu0 0.0
      %3157 = vmatpush1.msra.mxu0 0.0
      %3158 = vmatprep.subr.mxu0 0.0
      %3159 = vmatpush1.msra.mxu0 0.0
      %3160 = vmatprep.subr.mxu0 0.0
      %3161 = vmatpush1.msra.mxu0 0.0
      %3162 = vmatprep.subr.mxu0 0.0
      %3163 = vmatpush1.msra.mxu0 0.0
      %3164 = vmatprep.subr.mxu0 0.0
      %3165 = vmatpush1.msra.mxu0 0.0
      %3166 = vmatprep.subr.mxu0 0.0
      %3167 = vmatpush1.msra.mxu0 0.0
      %3168 = vmatprep.subr.mxu0 0.0
      %3169 = vmatpush1.msra.mxu0 0.0
      %3170 = vmatprep.subr.mxu0 0.0
      %3171 = vmatpush1.msra.mxu0 0.0
      %3172 = vmatprep.subr.mxu0 0.0
      %3173 = vmatpush1.msra.mxu0 0.0
      %3174 = vmatprep.subr.mxu0 0.0
      %3175 = vmatpush1.msra.mxu0 0.0
      %3176 = vmatprep.subr.mxu0 0.0
      %3177 = vmatpush1.msra.mxu0 0.0
      %3178 = vmatprep.subr.mxu0 0.0
      %3179 = vmatpush1.msra.mxu0 0.0
      %3180 = vmatprep.subr.mxu0 0.0
      %3181 = vmatpush1.msra.mxu0 0.0
      %3182 = vmatprep.subr.mxu0 0.0
      %3183 = vmatpush1.msra.mxu0 0.0
      %3184 = vmatprep.subr.mxu0 0.0
      %3185 = vmatpush1.msra.mxu0 0.0
      %3186 = vmatprep.subr.mxu0 0.0
      %3187 = vmatpush1.msra.mxu0 0.0
      %3188 = vmatprep.subr.mxu0 0.0
      %3189 = vmatpush1.msra.mxu0 0.0
      %3190 = vmatprep.subr.mxu0 0.0
      %3191 = vmatpush1.msra.mxu0 0.0
      %3192 = vmatprep.subr.mxu0 0.0
      %3193 = vmatpush1.msra.mxu0 0.0
      %3194 = vmatprep.mubr.f32.mxu0 0.0
      %3195 = vmatmul.mubr.f32.gmra.mrb[0].mxu0 %v3126
      %v3196 = vpop.f32.mrb[0].mxu0
      %v3197 = vadd.f32 0.0, %v3196
      %v3198 = vpop.f32.mrb[0].mxu0
      %v3199 = vadd.f32 0.0, %v3198
      %3200 = vmatprep.mubr.f32.mxu0 0.0
      %3201 = vmatmul.mubr.f32.gmra.mrb[0].mxu0 %v3128
      %v3202 = vpop.f32.mrb[0].mxu0
      %v3203 = vadd.f32 0.0, %v3202
      %v3204 = vpop.f32.mrb[0].mxu0
      %v3205 = vadd.f32 0.0, %v3204
      %3206 = vdwg.mxu0
      %3207 = vrot.lane.b32.xlu0 %v256, 16
      %v3208 = vpop.permute.xlu0 %3207
      %3209 = vrot.lane.b32.xlu0 %v258, 16
      %v3210 = vpop.permute.xlu0 %3209
      %v3211 = vsel %vm281, %v3208, 0
      %v3213 = vsel %vm281, %v3210, 0
      %3215 = vmatprep.subr.mxu0 %v266
      %3216 = vmatpush1.msra.mxu0 %v265
      %3217 = vmatprep.subr.mxu0 %v268
      %3218 = vmatpush1.msra.mxu0 %v267
      %3219 = vmatprep.subr.mxu0 0.0
      %3220 = vmatpush1.msra.mxu0 0.0
      %3221 = vmatprep.subr.mxu0 0.0
      %3222 = vmatpush1.msra.mxu0 0.0
      %3223 = vmatprep.subr.mxu0 0.0
      %3224 = vmatpush1.msra.mxu0 0.0
      %3225 = vmatprep.subr.mxu0 0.0
      %3226 = vmatpush1.msra.mxu0 0.0
      %3227 = vmatprep.subr.mxu0 0.0
      %3228 = vmatpush1.msra.mxu0 0.0
      %3229 = vmatprep.subr.mxu0 0.0
      %3230 = vmatpush1.msra.mxu0 0.0
      %3231 = vmatprep.subr.mxu0 0.0
      %3232 = vmatpush1.msra.mxu0 0.0
      %3233 = vmatprep.subr.mxu0 0.0
      %3234 = vmatpush1.msra.mxu0 0.0
      %3235 = vmatprep.subr.mxu0 0.0
      %3236 = vmatpush1.msra.mxu0 0.0
      %3237 = vmatprep.subr.mxu0 0.0
      %3238 = vmatpush1.msra.mxu0 0.0
      %3239 = vmatprep.subr.mxu0 0.0
      %3240 = vmatpush1.msra.mxu0 0.0
      %3241 = vmatprep.subr.mxu0 0.0
      %3242 = vmatpush1.msra.mxu0 0.0
      %3243 = vmatprep.subr.mxu0 0.0
      %3244 = vmatpush1.msra.mxu0 0.0
      %3245 = vmatprep.subr.mxu0 0.0
      %3246 = vmatpush1.msra.mxu0 0.0
      %3247 = vmatprep.subr.mxu0 0.0
      %3248 = vmatpush1.msra.mxu0 0.0
      %3249 = vmatprep.subr.mxu0 0.0
      %3250 = vmatpush1.msra.mxu0 0.0
      %3251 = vmatprep.subr.mxu0 0.0
      %3252 = vmatpush1.msra.mxu0 0.0
      %3253 = vmatprep.subr.mxu0 0.0
      %3254 = vmatpush1.msra.mxu0 0.0
      %3255 = vmatprep.subr.mxu0 0.0
      %3256 = vmatpush1.msra.mxu0 0.0
      %3257 = vmatprep.subr.mxu0 0.0
      %3258 = vmatpush1.msra.mxu0 0.0
      %3259 = vmatprep.subr.mxu0 0.0
      %3260 = vmatpush1.msra.mxu0 0.0
      %3261 = vmatprep.subr.mxu0 0.0
      %3262 = vmatpush1.msra.mxu0 0.0
      %3263 = vmatprep.subr.mxu0 0.0
      %3264 = vmatpush1.msra.mxu0 0.0
      %3265 = vmatprep.subr.mxu0 0.0
      %3266 = vmatpush1.msra.mxu0 0.0
      %3267 = vmatprep.subr.mxu0 0.0
      %3268 = vmatpush1.msra.mxu0 0.0
      %3269 = vmatprep.subr.mxu0 0.0
      %3270 = vmatpush1.msra.mxu0 0.0
      %3271 = vmatprep.subr.mxu0 0.0
      %3272 = vmatpush1.msra.mxu0 0.0
      %3273 = vmatprep.subr.mxu0 0.0
      %3274 = vmatpush1.msra.mxu0 0.0
      %3275 = vmatprep.subr.mxu0 0.0
      %3276 = vmatpush1.msra.mxu0 0.0
      %3277 = vmatprep.subr.mxu0 0.0
      %3278 = vmatpush1.msra.mxu0 0.0
      %3279 = vmatprep.mubr.f32.mxu0 0.0
      %3280 = vmatmul.mubr.f32.gmra.mrb[0].mxu0 %v3211
      %v3281 = vpop.f32.mrb[0].mxu0
      %v3282 = vadd.f32 0.0, %v3281
      %v3283 = vpop.f32.mrb[0].mxu0
      %v3284 = vadd.f32 0.0, %v3283
      %3285 = vmatprep.mubr.f32.mxu0 0.0
      %3286 = vmatmul.mubr.f32.gmra.mrb[0].mxu0 %v3213
      %v3287 = vpop.f32.mrb[0].mxu0
      %v3288 = vadd.f32 0.0, %v3287
      %v3289 = vpop.f32.mrb[0].mxu0
      %v3290 = vadd.f32 0.0, %v3289
      %3291 = vdwg.mxu0
      %v3292 = vmul.f32 %v3197, %v3282
      %v3293 = vmul.f32 %v3199, %v3284
      %v3294 = vmul.f32 %v3203, %v3288
      %v3295 = vmul.f32 %v3205, %v3290
      %v3296 = vadd.f32 %v3106, %v3292
      %v3297 = vadd.f32 %v3107, %v3293
      %v3298 = vadd.f32 %v3108, %v3294
      %v3299 = vadd.f32 %v3109, %v3295
      %v3300 = vld [vmem:[%s4] sm:$0xff]
      %v3301 = vld [vmem:[%s4 + $0x8] sm:$0xff]
      %v3302 = vld [vmem:[%s4 + $0x10] sm:$0xff]
      %v3303 = vld [vmem:[%s4 + $0x18] sm:$0xff]
      %v3304 = vld [vmem:[%s4 + $0x20] sm:$0xff]
      %v3305 = vld [vmem:[%s4 + $0x28] sm:$0xff]
      %v3306 = vld [vmem:[%s4 + $0x30] sm:$0xff]
      %v3307 = vld [vmem:[%s4 + $0x38] sm:$0xff]
      %v3308 = vld [vmem:[%s4 + $0x40] sm:$0xff]
      %v3309 = vld [vmem:[%s4 + $0x48] sm:$0xff]
      %v3310 = vld [vmem:[%s4 + $0x50] sm:$0xff]
      %v3311 = vld [vmem:[%s4 + $0x58] sm:$0xff]
      %v3312 = vld [vmem:[%s4 + $0x60] sm:$0xff]
      %v3313 = vld [vmem:[%s4 + $0x68] sm:$0xff]
      %v3314 = vld [vmem:[%s4 + $0x70] sm:$0xff]
      %v3315 = vld [vmem:[%s4 + $0x78] sm:$0xff]
      %v3316 = vld [vmem:[%s4 + $0x80] sm:$0xff]
      %v3317 = vld [vmem:[%s4 + $0x88] sm:$0xff]
      %v3318 = vld [vmem:[%s4 + $0x90] sm:$0xff]
      %v3319 = vld [vmem:[%s4 + $0x98] sm:$0xff]
      %v3320 = vld [vmem:[%s4 + $0xa0] sm:$0xff]
      %v3321 = vld [vmem:[%s4 + $0xa8] sm:$0xff]
      %v3322 = vld [vmem:[%s4 + $0xb0] sm:$0xff]
      %v3323 = vld [vmem:[%s4 + $0xb8] sm:$0xff]
      %v3324 = vld [vmem:[%s4 + $0xc0] sm:$0xff]
      %v3325 = vld [vmem:[%s4 + $0xc8] sm:$0xff]
      %v3326 = vld [vmem:[%s4 + $0xd0] sm:$0xff]
      %v3327 = vld [vmem:[%s4 + $0xd8] sm:$0xff]
      %v3328 = vld [vmem:[%s4 + $0xe0] sm:$0xff]
      %v3329 = vld [vmem:[%s4 + $0xe8] sm:$0xff]
      %v3330 = vld [vmem:[%s4 + $0xf0] sm:$0xff]
      %v3331 = vld [vmem:[%s4 + $0xf8] sm:$0xff]
      %v3332 = vld [vmem:[%s4 + $0x100] sm:$0xff]
      %v3333 = vld [vmem:[%s4 + $0x108] sm:$0xff]
      %v3334 = vld [vmem:[%s4 + $0x110] sm:$0xff]
      %v3335 = vld [vmem:[%s4 + $0x118] sm:$0xff]
      %v3336 = vld [vmem:[%s4 + $0x120] sm:$0xff]
      %v3337 = vld [vmem:[%s4 + $0x128] sm:$0xff]
      %v3338 = vld [vmem:[%s4 + $0x130] sm:$0xff]
      %v3339 = vld [vmem:[%s4 + $0x138] sm:$0xff]
      %v3340 = vld [vmem:[%s4 + $0x140] sm:$0xff]
      %v3341 = vld [vmem:[%s4 + $0x148] sm:$0xff]
      %v3342 = vld [vmem:[%s4 + $0x150] sm:$0xff]
      %v3343 = vld [vmem:[%s4 + $0x158] sm:$0xff]
      %v3344 = vld [vmem:[%s4 + $0x160] sm:$0xff]
      %v3345 = vld [vmem:[%s4 + $0x168] sm:$0xff]
      %v3346 = vld [vmem:[%s4 + $0x170] sm:$0xff]
      %v3347 = vld [vmem:[%s4 + $0x178] sm:$0xff]
      %v3348 = vld [vmem:[%s4 + $0x180] sm:$0xff]
      %v3349 = vld [vmem:[%s4 + $0x188] sm:$0xff]
      %v3350 = vld [vmem:[%s4 + $0x190] sm:$0xff]
      %v3351 = vld [vmem:[%s4 + $0x198] sm:$0xff]
      %v3352 = vld [vmem:[%s4 + $0x1a0] sm:$0xff]
      %v3353 = vld [vmem:[%s4 + $0x1a8] sm:$0xff]
      %v3354 = vld [vmem:[%s4 + $0x1b0] sm:$0xff]
      %v3355 = vld [vmem:[%s4 + $0x1b8] sm:$0xff]
      %v3356 = vld [vmem:[%s4 + $0x1c0] sm:$0xff]
      %v3357 = vld [vmem:[%s4 + $0x1c8] sm:$0xff]
      %v3358 = vld [vmem:[%s4 + $0x1d0] sm:$0xff]
      %v3359 = vld [vmem:[%s4 + $0x1d8] sm:$0xff]
      %v3360 = vld [vmem:[%s4 + $0x1e0] sm:$0xff]
      %v3361 = vld [vmem:[%s4 + $0x1e8] sm:$0xff]
      %v3362 = vld [vmem:[%s4 + $0x1f0] sm:$0xff]
      %v3363 = vld [vmem:[%s4 + $0x1f8] sm:$0xff]
      %3364 = vmatprep.subr.mxu0 %v3301
      %3365 = vmatpush1.msra.mxu0 %v3300
      %3366 = vmatprep.subr.mxu0 %v3303
      %3367 = vmatpush1.msra.mxu0 %v3302
      %3368 = vmatprep.subr.mxu0 %v3305
      %3369 = vmatpush1.msra.mxu0 %v3304
      %3370 = vmatprep.subr.mxu0 %v3307
      %3371 = vmatpush1.msra.mxu0 %v3306
      %3372 = vmatprep.subr.mxu0 %v3309
      %3373 = vmatpush1.msra.mxu0 %v3308
      %3374 = vmatprep.subr.mxu0 %v3311
      %3375 = vmatpush1.msra.mxu0 %v3310
      %3376 = vmatprep.subr.mxu0 %v3313
      %3377 = vmatpush1.msra.mxu0 %v3312
      %3378 = vmatprep.subr.mxu0 %v3315
      %3379 = vmatpush1.msra.mxu0 %v3314
      %3380 = vmatprep.subr.mxu0 %v3317
      %3381 = vmatpush1.msra.mxu0 %v3316
      %3382 = vmatprep.subr.mxu0 %v3319
      %3383 = vmatpush1.msra.mxu0 %v3318
      %3384 = vmatprep.subr.mxu0 %v3321
      %3385 = vmatpush1.msra.mxu0 %v3320
      %3386 = vmatprep.subr.mxu0 %v3323
      %3387 = vmatpush1.msra.mxu0 %v3322
      %3388 = vmatprep.subr.mxu0 %v3325
      %3389 = vmatpush1.msra.mxu0 %v3324
      %3390 = vmatprep.subr.mxu0 %v3327
      %3391 = vmatpush1.msra.mxu0 %v3326
      %3392 = vmatprep.subr.mxu0 %v3329
      %3393 = vmatpush1.msra.mxu0 %v3328
      %3394 = vmatprep.subr.mxu0 %v3331
      %3395 = vmatpush1.msra.mxu0 %v3330
      %3396 = vmatprep.subr.mxu0 %v3333
      %3397 = vmatpush1.msra.mxu0 %v3332
      %3398 = vmatprep.subr.mxu0 %v3335
      %3399 = vmatpush1.msra.mxu0 %v3334
      %3400 = vmatprep.subr.mxu0 %v3337
      %3401 = vmatpush1.msra.mxu0 %v3336
      %3402 = vmatprep.subr.mxu0 %v3339
      %3403 = vmatpush1.msra.mxu0 %v3338
      %3404 = vmatprep.subr.mxu0 %v3341
      %3405 = vmatpush1.msra.mxu0 %v3340
      %3406 = vmatprep.subr.mxu0 %v3343
      %3407 = vmatpush1.msra.mxu0 %v3342
      %3408 = vmatprep.subr.mxu0 %v3345
      %3409 = vmatpush1.msra.mxu0 %v3344
      %3410 = vmatprep.subr.mxu0 %v3347
      %3411 = vmatpush1.msra.mxu0 %v3346
      %3412 = vmatprep.subr.mxu0 %v3349
      %3413 = vmatpush1.msra.mxu0 %v3348
      %3414 = vmatprep.subr.mxu0 %v3351
      %3415 = vmatpush1.msra.mxu0 %v3350
      %3416 = vmatprep.subr.mxu0 %v3353
      %3417 = vmatpush1.msra.mxu0 %v3352
      %3418 = vmatprep.subr.mxu0 %v3355
      %3419 = vmatpush1.msra.mxu0 %v3354
      %3420 = vmatprep.subr.mxu0 %v3357
      %3421 = vmatpush1.msra.mxu0 %v3356
      %3422 = vmatprep.subr.mxu0 %v3359
      %3423 = vmatpush1.msra.mxu0 %v3358
      %3424 = vmatprep.subr.mxu0 %v3361
      %3425 = vmatpush1.msra.mxu0 %v3360
      %3426 = vmatprep.subr.mxu0 %v3363
      %3427 = vmatpush1.msra.mxu0 %v3362
      %3428 = vmatprep.mubr.f32.mxu0 %v3297
      %3429 = vmatmul.mubr.f32.gmra.mrb[0].mxu0 %v3296
      %v3430 = vpop.f32.mrb[0].mxu0
      %v3431 = vadd.f32 0.0, %v3430
      %v3432 = vpop.f32.mrb[0].mxu0
      %v3433 = vadd.f32 0.0, %v3432
      %3434 = vmatprep.mubr.f32.mxu0 %v3299
      %3435 = vmatmul.mubr.f32.gmra.mrb[0].mxu0 %v3298
      %v3436 = vpop.f32.mrb[0].mxu0
      %v3437 = vadd.f32 0.0, %v3436
      %v3438 = vpop.f32.mrb[0].mxu0
      %v3439 = vadd.f32 0.0, %v3438
      %3440 = vdwg.mxu0
      %3441 = vst [vmem:[%s253] sm:$0xff] %v3431
      %3442 = vst [vmem:[%s253 + $0x8] sm:$0xff] %v3433
      %3443 = vst [vmem:[%s253 + $0x10] sm:$0xff] %v3437
      %3444 = vst [vmem:[%s253 + $0x18] sm:$0xff] %v3439
      %s3445 = smul.u32 2, %s16
      %p3446 = scmp.lt.s32.totalorder %s3445, 3
      %s3447 = scalar_select %p3446, %s3445, 3
      %s3448 = smul.addr %s3447, 2
      %s3449 = smul.addr %s3448, 8
      %s3450 = scalar_lea.vmem %s5, %s3449
      // Predicated region
      $region41: #{tangent_space_forward.3} parent=39 // pred_check
        %p3451 = pneg %p149
      $region42: #{tangent_space_forward.3} parent=39 // pred_check_branch
        %3453 = sbr.rel (%p3451) target = $region44
      $region43: #{tangent_space_forward.3} parent=39 // pred_region
        %s3454 = smul.u32 2, %s16
      $region44: #{tangent_space_forward.3} parent=39 // pred_fallthru
        _
    $region40: #{tangent_space_forward.3} parent=5 // pred_fallthru
      _
    %p3455 = scmp.le.s32.totalorder 2, %s11
    // Predicated region
    $region45: #{tangent_space_forward.3} parent=5 // pred_check
      %p3456 = pneg %p3455
    $region46: #{tangent_space_forward.3} parent=5 // pred_check_branch
      %3458 = sbr.rel (%p3456) target = $region48
    $region47: #{tangent_space_forward.3} parent=5 // pred_region
      %s3459 = ssub.s32 %s11, 2
      // Predicated region
      $region49: #{tangent_space_forward.3} parent=47 // pred_check
        %p3460 = pneg %p155
      $region50: #{tangent_space_forward.3} parent=47 // pred_check_branch
        %3462 = sbr.rel (%p3460) target = $region52
      $region51: #{tangent_space_forward.3} parent=47 // pred_region
        %s3463 = smul.u32 2, %s17
        %p3464 = scmp.lt.s32.totalorder %s3463, 3
        %s3465 = scalar_select %p3464, %s3463, 3
        %s3466 = smul.addr %s3465, 2
        %s3467 = smul.addr %s3466, 8
        %s3468 = scalar_lea.vmem %s5, %s3467
      $region52: #{tangent_space_forward.3} parent=47 // pred_fallthru
        _
    $region48: #{tangent_space_forward.3} parent=5 // pred_fallthru
      _
  $region6: #{tangent_space_forward.3} parent=0 // loop_footer
    %s15 = sadd.s32 1, %s11
  $region7: #{tangent_space_forward.3} parent=0 // loop_footer_branch
    %10 = sbr.rel target = $region3
  $region8: #{tangent_space_forward.3} parent=0 // loop_exit
    _

</llo_original>
